<compile_context>
chip_gen: v7x
topology: tpu7x:2x2x1
jax: 0.10.0
libtpu: 0.0.40
codegen_flags: <defaults>
</compile_context>

<pallas_src>
import math

import jax
import jax.numpy as jnp
from jax import lax
from jax.experimental import pallas as pl
from jax.experimental.pallas import tpu as pltpu

INPUT_DIM = 3
SHARED_DIMS = [16, 16, 16, 32, 32, 64, 128, 256]   # pick_type('mlp_test')
ACTOR_DIMS = [128, 64, 32, 32, 32]
CRITIC_DIMS = [128, 64, 32, 16, 8, 8, 4, 4]
ACTOR_OUT = 10
CRITIC_OUT = 1
BN_EPS = 1e-5

N_SHARED = len(SHARED_DIMS)                 # 8
N_ACTOR = len(ACTOR_DIMS)                   # 5
N_CRITIC = len(CRITIC_DIMS)                 # 8
N_HIDDEN = N_SHARED + N_ACTOR + N_CRITIC    # 21 hidden (Linear+BN+GELU) layers
ACTOR_HEAD_IDX = N_HIDDEN                   # 21
CRITIC_HEAD_IDX = N_HIDDEN + 1              # 22
N_LAYERS = N_HIDDEN + 2                     # 23 matmuls total

PAD = 256  # lane-pad width = max feature dim in the net


def _hidden_layer_dims():
    dims = []
    fi = INPUT_DIM
    for fo in SHARED_DIMS:
        dims.append((fi, fo)); fi = fo
    fi = SHARED_DIMS[-1]
    for fo in ACTOR_DIMS:
        dims.append((fi, fo)); fi = fo
    fi = SHARED_DIMS[-1]
    for fo in CRITIC_DIMS:
        dims.append((fi, fo)); fi = fo
    return dims


HIDDEN_LAYER_DIMS = _hidden_layer_dims()
assert len(HIDDEN_LAYER_DIMS) == N_HIDDEN


# ---------------------------------------------------------------------------
# In-kernel math helpers
# ---------------------------------------------------------------------------
def _gelu_exact(x):
    # nn.GELU() default: 0.5 * x * (1 + erf(x / sqrt(2)))
    return 0.5 * x * (1.0 + lax.erf(x * (1.0 / math.sqrt(2.0))))


# ---------------------------------------------------------------------------
# Single fused Pallas kernel: whole actor/critic forward pass, grid-less.
# Everything (6 MB weight slab + tiny tables + activations) lives in VMEM.
# ---------------------------------------------------------------------------
def net_kernel(x_ref, w_ref, gamma_ref, beta_ref, hb_ref, actor_ref, critic_ref):
    def hidden_layer(h, l):
        # Linear -- hidden-layer bias elided (exactly cancelled by BN mean subtraction).
        h = jnp.dot(h, w_ref[l], preferred_element_type=jnp.float32)
        # One-pass BN stats (training mode, biased variance): two independent reductions.
        mean = jnp.mean(h, axis=0, keepdims=True)
        var = jnp.mean(h * h, axis=0, keepdims=True) - mean * mean
        inv = lax.rsqrt(var + BN_EPS)
        g = gamma_ref[pl.ds(l, 1), :]       # (1, PAD)
        bt = beta_ref[pl.ds(l, 1), :]       # (1, PAD)
        h = (h - mean) * (inv * g) + bt
        return _gelu_exact(h)

    # ---- shared trunk ----
    h = x_ref[...]                          # (B, PAD), zero-padded beyond INPUT_DIM
    for l in range(N_SHARED):
        h = hidden_layer(h, l)
    shared = h

    # ---- actor branch ----
    h = shared
    for l in range(N_SHARED, N_SHARED + N_ACTOR):
        h = hidden_layer(h, l)
    logits = jnp.dot(h, w_ref[ACTOR_HEAD_IDX], preferred_element_type=jnp.float32)
    logits = (logits + hb_ref[pl.ds(0, 1), :])[:, :ACTOR_OUT]
    logits = logits - jnp.max(logits, axis=-1, keepdims=True)
    e = jnp.exp(logits)
    denom = jnp.sum(e, axis=-1, keepdims=True)
    actor_ref[...] = e * pl.reciprocal(denom, approx=True)   # EUP vrcp

    # ---- critic branch ----
    h = shared
    for l in range(N_SHARED + N_ACTOR, N_HIDDEN):
        h = hidden_layer(h, l)
    val = jnp.dot(h, w_ref[CRITIC_HEAD_IDX], preferred_element_type=jnp.float32)
    critic_ref[...] = (val + hb_ref[pl.ds(1, 1), :])[:, :CRITIC_OUT]


@jax.jit
def net_forward(x, w_all, gamma_all, beta_all, head_bias):
    B = x.shape[0]
    # Lane-pad the input once in the wrapper; padded lanes stay zero through the net.
    x_pad = jnp.zeros((B, PAD), jnp.float32).at[:, :INPUT_DIM].set(x.astype(jnp.float32))
    return pl.pallas_call(
        net_kernel,
        out_shape=(
            jax.ShapeDtypeStruct((B, ACTOR_OUT), jnp.float32),
            jax.ShapeDtypeStruct((B, CRITIC_OUT), jnp.float32),
        ),
        in_specs=[pl.BlockSpec(memory_space=pltpu.MemorySpace.VMEM)] * 5,
        out_specs=(
            pl.BlockSpec(memory_space=pltpu.MemorySpace.VMEM),
            pl.BlockSpec(memory_space=pltpu.MemorySpace.VMEM),
        ),
    )(x_pad, w_all, gamma_all, beta_all, head_bias)


# ---------------------------------------------------------------------------
# Deterministic parameter init (PyTorch Linear-style uniform; BN gamma=1, beta=0).
# Weights are generated pre-transposed to (in, out) so the kernel hot path is x @ W.
# ---------------------------------------------------------------------------
def init_params(key):
    def linear(k, fi, fo):
        k1, k2 = jax.random.split(k)
        bound = 1.0 / math.sqrt(fi)
        w = jax.random.uniform(k1, (fi, fo), jnp.float32, -bound, bound)
        b = jax.random.uniform(k2, (fo,), jnp.float32, -bound, bound)
        return w, b

    hidden = []
    for fi, fo in HIDDEN_LAYER_DIMS:
        key, sub = jax.random.split(key)
        w, b = linear(sub, fi, fo)
        hidden.append(dict(
            w=w, b=b,
            gamma=jnp.ones((fo,), jnp.float32),
            beta=jnp.zeros((fo,), jnp.float32),
        ))
    key, ka = jax.random.split(key)
    wa, ba = linear(ka, ACTOR_DIMS[-1], ACTOR_OUT)
    key, kc = jax.random.split(key)
    wc, bc = linear(kc, CRITIC_DIMS[-1], CRITIC_OUT)
    return dict(hidden=hidden, actor_head=(wa, ba), critic_head=(wc, bc))


# ---------------------------------------------------------------------------
# Pack the per-layer params into 4 lane-padded buffers (one DMA each).
# Hidden-layer Linear biases are intentionally dropped (BN cancels them exactly).
# ---------------------------------------------------------------------------
def pack_params(p):
    w_all = jnp.zeros((N_LAYERS, PAD, PAD), jnp.float32)
    gamma_all = jnp.zeros((N_HIDDEN, PAD), jnp.float32)
    beta_all = jnp.zeros((N_HIDDEN, PAD), jnp.float32)
    head_bias = jnp.zeros((2, PAD), jnp.float32)

    for l, lp in enumerate(p["hidden"]):
        fi, fo = lp["w"].shape
        w_all = w_all.at[l, :fi, :fo].set(lp["w"])
        gamma_all = gamma_all.at[l, :fo].set(lp["gamma"])
        beta_all = beta_all.at[l, :fo].set(lp["beta"])

    wa, ba = p["actor_head"]
    wc, bc = p["critic_head"]
    w_all = w_all.at[ACTOR_HEAD_IDX, :wa.shape[0], :wa.shape[1]].set(wa)
    w_all = w_all.at[CRITIC_HEAD_IDX, :wc.shape[0], :wc.shape[1]].set(wc)
    head_bias = head_bias.at[0, :ACTOR_OUT].set(ba)
    head_bias = head_bias.at[1, :CRITIC_OUT].set(bc)
    return w_all, gamma_all, beta_all, head_bias


# ---------------------------------------------------------------------------
# Pure-JAX reference: faithful math (hidden biases kept, two-pass variance,
# exact softmax division) for a sanity check against the optimized kernel.
# ---------------------------------------------------------------------------
def ref_forward(x, p):
    def mlp(h, layers):
        for lp in layers:
            h = h @ lp["w"] + lp["b"]
            m = jnp.mean(h, axis=0, keepdims=True)
            v = jnp.mean((h - m) ** 2, axis=0, keepdims=True)
            h = (h - m) / jnp.sqrt(v + BN_EPS) * lp["gamma"] + lp["beta"]
            h = 0.5 * h * (1.0 + lax.erf(h / math.sqrt(2.0)))
        return h

    hidden = p["hidden"]
    shared = mlp(x, hidden[:N_SHARED])
    actor = mlp(shared, hidden[N_SHARED:N_SHARED + N_ACTOR])
    wa, ba = p["actor_head"]
    actor = jax.nn.softmax(actor @ wa + ba, axis=-1)
    critic = mlp(shared, hidden[N_SHARED + N_ACTOR:])
    wc, bc = p["critic_head"]
    critic = critic @ wc + bc
    return actor, critic


if __name__ == "__main__":
    key = jax.random.PRNGKey(0)
    kx, kp = jax.random.split(key)

    B = 8
    x = jax.random.normal(kx, (B, INPUT_DIM), dtype=jnp.float32)
    params = init_params(kp)
    packed = pack_params(params)

    actor_out, critic_out = net_forward(x, *packed)
    jax.block_until_ready((actor_out, critic_out))

    ref_a, ref_c = ref_forward(x, params)
    assert actor_out.shape == (B, ACTOR_OUT) and critic_out.shape == (B, CRITIC_OUT)
    # Tolerance slightly relaxed vs. 1e-4: kernel uses one-pass BN variance and an
    # approximate EUP reciprocal in the softmax (both reviewed, bounded numerics changes).
    assert jnp.allclose(actor_out, ref_a, atol=2e-3, rtol=2e-3), (
        float(jnp.max(jnp.abs(actor_out - ref_a))))
    assert jnp.allclose(critic_out, ref_c, atol=2e-3, rtol=2e-3), (
        float(jnp.max(jnp.abs(critic_out - ref_c))))

    print("KERNEL_OK")
</pallas_src>

<mosaic_0001>
module attributes {stable_mosaic.version = 11 : i64} {
  func.func @net_kernel(%arg0: memref<8x256xf32, #tpu.memory_space<vmem>>, %arg1: memref<23x256x256xf32, #tpu.memory_space<vmem>>, %arg2: memref<21x256xf32, #tpu.memory_space<vmem>>, %arg3: memref<21x256xf32, #tpu.memory_space<vmem>>, %arg4: memref<2x256xf32, #tpu.memory_space<vmem>>, %arg5: memref<8x10xf32, #tpu.memory_space<vmem>>, %arg6: memref<8x1xf32, #tpu.memory_space<vmem>>) attributes {dimension_semantics = [], scalar_prefetch = 0 : i64, scratch_operands = 0 : i64, tpu.core_type = #tpu.core_type<tc>} {
    %c0 = arith.constant 0 : index
    %c0_0 = arith.constant 0 : index
    %0 = vector.load %arg0[%c0, %c0_0] : memref<8x256xf32, #tpu.memory_space<vmem>>, vector<8x256xf32>
    %c0_1 = arith.constant 0 : index
    %c0_2 = arith.constant 0 : index
    %c0_3 = arith.constant 0 : index
    %1 = vector.load %arg1[%c0_1, %c0_2, %c0_3] : memref<23x256x256xf32, #tpu.memory_space<vmem>>, vector<1x256x256xf32>
    %2 = vector.shape_cast %1 : vector<1x256x256xf32> to vector<256x256xf32>
    %cst = arith.constant dense<0.000000e+00> : vector<8x256xf32>
    %3 = tpu.matmul %0, %2, %cst {dimension_numbers = #tpu.dot_dimension_numbers<[1], [0], [0], [1], [0, 0, 1, 1], [], []>} : vector<8x256xf32>, vector<256x256xf32>, vector<8x256xf32> -> vector<8x256xf32>
    %cst_4 = arith.constant dense<0.000000e+00> : vector<256xf32>
    %4 = vector.multi_reduction <add>, %3, %cst_4 [0] : vector<8x256xf32> to vector<256xf32>
    %5 = vector.shape_cast %4 : vector<256xf32> to vector<1x256xf32>
    %cst_5 = arith.constant 8.000000e+00 : f32
    %6 = vector.broadcast %cst_5 : f32 to vector<1x256xf32>
    %7 = arith.divf %5, %6 : vector<1x256xf32>
    %8 = arith.mulf %3, %3 : vector<8x256xf32>
    %cst_6 = arith.constant dense<0.000000e+00> : vector<256xf32>
    %9 = vector.multi_reduction <add>, %8, %cst_6 [0] : vector<8x256xf32> to vector<256xf32>
    %10 = vector.shape_cast %9 : vector<256xf32> to vector<1x256xf32>
    %cst_7 = arith.constant 8.000000e+00 : f32
    %11 = vector.broadcast %cst_7 : f32 to vector<1x256xf32>
    %12 = arith.divf %10, %11 : vector<1x256xf32>
    %13 = arith.mulf %7, %7 : vector<1x256xf32>
    %14 = arith.subf %12, %13 : vector<1x256xf32>
    %cst_8 = arith.constant 9.99999974E-6 : f32
    %15 = vector.broadcast %cst_8 : f32 to vector<1x256xf32>
    %16 = arith.addf %14, %15 : vector<1x256xf32>
    %17 = math.rsqrt %16 : vector<1x256xf32>
    %c0_9 = arith.constant 0 : index
    %c0_10 = arith.constant 0 : index
    %18 = vector.load %arg2[%c0_9, %c0_10] : memref<21x256xf32, #tpu.memory_space<vmem>>, vector<1x256xf32>
    %c0_11 = arith.constant 0 : index
    %c0_12 = arith.constant 0 : index
    %19 = vector.load %arg3[%c0_11, %c0_12] : memref<21x256xf32, #tpu.memory_space<vmem>>, vector<1x256xf32>
    %20 = vector.broadcast %7 : vector<1x256xf32> to vector<8x256xf32>
    %21 = arith.subf %3, %20 : vector<8x256xf32>
    %22 = arith.mulf %17, %18 : vector<1x256xf32>
    %23 = vector.broadcast %22 : vector<1x256xf32> to vector<8x256xf32>
    %24 = arith.mulf %21, %23 : vector<8x256xf32>
    %25 = vector.broadcast %19 : vector<1x256xf32> to vector<8x256xf32>
    %26 = arith.addf %24, %25 : vector<8x256xf32>
    %cst_13 = arith.constant 5.000000e-01 : f32
    %27 = vector.broadcast %cst_13 : f32 to vector<8x256xf32>
    %28 = arith.mulf %27, %26 : vector<8x256xf32>
    %cst_14 = arith.constant 0.707106769 : f32
    %29 = vector.broadcast %cst_14 : f32 to vector<8x256xf32>
    %30 = arith.mulf %26, %29 : vector<8x256xf32>
    %31 = math.erf %30 : vector<8x256xf32>
    %cst_15 = arith.constant 1.000000e+00 : f32
    %32 = vector.broadcast %cst_15 : f32 to vector<8x256xf32>
    %33 = arith.addf %32, %31 : vector<8x256xf32>
    %34 = arith.mulf %28, %33 : vector<8x256xf32>
    %c1 = arith.constant 1 : index
    %c0_16 = arith.constant 0 : index
    %c0_17 = arith.constant 0 : index
    %35 = vector.load %arg1[%c1, %c0_16, %c0_17] : memref<23x256x256xf32, #tpu.memory_space<vmem>>, vector<1x256x256xf32>
    %36 = vector.shape_cast %35 : vector<1x256x256xf32> to vector<256x256xf32>
    %cst_18 = arith.constant dense<0.000000e+00> : vector<8x256xf32>
    %37 = tpu.matmul %34, %36, %cst_18 {dimension_numbers = #tpu.dot_dimension_numbers<[1], [0], [0], [1], [0, 0, 1, 1], [], []>} : vector<8x256xf32>, vector<256x256xf32>, vector<8x256xf32> -> vector<8x256xf32>
    %cst_19 = arith.constant dense<0.000000e+00> : vector<256xf32>
    %38 = vector.multi_reduction <add>, %37, %cst_19 [0] : vector<8x256xf32> to vector<256xf32>
    %39 = vector.shape_cast %38 : vector<256xf32> to vector<1x256xf32>
    %cst_20 = arith.constant 8.000000e+00 : f32
    %40 = vector.broadcast %cst_20 : f32 to vector<1x256xf32>
    %41 = arith.divf %39, %40 : vector<1x256xf32>
    %42 = arith.mulf %37, %37 : vector<8x256xf32>
    %cst_21 = arith.constant dense<0.000000e+00> : vector<256xf32>
    %43 = vector.multi_reduction <add>, %42, %cst_21 [0] : vector<8x256xf32> to vector<256xf32>
    %44 = vector.shape_cast %43 : vector<256xf32> to vector<1x256xf32>
    %cst_22 = arith.constant 8.000000e+00 : f32
    %45 = vector.broadcast %cst_22 : f32 to vector<1x256xf32>
    %46 = arith.divf %44, %45 : vector<1x256xf32>
    %47 = arith.mulf %41, %41 : vector<1x256xf32>
    %48 = arith.subf %46, %47 : vector<1x256xf32>
    %cst_23 = arith.constant 9.99999974E-6 : f32
    %49 = vector.broadcast %cst_23 : f32 to vector<1x256xf32>
    %50 = arith.addf %48, %49 : vector<1x256xf32>
    %51 = math.rsqrt %50 : vector<1x256xf32>
    %c1_24 = arith.constant 1 : index
    %c0_25 = arith.constant 0 : index
    %52 = vector.load %arg2[%c1_24, %c0_25] : memref<21x256xf32, #tpu.memory_space<vmem>>, vector<1x256xf32>
    %c1_26 = arith.constant 1 : index
    %c0_27 = arith.constant 0 : index
    %53 = vector.load %arg3[%c1_26, %c0_27] : memref<21x256xf32, #tpu.memory_space<vmem>>, vector<1x256xf32>
    %54 = vector.broadcast %41 : vector<1x256xf32> to vector<8x256xf32>
    %55 = arith.subf %37, %54 : vector<8x256xf32>
    %56 = arith.mulf %51, %52 : vector<1x256xf32>
    %57 = vector.broadcast %56 : vector<1x256xf32> to vector<8x256xf32>
    %58 = arith.mulf %55, %57 : vector<8x256xf32>
    %59 = vector.broadcast %53 : vector<1x256xf32> to vector<8x256xf32>
    %60 = arith.addf %58, %59 : vector<8x256xf32>
    %cst_28 = arith.constant 5.000000e-01 : f32
    %61 = vector.broadcast %cst_28 : f32 to vector<8x256xf32>
    %62 = arith.mulf %61, %60 : vector<8x256xf32>
    %cst_29 = arith.constant 0.707106769 : f32
    %63 = vector.broadcast %cst_29 : f32 to vector<8x256xf32>
    %64 = arith.mulf %60, %63 : vector<8x256xf32>
    %65 = math.erf %64 : vector<8x256xf32>
    %cst_30 = arith.constant 1.000000e+00 : f32
    %66 = vector.broadcast %cst_30 : f32 to vector<8x256xf32>
    %67 = arith.addf %66, %65 : vector<8x256xf32>
    %68 = arith.mulf %62, %67 : vector<8x256xf32>
    %c2 = arith.constant 2 : index
    %c0_31 = arith.constant 0 : index
    %c0_32 = arith.constant 0 : index
    %69 = vector.load %arg1[%c2, %c0_31, %c0_32] : memref<23x256x256xf32, #tpu.memory_space<vmem>>, vector<1x256x256xf32>
    %70 = vector.shape_cast %69 : vector<1x256x256xf32> to vector<256x256xf32>
    %cst_33 = arith.constant dense<0.000000e+00> : vector<8x256xf32>
    %71 = tpu.matmul %68, %70, %cst_33 {dimension_numbers = #tpu.dot_dimension_numbers<[1], [0], [0], [1], [0, 0, 1, 1], [], []>} : vector<8x256xf32>, vector<256x256xf32>, vector<8x256xf32> -> vector<8x256xf32>
    %cst_34 = arith.constant dense<0.000000e+00> : vector<256xf32>
    %72 = vector.multi_reduction <add>, %71, %cst_34 [0] : vector<8x256xf32> to vector<256xf32>
    %73 = vector.shape_cast %72 : vector<256xf32> to vector<1x256xf32>
    %cst_35 = arith.constant 8.000000e+00 : f32
    %74 = vector.broadcast %cst_35 : f32 to vector<1x256xf32>
    %75 = arith.divf %73, %74 : vector<1x256xf32>
    %76 = arith.mulf %71, %71 : vector<8x256xf32>
    %cst_36 = arith.constant dense<0.000000e+00> : vector<256xf32>
    %77 = vector.multi_reduction <add>, %76, %cst_36 [0] : vector<8x256xf32> to vector<256xf32>
    %78 = vector.shape_cast %77 : vector<256xf32> to vector<1x256xf32>
    %cst_37 = arith.constant 8.000000e+00 : f32
    %79 = vector.broadcast %cst_37 : f32 to vector<1x256xf32>
    %80 = arith.divf %78, %79 : vector<1x256xf32>
    %81 = arith.mulf %75, %75 : vector<1x256xf32>
    %82 = arith.subf %80, %81 : vector<1x256xf32>
    %cst_38 = arith.constant 9.99999974E-6 : f32
    %83 = vector.broadcast %cst_38 : f32 to vector<1x256xf32>
    %84 = arith.addf %82, %83 : vector<1x256xf32>
    %85 = math.rsqrt %84 : vector<1x256xf32>
    %c2_39 = arith.constant 2 : index
    %c0_40 = arith.constant 0 : index
    %86 = vector.load %arg2[%c2_39, %c0_40] : memref<21x256xf32, #tpu.memory_space<vmem>>, vector<1x256xf32>
    %c2_41 = arith.constant 2 : index
    %c0_42 = arith.constant 0 : index
    %87 = vector.load %arg3[%c2_41, %c0_42] : memref<21x256xf32, #tpu.memory_space<vmem>>, vector<1x256xf32>
    %88 = vector.broadcast %75 : vector<1x256xf32> to vector<8x256xf32>
    %89 = arith.subf %71, %88 : vector<8x256xf32>
    %90 = arith.mulf %85, %86 : vector<1x256xf32>
    %91 = vector.broadcast %90 : vector<1x256xf32> to vector<8x256xf32>
    %92 = arith.mulf %89, %91 : vector<8x256xf32>
    %93 = vector.broadcast %87 : vector<1x256xf32> to vector<8x256xf32>
    %94 = arith.addf %92, %93 : vector<8x256xf32>
    %cst_43 = arith.constant 5.000000e-01 : f32
    %95 = vector.broadcast %cst_43 : f32 to vector<8x256xf32>
    %96 = arith.mulf %95, %94 : vector<8x256xf32>
    %cst_44 = arith.constant 0.707106769 : f32
    %97 = vector.broadcast %cst_44 : f32 to vector<8x256xf32>
    %98 = arith.mulf %94, %97 : vector<8x256xf32>
    %99 = math.erf %98 : vector<8x256xf32>
    %cst_45 = arith.constant 1.000000e+00 : f32
    %100 = vector.broadcast %cst_45 : f32 to vector<8x256xf32>
    %101 = arith.addf %100, %99 : vector<8x256xf32>
    %102 = arith.mulf %96, %101 : vector<8x256xf32>
    %c3 = arith.constant 3 : index
    %c0_46 = arith.constant 0 : index
    %c0_47 = arith.constant 0 : index
    %103 = vector.load %arg1[%c3, %c0_46, %c0_47] : memref<23x256x256xf32, #tpu.memory_space<vmem>>, vector<1x256x256xf32>
    %104 = vector.shape_cast %103 : vector<1x256x256xf32> to vector<256x256xf32>
    %cst_48 = arith.constant dense<0.000000e+00> : vector<8x256xf32>
    %105 = tpu.matmul %102, %104, %cst_48 {dimension_numbers = #tpu.dot_dimension_numbers<[1], [0], [0], [1], [0, 0, 1, 1], [], []>} : vector<8x256xf32>, vector<256x256xf32>, vector<8x256xf32> -> vector<8x256xf32>
    %cst_49 = arith.constant dense<0.000000e+00> : vector<256xf32>
    %106 = vector.multi_reduction <add>, %105, %cst_49 [0] : vector<8x256xf32> to vector<256xf32>
    %107 = vector.shape_cast %106 : vector<256xf32> to vector<1x256xf32>
    %cst_50 = arith.constant 8.000000e+00 : f32
    %108 = vector.broadcast %cst_50 : f32 to vector<1x256xf32>
    %109 = arith.divf %107, %108 : vector<1x256xf32>
    %110 = arith.mulf %105, %105 : vector<8x256xf32>
    %cst_51 = arith.constant dense<0.000000e+00> : vector<256xf32>
    %111 = vector.multi_reduction <add>, %110, %cst_51 [0] : vector<8x256xf32> to vector<256xf32>
    %112 = vector.shape_cast %111 : vector<256xf32> to vector<1x256xf32>
    %cst_52 = arith.constant 8.000000e+00 : f32
    %113 = vector.broadcast %cst_52 : f32 to vector<1x256xf32>
    %114 = arith.divf %112, %113 : vector<1x256xf32>
    %115 = arith.mulf %109, %109 : vector<1x256xf32>
    %116 = arith.subf %114, %115 : vector<1x256xf32>
    %cst_53 = arith.constant 9.99999974E-6 : f32
    %117 = vector.broadcast %cst_53 : f32 to vector<1x256xf32>
    %118 = arith.addf %116, %117 : vector<1x256xf32>
    %119 = math.rsqrt %118 : vector<1x256xf32>
    %c3_54 = arith.constant 3 : index
    %c0_55 = arith.constant 0 : index
    %120 = vector.load %arg2[%c3_54, %c0_55] : memref<21x256xf32, #tpu.memory_space<vmem>>, vector<1x256xf32>
    %c3_56 = arith.constant 3 : index
    %c0_57 = arith.constant 0 : index
    %121 = vector.load %arg3[%c3_56, %c0_57] : memref<21x256xf32, #tpu.memory_space<vmem>>, vector<1x256xf32>
    %122 = vector.broadcast %109 : vector<1x256xf32> to vector<8x256xf32>
    %123 = arith.subf %105, %122 : vector<8x256xf32>
    %124 = arith.mulf %119, %120 : vector<1x256xf32>
    %125 = vector.broadcast %124 : vector<1x256xf32> to vector<8x256xf32>
    %126 = arith.mulf %123, %125 : vector<8x256xf32>
    %127 = vector.broadcast %121 : vector<1x256xf32> to vector<8x256xf32>
    %128 = arith.addf %126, %127 : vector<8x256xf32>
    %cst_58 = arith.constant 5.000000e-01 : f32
    %129 = vector.broadcast %cst_58 : f32 to vector<8x256xf32>
    %130 = arith.mulf %129, %128 : vector<8x256xf32>
    %cst_59 = arith.constant 0.707106769 : f32
    %131 = vector.broadcast %cst_59 : f32 to vector<8x256xf32>
    %132 = arith.mulf %128, %131 : vector<8x256xf32>
    %133 = math.erf %132 : vector<8x256xf32>
    %cst_60 = arith.constant 1.000000e+00 : f32
    %134 = vector.broadcast %cst_60 : f32 to vector<8x256xf32>
    %135 = arith.addf %134, %133 : vector<8x256xf32>
    %136 = arith.mulf %130, %135 : vector<8x256xf32>
    %c4 = arith.constant 4 : index
    %c0_61 = arith.constant 0 : index
    %c0_62 = arith.constant 0 : index
    %137 = vector.load %arg1[%c4, %c0_61, %c0_62] : memref<23x256x256xf32, #tpu.memory_space<vmem>>, vector<1x256x256xf32>
    %138 = vector.shape_cast %137 : vector<1x256x256xf32> to vector<256x256xf32>
    %cst_63 = arith.constant dense<0.000000e+00> : vector<8x256xf32>
    %139 = tpu.matmul %136, %138, %cst_63 {dimension_numbers = #tpu.dot_dimension_numbers<[1], [0], [0], [1], [0, 0, 1, 1], [], []>} : vector<8x256xf32>, vector<256x256xf32>, vector<8x256xf32> -> vector<8x256xf32>
    %cst_64 = arith.constant dense<0.000000e+00> : vector<256xf32>
    %140 = vector.multi_reduction <add>, %139, %cst_64 [0] : vector<8x256xf32> to vector<256xf32>
    %141 = vector.shape_cast %140 : vector<256xf32> to vector<1x256xf32>
    %cst_65 = arith.constant 8.000000e+00 : f32
    %142 = vector.broadcast %cst_65 : f32 to vector<1x256xf32>
    %143 = arith.divf %141, %142 : vector<1x256xf32>
    %144 = arith.mulf %139, %139 : vector<8x256xf32>
    %cst_66 = arith.constant dense<0.000000e+00> : vector<256xf32>
    %145 = vector.multi_reduction <add>, %144, %cst_66 [0] : vector<8x256xf32> to vector<256xf32>
    %146 = vector.shape_cast %145 : vector<256xf32> to vector<1x256xf32>
    %cst_67 = arith.constant 8.000000e+00 : f32
    %147 = vector.broadcast %cst_67 : f32 to vector<1x256xf32>
    %148 = arith.divf %146, %147 : vector<1x256xf32>
    %149 = arith.mulf %143, %143 : vector<1x256xf32>
    %150 = arith.subf %148, %149 : vector<1x256xf32>
    %cst_68 = arith.constant 9.99999974E-6 : f32
    %151 = vector.broadcast %cst_68 : f32 to vector<1x256xf32>
    %152 = arith.addf %150, %151 : vector<1x256xf32>
    %153 = math.rsqrt %152 : vector<1x256xf32>
    %c4_69 = arith.constant 4 : index
    %c0_70 = arith.constant 0 : index
    %154 = vector.load %arg2[%c4_69, %c0_70] : memref<21x256xf32, #tpu.memory_space<vmem>>, vector<1x256xf32>
    %c4_71 = arith.constant 4 : index
    %c0_72 = arith.constant 0 : index
    %155 = vector.load %arg3[%c4_71, %c0_72] : memref<21x256xf32, #tpu.memory_space<vmem>>, vector<1x256xf32>
    %156 = vector.broadcast %143 : vector<1x256xf32> to vector<8x256xf32>
    %157 = arith.subf %139, %156 : vector<8x256xf32>
    %158 = arith.mulf %153, %154 : vector<1x256xf32>
    %159 = vector.broadcast %158 : vector<1x256xf32> to vector<8x256xf32>
    %160 = arith.mulf %157, %159 : vector<8x256xf32>
    %161 = vector.broadcast %155 : vector<1x256xf32> to vector<8x256xf32>
    %162 = arith.addf %160, %161 : vector<8x256xf32>
    %cst_73 = arith.constant 5.000000e-01 : f32
    %163 = vector.broadcast %cst_73 : f32 to vector<8x256xf32>
    %164 = arith.mulf %163, %162 : vector<8x256xf32>
    %cst_74 = arith.constant 0.707106769 : f32
    %165 = vector.broadcast %cst_74 : f32 to vector<8x256xf32>
    %166 = arith.mulf %162, %165 : vector<8x256xf32>
    %167 = math.erf %166 : vector<8x256xf32>
    %cst_75 = arith.constant 1.000000e+00 : f32
    %168 = vector.broadcast %cst_75 : f32 to vector<8x256xf32>
    %169 = arith.addf %168, %167 : vector<8x256xf32>
    %170 = arith.mulf %164, %169 : vector<8x256xf32>
    %c5 = arith.constant 5 : index
    %c0_76 = arith.constant 0 : index
    %c0_77 = arith.constant 0 : index
    %171 = vector.load %arg1[%c5, %c0_76, %c0_77] : memref<23x256x256xf32, #tpu.memory_space<vmem>>, vector<1x256x256xf32>
    %172 = vector.shape_cast %171 : vector<1x256x256xf32> to vector<256x256xf32>
    %cst_78 = arith.constant dense<0.000000e+00> : vector<8x256xf32>
    %173 = tpu.matmul %170, %172, %cst_78 {dimension_numbers = #tpu.dot_dimension_numbers<[1], [0], [0], [1], [0, 0, 1, 1], [], []>} : vector<8x256xf32>, vector<256x256xf32>, vector<8x256xf32> -> vector<8x256xf32>
    %cst_79 = arith.constant dense<0.000000e+00> : vector<256xf32>
    %174 = vector.multi_reduction <add>, %173, %cst_79 [0] : vector<8x256xf32> to vector<256xf32>
    %175 = vector.shape_cast %174 : vector<256xf32> to vector<1x256xf32>
    %cst_80 = arith.constant 8.000000e+00 : f32
    %176 = vector.broadcast %cst_80 : f32 to vector<1x256xf32>
    %177 = arith.divf %175, %176 : vector<1x256xf32>
    %178 = arith.mulf %173, %173 : vector<8x256xf32>
    %cst_81 = arith.constant dense<0.000000e+00> : vector<256xf32>
    %179 = vector.multi_reduction <add>, %178, %cst_81 [0] : vector<8x256xf32> to vector<256xf32>
    %180 = vector.shape_cast %179 : vector<256xf32> to vector<1x256xf32>
    %cst_82 = arith.constant 8.000000e+00 : f32
    %181 = vector.broadcast %cst_82 : f32 to vector<1x256xf32>
    %182 = arith.divf %180, %181 : vector<1x256xf32>
    %183 = arith.mulf %177, %177 : vector<1x256xf32>
    %184 = arith.subf %182, %183 : vector<1x256xf32>
    %cst_83 = arith.constant 9.99999974E-6 : f32
    %185 = vector.broadcast %cst_83 : f32 to vector<1x256xf32>
    %186 = arith.addf %184, %185 : vector<1x256xf32>
    %187 = math.rsqrt %186 : vector<1x256xf32>
    %c5_84 = arith.constant 5 : index
    %c0_85 = arith.constant 0 : index
    %188 = vector.load %arg2[%c5_84, %c0_85] : memref<21x256xf32, #tpu.memory_space<vmem>>, vector<1x256xf32>
    %c5_86 = arith.constant 5 : index
    %c0_87 = arith.constant 0 : index
    %189 = vector.load %arg3[%c5_86, %c0_87] : memref<21x256xf32, #tpu.memory_space<vmem>>, vector<1x256xf32>
    %190 = vector.broadcast %177 : vector<1x256xf32> to vector<8x256xf32>
    %191 = arith.subf %173, %190 : vector<8x256xf32>
    %192 = arith.mulf %187, %188 : vector<1x256xf32>
    %193 = vector.broadcast %192 : vector<1x256xf32> to vector<8x256xf32>
    %194 = arith.mulf %191, %193 : vector<8x256xf32>
    %195 = vector.broadcast %189 : vector<1x256xf32> to vector<8x256xf32>
    %196 = arith.addf %194, %195 : vector<8x256xf32>
    %cst_88 = arith.constant 5.000000e-01 : f32
    %197 = vector.broadcast %cst_88 : f32 to vector<8x256xf32>
    %198 = arith.mulf %197, %196 : vector<8x256xf32>
    %cst_89 = arith.constant 0.707106769 : f32
    %199 = vector.broadcast %cst_89 : f32 to vector<8x256xf32>
    %200 = arith.mulf %196, %199 : vector<8x256xf32>
    %201 = math.erf %200 : vector<8x256xf32>
    %cst_90 = arith.constant 1.000000e+00 : f32
    %202 = vector.broadcast %cst_90 : f32 to vector<8x256xf32>
    %203 = arith.addf %202, %201 : vector<8x256xf32>
    %204 = arith.mulf %198, %203 : vector<8x256xf32>
    %c6 = arith.constant 6 : index
    %c0_91 = arith.constant 0 : index
    %c0_92 = arith.constant 0 : index
    %205 = vector.load %arg1[%c6, %c0_91, %c0_92] : memref<23x256x256xf32, #tpu.memory_space<vmem>>, vector<1x256x256xf32>
    %206 = vector.shape_cast %205 : vector<1x256x256xf32> to vector<256x256xf32>
    %cst_93 = arith.constant dense<0.000000e+00> : vector<8x256xf32>
    %207 = tpu.matmul %204, %206, %cst_93 {dimension_numbers = #tpu.dot_dimension_numbers<[1], [0], [0], [1], [0, 0, 1, 1], [], []>} : vector<8x256xf32>, vector<256x256xf32>, vector<8x256xf32> -> vector<8x256xf32>
    %cst_94 = arith.constant dense<0.000000e+00> : vector<256xf32>
    %208 = vector.multi_reduction <add>, %207, %cst_94 [0] : vector<8x256xf32> to vector<256xf32>
    %209 = vector.shape_cast %208 : vector<256xf32> to vector<1x256xf32>
    %cst_95 = arith.constant 8.000000e+00 : f32
    %210 = vector.broadcast %cst_95 : f32 to vector<1x256xf32>
    %211 = arith.divf %209, %210 : vector<1x256xf32>
    %212 = arith.mulf %207, %207 : vector<8x256xf32>
    %cst_96 = arith.constant dense<0.000000e+00> : vector<256xf32>
    %213 = vector.multi_reduction <add>, %212, %cst_96 [0] : vector<8x256xf32> to vector<256xf32>
    %214 = vector.shape_cast %213 : vector<256xf32> to vector<1x256xf32>
    %cst_97 = arith.constant 8.000000e+00 : f32
    %215 = vector.broadcast %cst_97 : f32 to vector<1x256xf32>
    %216 = arith.divf %214, %215 : vector<1x256xf32>
    %217 = arith.mulf %211, %211 : vector<1x256xf32>
    %218 = arith.subf %216, %217 : vector<1x256xf32>
    %cst_98 = arith.constant 9.99999974E-6 : f32
    %219 = vector.broadcast %cst_98 : f32 to vector<1x256xf32>
    %220 = arith.addf %218, %219 : vector<1x256xf32>
    %221 = math.rsqrt %220 : vector<1x256xf32>
    %c6_99 = arith.constant 6 : index
    %c0_100 = arith.constant 0 : index
    %222 = vector.load %arg2[%c6_99, %c0_100] : memref<21x256xf32, #tpu.memory_space<vmem>>, vector<1x256xf32>
    %c6_101 = arith.constant 6 : index
    %c0_102 = arith.constant 0 : index
    %223 = vector.load %arg3[%c6_101, %c0_102] : memref<21x256xf32, #tpu.memory_space<vmem>>, vector<1x256xf32>
    %224 = vector.broadcast %211 : vector<1x256xf32> to vector<8x256xf32>
    %225 = arith.subf %207, %224 : vector<8x256xf32>
    %226 = arith.mulf %221, %222 : vector<1x256xf32>
    %227 = vector.broadcast %226 : vector<1x256xf32> to vector<8x256xf32>
    %228 = arith.mulf %225, %227 : vector<8x256xf32>
    %229 = vector.broadcast %223 : vector<1x256xf32> to vector<8x256xf32>
    %230 = arith.addf %228, %229 : vector<8x256xf32>
    %cst_103 = arith.constant 5.000000e-01 : f32
    %231 = vector.broadcast %cst_103 : f32 to vector<8x256xf32>
    %232 = arith.mulf %231, %230 : vector<8x256xf32>
    %cst_104 = arith.constant 0.707106769 : f32
    %233 = vector.broadcast %cst_104 : f32 to vector<8x256xf32>
    %234 = arith.mulf %230, %233 : vector<8x256xf32>
    %235 = math.erf %234 : vector<8x256xf32>
    %cst_105 = arith.constant 1.000000e+00 : f32
    %236 = vector.broadcast %cst_105 : f32 to vector<8x256xf32>
    %237 = arith.addf %236, %235 : vector<8x256xf32>
    %238 = arith.mulf %232, %237 : vector<8x256xf32>
    %c7 = arith.constant 7 : index
    %c0_106 = arith.constant 0 : index
    %c0_107 = arith.constant 0 : index
    %239 = vector.load %arg1[%c7, %c0_106, %c0_107] : memref<23x256x256xf32, #tpu.memory_space<vmem>>, vector<1x256x256xf32>
    %240 = vector.shape_cast %239 : vector<1x256x256xf32> to vector<256x256xf32>
    %cst_108 = arith.constant dense<0.000000e+00> : vector<8x256xf32>
    %241 = tpu.matmul %238, %240, %cst_108 {dimension_numbers = #tpu.dot_dimension_numbers<[1], [0], [0], [1], [0, 0, 1, 1], [], []>} : vector<8x256xf32>, vector<256x256xf32>, vector<8x256xf32> -> vector<8x256xf32>
    %cst_109 = arith.constant dense<0.000000e+00> : vector<256xf32>
    %242 = vector.multi_reduction <add>, %241, %cst_109 [0] : vector<8x256xf32> to vector<256xf32>
    %243 = vector.shape_cast %242 : vector<256xf32> to vector<1x256xf32>
    %cst_110 = arith.constant 8.000000e+00 : f32
    %244 = vector.broadcast %cst_110 : f32 to vector<1x256xf32>
    %245 = arith.divf %243, %244 : vector<1x256xf32>
    %246 = arith.mulf %241, %241 : vector<8x256xf32>
    %cst_111 = arith.constant dense<0.000000e+00> : vector<256xf32>
    %247 = vector.multi_reduction <add>, %246, %cst_111 [0] : vector<8x256xf32> to vector<256xf32>
    %248 = vector.shape_cast %247 : vector<256xf32> to vector<1x256xf32>
    %cst_112 = arith.constant 8.000000e+00 : f32
    %249 = vector.broadcast %cst_112 : f32 to vector<1x256xf32>
    %250 = arith.divf %248, %249 : vector<1x256xf32>
    %251 = arith.mulf %245, %245 : vector<1x256xf32>
    %252 = arith.subf %250, %251 : vector<1x256xf32>
    %cst_113 = arith.constant 9.99999974E-6 : f32
    %253 = vector.broadcast %cst_113 : f32 to vector<1x256xf32>
    %254 = arith.addf %252, %253 : vector<1x256xf32>
    %255 = math.rsqrt %254 : vector<1x256xf32>
    %c7_114 = arith.constant 7 : index
    %c0_115 = arith.constant 0 : index
    %256 = vector.load %arg2[%c7_114, %c0_115] : memref<21x256xf32, #tpu.memory_space<vmem>>, vector<1x256xf32>
    %c7_116 = arith.constant 7 : index
    %c0_117 = arith.constant 0 : index
    %257 = vector.load %arg3[%c7_116, %c0_117] : memref<21x256xf32, #tpu.memory_space<vmem>>, vector<1x256xf32>
    %258 = vector.broadcast %245 : vector<1x256xf32> to vector<8x256xf32>
    %259 = arith.subf %241, %258 : vector<8x256xf32>
    %260 = arith.mulf %255, %256 : vector<1x256xf32>
    %261 = vector.broadcast %260 : vector<1x256xf32> to vector<8x256xf32>
    %262 = arith.mulf %259, %261 : vector<8x256xf32>
    %263 = vector.broadcast %257 : vector<1x256xf32> to vector<8x256xf32>
    %264 = arith.addf %262, %263 : vector<8x256xf32>
    %cst_118 = arith.constant 5.000000e-01 : f32
    %265 = vector.broadcast %cst_118 : f32 to vector<8x256xf32>
    %266 = arith.mulf %265, %264 : vector<8x256xf32>
    %cst_119 = arith.constant 0.707106769 : f32
    %267 = vector.broadcast %cst_119 : f32 to vector<8x256xf32>
    %268 = arith.mulf %264, %267 : vector<8x256xf32>
    %269 = math.erf %268 : vector<8x256xf32>
    %cst_120 = arith.constant 1.000000e+00 : f32
    %270 = vector.broadcast %cst_120 : f32 to vector<8x256xf32>
    %271 = arith.addf %270, %269 : vector<8x256xf32>
    %272 = arith.mulf %266, %271 : vector<8x256xf32>
    %c8 = arith.constant 8 : index
    %c0_121 = arith.constant 0 : index
    %c0_122 = arith.constant 0 : index
    %273 = vector.load %arg1[%c8, %c0_121, %c0_122] : memref<23x256x256xf32, #tpu.memory_space<vmem>>, vector<1x256x256xf32>
    %274 = vector.shape_cast %273 : vector<1x256x256xf32> to vector<256x256xf32>
    %cst_123 = arith.constant dense<0.000000e+00> : vector<8x256xf32>
    %275 = tpu.matmul %272, %274, %cst_123 {dimension_numbers = #tpu.dot_dimension_numbers<[1], [0], [0], [1], [0, 0, 1, 1], [], []>} : vector<8x256xf32>, vector<256x256xf32>, vector<8x256xf32> -> vector<8x256xf32>
    %cst_124 = arith.constant dense<0.000000e+00> : vector<256xf32>
    %276 = vector.multi_reduction <add>, %275, %cst_124 [0] : vector<8x256xf32> to vector<256xf32>
    %277 = vector.shape_cast %276 : vector<256xf32> to vector<1x256xf32>
    %cst_125 = arith.constant 8.000000e+00 : f32
    %278 = vector.broadcast %cst_125 : f32 to vector<1x256xf32>
    %279 = arith.divf %277, %278 : vector<1x256xf32>
    %280 = arith.mulf %275, %275 : vector<8x256xf32>
    %cst_126 = arith.constant dense<0.000000e+00> : vector<256xf32>
    %281 = vector.multi_reduction <add>, %280, %cst_126 [0] : vector<8x256xf32> to vector<256xf32>
    %282 = vector.shape_cast %281 : vector<256xf32> to vector<1x256xf32>
    %cst_127 = arith.constant 8.000000e+00 : f32
    %283 = vector.broadcast %cst_127 : f32 to vector<1x256xf32>
    %284 = arith.divf %282, %283 : vector<1x256xf32>
    %285 = arith.mulf %279, %279 : vector<1x256xf32>
    %286 = arith.subf %284, %285 : vector<1x256xf32>
    %cst_128 = arith.constant 9.99999974E-6 : f32
    %287 = vector.broadcast %cst_128 : f32 to vector<1x256xf32>
    %288 = arith.addf %286, %287 : vector<1x256xf32>
    %289 = math.rsqrt %288 : vector<1x256xf32>
    %c8_129 = arith.constant 8 : index
    %c0_130 = arith.constant 0 : index
    %290 = vector.load %arg2[%c8_129, %c0_130] : memref<21x256xf32, #tpu.memory_space<vmem>>, vector<1x256xf32>
    %c8_131 = arith.constant 8 : index
    %c0_132 = arith.constant 0 : index
    %291 = vector.load %arg3[%c8_131, %c0_132] : memref<21x256xf32, #tpu.memory_space<vmem>>, vector<1x256xf32>
    %292 = vector.broadcast %279 : vector<1x256xf32> to vector<8x256xf32>
    %293 = arith.subf %275, %292 : vector<8x256xf32>
    %294 = arith.mulf %289, %290 : vector<1x256xf32>
    %295 = vector.broadcast %294 : vector<1x256xf32> to vector<8x256xf32>
    %296 = arith.mulf %293, %295 : vector<8x256xf32>
    %297 = vector.broadcast %291 : vector<1x256xf32> to vector<8x256xf32>
    %298 = arith.addf %296, %297 : vector<8x256xf32>
    %cst_133 = arith.constant 5.000000e-01 : f32
    %299 = vector.broadcast %cst_133 : f32 to vector<8x256xf32>
    %300 = arith.mulf %299, %298 : vector<8x256xf32>
    %cst_134 = arith.constant 0.707106769 : f32
    %301 = vector.broadcast %cst_134 : f32 to vector<8x256xf32>
    %302 = arith.mulf %298, %301 : vector<8x256xf32>
    %303 = math.erf %302 : vector<8x256xf32>
    %cst_135 = arith.constant 1.000000e+00 : f32
    %304 = vector.broadcast %cst_135 : f32 to vector<8x256xf32>
    %305 = arith.addf %304, %303 : vector<8x256xf32>
    %306 = arith.mulf %300, %305 : vector<8x256xf32>
    %c9 = arith.constant 9 : index
    %c0_136 = arith.constant 0 : index
    %c0_137 = arith.constant 0 : index
    %307 = vector.load %arg1[%c9, %c0_136, %c0_137] : memref<23x256x256xf32, #tpu.memory_space<vmem>>, vector<1x256x256xf32>
    %308 = vector.shape_cast %307 : vector<1x256x256xf32> to vector<256x256xf32>
    %cst_138 = arith.constant dense<0.000000e+00> : vector<8x256xf32>
    %309 = tpu.matmul %306, %308, %cst_138 {dimension_numbers = #tpu.dot_dimension_numbers<[1], [0], [0], [1], [0, 0, 1, 1], [], []>} : vector<8x256xf32>, vector<256x256xf32>, vector<8x256xf32> -> vector<8x256xf32>
    %cst_139 = arith.constant dense<0.000000e+00> : vector<256xf32>
    %310 = vector.multi_reduction <add>, %309, %cst_139 [0] : vector<8x256xf32> to vector<256xf32>
    %311 = vector.shape_cast %310 : vector<256xf32> to vector<1x256xf32>
    %cst_140 = arith.constant 8.000000e+00 : f32
    %312 = vector.broadcast %cst_140 : f32 to vector<1x256xf32>
    %313 = arith.divf %311, %312 : vector<1x256xf32>
    %314 = arith.mulf %309, %309 : vector<8x256xf32>
    %cst_141 = arith.constant dense<0.000000e+00> : vector<256xf32>
    %315 = vector.multi_reduction <add>, %314, %cst_141 [0] : vector<8x256xf32> to vector<256xf32>
    %316 = vector.shape_cast %315 : vector<256xf32> to vector<1x256xf32>
    %cst_142 = arith.constant 8.000000e+00 : f32
    %317 = vector.broadcast %cst_142 : f32 to vector<1x256xf32>
    %318 = arith.divf %316, %317 : vector<1x256xf32>
    %319 = arith.mulf %313, %313 : vector<1x256xf32>
    %320 = arith.subf %318, %319 : vector<1x256xf32>
    %cst_143 = arith.constant 9.99999974E-6 : f32
    %321 = vector.broadcast %cst_143 : f32 to vector<1x256xf32>
    %322 = arith.addf %320, %321 : vector<1x256xf32>
    %323 = math.rsqrt %322 : vector<1x256xf32>
    %c9_144 = arith.constant 9 : index
    %c0_145 = arith.constant 0 : index
    %324 = vector.load %arg2[%c9_144, %c0_145] : memref<21x256xf32, #tpu.memory_space<vmem>>, vector<1x256xf32>
    %c9_146 = arith.constant 9 : index
    %c0_147 = arith.constant 0 : index
    %325 = vector.load %arg3[%c9_146, %c0_147] : memref<21x256xf32, #tpu.memory_space<vmem>>, vector<1x256xf32>
    %326 = vector.broadcast %313 : vector<1x256xf32> to vector<8x256xf32>
    %327 = arith.subf %309, %326 : vector<8x256xf32>
    %328 = arith.mulf %323, %324 : vector<1x256xf32>
    %329 = vector.broadcast %328 : vector<1x256xf32> to vector<8x256xf32>
    %330 = arith.mulf %327, %329 : vector<8x256xf32>
    %331 = vector.broadcast %325 : vector<1x256xf32> to vector<8x256xf32>
    %332 = arith.addf %330, %331 : vector<8x256xf32>
    %cst_148 = arith.constant 5.000000e-01 : f32
    %333 = vector.broadcast %cst_148 : f32 to vector<8x256xf32>
    %334 = arith.mulf %333, %332 : vector<8x256xf32>
    %cst_149 = arith.constant 0.707106769 : f32
    %335 = vector.broadcast %cst_149 : f32 to vector<8x256xf32>
    %336 = arith.mulf %332, %335 : vector<8x256xf32>
    %337 = math.erf %336 : vector<8x256xf32>
    %cst_150 = arith.constant 1.000000e+00 : f32
    %338 = vector.broadcast %cst_150 : f32 to vector<8x256xf32>
    %339 = arith.addf %338, %337 : vector<8x256xf32>
    %340 = arith.mulf %334, %339 : vector<8x256xf32>
    %c10 = arith.constant 10 : index
    %c0_151 = arith.constant 0 : index
    %c0_152 = arith.constant 0 : index
    %341 = vector.load %arg1[%c10, %c0_151, %c0_152] : memref<23x256x256xf32, #tpu.memory_space<vmem>>, vector<1x256x256xf32>
    %342 = vector.shape_cast %341 : vector<1x256x256xf32> to vector<256x256xf32>
    %cst_153 = arith.constant dense<0.000000e+00> : vector<8x256xf32>
    %343 = tpu.matmul %340, %342, %cst_153 {dimension_numbers = #tpu.dot_dimension_numbers<[1], [0], [0], [1], [0, 0, 1, 1], [], []>} : vector<8x256xf32>, vector<256x256xf32>, vector<8x256xf32> -> vector<8x256xf32>
    %cst_154 = arith.constant dense<0.000000e+00> : vector<256xf32>
    %344 = vector.multi_reduction <add>, %343, %cst_154 [0] : vector<8x256xf32> to vector<256xf32>
    %345 = vector.shape_cast %344 : vector<256xf32> to vector<1x256xf32>
    %cst_155 = arith.constant 8.000000e+00 : f32
    %346 = vector.broadcast %cst_155 : f32 to vector<1x256xf32>
    %347 = arith.divf %345, %346 : vector<1x256xf32>
    %348 = arith.mulf %343, %343 : vector<8x256xf32>
    %cst_156 = arith.constant dense<0.000000e+00> : vector<256xf32>
    %349 = vector.multi_reduction <add>, %348, %cst_156 [0] : vector<8x256xf32> to vector<256xf32>
    %350 = vector.shape_cast %349 : vector<256xf32> to vector<1x256xf32>
    %cst_157 = arith.constant 8.000000e+00 : f32
    %351 = vector.broadcast %cst_157 : f32 to vector<1x256xf32>
    %352 = arith.divf %350, %351 : vector<1x256xf32>
    %353 = arith.mulf %347, %347 : vector<1x256xf32>
    %354 = arith.subf %352, %353 : vector<1x256xf32>
    %cst_158 = arith.constant 9.99999974E-6 : f32
    %355 = vector.broadcast %cst_158 : f32 to vector<1x256xf32>
    %356 = arith.addf %354, %355 : vector<1x256xf32>
    %357 = math.rsqrt %356 : vector<1x256xf32>
    %c10_159 = arith.constant 10 : index
    %c0_160 = arith.constant 0 : index
    %358 = vector.load %arg2[%c10_159, %c0_160] : memref<21x256xf32, #tpu.memory_space<vmem>>, vector<1x256xf32>
    %c10_161 = arith.constant 10 : index
    %c0_162 = arith.constant 0 : index
    %359 = vector.load %arg3[%c10_161, %c0_162] : memref<21x256xf32, #tpu.memory_space<vmem>>, vector<1x256xf32>
    %360 = vector.broadcast %347 : vector<1x256xf32> to vector<8x256xf32>
    %361 = arith.subf %343, %360 : vector<8x256xf32>
    %362 = arith.mulf %357, %358 : vector<1x256xf32>
    %363 = vector.broadcast %362 : vector<1x256xf32> to vector<8x256xf32>
    %364 = arith.mulf %361, %363 : vector<8x256xf32>
    %365 = vector.broadcast %359 : vector<1x256xf32> to vector<8x256xf32>
    %366 = arith.addf %364, %365 : vector<8x256xf32>
    %cst_163 = arith.constant 5.000000e-01 : f32
    %367 = vector.broadcast %cst_163 : f32 to vector<8x256xf32>
    %368 = arith.mulf %367, %366 : vector<8x256xf32>
    %cst_164 = arith.constant 0.707106769 : f32
    %369 = vector.broadcast %cst_164 : f32 to vector<8x256xf32>
    %370 = arith.mulf %366, %369 : vector<8x256xf32>
    %371 = math.erf %370 : vector<8x256xf32>
    %cst_165 = arith.constant 1.000000e+00 : f32
    %372 = vector.broadcast %cst_165 : f32 to vector<8x256xf32>
    %373 = arith.addf %372, %371 : vector<8x256xf32>
    %374 = arith.mulf %368, %373 : vector<8x256xf32>
    %c11 = arith.constant 11 : index
    %c0_166 = arith.constant 0 : index
    %c0_167 = arith.constant 0 : index
    %375 = vector.load %arg1[%c11, %c0_166, %c0_167] : memref<23x256x256xf32, #tpu.memory_space<vmem>>, vector<1x256x256xf32>
    %376 = vector.shape_cast %375 : vector<1x256x256xf32> to vector<256x256xf32>
    %cst_168 = arith.constant dense<0.000000e+00> : vector<8x256xf32>
    %377 = tpu.matmul %374, %376, %cst_168 {dimension_numbers = #tpu.dot_dimension_numbers<[1], [0], [0], [1], [0, 0, 1, 1], [], []>} : vector<8x256xf32>, vector<256x256xf32>, vector<8x256xf32> -> vector<8x256xf32>
    %cst_169 = arith.constant dense<0.000000e+00> : vector<256xf32>
    %378 = vector.multi_reduction <add>, %377, %cst_169 [0] : vector<8x256xf32> to vector<256xf32>
    %379 = vector.shape_cast %378 : vector<256xf32> to vector<1x256xf32>
    %cst_170 = arith.constant 8.000000e+00 : f32
    %380 = vector.broadcast %cst_170 : f32 to vector<1x256xf32>
    %381 = arith.divf %379, %380 : vector<1x256xf32>
    %382 = arith.mulf %377, %377 : vector<8x256xf32>
    %cst_171 = arith.constant dense<0.000000e+00> : vector<256xf32>
    %383 = vector.multi_reduction <add>, %382, %cst_171 [0] : vector<8x256xf32> to vector<256xf32>
    %384 = vector.shape_cast %383 : vector<256xf32> to vector<1x256xf32>
    %cst_172 = arith.constant 8.000000e+00 : f32
    %385 = vector.broadcast %cst_172 : f32 to vector<1x256xf32>
    %386 = arith.divf %384, %385 : vector<1x256xf32>
    %387 = arith.mulf %381, %381 : vector<1x256xf32>
    %388 = arith.subf %386, %387 : vector<1x256xf32>
    %cst_173 = arith.constant 9.99999974E-6 : f32
    %389 = vector.broadcast %cst_173 : f32 to vector<1x256xf32>
    %390 = arith.addf %388, %389 : vector<1x256xf32>
    %391 = math.rsqrt %390 : vector<1x256xf32>
    %c11_174 = arith.constant 11 : index
    %c0_175 = arith.constant 0 : index
    %392 = vector.load %arg2[%c11_174, %c0_175] : memref<21x256xf32, #tpu.memory_space<vmem>>, vector<1x256xf32>
    %c11_176 = arith.constant 11 : index
    %c0_177 = arith.constant 0 : index
    %393 = vector.load %arg3[%c11_176, %c0_177] : memref<21x256xf32, #tpu.memory_space<vmem>>, vector<1x256xf32>
    %394 = vector.broadcast %381 : vector<1x256xf32> to vector<8x256xf32>
    %395 = arith.subf %377, %394 : vector<8x256xf32>
    %396 = arith.mulf %391, %392 : vector<1x256xf32>
    %397 = vector.broadcast %396 : vector<1x256xf32> to vector<8x256xf32>
    %398 = arith.mulf %395, %397 : vector<8x256xf32>
    %399 = vector.broadcast %393 : vector<1x256xf32> to vector<8x256xf32>
    %400 = arith.addf %398, %399 : vector<8x256xf32>
    %cst_178 = arith.constant 5.000000e-01 : f32
    %401 = vector.broadcast %cst_178 : f32 to vector<8x256xf32>
    %402 = arith.mulf %401, %400 : vector<8x256xf32>
    %cst_179 = arith.constant 0.707106769 : f32
    %403 = vector.broadcast %cst_179 : f32 to vector<8x256xf32>
    %404 = arith.mulf %400, %403 : vector<8x256xf32>
    %405 = math.erf %404 : vector<8x256xf32>
    %cst_180 = arith.constant 1.000000e+00 : f32
    %406 = vector.broadcast %cst_180 : f32 to vector<8x256xf32>
    %407 = arith.addf %406, %405 : vector<8x256xf32>
    %408 = arith.mulf %402, %407 : vector<8x256xf32>
    %c12 = arith.constant 12 : index
    %c0_181 = arith.constant 0 : index
    %c0_182 = arith.constant 0 : index
    %409 = vector.load %arg1[%c12, %c0_181, %c0_182] : memref<23x256x256xf32, #tpu.memory_space<vmem>>, vector<1x256x256xf32>
    %410 = vector.shape_cast %409 : vector<1x256x256xf32> to vector<256x256xf32>
    %cst_183 = arith.constant dense<0.000000e+00> : vector<8x256xf32>
    %411 = tpu.matmul %408, %410, %cst_183 {dimension_numbers = #tpu.dot_dimension_numbers<[1], [0], [0], [1], [0, 0, 1, 1], [], []>} : vector<8x256xf32>, vector<256x256xf32>, vector<8x256xf32> -> vector<8x256xf32>
    %cst_184 = arith.constant dense<0.000000e+00> : vector<256xf32>
    %412 = vector.multi_reduction <add>, %411, %cst_184 [0] : vector<8x256xf32> to vector<256xf32>
    %413 = vector.shape_cast %412 : vector<256xf32> to vector<1x256xf32>
    %cst_185 = arith.constant 8.000000e+00 : f32
    %414 = vector.broadcast %cst_185 : f32 to vector<1x256xf32>
    %415 = arith.divf %413, %414 : vector<1x256xf32>
    %416 = arith.mulf %411, %411 : vector<8x256xf32>
    %cst_186 = arith.constant dense<0.000000e+00> : vector<256xf32>
    %417 = vector.multi_reduction <add>, %416, %cst_186 [0] : vector<8x256xf32> to vector<256xf32>
    %418 = vector.shape_cast %417 : vector<256xf32> to vector<1x256xf32>
    %cst_187 = arith.constant 8.000000e+00 : f32
    %419 = vector.broadcast %cst_187 : f32 to vector<1x256xf32>
    %420 = arith.divf %418, %419 : vector<1x256xf32>
    %421 = arith.mulf %415, %415 : vector<1x256xf32>
    %422 = arith.subf %420, %421 : vector<1x256xf32>
    %cst_188 = arith.constant 9.99999974E-6 : f32
    %423 = vector.broadcast %cst_188 : f32 to vector<1x256xf32>
    %424 = arith.addf %422, %423 : vector<1x256xf32>
    %425 = math.rsqrt %424 : vector<1x256xf32>
    %c12_189 = arith.constant 12 : index
    %c0_190 = arith.constant 0 : index
    %426 = vector.load %arg2[%c12_189, %c0_190] : memref<21x256xf32, #tpu.memory_space<vmem>>, vector<1x256xf32>
    %c12_191 = arith.constant 12 : index
    %c0_192 = arith.constant 0 : index
    %427 = vector.load %arg3[%c12_191, %c0_192] : memref<21x256xf32, #tpu.memory_space<vmem>>, vector<1x256xf32>
    %428 = vector.broadcast %415 : vector<1x256xf32> to vector<8x256xf32>
    %429 = arith.subf %411, %428 : vector<8x256xf32>
    %430 = arith.mulf %425, %426 : vector<1x256xf32>
    %431 = vector.broadcast %430 : vector<1x256xf32> to vector<8x256xf32>
    %432 = arith.mulf %429, %431 : vector<8x256xf32>
    %433 = vector.broadcast %427 : vector<1x256xf32> to vector<8x256xf32>
    %434 = arith.addf %432, %433 : vector<8x256xf32>
    %cst_193 = arith.constant 5.000000e-01 : f32
    %435 = vector.broadcast %cst_193 : f32 to vector<8x256xf32>
    %436 = arith.mulf %435, %434 : vector<8x256xf32>
    %cst_194 = arith.constant 0.707106769 : f32
    %437 = vector.broadcast %cst_194 : f32 to vector<8x256xf32>
    %438 = arith.mulf %434, %437 : vector<8x256xf32>
    %439 = math.erf %438 : vector<8x256xf32>
    %cst_195 = arith.constant 1.000000e+00 : f32
    %440 = vector.broadcast %cst_195 : f32 to vector<8x256xf32>
    %441 = arith.addf %440, %439 : vector<8x256xf32>
    %442 = arith.mulf %436, %441 : vector<8x256xf32>
    %c21 = arith.constant 21 : index
    %c0_196 = arith.constant 0 : index
    %c0_197 = arith.constant 0 : index
    %443 = vector.load %arg1[%c21, %c0_196, %c0_197] : memref<23x256x256xf32, #tpu.memory_space<vmem>>, vector<1x256x256xf32>
    %444 = vector.shape_cast %443 : vector<1x256x256xf32> to vector<256x256xf32>
    %cst_198 = arith.constant dense<0.000000e+00> : vector<8x256xf32>
    %445 = tpu.matmul %442, %444, %cst_198 {dimension_numbers = #tpu.dot_dimension_numbers<[1], [0], [0], [1], [0, 0, 1, 1], [], []>} : vector<8x256xf32>, vector<256x256xf32>, vector<8x256xf32> -> vector<8x256xf32>
    %c0_199 = arith.constant 0 : index
    %c0_200 = arith.constant 0 : index
    %446 = vector.load %arg4[%c0_199, %c0_200] : memref<2x256xf32, #tpu.memory_space<vmem>>, vector<1x256xf32>
    %447 = vector.broadcast %446 : vector<1x256xf32> to vector<8x256xf32>
    %448 = arith.addf %445, %447 : vector<8x256xf32>
    %449 = vector.extract_strided_slice %448 {offsets = [0, 0], sizes = [8, 10], strides = [1, 1]} : vector<8x256xf32> to vector<8x10xf32>
    %cst_201 = arith.constant dense<0xFF800000> : vector<8xf32>
    %450 = vector.multi_reduction <maximumf>, %449, %cst_201 [1] : vector<8x10xf32> to vector<8xf32>
    %451 = vector.shape_cast %450 : vector<8xf32> to vector<8x1xf32>
    %452 = vector.broadcast %451 : vector<8x1xf32> to vector<8x10xf32>
    %453 = arith.subf %449, %452 : vector<8x10xf32>
    %454 = math.exp %453 : vector<8x10xf32>
    %cst_202 = arith.constant dense<0.000000e+00> : vector<8xf32>
    %455 = vector.multi_reduction <add>, %454, %cst_202 [1] : vector<8x10xf32> to vector<8xf32>
    %456 = vector.shape_cast %455 : vector<8xf32> to vector<8x1xf32>
    %457 = tpu.reciprocal %456 {approx = true} : vector<8x1xf32> -> vector<8x1xf32>
    %458 = vector.broadcast %457 : vector<8x1xf32> to vector<8x10xf32>
    %459 = arith.mulf %454, %458 : vector<8x10xf32>
    %c0_203 = arith.constant 0 : index
    %c0_204 = arith.constant 0 : index
    %460 = vector.load %arg5[%c0_203, %c0_204] : memref<8x10xf32, #tpu.memory_space<vmem>>, vector<8x10xf32>
    tpu.vector_store %arg5[%c0_203, %c0_204], %459 {strides = array<i32>} : memref<8x10xf32, #tpu.memory_space<vmem>>, vector<8x10xf32>,
    %c13 = arith.constant 13 : index
    %c0_205 = arith.constant 0 : index
    %c0_206 = arith.constant 0 : index
    %461 = vector.load %arg1[%c13, %c0_205, %c0_206] : memref<23x256x256xf32, #tpu.memory_space<vmem>>, vector<1x256x256xf32>
    %462 = vector.shape_cast %461 : vector<1x256x256xf32> to vector<256x256xf32>
    %cst_207 = arith.constant dense<0.000000e+00> : vector<8x256xf32>
    %463 = tpu.matmul %272, %462, %cst_207 {dimension_numbers = #tpu.dot_dimension_numbers<[1], [0], [0], [1], [0, 0, 1, 1], [], []>} : vector<8x256xf32>, vector<256x256xf32>, vector<8x256xf32> -> vector<8x256xf32>
    %cst_208 = arith.constant dense<0.000000e+00> : vector<256xf32>
    %464 = vector.multi_reduction <add>, %463, %cst_208 [0] : vector<8x256xf32> to vector<256xf32>
    %465 = vector.shape_cast %464 : vector<256xf32> to vector<1x256xf32>
    %cst_209 = arith.constant 8.000000e+00 : f32
    %466 = vector.broadcast %cst_209 : f32 to vector<1x256xf32>
    %467 = arith.divf %465, %466 : vector<1x256xf32>
    %468 = arith.mulf %463, %463 : vector<8x256xf32>
    %cst_210 = arith.constant dense<0.000000e+00> : vector<256xf32>
    %469 = vector.multi_reduction <add>, %468, %cst_210 [0] : vector<8x256xf32> to vector<256xf32>
    %470 = vector.shape_cast %469 : vector<256xf32> to vector<1x256xf32>
    %cst_211 = arith.constant 8.000000e+00 : f32
    %471 = vector.broadcast %cst_211 : f32 to vector<1x256xf32>
    %472 = arith.divf %470, %471 : vector<1x256xf32>
    %473 = arith.mulf %467, %467 : vector<1x256xf32>
    %474 = arith.subf %472, %473 : vector<1x256xf32>
    %cst_212 = arith.constant 9.99999974E-6 : f32
    %475 = vector.broadcast %cst_212 : f32 to vector<1x256xf32>
    %476 = arith.addf %474, %475 : vector<1x256xf32>
    %477 = math.rsqrt %476 : vector<1x256xf32>
    %c13_213 = arith.constant 13 : index
    %c0_214 = arith.constant 0 : index
    %478 = vector.load %arg2[%c13_213, %c0_214] : memref<21x256xf32, #tpu.memory_space<vmem>>, vector<1x256xf32>
    %c13_215 = arith.constant 13 : index
    %c0_216 = arith.constant 0 : index
    %479 = vector.load %arg3[%c13_215, %c0_216] : memref<21x256xf32, #tpu.memory_space<vmem>>, vector<1x256xf32>
    %480 = vector.broadcast %467 : vector<1x256xf32> to vector<8x256xf32>
    %481 = arith.subf %463, %480 : vector<8x256xf32>
    %482 = arith.mulf %477, %478 : vector<1x256xf32>
    %483 = vector.broadcast %482 : vector<1x256xf32> to vector<8x256xf32>
    %484 = arith.mulf %481, %483 : vector<8x256xf32>
    %485 = vector.broadcast %479 : vector<1x256xf32> to vector<8x256xf32>
    %486 = arith.addf %484, %485 : vector<8x256xf32>
    %cst_217 = arith.constant 5.000000e-01 : f32
    %487 = vector.broadcast %cst_217 : f32 to vector<8x256xf32>
    %488 = arith.mulf %487, %486 : vector<8x256xf32>
    %cst_218 = arith.constant 0.707106769 : f32
    %489 = vector.broadcast %cst_218 : f32 to vector<8x256xf32>
    %490 = arith.mulf %486, %489 : vector<8x256xf32>
    %491 = math.erf %490 : vector<8x256xf32>
    %cst_219 = arith.constant 1.000000e+00 : f32
    %492 = vector.broadcast %cst_219 : f32 to vector<8x256xf32>
    %493 = arith.addf %492, %491 : vector<8x256xf32>
    %494 = arith.mulf %488, %493 : vector<8x256xf32>
    %c14 = arith.constant 14 : index
    %c0_220 = arith.constant 0 : index
    %c0_221 = arith.constant 0 : index
    %495 = vector.load %arg1[%c14, %c0_220, %c0_221] : memref<23x256x256xf32, #tpu.memory_space<vmem>>, vector<1x256x256xf32>
    %496 = vector.shape_cast %495 : vector<1x256x256xf32> to vector<256x256xf32>
    %cst_222 = arith.constant dense<0.000000e+00> : vector<8x256xf32>
    %497 = tpu.matmul %494, %496, %cst_222 {dimension_numbers = #tpu.dot_dimension_numbers<[1], [0], [0], [1], [0, 0, 1, 1], [], []>} : vector<8x256xf32>, vector<256x256xf32>, vector<8x256xf32> -> vector<8x256xf32>
    %cst_223 = arith.constant dense<0.000000e+00> : vector<256xf32>
    %498 = vector.multi_reduction <add>, %497, %cst_223 [0] : vector<8x256xf32> to vector<256xf32>
    %499 = vector.shape_cast %498 : vector<256xf32> to vector<1x256xf32>
    %cst_224 = arith.constant 8.000000e+00 : f32
    %500 = vector.broadcast %cst_224 : f32 to vector<1x256xf32>
    %501 = arith.divf %499, %500 : vector<1x256xf32>
    %502 = arith.mulf %497, %497 : vector<8x256xf32>
    %cst_225 = arith.constant dense<0.000000e+00> : vector<256xf32>
    %503 = vector.multi_reduction <add>, %502, %cst_225 [0] : vector<8x256xf32> to vector<256xf32>
    %504 = vector.shape_cast %503 : vector<256xf32> to vector<1x256xf32>
    %cst_226 = arith.constant 8.000000e+00 : f32
    %505 = vector.broadcast %cst_226 : f32 to vector<1x256xf32>
    %506 = arith.divf %504, %505 : vector<1x256xf32>
    %507 = arith.mulf %501, %501 : vector<1x256xf32>
    %508 = arith.subf %506, %507 : vector<1x256xf32>
    %cst_227 = arith.constant 9.99999974E-6 : f32
    %509 = vector.broadcast %cst_227 : f32 to vector<1x256xf32>
    %510 = arith.addf %508, %509 : vector<1x256xf32>
    %511 = math.rsqrt %510 : vector<1x256xf32>
    %c14_228 = arith.constant 14 : index
    %c0_229 = arith.constant 0 : index
    %512 = vector.load %arg2[%c14_228, %c0_229] : memref<21x256xf32, #tpu.memory_space<vmem>>, vector<1x256xf32>
    %c14_230 = arith.constant 14 : index
    %c0_231 = arith.constant 0 : index
    %513 = vector.load %arg3[%c14_230, %c0_231] : memref<21x256xf32, #tpu.memory_space<vmem>>, vector<1x256xf32>
    %514 = vector.broadcast %501 : vector<1x256xf32> to vector<8x256xf32>
    %515 = arith.subf %497, %514 : vector<8x256xf32>
    %516 = arith.mulf %511, %512 : vector<1x256xf32>
    %517 = vector.broadcast %516 : vector<1x256xf32> to vector<8x256xf32>
    %518 = arith.mulf %515, %517 : vector<8x256xf32>
    %519 = vector.broadcast %513 : vector<1x256xf32> to vector<8x256xf32>
    %520 = arith.addf %518, %519 : vector<8x256xf32>
    %cst_232 = arith.constant 5.000000e-01 : f32
    %521 = vector.broadcast %cst_232 : f32 to vector<8x256xf32>
    %522 = arith.mulf %521, %520 : vector<8x256xf32>
    %cst_233 = arith.constant 0.707106769 : f32
    %523 = vector.broadcast %cst_233 : f32 to vector<8x256xf32>
    %524 = arith.mulf %520, %523 : vector<8x256xf32>
    %525 = math.erf %524 : vector<8x256xf32>
    %cst_234 = arith.constant 1.000000e+00 : f32
    %526 = vector.broadcast %cst_234 : f32 to vector<8x256xf32>
    %527 = arith.addf %526, %525 : vector<8x256xf32>
    %528 = arith.mulf %522, %527 : vector<8x256xf32>
    %c15 = arith.constant 15 : index
    %c0_235 = arith.constant 0 : index
    %c0_236 = arith.constant 0 : index
    %529 = vector.load %arg1[%c15, %c0_235, %c0_236] : memref<23x256x256xf32, #tpu.memory_space<vmem>>, vector<1x256x256xf32>
    %530 = vector.shape_cast %529 : vector<1x256x256xf32> to vector<256x256xf32>
    %cst_237 = arith.constant dense<0.000000e+00> : vector<8x256xf32>
    %531 = tpu.matmul %528, %530, %cst_237 {dimension_numbers = #tpu.dot_dimension_numbers<[1], [0], [0], [1], [0, 0, 1, 1], [], []>} : vector<8x256xf32>, vector<256x256xf32>, vector<8x256xf32> -> vector<8x256xf32>
    %cst_238 = arith.constant dense<0.000000e+00> : vector<256xf32>
    %532 = vector.multi_reduction <add>, %531, %cst_238 [0] : vector<8x256xf32> to vector<256xf32>
    %533 = vector.shape_cast %532 : vector<256xf32> to vector<1x256xf32>
    %cst_239 = arith.constant 8.000000e+00 : f32
    %534 = vector.broadcast %cst_239 : f32 to vector<1x256xf32>
    %535 = arith.divf %533, %534 : vector<1x256xf32>
    %536 = arith.mulf %531, %531 : vector<8x256xf32>
    %cst_240 = arith.constant dense<0.000000e+00> : vector<256xf32>
    %537 = vector.multi_reduction <add>, %536, %cst_240 [0] : vector<8x256xf32> to vector<256xf32>
    %538 = vector.shape_cast %537 : vector<256xf32> to vector<1x256xf32>
    %cst_241 = arith.constant 8.000000e+00 : f32
    %539 = vector.broadcast %cst_241 : f32 to vector<1x256xf32>
    %540 = arith.divf %538, %539 : vector<1x256xf32>
    %541 = arith.mulf %535, %535 : vector<1x256xf32>
    %542 = arith.subf %540, %541 : vector<1x256xf32>
    %cst_242 = arith.constant 9.99999974E-6 : f32
    %543 = vector.broadcast %cst_242 : f32 to vector<1x256xf32>
    %544 = arith.addf %542, %543 : vector<1x256xf32>
    %545 = math.rsqrt %544 : vector<1x256xf32>
    %c15_243 = arith.constant 15 : index
    %c0_244 = arith.constant 0 : index
    %546 = vector.load %arg2[%c15_243, %c0_244] : memref<21x256xf32, #tpu.memory_space<vmem>>, vector<1x256xf32>
    %c15_245 = arith.constant 15 : index
    %c0_246 = arith.constant 0 : index
    %547 = vector.load %arg3[%c15_245, %c0_246] : memref<21x256xf32, #tpu.memory_space<vmem>>, vector<1x256xf32>
    %548 = vector.broadcast %535 : vector<1x256xf32> to vector<8x256xf32>
    %549 = arith.subf %531, %548 : vector<8x256xf32>
    %550 = arith.mulf %545, %546 : vector<1x256xf32>
    %551 = vector.broadcast %550 : vector<1x256xf32> to vector<8x256xf32>
    %552 = arith.mulf %549, %551 : vector<8x256xf32>
    %553 = vector.broadcast %547 : vector<1x256xf32> to vector<8x256xf32>
    %554 = arith.addf %552, %553 : vector<8x256xf32>
    %cst_247 = arith.constant 5.000000e-01 : f32
    %555 = vector.broadcast %cst_247 : f32 to vector<8x256xf32>
    %556 = arith.mulf %555, %554 : vector<8x256xf32>
    %cst_248 = arith.constant 0.707106769 : f32
    %557 = vector.broadcast %cst_248 : f32 to vector<8x256xf32>
    %558 = arith.mulf %554, %557 : vector<8x256xf32>
    %559 = math.erf %558 : vector<8x256xf32>
    %cst_249 = arith.constant 1.000000e+00 : f32
    %560 = vector.broadcast %cst_249 : f32 to vector<8x256xf32>
    %561 = arith.addf %560, %559 : vector<8x256xf32>
    %562 = arith.mulf %556, %561 : vector<8x256xf32>
    %c16 = arith.constant 16 : index
    %c0_250 = arith.constant 0 : index
    %c0_251 = arith.constant 0 : index
    %563 = vector.load %arg1[%c16, %c0_250, %c0_251] : memref<23x256x256xf32, #tpu.memory_space<vmem>>, vector<1x256x256xf32>
    %564 = vector.shape_cast %563 : vector<1x256x256xf32> to vector<256x256xf32>
    %cst_252 = arith.constant dense<0.000000e+00> : vector<8x256xf32>
    %565 = tpu.matmul %562, %564, %cst_252 {dimension_numbers = #tpu.dot_dimension_numbers<[1], [0], [0], [1], [0, 0, 1, 1], [], []>} : vector<8x256xf32>, vector<256x256xf32>, vector<8x256xf32> -> vector<8x256xf32>
    %cst_253 = arith.constant dense<0.000000e+00> : vector<256xf32>
    %566 = vector.multi_reduction <add>, %565, %cst_253 [0] : vector<8x256xf32> to vector<256xf32>
    %567 = vector.shape_cast %566 : vector<256xf32> to vector<1x256xf32>
    %cst_254 = arith.constant 8.000000e+00 : f32
    %568 = vector.broadcast %cst_254 : f32 to vector<1x256xf32>
    %569 = arith.divf %567, %568 : vector<1x256xf32>
    %570 = arith.mulf %565, %565 : vector<8x256xf32>
    %cst_255 = arith.constant dense<0.000000e+00> : vector<256xf32>
    %571 = vector.multi_reduction <add>, %570, %cst_255 [0] : vector<8x256xf32> to vector<256xf32>
    %572 = vector.shape_cast %571 : vector<256xf32> to vector<1x256xf32>
    %cst_256 = arith.constant 8.000000e+00 : f32
    %573 = vector.broadcast %cst_256 : f32 to vector<1x256xf32>
    %574 = arith.divf %572, %573 : vector<1x256xf32>
    %575 = arith.mulf %569, %569 : vector<1x256xf32>
    %576 = arith.subf %574, %575 : vector<1x256xf32>
    %cst_257 = arith.constant 9.99999974E-6 : f32
    %577 = vector.broadcast %cst_257 : f32 to vector<1x256xf32>
    %578 = arith.addf %576, %577 : vector<1x256xf32>
    %579 = math.rsqrt %578 : vector<1x256xf32>
    %c16_258 = arith.constant 16 : index
    %c0_259 = arith.constant 0 : index
    %580 = vector.load %arg2[%c16_258, %c0_259] : memref<21x256xf32, #tpu.memory_space<vmem>>, vector<1x256xf32>
    %c16_260 = arith.constant 16 : index
    %c0_261 = arith.constant 0 : index
    %581 = vector.load %arg3[%c16_260, %c0_261] : memref<21x256xf32, #tpu.memory_space<vmem>>, vector<1x256xf32>
    %582 = vector.broadcast %569 : vector<1x256xf32> to vector<8x256xf32>
    %583 = arith.subf %565, %582 : vector<8x256xf32>
    %584 = arith.mulf %579, %580 : vector<1x256xf32>
    %585 = vector.broadcast %584 : vector<1x256xf32> to vector<8x256xf32>
    %586 = arith.mulf %583, %585 : vector<8x256xf32>
    %587 = vector.broadcast %581 : vector<1x256xf32> to vector<8x256xf32>
    %588 = arith.addf %586, %587 : vector<8x256xf32>
    %cst_262 = arith.constant 5.000000e-01 : f32
    %589 = vector.broadcast %cst_262 : f32 to vector<8x256xf32>
    %590 = arith.mulf %589, %588 : vector<8x256xf32>
    %cst_263 = arith.constant 0.707106769 : f32
    %591 = vector.broadcast %cst_263 : f32 to vector<8x256xf32>
    %592 = arith.mulf %588, %591 : vector<8x256xf32>
    %593 = math.erf %592 : vector<8x256xf32>
    %cst_264 = arith.constant 1.000000e+00 : f32
    %594 = vector.broadcast %cst_264 : f32 to vector<8x256xf32>
    %595 = arith.addf %594, %593 : vector<8x256xf32>
    %596 = arith.mulf %590, %595 : vector<8x256xf32>
    %c17 = arith.constant 17 : index
    %c0_265 = arith.constant 0 : index
    %c0_266 = arith.constant 0 : index
    %597 = vector.load %arg1[%c17, %c0_265, %c0_266] : memref<23x256x256xf32, #tpu.memory_space<vmem>>, vector<1x256x256xf32>
    %598 = vector.shape_cast %597 : vector<1x256x256xf32> to vector<256x256xf32>
    %cst_267 = arith.constant dense<0.000000e+00> : vector<8x256xf32>
    %599 = tpu.matmul %596, %598, %cst_267 {dimension_numbers = #tpu.dot_dimension_numbers<[1], [0], [0], [1], [0, 0, 1, 1], [], []>} : vector<8x256xf32>, vector<256x256xf32>, vector<8x256xf32> -> vector<8x256xf32>
    %cst_268 = arith.constant dense<0.000000e+00> : vector<256xf32>
    %600 = vector.multi_reduction <add>, %599, %cst_268 [0] : vector<8x256xf32> to vector<256xf32>
    %601 = vector.shape_cast %600 : vector<256xf32> to vector<1x256xf32>
    %cst_269 = arith.constant 8.000000e+00 : f32
    %602 = vector.broadcast %cst_269 : f32 to vector<1x256xf32>
    %603 = arith.divf %601, %602 : vector<1x256xf32>
    %604 = arith.mulf %599, %599 : vector<8x256xf32>
    %cst_270 = arith.constant dense<0.000000e+00> : vector<256xf32>
    %605 = vector.multi_reduction <add>, %604, %cst_270 [0] : vector<8x256xf32> to vector<256xf32>
    %606 = vector.shape_cast %605 : vector<256xf32> to vector<1x256xf32>
    %cst_271 = arith.constant 8.000000e+00 : f32
    %607 = vector.broadcast %cst_271 : f32 to vector<1x256xf32>
    %608 = arith.divf %606, %607 : vector<1x256xf32>
    %609 = arith.mulf %603, %603 : vector<1x256xf32>
    %610 = arith.subf %608, %609 : vector<1x256xf32>
    %cst_272 = arith.constant 9.99999974E-6 : f32
    %611 = vector.broadcast %cst_272 : f32 to vector<1x256xf32>
    %612 = arith.addf %610, %611 : vector<1x256xf32>
    %613 = math.rsqrt %612 : vector<1x256xf32>
    %c17_273 = arith.constant 17 : index
    %c0_274 = arith.constant 0 : index
    %614 = vector.load %arg2[%c17_273, %c0_274] : memref<21x256xf32, #tpu.memory_space<vmem>>, vector<1x256xf32>
    %c17_275 = arith.constant 17 : index
    %c0_276 = arith.constant 0 : index
    %615 = vector.load %arg3[%c17_275, %c0_276] : memref<21x256xf32, #tpu.memory_space<vmem>>, vector<1x256xf32>
    %616 = vector.broadcast %603 : vector<1x256xf32> to vector<8x256xf32>
    %617 = arith.subf %599, %616 : vector<8x256xf32>
    %618 = arith.mulf %613, %614 : vector<1x256xf32>
    %619 = vector.broadcast %618 : vector<1x256xf32> to vector<8x256xf32>
    %620 = arith.mulf %617, %619 : vector<8x256xf32>
    %621 = vector.broadcast %615 : vector<1x256xf32> to vector<8x256xf32>
    %622 = arith.addf %620, %621 : vector<8x256xf32>
    %cst_277 = arith.constant 5.000000e-01 : f32
    %623 = vector.broadcast %cst_277 : f32 to vector<8x256xf32>
    %624 = arith.mulf %623, %622 : vector<8x256xf32>
    %cst_278 = arith.constant 0.707106769 : f32
    %625 = vector.broadcast %cst_278 : f32 to vector<8x256xf32>
    %626 = arith.mulf %622, %625 : vector<8x256xf32>
    %627 = math.erf %626 : vector<8x256xf32>
    %cst_279 = arith.constant 1.000000e+00 : f32
    %628 = vector.broadcast %cst_279 : f32 to vector<8x256xf32>
    %629 = arith.addf %628, %627 : vector<8x256xf32>
    %630 = arith.mulf %624, %629 : vector<8x256xf32>
    %c18 = arith.constant 18 : index
    %c0_280 = arith.constant 0 : index
    %c0_281 = arith.constant 0 : index
    %631 = vector.load %arg1[%c18, %c0_280, %c0_281] : memref<23x256x256xf32, #tpu.memory_space<vmem>>, vector<1x256x256xf32>
    %632 = vector.shape_cast %631 : vector<1x256x256xf32> to vector<256x256xf32>
    %cst_282 = arith.constant dense<0.000000e+00> : vector<8x256xf32>
    %633 = tpu.matmul %630, %632, %cst_282 {dimension_numbers = #tpu.dot_dimension_numbers<[1], [0], [0], [1], [0, 0, 1, 1], [], []>} : vector<8x256xf32>, vector<256x256xf32>, vector<8x256xf32> -> vector<8x256xf32>
    %cst_283 = arith.constant dense<0.000000e+00> : vector<256xf32>
    %634 = vector.multi_reduction <add>, %633, %cst_283 [0] : vector<8x256xf32> to vector<256xf32>
    %635 = vector.shape_cast %634 : vector<256xf32> to vector<1x256xf32>
    %cst_284 = arith.constant 8.000000e+00 : f32
    %636 = vector.broadcast %cst_284 : f32 to vector<1x256xf32>
    %637 = arith.divf %635, %636 : vector<1x256xf32>
    %638 = arith.mulf %633, %633 : vector<8x256xf32>
    %cst_285 = arith.constant dense<0.000000e+00> : vector<256xf32>
    %639 = vector.multi_reduction <add>, %638, %cst_285 [0] : vector<8x256xf32> to vector<256xf32>
    %640 = vector.shape_cast %639 : vector<256xf32> to vector<1x256xf32>
    %cst_286 = arith.constant 8.000000e+00 : f32
    %641 = vector.broadcast %cst_286 : f32 to vector<1x256xf32>
    %642 = arith.divf %640, %641 : vector<1x256xf32>
    %643 = arith.mulf %637, %637 : vector<1x256xf32>
    %644 = arith.subf %642, %643 : vector<1x256xf32>
    %cst_287 = arith.constant 9.99999974E-6 : f32
    %645 = vector.broadcast %cst_287 : f32 to vector<1x256xf32>
    %646 = arith.addf %644, %645 : vector<1x256xf32>
    %647 = math.rsqrt %646 : vector<1x256xf32>
    %c18_288 = arith.constant 18 : index
    %c0_289 = arith.constant 0 : index
    %648 = vector.load %arg2[%c18_288, %c0_289] : memref<21x256xf32, #tpu.memory_space<vmem>>, vector<1x256xf32>
    %c18_290 = arith.constant 18 : index
    %c0_291 = arith.constant 0 : index
    %649 = vector.load %arg3[%c18_290, %c0_291] : memref<21x256xf32, #tpu.memory_space<vmem>>, vector<1x256xf32>
    %650 = vector.broadcast %637 : vector<1x256xf32> to vector<8x256xf32>
    %651 = arith.subf %633, %650 : vector<8x256xf32>
    %652 = arith.mulf %647, %648 : vector<1x256xf32>
    %653 = vector.broadcast %652 : vector<1x256xf32> to vector<8x256xf32>
    %654 = arith.mulf %651, %653 : vector<8x256xf32>
    %655 = vector.broadcast %649 : vector<1x256xf32> to vector<8x256xf32>
    %656 = arith.addf %654, %655 : vector<8x256xf32>
    %cst_292 = arith.constant 5.000000e-01 : f32
    %657 = vector.broadcast %cst_292 : f32 to vector<8x256xf32>
    %658 = arith.mulf %657, %656 : vector<8x256xf32>
    %cst_293 = arith.constant 0.707106769 : f32
    %659 = vector.broadcast %cst_293 : f32 to vector<8x256xf32>
    %660 = arith.mulf %656, %659 : vector<8x256xf32>
    %661 = math.erf %660 : vector<8x256xf32>
    %cst_294 = arith.constant 1.000000e+00 : f32
    %662 = vector.broadcast %cst_294 : f32 to vector<8x256xf32>
    %663 = arith.addf %662, %661 : vector<8x256xf32>
    %664 = arith.mulf %658, %663 : vector<8x256xf32>
    %c19 = arith.constant 19 : index
    %c0_295 = arith.constant 0 : index
    %c0_296 = arith.constant 0 : index
    %665 = vector.load %arg1[%c19, %c0_295, %c0_296] : memref<23x256x256xf32, #tpu.memory_space<vmem>>, vector<1x256x256xf32>
    %666 = vector.shape_cast %665 : vector<1x256x256xf32> to vector<256x256xf32>
    %cst_297 = arith.constant dense<0.000000e+00> : vector<8x256xf32>
    %667 = tpu.matmul %664, %666, %cst_297 {dimension_numbers = #tpu.dot_dimension_numbers<[1], [0], [0], [1], [0, 0, 1, 1], [], []>} : vector<8x256xf32>, vector<256x256xf32>, vector<8x256xf32> -> vector<8x256xf32>
    %cst_298 = arith.constant dense<0.000000e+00> : vector<256xf32>
    %668 = vector.multi_reduction <add>, %667, %cst_298 [0] : vector<8x256xf32> to vector<256xf32>
    %669 = vector.shape_cast %668 : vector<256xf32> to vector<1x256xf32>
    %cst_299 = arith.constant 8.000000e+00 : f32
    %670 = vector.broadcast %cst_299 : f32 to vector<1x256xf32>
    %671 = arith.divf %669, %670 : vector<1x256xf32>
    %672 = arith.mulf %667, %667 : vector<8x256xf32>
    %cst_300 = arith.constant dense<0.000000e+00> : vector<256xf32>
    %673 = vector.multi_reduction <add>, %672, %cst_300 [0] : vector<8x256xf32> to vector<256xf32>
    %674 = vector.shape_cast %673 : vector<256xf32> to vector<1x256xf32>
    %cst_301 = arith.constant 8.000000e+00 : f32
    %675 = vector.broadcast %cst_301 : f32 to vector<1x256xf32>
    %676 = arith.divf %674, %675 : vector<1x256xf32>
    %677 = arith.mulf %671, %671 : vector<1x256xf32>
    %678 = arith.subf %676, %677 : vector<1x256xf32>
    %cst_302 = arith.constant 9.99999974E-6 : f32
    %679 = vector.broadcast %cst_302 : f32 to vector<1x256xf32>
    %680 = arith.addf %678, %679 : vector<1x256xf32>
    %681 = math.rsqrt %680 : vector<1x256xf32>
    %c19_303 = arith.constant 19 : index
    %c0_304 = arith.constant 0 : index
    %682 = vector.load %arg2[%c19_303, %c0_304] : memref<21x256xf32, #tpu.memory_space<vmem>>, vector<1x256xf32>
    %c19_305 = arith.constant 19 : index
    %c0_306 = arith.constant 0 : index
    %683 = vector.load %arg3[%c19_305, %c0_306] : memref<21x256xf32, #tpu.memory_space<vmem>>, vector<1x256xf32>
    %684 = vector.broadcast %671 : vector<1x256xf32> to vector<8x256xf32>
    %685 = arith.subf %667, %684 : vector<8x256xf32>
    %686 = arith.mulf %681, %682 : vector<1x256xf32>
    %687 = vector.broadcast %686 : vector<1x256xf32> to vector<8x256xf32>
    %688 = arith.mulf %685, %687 : vector<8x256xf32>
    %689 = vector.broadcast %683 : vector<1x256xf32> to vector<8x256xf32>
    %690 = arith.addf %688, %689 : vector<8x256xf32>
    %cst_307 = arith.constant 5.000000e-01 : f32
    %691 = vector.broadcast %cst_307 : f32 to vector<8x256xf32>
    %692 = arith.mulf %691, %690 : vector<8x256xf32>
    %cst_308 = arith.constant 0.707106769 : f32
    %693 = vector.broadcast %cst_308 : f32 to vector<8x256xf32>
    %694 = arith.mulf %690, %693 : vector<8x256xf32>
    %695 = math.erf %694 : vector<8x256xf32>
    %cst_309 = arith.constant 1.000000e+00 : f32
    %696 = vector.broadcast %cst_309 : f32 to vector<8x256xf32>
    %697 = arith.addf %696, %695 : vector<8x256xf32>
    %698 = arith.mulf %692, %697 : vector<8x256xf32>
    %c20 = arith.constant 20 : index
    %c0_310 = arith.constant 0 : index
    %c0_311 = arith.constant 0 : index
    %699 = vector.load %arg1[%c20, %c0_310, %c0_311] : memref<23x256x256xf32, #tpu.memory_space<vmem>>, vector<1x256x256xf32>
    %700 = vector.shape_cast %699 : vector<1x256x256xf32> to vector<256x256xf32>
    %cst_312 = arith.constant dense<0.000000e+00> : vector<8x256xf32>
    %701 = tpu.matmul %698, %700, %cst_312 {dimension_numbers = #tpu.dot_dimension_numbers<[1], [0], [0], [1], [0, 0, 1, 1], [], []>} : vector<8x256xf32>, vector<256x256xf32>, vector<8x256xf32> -> vector<8x256xf32>
    %cst_313 = arith.constant dense<0.000000e+00> : vector<256xf32>
    %702 = vector.multi_reduction <add>, %701, %cst_313 [0] : vector<8x256xf32> to vector<256xf32>
    %703 = vector.shape_cast %702 : vector<256xf32> to vector<1x256xf32>
    %cst_314 = arith.constant 8.000000e+00 : f32
    %704 = vector.broadcast %cst_314 : f32 to vector<1x256xf32>
    %705 = arith.divf %703, %704 : vector<1x256xf32>
    %706 = arith.mulf %701, %701 : vector<8x256xf32>
    %cst_315 = arith.constant dense<0.000000e+00> : vector<256xf32>
    %707 = vector.multi_reduction <add>, %706, %cst_315 [0] : vector<8x256xf32> to vector<256xf32>
    %708 = vector.shape_cast %707 : vector<256xf32> to vector<1x256xf32>
    %cst_316 = arith.constant 8.000000e+00 : f32
    %709 = vector.broadcast %cst_316 : f32 to vector<1x256xf32>
    %710 = arith.divf %708, %709 : vector<1x256xf32>
    %711 = arith.mulf %705, %705 : vector<1x256xf32>
    %712 = arith.subf %710, %711 : vector<1x256xf32>
    %cst_317 = arith.constant 9.99999974E-6 : f32
    %713 = vector.broadcast %cst_317 : f32 to vector<1x256xf32>
    %714 = arith.addf %712, %713 : vector<1x256xf32>
    %715 = math.rsqrt %714 : vector<1x256xf32>
    %c20_318 = arith.constant 20 : index
    %c0_319 = arith.constant 0 : index
    %716 = vector.load %arg2[%c20_318, %c0_319] : memref<21x256xf32, #tpu.memory_space<vmem>>, vector<1x256xf32>
    %c20_320 = arith.constant 20 : index
    %c0_321 = arith.constant 0 : index
    %717 = vector.load %arg3[%c20_320, %c0_321] : memref<21x256xf32, #tpu.memory_space<vmem>>, vector<1x256xf32>
    %718 = vector.broadcast %705 : vector<1x256xf32> to vector<8x256xf32>
    %719 = arith.subf %701, %718 : vector<8x256xf32>
    %720 = arith.mulf %715, %716 : vector<1x256xf32>
    %721 = vector.broadcast %720 : vector<1x256xf32> to vector<8x256xf32>
    %722 = arith.mulf %719, %721 : vector<8x256xf32>
    %723 = vector.broadcast %717 : vector<1x256xf32> to vector<8x256xf32>
    %724 = arith.addf %722, %723 : vector<8x256xf32>
    %cst_322 = arith.constant 5.000000e-01 : f32
    %725 = vector.broadcast %cst_322 : f32 to vector<8x256xf32>
    %726 = arith.mulf %725, %724 : vector<8x256xf32>
    %cst_323 = arith.constant 0.707106769 : f32
    %727 = vector.broadcast %cst_323 : f32 to vector<8x256xf32>
    %728 = arith.mulf %724, %727 : vector<8x256xf32>
    %729 = math.erf %728 : vector<8x256xf32>
    %cst_324 = arith.constant 1.000000e+00 : f32
    %730 = vector.broadcast %cst_324 : f32 to vector<8x256xf32>
    %731 = arith.addf %730, %729 : vector<8x256xf32>
    %732 = arith.mulf %726, %731 : vector<8x256xf32>
    %c22 = arith.constant 22 : index
    %c0_325 = arith.constant 0 : index
    %c0_326 = arith.constant 0 : index
    %733 = vector.load %arg1[%c22, %c0_325, %c0_326] : memref<23x256x256xf32, #tpu.memory_space<vmem>>, vector<1x256x256xf32>
    %734 = vector.shape_cast %733 : vector<1x256x256xf32> to vector<256x256xf32>
    %cst_327 = arith.constant dense<0.000000e+00> : vector<8x256xf32>
    %735 = tpu.matmul %732, %734, %cst_327 {dimension_numbers = #tpu.dot_dimension_numbers<[1], [0], [0], [1], [0, 0, 1, 1], [], []>} : vector<8x256xf32>, vector<256x256xf32>, vector<8x256xf32> -> vector<8x256xf32>
    %c1_328 = arith.constant 1 : index
    %c0_329 = arith.constant 0 : index
    %736 = vector.load %arg4[%c1_328, %c0_329] : memref<2x256xf32, #tpu.memory_space<vmem>>, vector<1x256xf32>
    %737 = vector.broadcast %736 : vector<1x256xf32> to vector<8x256xf32>
    %738 = arith.addf %735, %737 : vector<8x256xf32>
    %739 = vector.extract_strided_slice %738 {offsets = [0, 0], sizes = [8, 1], strides = [1, 1]} : vector<8x256xf32> to vector<8x1xf32>
    %c0_330 = arith.constant 0 : index
    %c0_331 = arith.constant 0 : index
    %740 = vector.load %arg6[%c0_330, %c0_331] : memref<8x1xf32, #tpu.memory_space<vmem>>, vector<8x1xf32>
    tpu.vector_store %arg6[%c0_330, %c0_331], %739 {strides = array<i32>} : memref<8x1xf32, #tpu.memory_space<vmem>>, vector<8x1xf32>,
    return
  }
}

</mosaic_0001>

<llo_original>
// kernel: net_forward.1
$region0: #{net_forward.1}
  #allocation0 [shape = 'u32[]', space=smem, size = 0x4, offset = 0x4, fixed_abs, tag = 'smem constant byte address 0x4 - core index']
  #allocation1 [shape = 'u32[144,128]{1,0:T(1,128)}', space=vmem, size = 0x12000, scoped, tag = 'internal scratch']
  %s0 = inlined_call_operand.vmem [shape: f32[8,256], index: 0, kind: input, shape index: {}]
  %s1 = inlined_call_operand.hbm [shape: f32[23,256,256], index: 1, kind: input, shape index: {}]
  %s2 = inlined_call_operand.hbm [shape: f32[21,256], index: 2, kind: input, shape index: {}]
  %s3 = inlined_call_operand.hbm [shape: f32[21,256], index: 3, kind: input, shape index: {}]
  %s4 = inlined_call_operand.hbm [shape: f32[2,256], index: 4, kind: input, shape index: {}]
  %s5 = inlined_call_operand.hbm [shape: f32[8,10], index: 5, kind: output, shape index: {0}]
  %s6 = inlined_call_operand.vmem [shape: f32[8,1], index: 6, kind: output, shape index: {1}]
  %7 = xla_tuple %s5, %s6
  %s8 = sld [smem:[#allocation0]]
  $region54: #{net_forward.1} parent=0
    _
  %s10 = ssub.s32 1, %s8
  %s11 = scalar_select 0, %s10, %s8
  $region1: #{net_forward.1} parent=0
    #allocation2 [shape = 'u8[6029312]{0}', space=vmem, size = 0x5c0000, scoped, tag = 'input window, operand 1, single buffered']
    #allocation3 [shape = 's32[1]{0}', space=sflag, size = 0x4, scoped, tag = 'scoped memory for net_forward.1']
    #allocation4 [shape = 's32[1]{0}', space=sflag, size = 0x4, scoped, tag = 'scoped memory for net_forward.1']
    #allocation5 [shape = 'u8[24576]{0}', space=vmem, size = 0x6000, scoped, tag = 'input window, operand 2, single buffered']
    #allocation6 [shape = 's32[1]{0}', space=sflag, size = 0x4, scoped, tag = 'scoped memory for net_forward.1']
    #allocation7 [shape = 'u8[24576]{0}', space=vmem, size = 0x6000, scoped, tag = 'input window, operand 3, single buffered']
    #allocation8 [shape = 'u8[2048]{0}', space=vmem, size = 0x800, scoped, tag = 'input window, operand 4, single buffered']
    #allocation9 [shape = 's32[1]{0}', space=sflag, size = 0x4, scoped, tag = 'scoped memory for net_forward.1']
    #allocation10 [shape = 'u8[4096]{0}', space=vmem, size = 0x1000, scoped, tag = 'output window, operand 0, single buffered']
    %12 = vsyncpa [#allocation3], 0
    %13 = vsyncpa [#allocation6], 0
    %14 = vsyncpa [#allocation9], 0
    %15 = vsyncpa [#allocation4], 0
    // Predicated region
    $region2: #{net_forward.1} parent=1 // pred_check
      _
    $region3: #{net_forward.1} parent=1 // pred_check_branch
      %17 = sbr.rel (0) target = $region5
    $region4: #{net_forward.1} parent=1 // pred_region
      _
    $region5: #{net_forward.1} parent=1 // pred_fallthru
      _
    // Predicated region
    $region6: #{net_forward.1} parent=1 // pred_check
      _
    $region7: #{net_forward.1} parent=1 // pred_check_branch
      %19 = sbr.rel (0) target = $region9
    $region8: #{net_forward.1} parent=1 // pred_region
      %s21 = ssub.s32 188416, 188416
      %22 = vsyncadd [#allocation3], %s21
      %s23 = sshll.u32 [#allocation2], 4
      %s24 = int_to_ptr.vmem [resolvable:$true] %s23
      %29 = dma.hbm_to_vmem [thread:$0]  %s1, 188416, %s24, [#allocation3], 256, 256, 16
    $region9: #{net_forward.1} parent=1 // pred_fallthru
      _
    // Predicated region
    $region10: #{net_forward.1} parent=1 // pred_check
      _
    $region11: #{net_forward.1} parent=1 // pred_check_branch
      %31 = sbr.rel (0) target = $region13
    $region12: #{net_forward.1} parent=1 // pred_region
      %s33 = ssub.s32 768, 768
      %34 = vsyncadd [#allocation6], %s33
      %s35 = sshll.u32 [#allocation5], 4
      %s36 = int_to_ptr.vmem [resolvable:$true] %s35
      %41 = dma.hbm_to_vmem [thread:$0]  %s2, 768, %s36, [#allocation6], 256, 256, 16
    $region13: #{net_forward.1} parent=1 // pred_fallthru
      _
    // Predicated region
    $region14: #{net_forward.1} parent=1 // pred_check
      _
    $region15: #{net_forward.1} parent=1 // pred_check_branch
      %43 = sbr.rel (0) target = $region17
    $region16: #{net_forward.1} parent=1 // pred_region
      %s45 = ssub.s32 768, 768
      %46 = vsyncadd [#allocation6], %s45
      %s47 = sshll.u32 [#allocation7], 4
      %s48 = int_to_ptr.vmem [resolvable:$true] %s47
      %53 = dma.hbm_to_vmem [thread:$0]  %s3, 768, %s48, [#allocation6], 256, 256, 16
    $region17: #{net_forward.1} parent=1 // pred_fallthru
      _
    // Predicated region
    $region18: #{net_forward.1} parent=1 // pred_check
      _
    $region19: #{net_forward.1} parent=1 // pred_check_branch
      %55 = sbr.rel (0) target = $region21
    $region20: #{net_forward.1} parent=1 // pred_region
      %s57 = ssub.s32 64, 64
      %58 = vsyncadd [#allocation9], %s57
      %s60 = sshll.u32 [#allocation8], 4
      %s61 = int_to_ptr.vmem [resolvable:$true] %s60
      %63 = dma.hbm_to_vmem [thread:$0]  %s4, 64, %s61, [#allocation9]
    $region21: #{net_forward.1} parent=1 // pred_fallthru
      _
    // Predicated region
    $region22: #{net_forward.1} parent=1 // pred_check
      _
    $region23: #{net_forward.1} parent=1 // pred_check_branch
      %65 = sbr.rel (0) target = $region25
    $region24: #{net_forward.1} parent=1 // pred_region
      %66 = dma.done [#allocation3], 188416
    $region25: #{net_forward.1} parent=1 // pred_fallthru
      _
    // Predicated region
    $region26: #{net_forward.1} parent=1 // pred_check
      _
    $region27: #{net_forward.1} parent=1 // pred_check_branch
      %68 = sbr.rel (0) target = $region29
    $region28: #{net_forward.1} parent=1 // pred_region
      %69 = dma.done [#allocation6], 768
    $region29: #{net_forward.1} parent=1 // pred_fallthru
      _
    // Predicated region
    $region30: #{net_forward.1} parent=1 // pred_check
      _
    $region31: #{net_forward.1} parent=1 // pred_check_branch
      %71 = sbr.rel (0) target = $region33
    $region32: #{net_forward.1} parent=1 // pred_region
      %72 = dma.done [#allocation6], 768
    $region33: #{net_forward.1} parent=1 // pred_fallthru
      _
    // Predicated region
    $region34: #{net_forward.1} parent=1 // pred_check
      _
    $region35: #{net_forward.1} parent=1 // pred_check_branch
      %74 = sbr.rel (0) target = $region37
    $region36: #{net_forward.1} parent=1 // pred_region
      %75 = dma.done [#allocation9], 64
    $region37: #{net_forward.1} parent=1 // pred_fallthru
      _
    %v76 = vld [vmem:[%s0] sm:$0xff]
    %v77 = vld [vmem:[%s0 + $0x8] sm:$0xff]
    %v78 = vld [vmem:[#allocation2] sm:$0xff]
    %v79 = vld [vmem:[#allocation2 + $0x8] sm:$0xff]
    %v80 = vld [vmem:[#allocation2 + $0x10] sm:$0xff]
    %v81 = vld [vmem:[#allocation2 + $0x18] sm:$0xff]
    %v82 = vld [vmem:[#allocation2 + $0x20] sm:$0xff]
    %v83 = vld [vmem:[#allocation2 + $0x28] sm:$0xff]
    %v84 = vld [vmem:[#allocation2 + $0x30] sm:$0xff]
    %v85 = vld [vmem:[#allocation2 + $0x38] sm:$0xff]
    %v86 = vld [vmem:[#allocation2 + $0x40] sm:$0xff]
    %v87 = vld [vmem:[#allocation2 + $0x48] sm:$0xff]
    %v88 = vld [vmem:[#allocation2 + $0x50] sm:$0xff]
    %v89 = vld [vmem:[#allocation2 + $0x58] sm:$0xff]
    %v90 = vld [vmem:[#allocation2 + $0x60] sm:$0xff]
    %v91 = vld [vmem:[#allocation2 + $0x68] sm:$0xff]
    %v92 = vld [vmem:[#allocation2 + $0x70] sm:$0xff]
    %v93 = vld [vmem:[#allocation2 + $0x78] sm:$0xff]
    %v94 = vld [vmem:[#allocation2 + $0x80] sm:$0xff]
    %v95 = vld [vmem:[#allocation2 + $0x88] sm:$0xff]
    %v96 = vld [vmem:[#allocation2 + $0x90] sm:$0xff]
    %v97 = vld [vmem:[#allocation2 + $0x98] sm:$0xff]
    %v98 = vld [vmem:[#allocation2 + $0xa0] sm:$0xff]
    %v99 = vld [vmem:[#allocation2 + $0xa8] sm:$0xff]
    %v100 = vld [vmem:[#allocation2 + $0xb0] sm:$0xff]
    %v101 = vld [vmem:[#allocation2 + $0xb8] sm:$0xff]
    %v102 = vld [vmem:[#allocation2 + $0xc0] sm:$0xff]
    %v103 = vld [vmem:[#allocation2 + $0xc8] sm:$0xff]
    %v104 = vld [vmem:[#allocation2 + $0xd0] sm:$0xff]
    %v105 = vld [vmem:[#allocation2 + $0xd8] sm:$0xff]
    %v106 = vld [vmem:[#allocation2 + $0xe0] sm:$0xff]
    %v107 = vld [vmem:[#allocation2 + $0xe8] sm:$0xff]
    %v108 = vld [vmem:[#allocation2 + $0xf0] sm:$0xff]
    %v109 = vld [vmem:[#allocation2 + $0xf8] sm:$0xff]
    %v110 = vld [vmem:[#allocation2 + $0x100] sm:$0xff]
    %v111 = vld [vmem:[#allocation2 + $0x108] sm:$0xff]
    %v112 = vld [vmem:[#allocation2 + $0x110] sm:$0xff]
    %v113 = vld [vmem:[#allocation2 + $0x118] sm:$0xff]
    %v114 = vld [vmem:[#allocation2 + $0x120] sm:$0xff]
    %v115 = vld [vmem:[#allocation2 + $0x128] sm:$0xff]
    %v116 = vld [vmem:[#allocation2 + $0x130] sm:$0xff]
    %v117 = vld [vmem:[#allocation2 + $0x138] sm:$0xff]
    %v118 = vld [vmem:[#allocation2 + $0x140] sm:$0xff]
    %v119 = vld [vmem:[#allocation2 + $0x148] sm:$0xff]
    %v120 = vld [vmem:[#allocation2 + $0x150] sm:$0xff]
    %v121 = vld [vmem:[#allocation2 + $0x158] sm:$0xff]
    %v122 = vld [vmem:[#allocation2 + $0x160] sm:$0xff]
    %v123 = vld [vmem:[#allocation2 + $0x168] sm:$0xff]
    %v124 = vld [vmem:[#allocation2 + $0x170] sm:$0xff]
    %v125 = vld [vmem:[#allocation2 + $0x178] sm:$0xff]
    %v126 = vld [vmem:[#allocation2 + $0x180] sm:$0xff]
    %v127 = vld [vmem:[#allocation2 + $0x188] sm:$0xff]
    %v128 = vld [vmem:[#allocation2 + $0x190] sm:$0xff]
    %v129 = vld [vmem:[#allocation2 + $0x198] sm:$0xff]
    %v130 = vld [vmem:[#allocation2 + $0x1a0] sm:$0xff]
    %v131 = vld [vmem:[#allocation2 + $0x1a8] sm:$0xff]
    %v132 = vld [vmem:[#allocation2 + $0x1b0] sm:$0xff]
    %v133 = vld [vmem:[#allocation2 + $0x1b8] sm:$0xff]
    %v134 = vld [vmem:[#allocation2 + $0x1c0] sm:$0xff]
    %v135 = vld [vmem:[#allocation2 + $0x1c8] sm:$0xff]
    %v136 = vld [vmem:[#allocation2 + $0x1d0] sm:$0xff]
    %v137 = vld [vmem:[#allocation2 + $0x1d8] sm:$0xff]
    %v138 = vld [vmem:[#allocation2 + $0x1e0] sm:$0xff]
    %v139 = vld [vmem:[#allocation2 + $0x1e8] sm:$0xff]
    %v140 = vld [vmem:[#allocation2 + $0x1f0] sm:$0xff]
    %v141 = vld [vmem:[#allocation2 + $0x1f8] sm:$0xff]
    %142 = vmatprep.subr.mxu0 %v79
    %143 = vmatpush1.msra.mxu0 %v78
    %144 = vmatprep.subr.mxu0 %v81
    %145 = vmatpush1.msra.mxu0 %v80
    %146 = vmatprep.subr.mxu0 %v83
    %147 = vmatpush1.msra.mxu0 %v82
    %148 = vmatprep.subr.mxu0 %v85
    %149 = vmatpush1.msra.mxu0 %v84
    %150 = vmatprep.subr.mxu0 %v87
    %151 = vmatpush1.msra.mxu0 %v86
    %152 = vmatprep.subr.mxu0 %v89
    %153 = vmatpush1.msra.mxu0 %v88
    %154 = vmatprep.subr.mxu0 %v91
    %155 = vmatpush1.msra.mxu0 %v90
    %156 = vmatprep.subr.mxu0 %v93
    %157 = vmatpush1.msra.mxu0 %v92
    %158 = vmatprep.subr.mxu0 %v95
    %159 = vmatpush1.msra.mxu0 %v94
    %160 = vmatprep.subr.mxu0 %v97
    %161 = vmatpush1.msra.mxu0 %v96
    %162 = vmatprep.subr.mxu0 %v99
    %163 = vmatpush1.msra.mxu0 %v98
    %164 = vmatprep.subr.mxu0 %v101
    %165 = vmatpush1.msra.mxu0 %v100
    %166 = vmatprep.subr.mxu0 %v103
    %167 = vmatpush1.msra.mxu0 %v102
    %168 = vmatprep.subr.mxu0 %v105
    %169 = vmatpush1.msra.mxu0 %v104
    %170 = vmatprep.subr.mxu0 %v107
    %171 = vmatpush1.msra.mxu0 %v106
    %172 = vmatprep.subr.mxu0 %v109
    %173 = vmatpush1.msra.mxu0 %v108
    %174 = vmatprep.subr.mxu0 %v111
    %175 = vmatpush1.msra.mxu0 %v110
    %176 = vmatprep.subr.mxu0 %v113
    %177 = vmatpush1.msra.mxu0 %v112
    %178 = vmatprep.subr.mxu0 %v115
    %179 = vmatpush1.msra.mxu0 %v114
    %180 = vmatprep.subr.mxu0 %v117
    %181 = vmatpush1.msra.mxu0 %v116
    %182 = vmatprep.subr.mxu0 %v119
    %183 = vmatpush1.msra.mxu0 %v118
    %184 = vmatprep.subr.mxu0 %v121
    %185 = vmatpush1.msra.mxu0 %v120
    %186 = vmatprep.subr.mxu0 %v123
    %187 = vmatpush1.msra.mxu0 %v122
    %188 = vmatprep.subr.mxu0 %v125
    %189 = vmatpush1.msra.mxu0 %v124
    %190 = vmatprep.subr.mxu0 %v127
    %191 = vmatpush1.msra.mxu0 %v126
    %192 = vmatprep.subr.mxu0 %v129
    %193 = vmatpush1.msra.mxu0 %v128
    %194 = vmatprep.subr.mxu0 %v131
    %195 = vmatpush1.msra.mxu0 %v130
    %196 = vmatprep.subr.mxu0 %v133
    %197 = vmatpush1.msra.mxu0 %v132
    %198 = vmatprep.subr.mxu0 %v135
    %199 = vmatpush1.msra.mxu0 %v134
    %200 = vmatprep.subr.mxu0 %v137
    %201 = vmatpush1.msra.mxu0 %v136
    %202 = vmatprep.subr.mxu0 %v139
    %203 = vmatpush1.msra.mxu0 %v138
    %204 = vmatprep.subr.mxu0 %v141
    %205 = vmatpush1.msra.mxu0 %v140
    %206 = vmatprep.mubr.f32.mxu0 %v77
    %207 = vmatmul.mubr.f32.gmra.mrb[0].mxu0 %v76
    %v208 = vpop.f32.mrb[0].mxu0
    %v209 = vadd.f32 0.0, %v208
    %v210 = vpop.f32.mrb[0].mxu0
    %v211 = vadd.f32 0.0, %v210
    %212 = vdwg.mxu0
    %v213 = vrot.slane %v209, 4
    %v214 = vadd.f32 %v209, %v213
    %v215 = vrot.slane %v214, 2
    %v216 = vadd.f32 %v214, %v215
    %v217 = vrot.slane %v216, 1
    %v218 = vadd.f32 %v216, %v217
    %v219 = vrot.slane %v211, 4
    %v220 = vadd.f32 %v211, %v219
    %v221 = vrot.slane %v220, 2
    %v222 = vadd.f32 %v220, %v221
    %v223 = vrot.slane %v222, 1
    %v224 = vadd.f32 %v222, %v223
    %v225 = vrcp.pop 8.0
    %v226 = vmul.f32 %v218, %v225
    %v227 = vmul.f32 %v224, %v225
    %v228 = vmul.f32 %v209, %v209
    %v229 = vmul.f32 %v211, %v211
    %v230 = vrot.slane %v228, 4
    %v231 = vadd.f32 %v228, %v230
    %v232 = vrot.slane %v231, 2
    %v233 = vadd.f32 %v231, %v232
    %v234 = vrot.slane %v233, 1
    %v235 = vadd.f32 %v233, %v234
    %v236 = vrot.slane %v229, 4
    %v237 = vadd.f32 %v229, %v236
    %v238 = vrot.slane %v237, 2
    %v239 = vadd.f32 %v237, %v238
    %v240 = vrot.slane %v239, 1
    %v241 = vadd.f32 %v239, %v240
    %v242 = vmul.f32 %v235, %v225
    %v243 = vmul.f32 %v241, %v225
    %v244 = vmul.f32 %v226, %v226
    %v245 = vmul.f32 %v227, %v227
    %v246 = vsub.f32 %v242, %v244
    %v247 = vsub.f32 %v243, %v245
    %v248 = vadd.f32 %v246, 1e-05
    %v249 = vadd.f32 %v247, 1e-05
    %v250 = vrsqrt.pop %v248
    %v251 = vrsqrt.pop %v249
    %v252 = vld [vmem:[#allocation5] ss:$8 sm:$0x3]
    %v253 = vld [vmem:[#allocation7] ss:$8 sm:$0x3]
    %v254 = vsub.f32 %v209, %v226
    %v255 = vsub.f32 %v211, %v227
    %v257 = vlaneseq
    %v258 = vshrl.u32 %v257, 7
    %v259 = vsub.s32 0, %v258
    %v260 = vrot.slane %v252, %v259
    %v261 = vlaneseq
    %v262 = vshrl.u32 %v261, 7
    %v263 = vsub.s32 1, %v262
    %v264 = vrot.slane %v252, %v263
    %v267 = vmul.f32 %v250, %v260
    %v268 = vmul.f32 %v251, %v264
    %v269 = vlaneseq
    %v270 = vshrl.u32 %v269, 7
    %v271 = vsub.s32 0, %v270
    %v272 = vrot.slane %v267, %v271
    %v273 = vlaneseq
    %v274 = vshrl.u32 %v273, 7
    %v275 = vsub.s32 0, %v274
    %v276 = vrot.slane %v268, %v275
    %v277 = vmul.f32 %v254, %v272
    %v278 = vmul.f32 %v255, %v276
    %v280 = vlaneseq
    %v281 = vshrl.u32 %v280, 7
    %v282 = vsub.s32 0, %v281
    %v283 = vrot.slane %v253, %v282
    %v284 = vlaneseq
    %v285 = vshrl.u32 %v284, 7
    %v286 = vsub.s32 1, %v285
    %v287 = vrot.slane %v253, %v286
    %v290 = vadd.f32 %v277, %v283
    %v291 = vadd.f32 %v278, %v287
    %v292 = vmul.f32 %v290, 0.5
    %v293 = vmul.f32 %v291, 0.5
    %v294 = vmul.f32 %v290, 0.70710677
    %v295 = vmul.f32 %v291, 0.70710677
    %v296 = verf.f32.pop %v294
    %v297 = verf.f32.pop %v295
    %v298 = vadd.f32 %v296, 1.0
    %v299 = vadd.f32 %v297, 1.0
    %v300 = vmul.f32 %v292, %v298
    %v301 = vmul.f32 %v293, %v299
    %s302 = scalar_lea.vmem [#allocation2], 512
    %v303 = vld [vmem:[%s302] sm:$0xff]
    %v304 = vld [vmem:[%s302 + $0x8] sm:$0xff]
    %v305 = vld [vmem:[%s302 + $0x10] sm:$0xff]
    %v306 = vld [vmem:[%s302 + $0x18] sm:$0xff]
    %v307 = vld [vmem:[%s302 + $0x20] sm:$0xff]
    %v308 = vld [vmem:[%s302 + $0x28] sm:$0xff]
    %v309 = vld [vmem:[%s302 + $0x30] sm:$0xff]
    %v310 = vld [vmem:[%s302 + $0x38] sm:$0xff]
    %v311 = vld [vmem:[%s302 + $0x40] sm:$0xff]
    %v312 = vld [vmem:[%s302 + $0x48] sm:$0xff]
    %v313 = vld [vmem:[%s302 + $0x50] sm:$0xff]
    %v314 = vld [vmem:[%s302 + $0x58] sm:$0xff]
    %v315 = vld [vmem:[%s302 + $0x60] sm:$0xff]
    %v316 = vld [vmem:[%s302 + $0x68] sm:$0xff]
    %v317 = vld [vmem:[%s302 + $0x70] sm:$0xff]
    %v318 = vld [vmem:[%s302 + $0x78] sm:$0xff]
    %v319 = vld [vmem:[%s302 + $0x80] sm:$0xff]
    %v320 = vld [vmem:[%s302 + $0x88] sm:$0xff]
    %v321 = vld [vmem:[%s302 + $0x90] sm:$0xff]
    %v322 = vld [vmem:[%s302 + $0x98] sm:$0xff]
    %v323 = vld [vmem:[%s302 + $0xa0] sm:$0xff]
    %v324 = vld [vmem:[%s302 + $0xa8] sm:$0xff]
    %v325 = vld [vmem:[%s302 + $0xb0] sm:$0xff]
    %v326 = vld [vmem:[%s302 + $0xb8] sm:$0xff]
    %v327 = vld [vmem:[%s302 + $0xc0] sm:$0xff]
    %v328 = vld [vmem:[%s302 + $0xc8] sm:$0xff]
    %v329 = vld [vmem:[%s302 + $0xd0] sm:$0xff]
    %v330 = vld [vmem:[%s302 + $0xd8] sm:$0xff]
    %v331 = vld [vmem:[%s302 + $0xe0] sm:$0xff]
    %v332 = vld [vmem:[%s302 + $0xe8] sm:$0xff]
    %v333 = vld [vmem:[%s302 + $0xf0] sm:$0xff]
    %v334 = vld [vmem:[%s302 + $0xf8] sm:$0xff]
    %v335 = vld [vmem:[%s302 + $0x100] sm:$0xff]
    %v336 = vld [vmem:[%s302 + $0x108] sm:$0xff]
    %v337 = vld [vmem:[%s302 + $0x110] sm:$0xff]
    %v338 = vld [vmem:[%s302 + $0x118] sm:$0xff]
    %v339 = vld [vmem:[%s302 + $0x120] sm:$0xff]
    %v340 = vld [vmem:[%s302 + $0x128] sm:$0xff]
    %v341 = vld [vmem:[%s302 + $0x130] sm:$0xff]
    %v342 = vld [vmem:[%s302 + $0x138] sm:$0xff]
    %v343 = vld [vmem:[%s302 + $0x140] sm:$0xff]
    %v344 = vld [vmem:[%s302 + $0x148] sm:$0xff]
    %v345 = vld [vmem:[%s302 + $0x150] sm:$0xff]
    %v346 = vld [vmem:[%s302 + $0x158] sm:$0xff]
    %v347 = vld [vmem:[%s302 + $0x160] sm:$0xff]
    %v348 = vld [vmem:[%s302 + $0x168] sm:$0xff]
    %v349 = vld [vmem:[%s302 + $0x170] sm:$0xff]
    %v350 = vld [vmem:[%s302 + $0x178] sm:$0xff]
    %v351 = vld [vmem:[%s302 + $0x180] sm:$0xff]
    %v352 = vld [vmem:[%s302 + $0x188] sm:$0xff]
    %v353 = vld [vmem:[%s302 + $0x190] sm:$0xff]
    %v354 = vld [vmem:[%s302 + $0x198] sm:$0xff]
    %v355 = vld [vmem:[%s302 + $0x1a0] sm:$0xff]
    %v356 = vld [vmem:[%s302 + $0x1a8] sm:$0xff]
    %v357 = vld [vmem:[%s302 + $0x1b0] sm:$0xff]
    %v358 = vld [vmem:[%s302 + $0x1b8] sm:$0xff]
    %v359 = vld [vmem:[%s302 + $0x1c0] sm:$0xff]
    %v360 = vld [vmem:[%s302 + $0x1c8] sm:$0xff]
    %v361 = vld [vmem:[%s302 + $0x1d0] sm:$0xff]
    %v362 = vld [vmem:[%s302 + $0x1d8] sm:$0xff]
    %v363 = vld [vmem:[%s302 + $0x1e0] sm:$0xff]
    %v364 = vld [vmem:[%s302 + $0x1e8] sm:$0xff]
    %v365 = vld [vmem:[%s302 + $0x1f0] sm:$0xff]
    %v366 = vld [vmem:[%s302 + $0x1f8] sm:$0xff]
    %367 = vmatprep.subr.mxu0 %v304
    %368 = vmatpush1.msra.mxu0 %v303
    %369 = vmatprep.subr.mxu0 %v306
    %370 = vmatpush1.msra.mxu0 %v305
    %371 = vmatprep.subr.mxu0 %v308
    %372 = vmatpush1.msra.mxu0 %v307
    %373 = vmatprep.subr.mxu0 %v310
    %374 = vmatpush1.msra.mxu0 %v309
    %375 = vmatprep.subr.mxu0 %v312
    %376 = vmatpush1.msra.mxu0 %v311
    %377 = vmatprep.subr.mxu0 %v314
    %378 = vmatpush1.msra.mxu0 %v313
    %379 = vmatprep.subr.mxu0 %v316
    %380 = vmatpush1.msra.mxu0 %v315
    %381 = vmatprep.subr.mxu0 %v318
    %382 = vmatpush1.msra.mxu0 %v317
    %383 = vmatprep.subr.mxu0 %v320
    %384 = vmatpush1.msra.mxu0 %v319
    %385 = vmatprep.subr.mxu0 %v322
    %386 = vmatpush1.msra.mxu0 %v321
    %387 = vmatprep.subr.mxu0 %v324
    %388 = vmatpush1.msra.mxu0 %v323
    %389 = vmatprep.subr.mxu0 %v326
    %390 = vmatpush1.msra.mxu0 %v325
    %391 = vmatprep.subr.mxu0 %v328
    %392 = vmatpush1.msra.mxu0 %v327
    %393 = vmatprep.subr.mxu0 %v330
    %394 = vmatpush1.msra.mxu0 %v329
    %395 = vmatprep.subr.mxu0 %v332
    %396 = vmatpush1.msra.mxu0 %v331
    %397 = vmatprep.subr.mxu0 %v334
    %398 = vmatpush1.msra.mxu0 %v333
    %399 = vmatprep.subr.mxu0 %v336
    %400 = vmatpush1.msra.mxu0 %v335
    %401 = vmatprep.subr.mxu0 %v338
    %402 = vmatpush1.msra.mxu0 %v337
    %403 = vmatprep.subr.mxu0 %v340
    %404 = vmatpush1.msra.mxu0 %v339
    %405 = vmatprep.subr.mxu0 %v342
    %406 = vmatpush1.msra.mxu0 %v341
    %407 = vmatprep.subr.mxu0 %v344
    %408 = vmatpush1.msra.mxu0 %v343
    %409 = vmatprep.subr.mxu0 %v346
    %410 = vmatpush1.msra.mxu0 %v345
    %411 = vmatprep.subr.mxu0 %v348
    %412 = vmatpush1.msra.mxu0 %v347
    %413 = vmatprep.subr.mxu0 %v350
    %414 = vmatpush1.msra.mxu0 %v349
    %415 = vmatprep.subr.mxu0 %v352
    %416 = vmatpush1.msra.mxu0 %v351
    %417 = vmatprep.subr.mxu0 %v354
    %418 = vmatpush1.msra.mxu0 %v353
    %419 = vmatprep.subr.mxu0 %v356
    %420 = vmatpush1.msra.mxu0 %v355
    %421 = vmatprep.subr.mxu0 %v358
    %422 = vmatpush1.msra.mxu0 %v357
    %423 = vmatprep.subr.mxu0 %v360
    %424 = vmatpush1.msra.mxu0 %v359
    %425 = vmatprep.subr.mxu0 %v362
    %426 = vmatpush1.msra.mxu0 %v361
    %427 = vmatprep.subr.mxu0 %v364
    %428 = vmatpush1.msra.mxu0 %v363
    %429 = vmatprep.subr.mxu0 %v366
    %430 = vmatpush1.msra.mxu0 %v365
    %431 = vmatprep.mubr.f32.mxu0 %v301
    %432 = vmatmul.mubr.f32.gmra.mrb[0].mxu0 %v300
    %v433 = vpop.f32.mrb[0].mxu0
    %v434 = vadd.f32 0.0, %v433
    %v435 = vpop.f32.mrb[0].mxu0
    %v436 = vadd.f32 0.0, %v435
    %437 = vdwg.mxu0
    %v438 = vrot.slane %v434, 4
    %v439 = vadd.f32 %v434, %v438
    %v440 = vrot.slane %v439, 2
    %v441 = vadd.f32 %v439, %v440
    %v442 = vrot.slane %v441, 1
    %v443 = vadd.f32 %v441, %v442
    %v444 = vrot.slane %v436, 4
    %v445 = vadd.f32 %v436, %v444
    %v446 = vrot.slane %v445, 2
    %v447 = vadd.f32 %v445, %v446
    %v448 = vrot.slane %v447, 1
    %v449 = vadd.f32 %v447, %v448
    %v450 = vmul.f32 %v443, %v225
    %v451 = vmul.f32 %v449, %v225
    %v452 = vmul.f32 %v434, %v434
    %v453 = vmul.f32 %v436, %v436
    %v454 = vrot.slane %v452, 4
    %v455 = vadd.f32 %v452, %v454
    %v456 = vrot.slane %v455, 2
    %v457 = vadd.f32 %v455, %v456
    %v458 = vrot.slane %v457, 1
    %v459 = vadd.f32 %v457, %v458
    %v460 = vrot.slane %v453, 4
    %v461 = vadd.f32 %v453, %v460
    %v462 = vrot.slane %v461, 2
    %v463 = vadd.f32 %v461, %v462
    %v464 = vrot.slane %v463, 1
    %v465 = vadd.f32 %v463, %v464
    %v466 = vmul.f32 %v459, %v225
    %v467 = vmul.f32 %v465, %v225
    %v468 = vmul.f32 %v450, %v450
    %v469 = vmul.f32 %v451, %v451
    %v470 = vsub.f32 %v466, %v468
    %v471 = vsub.f32 %v467, %v469
    %v472 = vadd.f32 %v470, 1e-05
    %v473 = vadd.f32 %v471, 1e-05
    %v474 = vrsqrt.pop %v472
    %v475 = vrsqrt.pop %v473
    %s476 = scalar_lea.vmem [#allocation5], 1
    %v477 = vld [vmem:[%s476] ss:$8 sm:$0x3]
    %s478 = scalar_lea.vmem [#allocation7], 1
    %v479 = vld [vmem:[%s478] ss:$8 sm:$0x3]
    %v480 = vsub.f32 %v434, %v450
    %v481 = vsub.f32 %v436, %v451
    %v483 = vlaneseq
    %v484 = vshrl.u32 %v483, 7
    %v485 = vsub.s32 0, %v484
    %v486 = vrot.slane %v477, %v485
    %v487 = vlaneseq
    %v488 = vshrl.u32 %v487, 7
    %v489 = vsub.s32 1, %v488
    %v490 = vrot.slane %v477, %v489
    %v493 = vmul.f32 %v474, %v486
    %v494 = vmul.f32 %v475, %v490
    %v495 = vlaneseq
    %v496 = vshrl.u32 %v495, 7
    %v497 = vsub.s32 0, %v496
    %v498 = vrot.slane %v493, %v497
    %v499 = vlaneseq
    %v500 = vshrl.u32 %v499, 7
    %v501 = vsub.s32 0, %v500
    %v502 = vrot.slane %v494, %v501
    %v503 = vmul.f32 %v480, %v498
    %v504 = vmul.f32 %v481, %v502
    %v506 = vlaneseq
    %v507 = vshrl.u32 %v506, 7
    %v508 = vsub.s32 0, %v507
    %v509 = vrot.slane %v479, %v508
    %v510 = vlaneseq
    %v511 = vshrl.u32 %v510, 7
    %v512 = vsub.s32 1, %v511
    %v513 = vrot.slane %v479, %v512
    %v516 = vadd.f32 %v503, %v509
    %v517 = vadd.f32 %v504, %v513
    %v518 = vmul.f32 %v516, 0.5
    %v519 = vmul.f32 %v517, 0.5
    %v520 = vmul.f32 %v516, 0.70710677
    %v521 = vmul.f32 %v517, 0.70710677
    %v522 = verf.f32.pop %v520
    %v523 = verf.f32.pop %v521
    %v524 = vadd.f32 %v522, 1.0
    %v525 = vadd.f32 %v523, 1.0
    %v526 = vmul.f32 %v518, %v524
    %v527 = vmul.f32 %v519, %v525
    %s528 = scalar_lea.vmem [#allocation2], 1024
    %v529 = vld [vmem:[%s528] sm:$0xff]
    %v530 = vld [vmem:[%s528 + $0x8] sm:$0xff]
    %v531 = vld [vmem:[%s528 + $0x10] sm:$0xff]
    %v532 = vld [vmem:[%s528 + $0x18] sm:$0xff]
    %v533 = vld [vmem:[%s528 + $0x20] sm:$0xff]
    %v534 = vld [vmem:[%s528 + $0x28] sm:$0xff]
    %v535 = vld [vmem:[%s528 + $0x30] sm:$0xff]
    %v536 = vld [vmem:[%s528 + $0x38] sm:$0xff]
    %v537 = vld [vmem:[%s528 + $0x40] sm:$0xff]
    %v538 = vld [vmem:[%s528 + $0x48] sm:$0xff]
    %v539 = vld [vmem:[%s528 + $0x50] sm:$0xff]
    %v540 = vld [vmem:[%s528 + $0x58] sm:$0xff]
    %v541 = vld [vmem:[%s528 + $0x60] sm:$0xff]
    %v542 = vld [vmem:[%s528 + $0x68] sm:$0xff]
    %v543 = vld [vmem:[%s528 + $0x70] sm:$0xff]
    %v544 = vld [vmem:[%s528 + $0x78] sm:$0xff]
    %v545 = vld [vmem:[%s528 + $0x80] sm:$0xff]
    %v546 = vld [vmem:[%s528 + $0x88] sm:$0xff]
    %v547 = vld [vmem:[%s528 + $0x90] sm:$0xff]
    %v548 = vld [vmem:[%s528 + $0x98] sm:$0xff]
    %v549 = vld [vmem:[%s528 + $0xa0] sm:$0xff]
    %v550 = vld [vmem:[%s528 + $0xa8] sm:$0xff]
    %v551 = vld [vmem:[%s528 + $0xb0] sm:$0xff]
    %v552 = vld [vmem:[%s528 + $0xb8] sm:$0xff]
    %v553 = vld [vmem:[%s528 + $0xc0] sm:$0xff]
    %v554 = vld [vmem:[%s528 + $0xc8] sm:$0xff]
    %v555 = vld [vmem:[%s528 + $0xd0] sm:$0xff]
    %v556 = vld [vmem:[%s528 + $0xd8] sm:$0xff]
    %v557 = vld [vmem:[%s528 + $0xe0] sm:$0xff]
    %v558 = vld [vmem:[%s528 + $0xe8] sm:$0xff]
    %v559 = vld [vmem:[%s528 + $0xf0] sm:$0xff]
    %v560 = vld [vmem:[%s528 + $0xf8] sm:$0xff]
    %v561 = vld [vmem:[%s528 + $0x100] sm:$0xff]
    %v562 = vld [vmem:[%s528 + $0x108] sm:$0xff]
    %v563 = vld [vmem:[%s528 + $0x110] sm:$0xff]
    %v564 = vld [vmem:[%s528 + $0x118] sm:$0xff]
    %v565 = vld [vmem:[%s528 + $0x120] sm:$0xff]
    %v566 = vld [vmem:[%s528 + $0x128] sm:$0xff]
    %v567 = vld [vmem:[%s528 + $0x130] sm:$0xff]
    %v568 = vld [vmem:[%s528 + $0x138] sm:$0xff]
    %v569 = vld [vmem:[%s528 + $0x140] sm:$0xff]
    %v570 = vld [vmem:[%s528 + $0x148] sm:$0xff]
    %v571 = vld [vmem:[%s528 + $0x150] sm:$0xff]
    %v572 = vld [vmem:[%s528 + $0x158] sm:$0xff]
    %v573 = vld [vmem:[%s528 + $0x160] sm:$0xff]
    %v574 = vld [vmem:[%s528 + $0x168] sm:$0xff]
    %v575 = vld [vmem:[%s528 + $0x170] sm:$0xff]
    %v576 = vld [vmem:[%s528 + $0x178] sm:$0xff]
    %v577 = vld [vmem:[%s528 + $0x180] sm:$0xff]
    %v578 = vld [vmem:[%s528 + $0x188] sm:$0xff]
    %v579 = vld [vmem:[%s528 + $0x190] sm:$0xff]
    %v580 = vld [vmem:[%s528 + $0x198] sm:$0xff]
    %v581 = vld [vmem:[%s528 + $0x1a0] sm:$0xff]
    %v582 = vld [vmem:[%s528 + $0x1a8] sm:$0xff]
    %v583 = vld [vmem:[%s528 + $0x1b0] sm:$0xff]
    %v584 = vld [vmem:[%s528 + $0x1b8] sm:$0xff]
    %v585 = vld [vmem:[%s528 + $0x1c0] sm:$0xff]
    %v586 = vld [vmem:[%s528 + $0x1c8] sm:$0xff]
    %v587 = vld [vmem:[%s528 + $0x1d0] sm:$0xff]
    %v588 = vld [vmem:[%s528 + $0x1d8] sm:$0xff]
    %v589 = vld [vmem:[%s528 + $0x1e0] sm:$0xff]
    %v590 = vld [vmem:[%s528 + $0x1e8] sm:$0xff]
    %v591 = vld [vmem:[%s528 + $0x1f0] sm:$0xff]
    %v592 = vld [vmem:[%s528 + $0x1f8] sm:$0xff]
    %593 = vmatprep.subr.mxu0 %v530
    %594 = vmatpush1.msra.mxu0 %v529
    %595 = vmatprep.subr.mxu0 %v532
    %596 = vmatpush1.msra.mxu0 %v531
    %597 = vmatprep.subr.mxu0 %v534
    %598 = vmatpush1.msra.mxu0 %v533
    %599 = vmatprep.subr.mxu0 %v536
    %600 = vmatpush1.msra.mxu0 %v535
    %601 = vmatprep.subr.mxu0 %v538
    %602 = vmatpush1.msra.mxu0 %v537
    %603 = vmatprep.subr.mxu0 %v540
    %604 = vmatpush1.msra.mxu0 %v539
    %605 = vmatprep.subr.mxu0 %v542
    %606 = vmatpush1.msra.mxu0 %v541
    %607 = vmatprep.subr.mxu0 %v544
    %608 = vmatpush1.msra.mxu0 %v543
    %609 = vmatprep.subr.mxu0 %v546
    %610 = vmatpush1.msra.mxu0 %v545
    %611 = vmatprep.subr.mxu0 %v548
    %612 = vmatpush1.msra.mxu0 %v547
    %613 = vmatprep.subr.mxu0 %v550
    %614 = vmatpush1.msra.mxu0 %v549
    %615 = vmatprep.subr.mxu0 %v552
    %616 = vmatpush1.msra.mxu0 %v551
    %617 = vmatprep.subr.mxu0 %v554
    %618 = vmatpush1.msra.mxu0 %v553
    %619 = vmatprep.subr.mxu0 %v556
    %620 = vmatpush1.msra.mxu0 %v555
    %621 = vmatprep.subr.mxu0 %v558
    %622 = vmatpush1.msra.mxu0 %v557
    %623 = vmatprep.subr.mxu0 %v560
    %624 = vmatpush1.msra.mxu0 %v559
    %625 = vmatprep.subr.mxu0 %v562
    %626 = vmatpush1.msra.mxu0 %v561
    %627 = vmatprep.subr.mxu0 %v564
    %628 = vmatpush1.msra.mxu0 %v563
    %629 = vmatprep.subr.mxu0 %v566
    %630 = vmatpush1.msra.mxu0 %v565
    %631 = vmatprep.subr.mxu0 %v568
    %632 = vmatpush1.msra.mxu0 %v567
    %633 = vmatprep.subr.mxu0 %v570
    %634 = vmatpush1.msra.mxu0 %v569
    %635 = vmatprep.subr.mxu0 %v572
    %636 = vmatpush1.msra.mxu0 %v571
    %637 = vmatprep.subr.mxu0 %v574
    %638 = vmatpush1.msra.mxu0 %v573
    %639 = vmatprep.subr.mxu0 %v576
    %640 = vmatpush1.msra.mxu0 %v575
    %641 = vmatprep.subr.mxu0 %v578
    %642 = vmatpush1.msra.mxu0 %v577
    %643 = vmatprep.subr.mxu0 %v580
    %644 = vmatpush1.msra.mxu0 %v579
    %645 = vmatprep.subr.mxu0 %v582
    %646 = vmatpush1.msra.mxu0 %v581
    %647 = vmatprep.subr.mxu0 %v584
    %648 = vmatpush1.msra.mxu0 %v583
    %649 = vmatprep.subr.mxu0 %v586
    %650 = vmatpush1.msra.mxu0 %v585
    %651 = vmatprep.subr.mxu0 %v588
    %652 = vmatpush1.msra.mxu0 %v587
    %653 = vmatprep.subr.mxu0 %v590
    %654 = vmatpush1.msra.mxu0 %v589
    %655 = vmatprep.subr.mxu0 %v592
    %656 = vmatpush1.msra.mxu0 %v591
    %657 = vmatprep.mubr.f32.mxu0 %v527
    %658 = vmatmul.mubr.f32.gmra.mrb[0].mxu0 %v526
    %v659 = vpop.f32.mrb[0].mxu0
    %v660 = vadd.f32 0.0, %v659
    %v661 = vpop.f32.mrb[0].mxu0
    %v662 = vadd.f32 0.0, %v661
    %663 = vdwg.mxu0
    %v664 = vrot.slane %v660, 4
    %v665 = vadd.f32 %v660, %v664
    %v666 = vrot.slane %v665, 2
    %v667 = vadd.f32 %v665, %v666
    %v668 = vrot.slane %v667, 1
    %v669 = vadd.f32 %v667, %v668
    %v670 = vrot.slane %v662, 4
    %v671 = vadd.f32 %v662, %v670
    %v672 = vrot.slane %v671, 2
    %v673 = vadd.f32 %v671, %v672
    %v674 = vrot.slane %v673, 1
    %v675 = vadd.f32 %v673, %v674
    %v676 = vmul.f32 %v669, %v225
    %v677 = vmul.f32 %v675, %v225
    %v678 = vmul.f32 %v660, %v660
    %v679 = vmul.f32 %v662, %v662
    %v680 = vrot.slane %v678, 4
    %v681 = vadd.f32 %v678, %v680
    %v682 = vrot.slane %v681, 2
    %v683 = vadd.f32 %v681, %v682
    %v684 = vrot.slane %v683, 1
    %v685 = vadd.f32 %v683, %v684
    %v686 = vrot.slane %v679, 4
    %v687 = vadd.f32 %v679, %v686
    %v688 = vrot.slane %v687, 2
    %v689 = vadd.f32 %v687, %v688
    %v690 = vrot.slane %v689, 1
    %v691 = vadd.f32 %v689, %v690
    %v692 = vmul.f32 %v685, %v225
    %v693 = vmul.f32 %v691, %v225
    %v694 = vmul.f32 %v676, %v676
    %v695 = vmul.f32 %v677, %v677
    %v696 = vsub.f32 %v692, %v694
    %v697 = vsub.f32 %v693, %v695
    %v698 = vadd.f32 %v696, 1e-05
    %v699 = vadd.f32 %v697, 1e-05
    %v700 = vrsqrt.pop %v698
    %v701 = vrsqrt.pop %v699
    %s702 = scalar_lea.vmem [#allocation5], 2
    %v703 = vld [vmem:[%s702] ss:$8 sm:$0x3]
    %s704 = scalar_lea.vmem [#allocation7], 2
    %v705 = vld [vmem:[%s704] ss:$8 sm:$0x3]
    %v706 = vsub.f32 %v660, %v676
    %v707 = vsub.f32 %v662, %v677
    %v709 = vlaneseq
    %v710 = vshrl.u32 %v709, 7
    %v711 = vsub.s32 0, %v710
    %v712 = vrot.slane %v703, %v711
    %v713 = vlaneseq
    %v714 = vshrl.u32 %v713, 7
    %v715 = vsub.s32 1, %v714
    %v716 = vrot.slane %v703, %v715
    %v719 = vmul.f32 %v700, %v712
    %v720 = vmul.f32 %v701, %v716
    %v721 = vlaneseq
    %v722 = vshrl.u32 %v721, 7
    %v723 = vsub.s32 0, %v722
    %v724 = vrot.slane %v719, %v723
    %v725 = vlaneseq
    %v726 = vshrl.u32 %v725, 7
    %v727 = vsub.s32 0, %v726
    %v728 = vrot.slane %v720, %v727
    %v729 = vmul.f32 %v706, %v724
    %v730 = vmul.f32 %v707, %v728
    %v732 = vlaneseq
    %v733 = vshrl.u32 %v732, 7
    %v734 = vsub.s32 0, %v733
    %v735 = vrot.slane %v705, %v734
    %v736 = vlaneseq
    %v737 = vshrl.u32 %v736, 7
    %v738 = vsub.s32 1, %v737
    %v739 = vrot.slane %v705, %v738
    %v742 = vadd.f32 %v729, %v735
    %v743 = vadd.f32 %v730, %v739
    %v744 = vmul.f32 %v742, 0.5
    %v745 = vmul.f32 %v743, 0.5
    %v746 = vmul.f32 %v742, 0.70710677
    %v747 = vmul.f32 %v743, 0.70710677
    %v748 = verf.f32.pop %v746
    %v749 = verf.f32.pop %v747
    %v750 = vadd.f32 %v748, 1.0
    %v751 = vadd.f32 %v749, 1.0
    %v752 = vmul.f32 %v744, %v750
    %v753 = vmul.f32 %v745, %v751
    %s754 = scalar_lea.vmem [#allocation2], 1536
    %v755 = vld [vmem:[%s754] sm:$0xff]
    %v756 = vld [vmem:[%s754 + $0x8] sm:$0xff]
    %v757 = vld [vmem:[%s754 + $0x10] sm:$0xff]
    %v758 = vld [vmem:[%s754 + $0x18] sm:$0xff]
    %v759 = vld [vmem:[%s754 + $0x20] sm:$0xff]
    %v760 = vld [vmem:[%s754 + $0x28] sm:$0xff]
    %v761 = vld [vmem:[%s754 + $0x30] sm:$0xff]
    %v762 = vld [vmem:[%s754 + $0x38] sm:$0xff]
    %v763 = vld [vmem:[%s754 + $0x40] sm:$0xff]
    %v764 = vld [vmem:[%s754 + $0x48] sm:$0xff]
    %v765 = vld [vmem:[%s754 + $0x50] sm:$0xff]
    %v766 = vld [vmem:[%s754 + $0x58] sm:$0xff]
    %v767 = vld [vmem:[%s754 + $0x60] sm:$0xff]
    %v768 = vld [vmem:[%s754 + $0x68] sm:$0xff]
    %v769 = vld [vmem:[%s754 + $0x70] sm:$0xff]
    %v770 = vld [vmem:[%s754 + $0x78] sm:$0xff]
    %v771 = vld [vmem:[%s754 + $0x80] sm:$0xff]
    %v772 = vld [vmem:[%s754 + $0x88] sm:$0xff]
    %v773 = vld [vmem:[%s754 + $0x90] sm:$0xff]
    %v774 = vld [vmem:[%s754 + $0x98] sm:$0xff]
    %v775 = vld [vmem:[%s754 + $0xa0] sm:$0xff]
    %v776 = vld [vmem:[%s754 + $0xa8] sm:$0xff]
    %v777 = vld [vmem:[%s754 + $0xb0] sm:$0xff]
    %v778 = vld [vmem:[%s754 + $0xb8] sm:$0xff]
    %v779 = vld [vmem:[%s754 + $0xc0] sm:$0xff]
    %v780 = vld [vmem:[%s754 + $0xc8] sm:$0xff]
    %v781 = vld [vmem:[%s754 + $0xd0] sm:$0xff]
    %v782 = vld [vmem:[%s754 + $0xd8] sm:$0xff]
    %v783 = vld [vmem:[%s754 + $0xe0] sm:$0xff]
    %v784 = vld [vmem:[%s754 + $0xe8] sm:$0xff]
    %v785 = vld [vmem:[%s754 + $0xf0] sm:$0xff]
    %v786 = vld [vmem:[%s754 + $0xf8] sm:$0xff]
    %v787 = vld [vmem:[%s754 + $0x100] sm:$0xff]
    %v788 = vld [vmem:[%s754 + $0x108] sm:$0xff]
    %v789 = vld [vmem:[%s754 + $0x110] sm:$0xff]
    %v790 = vld [vmem:[%s754 + $0x118] sm:$0xff]
    %v791 = vld [vmem:[%s754 + $0x120] sm:$0xff]
    %v792 = vld [vmem:[%s754 + $0x128] sm:$0xff]
    %v793 = vld [vmem:[%s754 + $0x130] sm:$0xff]
    %v794 = vld [vmem:[%s754 + $0x138] sm:$0xff]
    %v795 = vld [vmem:[%s754 + $0x140] sm:$0xff]
    %v796 = vld [vmem:[%s754 + $0x148] sm:$0xff]
    %v797 = vld [vmem:[%s754 + $0x150] sm:$0xff]
    %v798 = vld [vmem:[%s754 + $0x158] sm:$0xff]
    %v799 = vld [vmem:[%s754 + $0x160] sm:$0xff]
    %v800 = vld [vmem:[%s754 + $0x168] sm:$0xff]
    %v801 = vld [vmem:[%s754 + $0x170] sm:$0xff]
    %v802 = vld [vmem:[%s754 + $0x178] sm:$0xff]
    %v803 = vld [vmem:[%s754 + $0x180] sm:$0xff]
    %v804 = vld [vmem:[%s754 + $0x188] sm:$0xff]
    %v805 = vld [vmem:[%s754 + $0x190] sm:$0xff]
    %v806 = vld [vmem:[%s754 + $0x198] sm:$0xff]
    %v807 = vld [vmem:[%s754 + $0x1a0] sm:$0xff]
    %v808 = vld [vmem:[%s754 + $0x1a8] sm:$0xff]
    %v809 = vld [vmem:[%s754 + $0x1b0] sm:$0xff]
    %v810 = vld [vmem:[%s754 + $0x1b8] sm:$0xff]
    %v811 = vld [vmem:[%s754 + $0x1c0] sm:$0xff]
    %v812 = vld [vmem:[%s754 + $0x1c8] sm:$0xff]
    %v813 = vld [vmem:[%s754 + $0x1d0] sm:$0xff]
    %v814 = vld [vmem:[%s754 + $0x1d8] sm:$0xff]
    %v815 = vld [vmem:[%s754 + $0x1e0] sm:$0xff]
    %v816 = vld [vmem:[%s754 + $0x1e8] sm:$0xff]
    %v817 = vld [vmem:[%s754 + $0x1f0] sm:$0xff]
    %v818 = vld [vmem:[%s754 + $0x1f8] sm:$0xff]
    %819 = vmatprep.subr.mxu0 %v756
    %820 = vmatpush1.msra.mxu0 %v755
    %821 = vmatprep.subr.mxu0 %v758
    %822 = vmatpush1.msra.mxu0 %v757
    %823 = vmatprep.subr.mxu0 %v760
    %824 = vmatpush1.msra.mxu0 %v759
    %825 = vmatprep.subr.mxu0 %v762
    %826 = vmatpush1.msra.mxu0 %v761
    %827 = vmatprep.subr.mxu0 %v764
    %828 = vmatpush1.msra.mxu0 %v763
    %829 = vmatprep.subr.mxu0 %v766
    %830 = vmatpush1.msra.mxu0 %v765
    %831 = vmatprep.subr.mxu0 %v768
    %832 = vmatpush1.msra.mxu0 %v767
    %833 = vmatprep.subr.mxu0 %v770
    %834 = vmatpush1.msra.mxu0 %v769
    %835 = vmatprep.subr.mxu0 %v772
    %836 = vmatpush1.msra.mxu0 %v771
    %837 = vmatprep.subr.mxu0 %v774
    %838 = vmatpush1.msra.mxu0 %v773
    %839 = vmatprep.subr.mxu0 %v776
    %840 = vmatpush1.msra.mxu0 %v775
    %841 = vmatprep.subr.mxu0 %v778
    %842 = vmatpush1.msra.mxu0 %v777
    %843 = vmatprep.subr.mxu0 %v780
    %844 = vmatpush1.msra.mxu0 %v779
    %845 = vmatprep.subr.mxu0 %v782
    %846 = vmatpush1.msra.mxu0 %v781
    %847 = vmatprep.subr.mxu0 %v784
    %848 = vmatpush1.msra.mxu0 %v783
    %849 = vmatprep.subr.mxu0 %v786
    %850 = vmatpush1.msra.mxu0 %v785
    %851 = vmatprep.subr.mxu0 %v788
    %852 = vmatpush1.msra.mxu0 %v787
    %853 = vmatprep.subr.mxu0 %v790
    %854 = vmatpush1.msra.mxu0 %v789
    %855 = vmatprep.subr.mxu0 %v792
    %856 = vmatpush1.msra.mxu0 %v791
    %857 = vmatprep.subr.mxu0 %v794
    %858 = vmatpush1.msra.mxu0 %v793
    %859 = vmatprep.subr.mxu0 %v796
    %860 = vmatpush1.msra.mxu0 %v795
    %861 = vmatprep.subr.mxu0 %v798
    %862 = vmatpush1.msra.mxu0 %v797
    %863 = vmatprep.subr.mxu0 %v800
    %864 = vmatpush1.msra.mxu0 %v799
    %865 = vmatprep.subr.mxu0 %v802
    %866 = vmatpush1.msra.mxu0 %v801
    %867 = vmatprep.subr.mxu0 %v804
    %868 = vmatpush1.msra.mxu0 %v803
    %869 = vmatprep.subr.mxu0 %v806
    %870 = vmatpush1.msra.mxu0 %v805
    %871 = vmatprep.subr.mxu0 %v808
    %872 = vmatpush1.msra.mxu0 %v807
    %873 = vmatprep.subr.mxu0 %v810
    %874 = vmatpush1.msra.mxu0 %v809
    %875 = vmatprep.subr.mxu0 %v812
    %876 = vmatpush1.msra.mxu0 %v811
    %877 = vmatprep.subr.mxu0 %v814
    %878 = vmatpush1.msra.mxu0 %v813
    %879 = vmatprep.subr.mxu0 %v816
    %880 = vmatpush1.msra.mxu0 %v815
    %881 = vmatprep.subr.mxu0 %v818
    %882 = vmatpush1.msra.mxu0 %v817
    %883 = vmatprep.mubr.f32.mxu0 %v753
    %884 = vmatmul.mubr.f32.gmra.mrb[0].mxu0 %v752
    %v885 = vpop.f32.mrb[0].mxu0
    %v886 = vadd.f32 0.0, %v885
    %v887 = vpop.f32.mrb[0].mxu0
    %v888 = vadd.f32 0.0, %v887
    %889 = vdwg.mxu0
    %v890 = vrot.slane %v886, 4
    %v891 = vadd.f32 %v886, %v890
    %v892 = vrot.slane %v891, 2
    %v893 = vadd.f32 %v891, %v892
    %v894 = vrot.slane %v893, 1
    %v895 = vadd.f32 %v893, %v894
    %v896 = vrot.slane %v888, 4
    %v897 = vadd.f32 %v888, %v896
    %v898 = vrot.slane %v897, 2
    %v899 = vadd.f32 %v897, %v898
    %v900 = vrot.slane %v899, 1
    %v901 = vadd.f32 %v899, %v900
    %v902 = vmul.f32 %v895, %v225
    %v903 = vmul.f32 %v901, %v225
    %v904 = vmul.f32 %v886, %v886
    %v905 = vmul.f32 %v888, %v888
    %v906 = vrot.slane %v904, 4
    %v907 = vadd.f32 %v904, %v906
    %v908 = vrot.slane %v907, 2
    %v909 = vadd.f32 %v907, %v908
    %v910 = vrot.slane %v909, 1
    %v911 = vadd.f32 %v909, %v910
    %v912 = vrot.slane %v905, 4
    %v913 = vadd.f32 %v905, %v912
    %v914 = vrot.slane %v913, 2
    %v915 = vadd.f32 %v913, %v914
    %v916 = vrot.slane %v915, 1
    %v917 = vadd.f32 %v915, %v916
    %v918 = vmul.f32 %v911, %v225
    %v919 = vmul.f32 %v917, %v225
    %v920 = vmul.f32 %v902, %v902
    %v921 = vmul.f32 %v903, %v903
    %v922 = vsub.f32 %v918, %v920
    %v923 = vsub.f32 %v919, %v921
    %v924 = vadd.f32 %v922, 1e-05
    %v925 = vadd.f32 %v923, 1e-05
    %v926 = vrsqrt.pop %v924
    %v927 = vrsqrt.pop %v925
    %s928 = scalar_lea.vmem [#allocation5], 3
    %v929 = vld [vmem:[%s928] ss:$8 sm:$0x3]
    %s930 = scalar_lea.vmem [#allocation7], 3
    %v931 = vld [vmem:[%s930] ss:$8 sm:$0x3]
    %v932 = vsub.f32 %v886, %v902
    %v933 = vsub.f32 %v888, %v903
    %v935 = vlaneseq
    %v936 = vshrl.u32 %v935, 7
    %v937 = vsub.s32 0, %v936
    %v938 = vrot.slane %v929, %v937
    %v939 = vlaneseq
    %v940 = vshrl.u32 %v939, 7
    %v941 = vsub.s32 1, %v940
    %v942 = vrot.slane %v929, %v941
    %v945 = vmul.f32 %v926, %v938
    %v946 = vmul.f32 %v927, %v942
    %v947 = vlaneseq
    %v948 = vshrl.u32 %v947, 7
    %v949 = vsub.s32 0, %v948
    %v950 = vrot.slane %v945, %v949
    %v951 = vlaneseq
    %v952 = vshrl.u32 %v951, 7
    %v953 = vsub.s32 0, %v952
    %v954 = vrot.slane %v946, %v953
    %v955 = vmul.f32 %v932, %v950
    %v956 = vmul.f32 %v933, %v954
    %v958 = vlaneseq
    %v959 = vshrl.u32 %v958, 7
    %v960 = vsub.s32 0, %v959
    %v961 = vrot.slane %v931, %v960
    %v962 = vlaneseq
    %v963 = vshrl.u32 %v962, 7
    %v964 = vsub.s32 1, %v963
    %v965 = vrot.slane %v931, %v964
    %v968 = vadd.f32 %v955, %v961
    %v969 = vadd.f32 %v956, %v965
    %v970 = vmul.f32 %v968, 0.5
    %v971 = vmul.f32 %v969, 0.5
    %v972 = vmul.f32 %v968, 0.70710677
    %v973 = vmul.f32 %v969, 0.70710677
    %v974 = verf.f32.pop %v972
    %v975 = verf.f32.pop %v973
    %v976 = vadd.f32 %v974, 1.0
    %v977 = vadd.f32 %v975, 1.0
    %v978 = vmul.f32 %v970, %v976
    %v979 = vmul.f32 %v971, %v977
    %s980 = scalar_lea.vmem [#allocation2], 2048
    %v981 = vld [vmem:[%s980] sm:$0xff]
    %v982 = vld [vmem:[%s980 + $0x8] sm:$0xff]
    %v983 = vld [vmem:[%s980 + $0x10] sm:$0xff]
    %v984 = vld [vmem:[%s980 + $0x18] sm:$0xff]
    %v985 = vld [vmem:[%s980 + $0x20] sm:$0xff]
    %v986 = vld [vmem:[%s980 + $0x28] sm:$0xff]
    %v987 = vld [vmem:[%s980 + $0x30] sm:$0xff]
    %v988 = vld [vmem:[%s980 + $0x38] sm:$0xff]
    %v989 = vld [vmem:[%s980 + $0x40] sm:$0xff]
    %v990 = vld [vmem:[%s980 + $0x48] sm:$0xff]
    %v991 = vld [vmem:[%s980 + $0x50] sm:$0xff]
    %v992 = vld [vmem:[%s980 + $0x58] sm:$0xff]
    %v993 = vld [vmem:[%s980 + $0x60] sm:$0xff]
    %v994 = vld [vmem:[%s980 + $0x68] sm:$0xff]
    %v995 = vld [vmem:[%s980 + $0x70] sm:$0xff]
    %v996 = vld [vmem:[%s980 + $0x78] sm:$0xff]
    %v997 = vld [vmem:[%s980 + $0x80] sm:$0xff]
    %v998 = vld [vmem:[%s980 + $0x88] sm:$0xff]
    %v999 = vld [vmem:[%s980 + $0x90] sm:$0xff]
    %v1000 = vld [vmem:[%s980 + $0x98] sm:$0xff]
    %v1001 = vld [vmem:[%s980 + $0xa0] sm:$0xff]
    %v1002 = vld [vmem:[%s980 + $0xa8] sm:$0xff]
    %v1003 = vld [vmem:[%s980 + $0xb0] sm:$0xff]
    %v1004 = vld [vmem:[%s980 + $0xb8] sm:$0xff]
    %v1005 = vld [vmem:[%s980 + $0xc0] sm:$0xff]
    %v1006 = vld [vmem:[%s980 + $0xc8] sm:$0xff]
    %v1007 = vld [vmem:[%s980 + $0xd0] sm:$0xff]
    %v1008 = vld [vmem:[%s980 + $0xd8] sm:$0xff]
    %v1009 = vld [vmem:[%s980 + $0xe0] sm:$0xff]
    %v1010 = vld [vmem:[%s980 + $0xe8] sm:$0xff]
    %v1011 = vld [vmem:[%s980 + $0xf0] sm:$0xff]
    %v1012 = vld [vmem:[%s980 + $0xf8] sm:$0xff]
    %v1013 = vld [vmem:[%s980 + $0x100] sm:$0xff]
    %v1014 = vld [vmem:[%s980 + $0x108] sm:$0xff]
    %v1015 = vld [vmem:[%s980 + $0x110] sm:$0xff]
    %v1016 = vld [vmem:[%s980 + $0x118] sm:$0xff]
    %v1017 = vld [vmem:[%s980 + $0x120] sm:$0xff]
    %v1018 = vld [vmem:[%s980 + $0x128] sm:$0xff]
    %v1019 = vld [vmem:[%s980 + $0x130] sm:$0xff]
    %v1020 = vld [vmem:[%s980 + $0x138] sm:$0xff]
    %v1021 = vld [vmem:[%s980 + $0x140] sm:$0xff]
    %v1022 = vld [vmem:[%s980 + $0x148] sm:$0xff]
    %v1023 = vld [vmem:[%s980 + $0x150] sm:$0xff]
    %v1024 = vld [vmem:[%s980 + $0x158] sm:$0xff]
    %v1025 = vld [vmem:[%s980 + $0x160] sm:$0xff]
    %v1026 = vld [vmem:[%s980 + $0x168] sm:$0xff]
    %v1027 = vld [vmem:[%s980 + $0x170] sm:$0xff]
    %v1028 = vld [vmem:[%s980 + $0x178] sm:$0xff]
    %v1029 = vld [vmem:[%s980 + $0x180] sm:$0xff]
    %v1030 = vld [vmem:[%s980 + $0x188] sm:$0xff]
    %v1031 = vld [vmem:[%s980 + $0x190] sm:$0xff]
    %v1032 = vld [vmem:[%s980 + $0x198] sm:$0xff]
    %v1033 = vld [vmem:[%s980 + $0x1a0] sm:$0xff]
    %v1034 = vld [vmem:[%s980 + $0x1a8] sm:$0xff]
    %v1035 = vld [vmem:[%s980 + $0x1b0] sm:$0xff]
    %v1036 = vld [vmem:[%s980 + $0x1b8] sm:$0xff]
    %v1037 = vld [vmem:[%s980 + $0x1c0] sm:$0xff]
    %v1038 = vld [vmem:[%s980 + $0x1c8] sm:$0xff]
    %v1039 = vld [vmem:[%s980 + $0x1d0] sm:$0xff]
    %v1040 = vld [vmem:[%s980 + $0x1d8] sm:$0xff]
    %v1041 = vld [vmem:[%s980 + $0x1e0] sm:$0xff]
    %v1042 = vld [vmem:[%s980 + $0x1e8] sm:$0xff]
    %v1043 = vld [vmem:[%s980 + $0x1f0] sm:$0xff]
    %v1044 = vld [vmem:[%s980 + $0x1f8] sm:$0xff]
    %1045 = vmatprep.subr.mxu0 %v982
    %1046 = vmatpush1.msra.mxu0 %v981
    %1047 = vmatprep.subr.mxu0 %v984
    %1048 = vmatpush1.msra.mxu0 %v983
    %1049 = vmatprep.subr.mxu0 %v986
    %1050 = vmatpush1.msra.mxu0 %v985
    %1051 = vmatprep.subr.mxu0 %v988
    %1052 = vmatpush1.msra.mxu0 %v987
    %1053 = vmatprep.subr.mxu0 %v990
    %1054 = vmatpush1.msra.mxu0 %v989
    %1055 = vmatprep.subr.mxu0 %v992
    %1056 = vmatpush1.msra.mxu0 %v991
    %1057 = vmatprep.subr.mxu0 %v994
    %1058 = vmatpush1.msra.mxu0 %v993
    %1059 = vmatprep.subr.mxu0 %v996
    %1060 = vmatpush1.msra.mxu0 %v995
    %1061 = vmatprep.subr.mxu0 %v998
    %1062 = vmatpush1.msra.mxu0 %v997
    %1063 = vmatprep.subr.mxu0 %v1000
    %1064 = vmatpush1.msra.mxu0 %v999
    %1065 = vmatprep.subr.mxu0 %v1002
    %1066 = vmatpush1.msra.mxu0 %v1001
    %1067 = vmatprep.subr.mxu0 %v1004
    %1068 = vmatpush1.msra.mxu0 %v1003
    %1069 = vmatprep.subr.mxu0 %v1006
    %1070 = vmatpush1.msra.mxu0 %v1005
    %1071 = vmatprep.subr.mxu0 %v1008
    %1072 = vmatpush1.msra.mxu0 %v1007
    %1073 = vmatprep.subr.mxu0 %v1010
    %1074 = vmatpush1.msra.mxu0 %v1009
    %1075 = vmatprep.subr.mxu0 %v1012
    %1076 = vmatpush1.msra.mxu0 %v1011
    %1077 = vmatprep.subr.mxu0 %v1014
    %1078 = vmatpush1.msra.mxu0 %v1013
    %1079 = vmatprep.subr.mxu0 %v1016
    %1080 = vmatpush1.msra.mxu0 %v1015
    %1081 = vmatprep.subr.mxu0 %v1018
    %1082 = vmatpush1.msra.mxu0 %v1017
    %1083 = vmatprep.subr.mxu0 %v1020
    %1084 = vmatpush1.msra.mxu0 %v1019
    %1085 = vmatprep.subr.mxu0 %v1022
    %1086 = vmatpush1.msra.mxu0 %v1021
    %1087 = vmatprep.subr.mxu0 %v1024
    %1088 = vmatpush1.msra.mxu0 %v1023
    %1089 = vmatprep.subr.mxu0 %v1026
    %1090 = vmatpush1.msra.mxu0 %v1025
    %1091 = vmatprep.subr.mxu0 %v1028
    %1092 = vmatpush1.msra.mxu0 %v1027
    %1093 = vmatprep.subr.mxu0 %v1030
    %1094 = vmatpush1.msra.mxu0 %v1029
    %1095 = vmatprep.subr.mxu0 %v1032
    %1096 = vmatpush1.msra.mxu0 %v1031
    %1097 = vmatprep.subr.mxu0 %v1034
    %1098 = vmatpush1.msra.mxu0 %v1033
    %1099 = vmatprep.subr.mxu0 %v1036
    %1100 = vmatpush1.msra.mxu0 %v1035
    %1101 = vmatprep.subr.mxu0 %v1038
    %1102 = vmatpush1.msra.mxu0 %v1037
    %1103 = vmatprep.subr.mxu0 %v1040
    %1104 = vmatpush1.msra.mxu0 %v1039
    %1105 = vmatprep.subr.mxu0 %v1042
    %1106 = vmatpush1.msra.mxu0 %v1041
    %1107 = vmatprep.subr.mxu0 %v1044
    %1108 = vmatpush1.msra.mxu0 %v1043
    %1109 = vmatprep.mubr.f32.mxu0 %v979
    %1110 = vmatmul.mubr.f32.gmra.mrb[0].mxu0 %v978
    %v1111 = vpop.f32.mrb[0].mxu0
    %v1112 = vadd.f32 0.0, %v1111
    %v1113 = vpop.f32.mrb[0].mxu0
    %v1114 = vadd.f32 0.0, %v1113
    %1115 = vdwg.mxu0
    %v1116 = vrot.slane %v1112, 4
    %v1117 = vadd.f32 %v1112, %v1116
    %v1118 = vrot.slane %v1117, 2
    %v1119 = vadd.f32 %v1117, %v1118
    %v1120 = vrot.slane %v1119, 1
    %v1121 = vadd.f32 %v1119, %v1120
    %v1122 = vrot.slane %v1114, 4
    %v1123 = vadd.f32 %v1114, %v1122
    %v1124 = vrot.slane %v1123, 2
    %v1125 = vadd.f32 %v1123, %v1124
    %v1126 = vrot.slane %v1125, 1
    %v1127 = vadd.f32 %v1125, %v1126
    %v1128 = vmul.f32 %v1121, %v225
    %v1129 = vmul.f32 %v1127, %v225
    %v1130 = vmul.f32 %v1112, %v1112
    %v1131 = vmul.f32 %v1114, %v1114
    %v1132 = vrot.slane %v1130, 4
    %v1133 = vadd.f32 %v1130, %v1132
    %v1134 = vrot.slane %v1133, 2
    %v1135 = vadd.f32 %v1133, %v1134
    %v1136 = vrot.slane %v1135, 1
    %v1137 = vadd.f32 %v1135, %v1136
    %v1138 = vrot.slane %v1131, 4
    %v1139 = vadd.f32 %v1131, %v1138
    %v1140 = vrot.slane %v1139, 2
    %v1141 = vadd.f32 %v1139, %v1140
    %v1142 = vrot.slane %v1141, 1
    %v1143 = vadd.f32 %v1141, %v1142
    %v1144 = vmul.f32 %v1137, %v225
    %v1145 = vmul.f32 %v1143, %v225
    %v1146 = vmul.f32 %v1128, %v1128
    %v1147 = vmul.f32 %v1129, %v1129
    %v1148 = vsub.f32 %v1144, %v1146
    %v1149 = vsub.f32 %v1145, %v1147
    %v1150 = vadd.f32 %v1148, 1e-05
    %v1151 = vadd.f32 %v1149, 1e-05
    %v1152 = vrsqrt.pop %v1150
    %v1153 = vrsqrt.pop %v1151
    %s1154 = scalar_lea.vmem [#allocation5], 4
    %v1155 = vld [vmem:[%s1154] ss:$8 sm:$0x3]
    %s1156 = scalar_lea.vmem [#allocation7], 4
    %v1157 = vld [vmem:[%s1156] ss:$8 sm:$0x3]
    %v1158 = vsub.f32 %v1112, %v1128
    %v1159 = vsub.f32 %v1114, %v1129
    %v1161 = vlaneseq
    %v1162 = vshrl.u32 %v1161, 7
    %v1163 = vsub.s32 0, %v1162
    %v1164 = vrot.slane %v1155, %v1163
    %v1165 = vlaneseq
    %v1166 = vshrl.u32 %v1165, 7
    %v1167 = vsub.s32 1, %v1166
    %v1168 = vrot.slane %v1155, %v1167
    %v1171 = vmul.f32 %v1152, %v1164
    %v1172 = vmul.f32 %v1153, %v1168
    %v1173 = vlaneseq
    %v1174 = vshrl.u32 %v1173, 7
    %v1175 = vsub.s32 0, %v1174
    %v1176 = vrot.slane %v1171, %v1175
    %v1177 = vlaneseq
    %v1178 = vshrl.u32 %v1177, 7
    %v1179 = vsub.s32 0, %v1178
    %v1180 = vrot.slane %v1172, %v1179
    %v1181 = vmul.f32 %v1158, %v1176
    %v1182 = vmul.f32 %v1159, %v1180
    %v1184 = vlaneseq
    %v1185 = vshrl.u32 %v1184, 7
    %v1186 = vsub.s32 0, %v1185
    %v1187 = vrot.slane %v1157, %v1186
    %v1188 = vlaneseq
    %v1189 = vshrl.u32 %v1188, 7
    %v1190 = vsub.s32 1, %v1189
    %v1191 = vrot.slane %v1157, %v1190
    %v1194 = vadd.f32 %v1181, %v1187
    %v1195 = vadd.f32 %v1182, %v1191
    %v1196 = vmul.f32 %v1194, 0.5
    %v1197 = vmul.f32 %v1195, 0.5
    %v1198 = vmul.f32 %v1194, 0.70710677
    %v1199 = vmul.f32 %v1195, 0.70710677
    %v1200 = verf.f32.pop %v1198
    %v1201 = verf.f32.pop %v1199
    %v1202 = vadd.f32 %v1200, 1.0
    %v1203 = vadd.f32 %v1201, 1.0
    %v1204 = vmul.f32 %v1196, %v1202
    %v1205 = vmul.f32 %v1197, %v1203
    %s1206 = scalar_lea.vmem [#allocation2], 2560
    %v1207 = vld [vmem:[%s1206] sm:$0xff]
    %v1208 = vld [vmem:[%s1206 + $0x8] sm:$0xff]
    %v1209 = vld [vmem:[%s1206 + $0x10] sm:$0xff]
    %v1210 = vld [vmem:[%s1206 + $0x18] sm:$0xff]
    %v1211 = vld [vmem:[%s1206 + $0x20] sm:$0xff]
    %v1212 = vld [vmem:[%s1206 + $0x28] sm:$0xff]
    %v1213 = vld [vmem:[%s1206 + $0x30] sm:$0xff]
    %v1214 = vld [vmem:[%s1206 + $0x38] sm:$0xff]
    %v1215 = vld [vmem:[%s1206 + $0x40] sm:$0xff]
    %v1216 = vld [vmem:[%s1206 + $0x48] sm:$0xff]
    %v1217 = vld [vmem:[%s1206 + $0x50] sm:$0xff]
    %v1218 = vld [vmem:[%s1206 + $0x58] sm:$0xff]
    %v1219 = vld [vmem:[%s1206 + $0x60] sm:$0xff]
    %v1220 = vld [vmem:[%s1206 + $0x68] sm:$0xff]
    %v1221 = vld [vmem:[%s1206 + $0x70] sm:$0xff]
    %v1222 = vld [vmem:[%s1206 + $0x78] sm:$0xff]
    %v1223 = vld [vmem:[%s1206 + $0x80] sm:$0xff]
    %v1224 = vld [vmem:[%s1206 + $0x88] sm:$0xff]
    %v1225 = vld [vmem:[%s1206 + $0x90] sm:$0xff]
    %v1226 = vld [vmem:[%s1206 + $0x98] sm:$0xff]
    %v1227 = vld [vmem:[%s1206 + $0xa0] sm:$0xff]
    %v1228 = vld [vmem:[%s1206 + $0xa8] sm:$0xff]
    %v1229 = vld [vmem:[%s1206 + $0xb0] sm:$0xff]
    %v1230 = vld [vmem:[%s1206 + $0xb8] sm:$0xff]
    %v1231 = vld [vmem:[%s1206 + $0xc0] sm:$0xff]
    %v1232 = vld [vmem:[%s1206 + $0xc8] sm:$0xff]
    %v1233 = vld [vmem:[%s1206 + $0xd0] sm:$0xff]
    %v1234 = vld [vmem:[%s1206 + $0xd8] sm:$0xff]
    %v1235 = vld [vmem:[%s1206 + $0xe0] sm:$0xff]
    %v1236 = vld [vmem:[%s1206 + $0xe8] sm:$0xff]
    %v1237 = vld [vmem:[%s1206 + $0xf0] sm:$0xff]
    %v1238 = vld [vmem:[%s1206 + $0xf8] sm:$0xff]
    %v1239 = vld [vmem:[%s1206 + $0x100] sm:$0xff]
    %v1240 = vld [vmem:[%s1206 + $0x108] sm:$0xff]
    %v1241 = vld [vmem:[%s1206 + $0x110] sm:$0xff]
    %v1242 = vld [vmem:[%s1206 + $0x118] sm:$0xff]
    %v1243 = vld [vmem:[%s1206 + $0x120] sm:$0xff]
    %v1244 = vld [vmem:[%s1206 + $0x128] sm:$0xff]
    %v1245 = vld [vmem:[%s1206 + $0x130] sm:$0xff]
    %v1246 = vld [vmem:[%s1206 + $0x138] sm:$0xff]
    %v1247 = vld [vmem:[%s1206 + $0x140] sm:$0xff]
    %v1248 = vld [vmem:[%s1206 + $0x148] sm:$0xff]
    %v1249 = vld [vmem:[%s1206 + $0x150] sm:$0xff]
    %v1250 = vld [vmem:[%s1206 + $0x158] sm:$0xff]
    %v1251 = vld [vmem:[%s1206 + $0x160] sm:$0xff]
    %v1252 = vld [vmem:[%s1206 + $0x168] sm:$0xff]
    %v1253 = vld [vmem:[%s1206 + $0x170] sm:$0xff]
    %v1254 = vld [vmem:[%s1206 + $0x178] sm:$0xff]
    %v1255 = vld [vmem:[%s1206 + $0x180] sm:$0xff]
    %v1256 = vld [vmem:[%s1206 + $0x188] sm:$0xff]
    %v1257 = vld [vmem:[%s1206 + $0x190] sm:$0xff]
    %v1258 = vld [vmem:[%s1206 + $0x198] sm:$0xff]
    %v1259 = vld [vmem:[%s1206 + $0x1a0] sm:$0xff]
    %v1260 = vld [vmem:[%s1206 + $0x1a8] sm:$0xff]
    %v1261 = vld [vmem:[%s1206 + $0x1b0] sm:$0xff]
    %v1262 = vld [vmem:[%s1206 + $0x1b8] sm:$0xff]
    %v1263 = vld [vmem:[%s1206 + $0x1c0] sm:$0xff]
    %v1264 = vld [vmem:[%s1206 + $0x1c8] sm:$0xff]
    %v1265 = vld [vmem:[%s1206 + $0x1d0] sm:$0xff]
    %v1266 = vld [vmem:[%s1206 + $0x1d8] sm:$0xff]
    %v1267 = vld [vmem:[%s1206 + $0x1e0] sm:$0xff]
    %v1268 = vld [vmem:[%s1206 + $0x1e8] sm:$0xff]
    %v1269 = vld [vmem:[%s1206 + $0x1f0] sm:$0xff]
    %v1270 = vld [vmem:[%s1206 + $0x1f8] sm:$0xff]
    %1271 = vmatprep.subr.mxu0 %v1208
    %1272 = vmatpush1.msra.mxu0 %v1207
    %1273 = vmatprep.subr.mxu0 %v1210
    %1274 = vmatpush1.msra.mxu0 %v1209
    %1275 = vmatprep.subr.mxu0 %v1212
    %1276 = vmatpush1.msra.mxu0 %v1211
    %1277 = vmatprep.subr.mxu0 %v1214
    %1278 = vmatpush1.msra.mxu0 %v1213
    %1279 = vmatprep.subr.mxu0 %v1216
    %1280 = vmatpush1.msra.mxu0 %v1215
    %1281 = vmatprep.subr.mxu0 %v1218
    %1282 = vmatpush1.msra.mxu0 %v1217
    %1283 = vmatprep.subr.mxu0 %v1220
    %1284 = vmatpush1.msra.mxu0 %v1219
    %1285 = vmatprep.subr.mxu0 %v1222
    %1286 = vmatpush1.msra.mxu0 %v1221
    %1287 = vmatprep.subr.mxu0 %v1224
    %1288 = vmatpush1.msra.mxu0 %v1223
    %1289 = vmatprep.subr.mxu0 %v1226
    %1290 = vmatpush1.msra.mxu0 %v1225
    %1291 = vmatprep.subr.mxu0 %v1228
    %1292 = vmatpush1.msra.mxu0 %v1227
    %1293 = vmatprep.subr.mxu0 %v1230
    %1294 = vmatpush1.msra.mxu0 %v1229
    %1295 = vmatprep.subr.mxu0 %v1232
    %1296 = vmatpush1.msra.mxu0 %v1231
    %1297 = vmatprep.subr.mxu0 %v1234
    %1298 = vmatpush1.msra.mxu0 %v1233
    %1299 = vmatprep.subr.mxu0 %v1236
    %1300 = vmatpush1.msra.mxu0 %v1235
    %1301 = vmatprep.subr.mxu0 %v1238
    %1302 = vmatpush1.msra.mxu0 %v1237
    %1303 = vmatprep.subr.mxu0 %v1240
    %1304 = vmatpush1.msra.mxu0 %v1239
    %1305 = vmatprep.subr.mxu0 %v1242
    %1306 = vmatpush1.msra.mxu0 %v1241
    %1307 = vmatprep.subr.mxu0 %v1244
    %1308 = vmatpush1.msra.mxu0 %v1243
    %1309 = vmatprep.subr.mxu0 %v1246
    %1310 = vmatpush1.msra.mxu0 %v1245
    %1311 = vmatprep.subr.mxu0 %v1248
    %1312 = vmatpush1.msra.mxu0 %v1247
    %1313 = vmatprep.subr.mxu0 %v1250
    %1314 = vmatpush1.msra.mxu0 %v1249
    %1315 = vmatprep.subr.mxu0 %v1252
    %1316 = vmatpush1.msra.mxu0 %v1251
    %1317 = vmatprep.subr.mxu0 %v1254
    %1318 = vmatpush1.msra.mxu0 %v1253
    %1319 = vmatprep.subr.mxu0 %v1256
    %1320 = vmatpush1.msra.mxu0 %v1255
    %1321 = vmatprep.subr.mxu0 %v1258
    %1322 = vmatpush1.msra.mxu0 %v1257
    %1323 = vmatprep.subr.mxu0 %v1260
    %1324 = vmatpush1.msra.mxu0 %v1259
    %1325 = vmatprep.subr.mxu0 %v1262
    %1326 = vmatpush1.msra.mxu0 %v1261
    %1327 = vmatprep.subr.mxu0 %v1264
    %1328 = vmatpush1.msra.mxu0 %v1263
    %1329 = vmatprep.subr.mxu0 %v1266
    %1330 = vmatpush1.msra.mxu0 %v1265
    %1331 = vmatprep.subr.mxu0 %v1268
    %1332 = vmatpush1.msra.mxu0 %v1267
    %1333 = vmatprep.subr.mxu0 %v1270
    %1334 = vmatpush1.msra.mxu0 %v1269
    %1335 = vmatprep.mubr.f32.mxu0 %v1205
    %1336 = vmatmul.mubr.f32.gmra.mrb[0].mxu0 %v1204
    %v1337 = vpop.f32.mrb[0].mxu0
    %v1338 = vadd.f32 0.0, %v1337
    %v1339 = vpop.f32.mrb[0].mxu0
    %v1340 = vadd.f32 0.0, %v1339
    %1341 = vdwg.mxu0
    %v1342 = vrot.slane %v1338, 4
    %v1343 = vadd.f32 %v1338, %v1342
    %v1344 = vrot.slane %v1343, 2
    %v1345 = vadd.f32 %v1343, %v1344
    %v1346 = vrot.slane %v1345, 1
    %v1347 = vadd.f32 %v1345, %v1346
    %v1348 = vrot.slane %v1340, 4
    %v1349 = vadd.f32 %v1340, %v1348
    %v1350 = vrot.slane %v1349, 2
    %v1351 = vadd.f32 %v1349, %v1350
    %v1352 = vrot.slane %v1351, 1
    %v1353 = vadd.f32 %v1351, %v1352
    %v1354 = vmul.f32 %v1347, %v225
    %v1355 = vmul.f32 %v1353, %v225
    %v1356 = vmul.f32 %v1338, %v1338
    %v1357 = vmul.f32 %v1340, %v1340
    %v1358 = vrot.slane %v1356, 4
    %v1359 = vadd.f32 %v1356, %v1358
    %v1360 = vrot.slane %v1359, 2
    %v1361 = vadd.f32 %v1359, %v1360
    %v1362 = vrot.slane %v1361, 1
    %v1363 = vadd.f32 %v1361, %v1362
    %v1364 = vrot.slane %v1357, 4
    %v1365 = vadd.f32 %v1357, %v1364
    %v1366 = vrot.slane %v1365, 2
    %v1367 = vadd.f32 %v1365, %v1366
    %v1368 = vrot.slane %v1367, 1
    %v1369 = vadd.f32 %v1367, %v1368
    %v1370 = vmul.f32 %v1363, %v225
    %v1371 = vmul.f32 %v1369, %v225
    %v1372 = vmul.f32 %v1354, %v1354
    %v1373 = vmul.f32 %v1355, %v1355
    %v1374 = vsub.f32 %v1370, %v1372
    %v1375 = vsub.f32 %v1371, %v1373
    %v1376 = vadd.f32 %v1374, 1e-05
    %v1377 = vadd.f32 %v1375, 1e-05
    %v1378 = vrsqrt.pop %v1376
    %v1379 = vrsqrt.pop %v1377
    %s1380 = scalar_lea.vmem [#allocation5], 5
    %v1381 = vld [vmem:[%s1380] ss:$8 sm:$0x3]
    %s1382 = scalar_lea.vmem [#allocation7], 5
    %v1383 = vld [vmem:[%s1382] ss:$8 sm:$0x3]
    %v1384 = vsub.f32 %v1338, %v1354
    %v1385 = vsub.f32 %v1340, %v1355
    %v1387 = vlaneseq
    %v1388 = vshrl.u32 %v1387, 7
    %v1389 = vsub.s32 0, %v1388
    %v1390 = vrot.slane %v1381, %v1389
    %v1391 = vlaneseq
    %v1392 = vshrl.u32 %v1391, 7
    %v1393 = vsub.s32 1, %v1392
    %v1394 = vrot.slane %v1381, %v1393
    %v1397 = vmul.f32 %v1378, %v1390
    %v1398 = vmul.f32 %v1379, %v1394
    %v1399 = vlaneseq
    %v1400 = vshrl.u32 %v1399, 7
    %v1401 = vsub.s32 0, %v1400
    %v1402 = vrot.slane %v1397, %v1401
    %v1403 = vlaneseq
    %v1404 = vshrl.u32 %v1403, 7
    %v1405 = vsub.s32 0, %v1404
    %v1406 = vrot.slane %v1398, %v1405
    %v1407 = vmul.f32 %v1384, %v1402
    %v1408 = vmul.f32 %v1385, %v1406
    %v1410 = vlaneseq
    %v1411 = vshrl.u32 %v1410, 7
    %v1412 = vsub.s32 0, %v1411
    %v1413 = vrot.slane %v1383, %v1412
    %v1414 = vlaneseq
    %v1415 = vshrl.u32 %v1414, 7
    %v1416 = vsub.s32 1, %v1415
    %v1417 = vrot.slane %v1383, %v1416
    %v1420 = vadd.f32 %v1407, %v1413
    %v1421 = vadd.f32 %v1408, %v1417
    %v1422 = vmul.f32 %v1420, 0.5
    %v1423 = vmul.f32 %v1421, 0.5
    %v1424 = vmul.f32 %v1420, 0.70710677
    %v1425 = vmul.f32 %v1421, 0.70710677
    %v1426 = verf.f32.pop %v1424
    %v1427 = verf.f32.pop %v1425
    %v1428 = vadd.f32 %v1426, 1.0
    %v1429 = vadd.f32 %v1427, 1.0
    %v1430 = vmul.f32 %v1422, %v1428
    %v1431 = vmul.f32 %v1423, %v1429
    %s1432 = scalar_lea.vmem [#allocation2], 3072
    %v1433 = vld [vmem:[%s1432] sm:$0xff]
    %v1434 = vld [vmem:[%s1432 + $0x8] sm:$0xff]
    %v1435 = vld [vmem:[%s1432 + $0x10] sm:$0xff]
    %v1436 = vld [vmem:[%s1432 + $0x18] sm:$0xff]
    %v1437 = vld [vmem:[%s1432 + $0x20] sm:$0xff]
    %v1438 = vld [vmem:[%s1432 + $0x28] sm:$0xff]
    %v1439 = vld [vmem:[%s1432 + $0x30] sm:$0xff]
    %v1440 = vld [vmem:[%s1432 + $0x38] sm:$0xff]
    %v1441 = vld [vmem:[%s1432 + $0x40] sm:$0xff]
    %v1442 = vld [vmem:[%s1432 + $0x48] sm:$0xff]
    %v1443 = vld [vmem:[%s1432 + $0x50] sm:$0xff]
    %v1444 = vld [vmem:[%s1432 + $0x58] sm:$0xff]
    %v1445 = vld [vmem:[%s1432 + $0x60] sm:$0xff]
    %v1446 = vld [vmem:[%s1432 + $0x68] sm:$0xff]
    %v1447 = vld [vmem:[%s1432 + $0x70] sm:$0xff]
    %v1448 = vld [vmem:[%s1432 + $0x78] sm:$0xff]
    %v1449 = vld [vmem:[%s1432 + $0x80] sm:$0xff]
    %v1450 = vld [vmem:[%s1432 + $0x88] sm:$0xff]
    %v1451 = vld [vmem:[%s1432 + $0x90] sm:$0xff]
    %v1452 = vld [vmem:[%s1432 + $0x98] sm:$0xff]
    %v1453 = vld [vmem:[%s1432 + $0xa0] sm:$0xff]
    %v1454 = vld [vmem:[%s1432 + $0xa8] sm:$0xff]
    %v1455 = vld [vmem:[%s1432 + $0xb0] sm:$0xff]
    %v1456 = vld [vmem:[%s1432 + $0xb8] sm:$0xff]
    %v1457 = vld [vmem:[%s1432 + $0xc0] sm:$0xff]
    %v1458 = vld [vmem:[%s1432 + $0xc8] sm:$0xff]
    %v1459 = vld [vmem:[%s1432 + $0xd0] sm:$0xff]
    %v1460 = vld [vmem:[%s1432 + $0xd8] sm:$0xff]
    %v1461 = vld [vmem:[%s1432 + $0xe0] sm:$0xff]
    %v1462 = vld [vmem:[%s1432 + $0xe8] sm:$0xff]
    %v1463 = vld [vmem:[%s1432 + $0xf0] sm:$0xff]
    %v1464 = vld [vmem:[%s1432 + $0xf8] sm:$0xff]
    %v1465 = vld [vmem:[%s1432 + $0x100] sm:$0xff]
    %v1466 = vld [vmem:[%s1432 + $0x108] sm:$0xff]
    %v1467 = vld [vmem:[%s1432 + $0x110] sm:$0xff]
    %v1468 = vld [vmem:[%s1432 + $0x118] sm:$0xff]
    %v1469 = vld [vmem:[%s1432 + $0x120] sm:$0xff]
    %v1470 = vld [vmem:[%s1432 + $0x128] sm:$0xff]
    %v1471 = vld [vmem:[%s1432 + $0x130] sm:$0xff]
    %v1472 = vld [vmem:[%s1432 + $0x138] sm:$0xff]
    %v1473 = vld [vmem:[%s1432 + $0x140] sm:$0xff]
    %v1474 = vld [vmem:[%s1432 + $0x148] sm:$0xff]
    %v1475 = vld [vmem:[%s1432 + $0x150] sm:$0xff]
    %v1476 = vld [vmem:[%s1432 + $0x158] sm:$0xff]
    %v1477 = vld [vmem:[%s1432 + $0x160] sm:$0xff]
    %v1478 = vld [vmem:[%s1432 + $0x168] sm:$0xff]
    %v1479 = vld [vmem:[%s1432 + $0x170] sm:$0xff]
    %v1480 = vld [vmem:[%s1432 + $0x178] sm:$0xff]
    %v1481 = vld [vmem:[%s1432 + $0x180] sm:$0xff]
    %v1482 = vld [vmem:[%s1432 + $0x188] sm:$0xff]
    %v1483 = vld [vmem:[%s1432 + $0x190] sm:$0xff]
    %v1484 = vld [vmem:[%s1432 + $0x198] sm:$0xff]
    %v1485 = vld [vmem:[%s1432 + $0x1a0] sm:$0xff]
    %v1486 = vld [vmem:[%s1432 + $0x1a8] sm:$0xff]
    %v1487 = vld [vmem:[%s1432 + $0x1b0] sm:$0xff]
    %v1488 = vld [vmem:[%s1432 + $0x1b8] sm:$0xff]
    %v1489 = vld [vmem:[%s1432 + $0x1c0] sm:$0xff]
    %v1490 = vld [vmem:[%s1432 + $0x1c8] sm:$0xff]
    %v1491 = vld [vmem:[%s1432 + $0x1d0] sm:$0xff]
    %v1492 = vld [vmem:[%s1432 + $0x1d8] sm:$0xff]
    %v1493 = vld [vmem:[%s1432 + $0x1e0] sm:$0xff]
    %v1494 = vld [vmem:[%s1432 + $0x1e8] sm:$0xff]
    %v1495 = vld [vmem:[%s1432 + $0x1f0] sm:$0xff]
    %v1496 = vld [vmem:[%s1432 + $0x1f8] sm:$0xff]
    %1497 = vmatprep.subr.mxu0 %v1434
    %1498 = vmatpush1.msra.mxu0 %v1433
    %1499 = vmatprep.subr.mxu0 %v1436
    %1500 = vmatpush1.msra.mxu0 %v1435
    %1501 = vmatprep.subr.mxu0 %v1438
    %1502 = vmatpush1.msra.mxu0 %v1437
    %1503 = vmatprep.subr.mxu0 %v1440
    %1504 = vmatpush1.msra.mxu0 %v1439
    %1505 = vmatprep.subr.mxu0 %v1442
    %1506 = vmatpush1.msra.mxu0 %v1441
    %1507 = vmatprep.subr.mxu0 %v1444
    %1508 = vmatpush1.msra.mxu0 %v1443
    %1509 = vmatprep.subr.mxu0 %v1446
    %1510 = vmatpush1.msra.mxu0 %v1445
    %1511 = vmatprep.subr.mxu0 %v1448
    %1512 = vmatpush1.msra.mxu0 %v1447
    %1513 = vmatprep.subr.mxu0 %v1450
    %1514 = vmatpush1.msra.mxu0 %v1449
    %1515 = vmatprep.subr.mxu0 %v1452
    %1516 = vmatpush1.msra.mxu0 %v1451
    %1517 = vmatprep.subr.mxu0 %v1454
    %1518 = vmatpush1.msra.mxu0 %v1453
    %1519 = vmatprep.subr.mxu0 %v1456
    %1520 = vmatpush1.msra.mxu0 %v1455
    %1521 = vmatprep.subr.mxu0 %v1458
    %1522 = vmatpush1.msra.mxu0 %v1457
    %1523 = vmatprep.subr.mxu0 %v1460
    %1524 = vmatpush1.msra.mxu0 %v1459
    %1525 = vmatprep.subr.mxu0 %v1462
    %1526 = vmatpush1.msra.mxu0 %v1461
    %1527 = vmatprep.subr.mxu0 %v1464
    %1528 = vmatpush1.msra.mxu0 %v1463
    %1529 = vmatprep.subr.mxu0 %v1466
    %1530 = vmatpush1.msra.mxu0 %v1465
    %1531 = vmatprep.subr.mxu0 %v1468
    %1532 = vmatpush1.msra.mxu0 %v1467
    %1533 = vmatprep.subr.mxu0 %v1470
    %1534 = vmatpush1.msra.mxu0 %v1469
    %1535 = vmatprep.subr.mxu0 %v1472
    %1536 = vmatpush1.msra.mxu0 %v1471
    %1537 = vmatprep.subr.mxu0 %v1474
    %1538 = vmatpush1.msra.mxu0 %v1473
    %1539 = vmatprep.subr.mxu0 %v1476
    %1540 = vmatpush1.msra.mxu0 %v1475
    %1541 = vmatprep.subr.mxu0 %v1478
    %1542 = vmatpush1.msra.mxu0 %v1477
    %1543 = vmatprep.subr.mxu0 %v1480
    %1544 = vmatpush1.msra.mxu0 %v1479
    %1545 = vmatprep.subr.mxu0 %v1482
    %1546 = vmatpush1.msra.mxu0 %v1481
    %1547 = vmatprep.subr.mxu0 %v1484
    %1548 = vmatpush1.msra.mxu0 %v1483
    %1549 = vmatprep.subr.mxu0 %v1486
    %1550 = vmatpush1.msra.mxu0 %v1485
    %1551 = vmatprep.subr.mxu0 %v1488
    %1552 = vmatpush1.msra.mxu0 %v1487
    %1553 = vmatprep.subr.mxu0 %v1490
    %1554 = vmatpush1.msra.mxu0 %v1489
    %1555 = vmatprep.subr.mxu0 %v1492
    %1556 = vmatpush1.msra.mxu0 %v1491
    %1557 = vmatprep.subr.mxu0 %v1494
    %1558 = vmatpush1.msra.mxu0 %v1493
    %1559 = vmatprep.subr.mxu0 %v1496
    %1560 = vmatpush1.msra.mxu0 %v1495
    %1561 = vmatprep.mubr.f32.mxu0 %v1431
    %1562 = vmatmul.mubr.f32.gmra.mrb[0].mxu0 %v1430
    %v1563 = vpop.f32.mrb[0].mxu0
    %v1564 = vadd.f32 0.0, %v1563
    %v1565 = vpop.f32.mrb[0].mxu0
    %v1566 = vadd.f32 0.0, %v1565
    %1567 = vdwg.mxu0
    %v1568 = vrot.slane %v1564, 4
    %v1569 = vadd.f32 %v1564, %v1568
    %v1570 = vrot.slane %v1569, 2
    %v1571 = vadd.f32 %v1569, %v1570
    %v1572 = vrot.slane %v1571, 1
    %v1573 = vadd.f32 %v1571, %v1572
    %v1574 = vrot.slane %v1566, 4
    %v1575 = vadd.f32 %v1566, %v1574
    %v1576 = vrot.slane %v1575, 2
    %v1577 = vadd.f32 %v1575, %v1576
    %v1578 = vrot.slane %v1577, 1
    %v1579 = vadd.f32 %v1577, %v1578
    %v1580 = vmul.f32 %v1573, %v225
    %v1581 = vmul.f32 %v1579, %v225
    %v1582 = vmul.f32 %v1564, %v1564
    %v1583 = vmul.f32 %v1566, %v1566
    %v1584 = vrot.slane %v1582, 4
    %v1585 = vadd.f32 %v1582, %v1584
    %v1586 = vrot.slane %v1585, 2
    %v1587 = vadd.f32 %v1585, %v1586
    %v1588 = vrot.slane %v1587, 1
    %v1589 = vadd.f32 %v1587, %v1588
    %v1590 = vrot.slane %v1583, 4
    %v1591 = vadd.f32 %v1583, %v1590
    %v1592 = vrot.slane %v1591, 2
    %v1593 = vadd.f32 %v1591, %v1592
    %v1594 = vrot.slane %v1593, 1
    %v1595 = vadd.f32 %v1593, %v1594
    %v1596 = vmul.f32 %v1589, %v225
    %v1597 = vmul.f32 %v1595, %v225
    %v1598 = vmul.f32 %v1580, %v1580
    %v1599 = vmul.f32 %v1581, %v1581
    %v1600 = vsub.f32 %v1596, %v1598
    %v1601 = vsub.f32 %v1597, %v1599
    %v1602 = vadd.f32 %v1600, 1e-05
    %v1603 = vadd.f32 %v1601, 1e-05
    %v1604 = vrsqrt.pop %v1602
    %v1605 = vrsqrt.pop %v1603
    %s1606 = scalar_lea.vmem [#allocation5], 6
    %v1607 = vld [vmem:[%s1606] ss:$8 sm:$0x3]
    %s1608 = scalar_lea.vmem [#allocation7], 6
    %v1609 = vld [vmem:[%s1608] ss:$8 sm:$0x3]
    %v1610 = vsub.f32 %v1564, %v1580
    %v1611 = vsub.f32 %v1566, %v1581
    %v1613 = vlaneseq
    %v1614 = vshrl.u32 %v1613, 7
    %v1615 = vsub.s32 0, %v1614
    %v1616 = vrot.slane %v1607, %v1615
    %v1617 = vlaneseq
    %v1618 = vshrl.u32 %v1617, 7
    %v1619 = vsub.s32 1, %v1618
    %v1620 = vrot.slane %v1607, %v1619
    %v1623 = vmul.f32 %v1604, %v1616
    %v1624 = vmul.f32 %v1605, %v1620
    %v1625 = vlaneseq
    %v1626 = vshrl.u32 %v1625, 7
    %v1627 = vsub.s32 0, %v1626
    %v1628 = vrot.slane %v1623, %v1627
    %v1629 = vlaneseq
    %v1630 = vshrl.u32 %v1629, 7
    %v1631 = vsub.s32 0, %v1630
    %v1632 = vrot.slane %v1624, %v1631
    %v1633 = vmul.f32 %v1610, %v1628
    %v1634 = vmul.f32 %v1611, %v1632
    %v1636 = vlaneseq
    %v1637 = vshrl.u32 %v1636, 7
    %v1638 = vsub.s32 0, %v1637
    %v1639 = vrot.slane %v1609, %v1638
    %v1640 = vlaneseq
    %v1641 = vshrl.u32 %v1640, 7
    %v1642 = vsub.s32 1, %v1641
    %v1643 = vrot.slane %v1609, %v1642
    %v1646 = vadd.f32 %v1633, %v1639
    %v1647 = vadd.f32 %v1634, %v1643
    %v1648 = vmul.f32 %v1646, 0.5
    %v1649 = vmul.f32 %v1647, 0.5
    %v1650 = vmul.f32 %v1646, 0.70710677
    %v1651 = vmul.f32 %v1647, 0.70710677
    %v1652 = verf.f32.pop %v1650
    %v1653 = verf.f32.pop %v1651
    %v1654 = vadd.f32 %v1652, 1.0
    %v1655 = vadd.f32 %v1653, 1.0
    %v1656 = vmul.f32 %v1648, %v1654
    %v1657 = vmul.f32 %v1649, %v1655
    %s1658 = scalar_lea.vmem [#allocation2], 3584
    %v1659 = vld [vmem:[%s1658] sm:$0xff]
    %v1660 = vld [vmem:[%s1658 + $0x8] sm:$0xff]
    %v1661 = vld [vmem:[%s1658 + $0x10] sm:$0xff]
    %v1662 = vld [vmem:[%s1658 + $0x18] sm:$0xff]
    %v1663 = vld [vmem:[%s1658 + $0x20] sm:$0xff]
    %v1664 = vld [vmem:[%s1658 + $0x28] sm:$0xff]
    %v1665 = vld [vmem:[%s1658 + $0x30] sm:$0xff]
    %v1666 = vld [vmem:[%s1658 + $0x38] sm:$0xff]
    %v1667 = vld [vmem:[%s1658 + $0x40] sm:$0xff]
    %v1668 = vld [vmem:[%s1658 + $0x48] sm:$0xff]
    %v1669 = vld [vmem:[%s1658 + $0x50] sm:$0xff]
    %v1670 = vld [vmem:[%s1658 + $0x58] sm:$0xff]
    %v1671 = vld [vmem:[%s1658 + $0x60] sm:$0xff]
    %v1672 = vld [vmem:[%s1658 + $0x68] sm:$0xff]
    %v1673 = vld [vmem:[%s1658 + $0x70] sm:$0xff]
    %v1674 = vld [vmem:[%s1658 + $0x78] sm:$0xff]
    %v1675 = vld [vmem:[%s1658 + $0x80] sm:$0xff]
    %v1676 = vld [vmem:[%s1658 + $0x88] sm:$0xff]
    %v1677 = vld [vmem:[%s1658 + $0x90] sm:$0xff]
    %v1678 = vld [vmem:[%s1658 + $0x98] sm:$0xff]
    %v1679 = vld [vmem:[%s1658 + $0xa0] sm:$0xff]
    %v1680 = vld [vmem:[%s1658 + $0xa8] sm:$0xff]
    %v1681 = vld [vmem:[%s1658 + $0xb0] sm:$0xff]
    %v1682 = vld [vmem:[%s1658 + $0xb8] sm:$0xff]
    %v1683 = vld [vmem:[%s1658 + $0xc0] sm:$0xff]
    %v1684 = vld [vmem:[%s1658 + $0xc8] sm:$0xff]
    %v1685 = vld [vmem:[%s1658 + $0xd0] sm:$0xff]
    %v1686 = vld [vmem:[%s1658 + $0xd8] sm:$0xff]
    %v1687 = vld [vmem:[%s1658 + $0xe0] sm:$0xff]
    %v1688 = vld [vmem:[%s1658 + $0xe8] sm:$0xff]
    %v1689 = vld [vmem:[%s1658 + $0xf0] sm:$0xff]
    %v1690 = vld [vmem:[%s1658 + $0xf8] sm:$0xff]
    %v1691 = vld [vmem:[%s1658 + $0x100] sm:$0xff]
    %v1692 = vld [vmem:[%s1658 + $0x108] sm:$0xff]
    %v1693 = vld [vmem:[%s1658 + $0x110] sm:$0xff]
    %v1694 = vld [vmem:[%s1658 + $0x118] sm:$0xff]
    %v1695 = vld [vmem:[%s1658 + $0x120] sm:$0xff]
    %v1696 = vld [vmem:[%s1658 + $0x128] sm:$0xff]
    %v1697 = vld [vmem:[%s1658 + $0x130] sm:$0xff]
    %v1698 = vld [vmem:[%s1658 + $0x138] sm:$0xff]
    %v1699 = vld [vmem:[%s1658 + $0x140] sm:$0xff]
    %v1700 = vld [vmem:[%s1658 + $0x148] sm:$0xff]
    %v1701 = vld [vmem:[%s1658 + $0x150] sm:$0xff]
    %v1702 = vld [vmem:[%s1658 + $0x158] sm:$0xff]
    %v1703 = vld [vmem:[%s1658 + $0x160] sm:$0xff]
    %v1704 = vld [vmem:[%s1658 + $0x168] sm:$0xff]
    %v1705 = vld [vmem:[%s1658 + $0x170] sm:$0xff]
    %v1706 = vld [vmem:[%s1658 + $0x178] sm:$0xff]
    %v1707 = vld [vmem:[%s1658 + $0x180] sm:$0xff]
    %v1708 = vld [vmem:[%s1658 + $0x188] sm:$0xff]
    %v1709 = vld [vmem:[%s1658 + $0x190] sm:$0xff]
    %v1710 = vld [vmem:[%s1658 + $0x198] sm:$0xff]
    %v1711 = vld [vmem:[%s1658 + $0x1a0] sm:$0xff]
    %v1712 = vld [vmem:[%s1658 + $0x1a8] sm:$0xff]
    %v1713 = vld [vmem:[%s1658 + $0x1b0] sm:$0xff]
    %v1714 = vld [vmem:[%s1658 + $0x1b8] sm:$0xff]
    %v1715 = vld [vmem:[%s1658 + $0x1c0] sm:$0xff]
    %v1716 = vld [vmem:[%s1658 + $0x1c8] sm:$0xff]
    %v1717 = vld [vmem:[%s1658 + $0x1d0] sm:$0xff]
    %v1718 = vld [vmem:[%s1658 + $0x1d8] sm:$0xff]
    %v1719 = vld [vmem:[%s1658 + $0x1e0] sm:$0xff]
    %v1720 = vld [vmem:[%s1658 + $0x1e8] sm:$0xff]
    %v1721 = vld [vmem:[%s1658 + $0x1f0] sm:$0xff]
    %v1722 = vld [vmem:[%s1658 + $0x1f8] sm:$0xff]
    %1723 = vmatprep.subr.mxu0 %v1660
    %1724 = vmatpush1.msra.mxu0 %v1659
    %1725 = vmatprep.subr.mxu0 %v1662
    %1726 = vmatpush1.msra.mxu0 %v1661
    %1727 = vmatprep.subr.mxu0 %v1664
    %1728 = vmatpush1.msra.mxu0 %v1663
    %1729 = vmatprep.subr.mxu0 %v1666
    %1730 = vmatpush1.msra.mxu0 %v1665
    %1731 = vmatprep.subr.mxu0 %v1668
    %1732 = vmatpush1.msra.mxu0 %v1667
    %1733 = vmatprep.subr.mxu0 %v1670
    %1734 = vmatpush1.msra.mxu0 %v1669
    %1735 = vmatprep.subr.mxu0 %v1672
    %1736 = vmatpush1.msra.mxu0 %v1671
    %1737 = vmatprep.subr.mxu0 %v1674
    %1738 = vmatpush1.msra.mxu0 %v1673
    %1739 = vmatprep.subr.mxu0 %v1676
    %1740 = vmatpush1.msra.mxu0 %v1675
    %1741 = vmatprep.subr.mxu0 %v1678
    %1742 = vmatpush1.msra.mxu0 %v1677
    %1743 = vmatprep.subr.mxu0 %v1680
    %1744 = vmatpush1.msra.mxu0 %v1679
    %1745 = vmatprep.subr.mxu0 %v1682
    %1746 = vmatpush1.msra.mxu0 %v1681
    %1747 = vmatprep.subr.mxu0 %v1684
    %1748 = vmatpush1.msra.mxu0 %v1683
    %1749 = vmatprep.subr.mxu0 %v1686
    %1750 = vmatpush1.msra.mxu0 %v1685
    %1751 = vmatprep.subr.mxu0 %v1688
    %1752 = vmatpush1.msra.mxu0 %v1687
    %1753 = vmatprep.subr.mxu0 %v1690
    %1754 = vmatpush1.msra.mxu0 %v1689
    %1755 = vmatprep.subr.mxu0 %v1692
    %1756 = vmatpush1.msra.mxu0 %v1691
    %1757 = vmatprep.subr.mxu0 %v1694
    %1758 = vmatpush1.msra.mxu0 %v1693
    %1759 = vmatprep.subr.mxu0 %v1696
    %1760 = vmatpush1.msra.mxu0 %v1695
    %1761 = vmatprep.subr.mxu0 %v1698
    %1762 = vmatpush1.msra.mxu0 %v1697
    %1763 = vmatprep.subr.mxu0 %v1700
    %1764 = vmatpush1.msra.mxu0 %v1699
    %1765 = vmatprep.subr.mxu0 %v1702
    %1766 = vmatpush1.msra.mxu0 %v1701
    %1767 = vmatprep.subr.mxu0 %v1704
    %1768 = vmatpush1.msra.mxu0 %v1703
    %1769 = vmatprep.subr.mxu0 %v1706
    %1770 = vmatpush1.msra.mxu0 %v1705
    %1771 = vmatprep.subr.mxu0 %v1708
    %1772 = vmatpush1.msra.mxu0 %v1707
    %1773 = vmatprep.subr.mxu0 %v1710
    %1774 = vmatpush1.msra.mxu0 %v1709
    %1775 = vmatprep.subr.mxu0 %v1712
    %1776 = vmatpush1.msra.mxu0 %v1711
    %1777 = vmatprep.subr.mxu0 %v1714
    %1778 = vmatpush1.msra.mxu0 %v1713
    %1779 = vmatprep.subr.mxu0 %v1716
    %1780 = vmatpush1.msra.mxu0 %v1715
    %1781 = vmatprep.subr.mxu0 %v1718
    %1782 = vmatpush1.msra.mxu0 %v1717
    %1783 = vmatprep.subr.mxu0 %v1720
    %1784 = vmatpush1.msra.mxu0 %v1719
    %1785 = vmatprep.subr.mxu0 %v1722
    %1786 = vmatpush1.msra.mxu0 %v1721
    %1787 = vmatprep.mubr.f32.mxu0 %v1657
    %1788 = vmatmul.mubr.f32.gmra.mrb[0].mxu0 %v1656
    %v1789 = vpop.f32.mrb[0].mxu0
    %v1790 = vadd.f32 0.0, %v1789
    %v1791 = vpop.f32.mrb[0].mxu0
    %v1792 = vadd.f32 0.0, %v1791
    %1793 = vdwg.mxu0
    %v1794 = vrot.slane %v1790, 4
    %v1795 = vadd.f32 %v1790, %v1794
    %v1796 = vrot.slane %v1795, 2
    %v1797 = vadd.f32 %v1795, %v1796
    %v1798 = vrot.slane %v1797, 1
    %v1799 = vadd.f32 %v1797, %v1798
    %v1800 = vrot.slane %v1792, 4
    %v1801 = vadd.f32 %v1792, %v1800
    %v1802 = vrot.slane %v1801, 2
    %v1803 = vadd.f32 %v1801, %v1802
    %v1804 = vrot.slane %v1803, 1
    %v1805 = vadd.f32 %v1803, %v1804
    %v1806 = vmul.f32 %v1799, %v225
    %v1807 = vmul.f32 %v1805, %v225
    %v1808 = vmul.f32 %v1790, %v1790
    %v1809 = vmul.f32 %v1792, %v1792
    %v1810 = vrot.slane %v1808, 4
    %v1811 = vadd.f32 %v1808, %v1810
    %v1812 = vrot.slane %v1811, 2
    %v1813 = vadd.f32 %v1811, %v1812
    %v1814 = vrot.slane %v1813, 1
    %v1815 = vadd.f32 %v1813, %v1814
    %v1816 = vrot.slane %v1809, 4
    %v1817 = vadd.f32 %v1809, %v1816
    %v1818 = vrot.slane %v1817, 2
    %v1819 = vadd.f32 %v1817, %v1818
    %v1820 = vrot.slane %v1819, 1
    %v1821 = vadd.f32 %v1819, %v1820
    %v1822 = vmul.f32 %v1815, %v225
    %v1823 = vmul.f32 %v1821, %v225
    %v1824 = vmul.f32 %v1806, %v1806
    %v1825 = vmul.f32 %v1807, %v1807
    %v1826 = vsub.f32 %v1822, %v1824
    %v1827 = vsub.f32 %v1823, %v1825
    %v1828 = vadd.f32 %v1826, 1e-05
    %v1829 = vadd.f32 %v1827, 1e-05
    %v1830 = vrsqrt.pop %v1828
    %v1831 = vrsqrt.pop %v1829
    %s1832 = scalar_lea.vmem [#allocation5], 7
    %v1833 = vld [vmem:[%s1832] ss:$8 sm:$0x3]
    %s1834 = scalar_lea.vmem [#allocation7], 7
    %v1835 = vld [vmem:[%s1834] ss:$8 sm:$0x3]
    %v1836 = vsub.f32 %v1790, %v1806
    %v1837 = vsub.f32 %v1792, %v1807
    %v1839 = vlaneseq
    %v1840 = vshrl.u32 %v1839, 7
    %v1841 = vsub.s32 0, %v1840
    %v1842 = vrot.slane %v1833, %v1841
    %v1843 = vlaneseq
    %v1844 = vshrl.u32 %v1843, 7
    %v1845 = vsub.s32 1, %v1844
    %v1846 = vrot.slane %v1833, %v1845
    %v1849 = vmul.f32 %v1830, %v1842
    %v1850 = vmul.f32 %v1831, %v1846
    %v1851 = vlaneseq
    %v1852 = vshrl.u32 %v1851, 7
    %v1853 = vsub.s32 0, %v1852
    %v1854 = vrot.slane %v1849, %v1853
    %v1855 = vlaneseq
    %v1856 = vshrl.u32 %v1855, 7
    %v1857 = vsub.s32 0, %v1856
    %v1858 = vrot.slane %v1850, %v1857
    %v1859 = vmul.f32 %v1836, %v1854
    %v1860 = vmul.f32 %v1837, %v1858
    %v1862 = vlaneseq
    %v1863 = vshrl.u32 %v1862, 7
    %v1864 = vsub.s32 0, %v1863
    %v1865 = vrot.slane %v1835, %v1864
    %v1866 = vlaneseq
    %v1867 = vshrl.u32 %v1866, 7
    %v1868 = vsub.s32 1, %v1867
    %v1869 = vrot.slane %v1835, %v1868
    %v1872 = vadd.f32 %v1859, %v1865
    %v1873 = vadd.f32 %v1860, %v1869
    %v1874 = vmul.f32 %v1872, 0.5
    %v1875 = vmul.f32 %v1873, 0.5
    %v1876 = vmul.f32 %v1872, 0.70710677
    %v1877 = vmul.f32 %v1873, 0.70710677
    %v1878 = verf.f32.pop %v1876
    %v1879 = verf.f32.pop %v1877
    %v1880 = vadd.f32 %v1878, 1.0
    %v1881 = vadd.f32 %v1879, 1.0
    %v1882 = vmul.f32 %v1874, %v1880
    %v1883 = vmul.f32 %v1875, %v1881
    %s1884 = scalar_lea.vmem [#allocation2], 4096
    %v1885 = vld [vmem:[%s1884] sm:$0xff]
    %v1886 = vld [vmem:[%s1884 + $0x8] sm:$0xff]
    %v1887 = vld [vmem:[%s1884 + $0x10] sm:$0xff]
    %v1888 = vld [vmem:[%s1884 + $0x18] sm:$0xff]
    %v1889 = vld [vmem:[%s1884 + $0x20] sm:$0xff]
    %v1890 = vld [vmem:[%s1884 + $0x28] sm:$0xff]
    %v1891 = vld [vmem:[%s1884 + $0x30] sm:$0xff]
    %v1892 = vld [vmem:[%s1884 + $0x38] sm:$0xff]
    %v1893 = vld [vmem:[%s1884 + $0x40] sm:$0xff]
    %v1894 = vld [vmem:[%s1884 + $0x48] sm:$0xff]
    %v1895 = vld [vmem:[%s1884 + $0x50] sm:$0xff]
    %v1896 = vld [vmem:[%s1884 + $0x58] sm:$0xff]
    %v1897 = vld [vmem:[%s1884 + $0x60] sm:$0xff]
    %v1898 = vld [vmem:[%s1884 + $0x68] sm:$0xff]
    %v1899 = vld [vmem:[%s1884 + $0x70] sm:$0xff]
    %v1900 = vld [vmem:[%s1884 + $0x78] sm:$0xff]
    %v1901 = vld [vmem:[%s1884 + $0x80] sm:$0xff]
    %v1902 = vld [vmem:[%s1884 + $0x88] sm:$0xff]
    %v1903 = vld [vmem:[%s1884 + $0x90] sm:$0xff]
    %v1904 = vld [vmem:[%s1884 + $0x98] sm:$0xff]
    %v1905 = vld [vmem:[%s1884 + $0xa0] sm:$0xff]
    %v1906 = vld [vmem:[%s1884 + $0xa8] sm:$0xff]
    %v1907 = vld [vmem:[%s1884 + $0xb0] sm:$0xff]
    %v1908 = vld [vmem:[%s1884 + $0xb8] sm:$0xff]
    %v1909 = vld [vmem:[%s1884 + $0xc0] sm:$0xff]
    %v1910 = vld [vmem:[%s1884 + $0xc8] sm:$0xff]
    %v1911 = vld [vmem:[%s1884 + $0xd0] sm:$0xff]
    %v1912 = vld [vmem:[%s1884 + $0xd8] sm:$0xff]
    %v1913 = vld [vmem:[%s1884 + $0xe0] sm:$0xff]
    %v1914 = vld [vmem:[%s1884 + $0xe8] sm:$0xff]
    %v1915 = vld [vmem:[%s1884 + $0xf0] sm:$0xff]
    %v1916 = vld [vmem:[%s1884 + $0xf8] sm:$0xff]
    %v1917 = vld [vmem:[%s1884 + $0x100] sm:$0xff]
    %v1918 = vld [vmem:[%s1884 + $0x108] sm:$0xff]
    %v1919 = vld [vmem:[%s1884 + $0x110] sm:$0xff]
    %v1920 = vld [vmem:[%s1884 + $0x118] sm:$0xff]
    %v1921 = vld [vmem:[%s1884 + $0x120] sm:$0xff]
    %v1922 = vld [vmem:[%s1884 + $0x128] sm:$0xff]
    %v1923 = vld [vmem:[%s1884 + $0x130] sm:$0xff]
    %v1924 = vld [vmem:[%s1884 + $0x138] sm:$0xff]
    %v1925 = vld [vmem:[%s1884 + $0x140] sm:$0xff]
    %v1926 = vld [vmem:[%s1884 + $0x148] sm:$0xff]
    %v1927 = vld [vmem:[%s1884 + $0x150] sm:$0xff]
    %v1928 = vld [vmem:[%s1884 + $0x158] sm:$0xff]
    %v1929 = vld [vmem:[%s1884 + $0x160] sm:$0xff]
    %v1930 = vld [vmem:[%s1884 + $0x168] sm:$0xff]
    %v1931 = vld [vmem:[%s1884 + $0x170] sm:$0xff]
    %v1932 = vld [vmem:[%s1884 + $0x178] sm:$0xff]
    %v1933 = vld [vmem:[%s1884 + $0x180] sm:$0xff]
    %v1934 = vld [vmem:[%s1884 + $0x188] sm:$0xff]
    %v1935 = vld [vmem:[%s1884 + $0x190] sm:$0xff]
    %v1936 = vld [vmem:[%s1884 + $0x198] sm:$0xff]
    %v1937 = vld [vmem:[%s1884 + $0x1a0] sm:$0xff]
    %v1938 = vld [vmem:[%s1884 + $0x1a8] sm:$0xff]
    %v1939 = vld [vmem:[%s1884 + $0x1b0] sm:$0xff]
    %v1940 = vld [vmem:[%s1884 + $0x1b8] sm:$0xff]
    %v1941 = vld [vmem:[%s1884 + $0x1c0] sm:$0xff]
    %v1942 = vld [vmem:[%s1884 + $0x1c8] sm:$0xff]
    %v1943 = vld [vmem:[%s1884 + $0x1d0] sm:$0xff]
    %v1944 = vld [vmem:[%s1884 + $0x1d8] sm:$0xff]
    %v1945 = vld [vmem:[%s1884 + $0x1e0] sm:$0xff]
    %v1946 = vld [vmem:[%s1884 + $0x1e8] sm:$0xff]
    %v1947 = vld [vmem:[%s1884 + $0x1f0] sm:$0xff]
    %v1948 = vld [vmem:[%s1884 + $0x1f8] sm:$0xff]
    %1949 = vmatprep.subr.mxu0 %v1886
    %1950 = vmatpush1.msra.mxu0 %v1885
    %1951 = vmatprep.subr.mxu0 %v1888
    %1952 = vmatpush1.msra.mxu0 %v1887
    %1953 = vmatprep.subr.mxu0 %v1890
    %1954 = vmatpush1.msra.mxu0 %v1889
    %1955 = vmatprep.subr.mxu0 %v1892
    %1956 = vmatpush1.msra.mxu0 %v1891
    %1957 = vmatprep.subr.mxu0 %v1894
    %1958 = vmatpush1.msra.mxu0 %v1893
    %1959 = vmatprep.subr.mxu0 %v1896
    %1960 = vmatpush1.msra.mxu0 %v1895
    %1961 = vmatprep.subr.mxu0 %v1898
    %1962 = vmatpush1.msra.mxu0 %v1897
    %1963 = vmatprep.subr.mxu0 %v1900
    %1964 = vmatpush1.msra.mxu0 %v1899
    %1965 = vmatprep.subr.mxu0 %v1902
    %1966 = vmatpush1.msra.mxu0 %v1901
    %1967 = vmatprep.subr.mxu0 %v1904
    %1968 = vmatpush1.msra.mxu0 %v1903
    %1969 = vmatprep.subr.mxu0 %v1906
    %1970 = vmatpush1.msra.mxu0 %v1905
    %1971 = vmatprep.subr.mxu0 %v1908
    %1972 = vmatpush1.msra.mxu0 %v1907
    %1973 = vmatprep.subr.mxu0 %v1910
    %1974 = vmatpush1.msra.mxu0 %v1909
    %1975 = vmatprep.subr.mxu0 %v1912
    %1976 = vmatpush1.msra.mxu0 %v1911
    %1977 = vmatprep.subr.mxu0 %v1914
    %1978 = vmatpush1.msra.mxu0 %v1913
    %1979 = vmatprep.subr.mxu0 %v1916
    %1980 = vmatpush1.msra.mxu0 %v1915
    %1981 = vmatprep.subr.mxu0 %v1918
    %1982 = vmatpush1.msra.mxu0 %v1917
    %1983 = vmatprep.subr.mxu0 %v1920
    %1984 = vmatpush1.msra.mxu0 %v1919
    %1985 = vmatprep.subr.mxu0 %v1922
    %1986 = vmatpush1.msra.mxu0 %v1921
    %1987 = vmatprep.subr.mxu0 %v1924
    %1988 = vmatpush1.msra.mxu0 %v1923
    %1989 = vmatprep.subr.mxu0 %v1926
    %1990 = vmatpush1.msra.mxu0 %v1925
    %1991 = vmatprep.subr.mxu0 %v1928
    %1992 = vmatpush1.msra.mxu0 %v1927
    %1993 = vmatprep.subr.mxu0 %v1930
    %1994 = vmatpush1.msra.mxu0 %v1929
    %1995 = vmatprep.subr.mxu0 %v1932
    %1996 = vmatpush1.msra.mxu0 %v1931
    %1997 = vmatprep.subr.mxu0 %v1934
    %1998 = vmatpush1.msra.mxu0 %v1933
    %1999 = vmatprep.subr.mxu0 %v1936
    %2000 = vmatpush1.msra.mxu0 %v1935
    %2001 = vmatprep.subr.mxu0 %v1938
    %2002 = vmatpush1.msra.mxu0 %v1937
    %2003 = vmatprep.subr.mxu0 %v1940
    %2004 = vmatpush1.msra.mxu0 %v1939
    %2005 = vmatprep.subr.mxu0 %v1942
    %2006 = vmatpush1.msra.mxu0 %v1941
    %2007 = vmatprep.subr.mxu0 %v1944
    %2008 = vmatpush1.msra.mxu0 %v1943
    %2009 = vmatprep.subr.mxu0 %v1946
    %2010 = vmatpush1.msra.mxu0 %v1945
    %2011 = vmatprep.subr.mxu0 %v1948
    %2012 = vmatpush1.msra.mxu0 %v1947
    %2013 = vmatprep.mubr.f32.mxu0 %v1883
    %2014 = vmatmul.mubr.f32.gmra.mrb[0].mxu0 %v1882
    %v2015 = vpop.f32.mrb[0].mxu0
    %v2016 = vadd.f32 0.0, %v2015
    %v2017 = vpop.f32.mrb[0].mxu0
    %v2018 = vadd.f32 0.0, %v2017
    %2019 = vdwg.mxu0
    %v2020 = vrot.slane %v2016, 4
    %v2021 = vadd.f32 %v2016, %v2020
    %v2022 = vrot.slane %v2021, 2
    %v2023 = vadd.f32 %v2021, %v2022
    %v2024 = vrot.slane %v2023, 1
    %v2025 = vadd.f32 %v2023, %v2024
    %v2026 = vrot.slane %v2018, 4
    %v2027 = vadd.f32 %v2018, %v2026
    %v2028 = vrot.slane %v2027, 2
    %v2029 = vadd.f32 %v2027, %v2028
    %v2030 = vrot.slane %v2029, 1
    %v2031 = vadd.f32 %v2029, %v2030
    %v2032 = vmul.f32 %v2025, %v225
    %v2033 = vmul.f32 %v2031, %v225
    %v2034 = vmul.f32 %v2016, %v2016
    %v2035 = vmul.f32 %v2018, %v2018
    %v2036 = vrot.slane %v2034, 4
    %v2037 = vadd.f32 %v2034, %v2036
    %v2038 = vrot.slane %v2037, 2
    %v2039 = vadd.f32 %v2037, %v2038
    %v2040 = vrot.slane %v2039, 1
    %v2041 = vadd.f32 %v2039, %v2040
    %v2042 = vrot.slane %v2035, 4
    %v2043 = vadd.f32 %v2035, %v2042
    %v2044 = vrot.slane %v2043, 2
    %v2045 = vadd.f32 %v2043, %v2044
    %v2046 = vrot.slane %v2045, 1
    %v2047 = vadd.f32 %v2045, %v2046
    %v2048 = vmul.f32 %v2041, %v225
    %v2049 = vmul.f32 %v2047, %v225
    %v2050 = vmul.f32 %v2032, %v2032
    %v2051 = vmul.f32 %v2033, %v2033
    %v2052 = vsub.f32 %v2048, %v2050
    %v2053 = vsub.f32 %v2049, %v2051
    %v2054 = vadd.f32 %v2052, 1e-05
    %v2055 = vadd.f32 %v2053, 1e-05
    %v2056 = vrsqrt.pop %v2054
    %v2057 = vrsqrt.pop %v2055
    %s2058 = scalar_lea.vmem [#allocation5], 16
    %v2059 = vld [vmem:[%s2058] ss:$8 sm:$0x3]
    %s2060 = scalar_lea.vmem [#allocation7], 16
    %v2061 = vld [vmem:[%s2060] ss:$8 sm:$0x3]
    %v2062 = vsub.f32 %v2016, %v2032
    %v2063 = vsub.f32 %v2018, %v2033
    %v2065 = vlaneseq
    %v2066 = vshrl.u32 %v2065, 7
    %v2067 = vsub.s32 0, %v2066
    %v2068 = vrot.slane %v2059, %v2067
    %v2069 = vlaneseq
    %v2070 = vshrl.u32 %v2069, 7
    %v2071 = vsub.s32 1, %v2070
    %v2072 = vrot.slane %v2059, %v2071
    %v2075 = vmul.f32 %v2056, %v2068
    %v2076 = vmul.f32 %v2057, %v2072
    %v2077 = vlaneseq
    %v2078 = vshrl.u32 %v2077, 7
    %v2079 = vsub.s32 0, %v2078
    %v2080 = vrot.slane %v2075, %v2079
    %v2081 = vlaneseq
    %v2082 = vshrl.u32 %v2081, 7
    %v2083 = vsub.s32 0, %v2082
    %v2084 = vrot.slane %v2076, %v2083
    %v2085 = vmul.f32 %v2062, %v2080
    %v2086 = vmul.f32 %v2063, %v2084
    %v2088 = vlaneseq
    %v2089 = vshrl.u32 %v2088, 7
    %v2090 = vsub.s32 0, %v2089
    %v2091 = vrot.slane %v2061, %v2090
    %v2092 = vlaneseq
    %v2093 = vshrl.u32 %v2092, 7
    %v2094 = vsub.s32 1, %v2093
    %v2095 = vrot.slane %v2061, %v2094
    %v2098 = vadd.f32 %v2085, %v2091
    %v2099 = vadd.f32 %v2086, %v2095
    %v2100 = vmul.f32 %v2098, 0.5
    %v2101 = vmul.f32 %v2099, 0.5
    %v2102 = vmul.f32 %v2098, 0.70710677
    %v2103 = vmul.f32 %v2099, 0.70710677
    %v2104 = verf.f32.pop %v2102
    %v2105 = verf.f32.pop %v2103
    %v2106 = vadd.f32 %v2104, 1.0
    %v2107 = vadd.f32 %v2105, 1.0
    %v2108 = vmul.f32 %v2100, %v2106
    %v2109 = vmul.f32 %v2101, %v2107
    %s2110 = scalar_lea.vmem [#allocation2], 4608
    %v2111 = vld [vmem:[%s2110] sm:$0xff]
    %v2112 = vld [vmem:[%s2110 + $0x8] sm:$0xff]
    %v2113 = vld [vmem:[%s2110 + $0x10] sm:$0xff]
    %v2114 = vld [vmem:[%s2110 + $0x18] sm:$0xff]
    %v2115 = vld [vmem:[%s2110 + $0x20] sm:$0xff]
    %v2116 = vld [vmem:[%s2110 + $0x28] sm:$0xff]
    %v2117 = vld [vmem:[%s2110 + $0x30] sm:$0xff]
    %v2118 = vld [vmem:[%s2110 + $0x38] sm:$0xff]
    %v2119 = vld [vmem:[%s2110 + $0x40] sm:$0xff]
    %v2120 = vld [vmem:[%s2110 + $0x48] sm:$0xff]
    %v2121 = vld [vmem:[%s2110 + $0x50] sm:$0xff]
    %v2122 = vld [vmem:[%s2110 + $0x58] sm:$0xff]
    %v2123 = vld [vmem:[%s2110 + $0x60] sm:$0xff]
    %v2124 = vld [vmem:[%s2110 + $0x68] sm:$0xff]
    %v2125 = vld [vmem:[%s2110 + $0x70] sm:$0xff]
    %v2126 = vld [vmem:[%s2110 + $0x78] sm:$0xff]
    %v2127 = vld [vmem:[%s2110 + $0x80] sm:$0xff]
    %v2128 = vld [vmem:[%s2110 + $0x88] sm:$0xff]
    %v2129 = vld [vmem:[%s2110 + $0x90] sm:$0xff]
    %v2130 = vld [vmem:[%s2110 + $0x98] sm:$0xff]
    %v2131 = vld [vmem:[%s2110 + $0xa0] sm:$0xff]
    %v2132 = vld [vmem:[%s2110 + $0xa8] sm:$0xff]
    %v2133 = vld [vmem:[%s2110 + $0xb0] sm:$0xff]
    %v2134 = vld [vmem:[%s2110 + $0xb8] sm:$0xff]
    %v2135 = vld [vmem:[%s2110 + $0xc0] sm:$0xff]
    %v2136 = vld [vmem:[%s2110 + $0xc8] sm:$0xff]
    %v2137 = vld [vmem:[%s2110 + $0xd0] sm:$0xff]
    %v2138 = vld [vmem:[%s2110 + $0xd8] sm:$0xff]
    %v2139 = vld [vmem:[%s2110 + $0xe0] sm:$0xff]
    %v2140 = vld [vmem:[%s2110 + $0xe8] sm:$0xff]
    %v2141 = vld [vmem:[%s2110 + $0xf0] sm:$0xff]
    %v2142 = vld [vmem:[%s2110 + $0xf8] sm:$0xff]
    %v2143 = vld [vmem:[%s2110 + $0x100] sm:$0xff]
    %v2144 = vld [vmem:[%s2110 + $0x108] sm:$0xff]
    %v2145 = vld [vmem:[%s2110 + $0x110] sm:$0xff]
    %v2146 = vld [vmem:[%s2110 + $0x118] sm:$0xff]
    %v2147 = vld [vmem:[%s2110 + $0x120] sm:$0xff]
    %v2148 = vld [vmem:[%s2110 + $0x128] sm:$0xff]
    %v2149 = vld [vmem:[%s2110 + $0x130] sm:$0xff]
    %v2150 = vld [vmem:[%s2110 + $0x138] sm:$0xff]
    %v2151 = vld [vmem:[%s2110 + $0x140] sm:$0xff]
    %v2152 = vld [vmem:[%s2110 + $0x148] sm:$0xff]
    %v2153 = vld [vmem:[%s2110 + $0x150] sm:$0xff]
    %v2154 = vld [vmem:[%s2110 + $0x158] sm:$0xff]
    %v2155 = vld [vmem:[%s2110 + $0x160] sm:$0xff]
    %v2156 = vld [vmem:[%s2110 + $0x168] sm:$0xff]
    %v2157 = vld [vmem:[%s2110 + $0x170] sm:$0xff]
    %v2158 = vld [vmem:[%s2110 + $0x178] sm:$0xff]
    %v2159 = vld [vmem:[%s2110 + $0x180] sm:$0xff]
    %v2160 = vld [vmem:[%s2110 + $0x188] sm:$0xff]
    %v2161 = vld [vmem:[%s2110 + $0x190] sm:$0xff]
    %v2162 = vld [vmem:[%s2110 + $0x198] sm:$0xff]
    %v2163 = vld [vmem:[%s2110 + $0x1a0] sm:$0xff]
    %v2164 = vld [vmem:[%s2110 + $0x1a8] sm:$0xff]
    %v2165 = vld [vmem:[%s2110 + $0x1b0] sm:$0xff]
    %v2166 = vld [vmem:[%s2110 + $0x1b8] sm:$0xff]
    %v2167 = vld [vmem:[%s2110 + $0x1c0] sm:$0xff]
    %v2168 = vld [vmem:[%s2110 + $0x1c8] sm:$0xff]
    %v2169 = vld [vmem:[%s2110 + $0x1d0] sm:$0xff]
    %v2170 = vld [vmem:[%s2110 + $0x1d8] sm:$0xff]
    %v2171 = vld [vmem:[%s2110 + $0x1e0] sm:$0xff]
    %v2172 = vld [vmem:[%s2110 + $0x1e8] sm:$0xff]
    %v2173 = vld [vmem:[%s2110 + $0x1f0] sm:$0xff]
    %v2174 = vld [vmem:[%s2110 + $0x1f8] sm:$0xff]
    %2175 = vmatprep.subr.mxu0 %v2112
    %2176 = vmatpush1.msra.mxu0 %v2111
    %2177 = vmatprep.subr.mxu0 %v2114
    %2178 = vmatpush1.msra.mxu0 %v2113
    %2179 = vmatprep.subr.mxu0 %v2116
    %2180 = vmatpush1.msra.mxu0 %v2115
    %2181 = vmatprep.subr.mxu0 %v2118
    %2182 = vmatpush1.msra.mxu0 %v2117
    %2183 = vmatprep.subr.mxu0 %v2120
    %2184 = vmatpush1.msra.mxu0 %v2119
    %2185 = vmatprep.subr.mxu0 %v2122
    %2186 = vmatpush1.msra.mxu0 %v2121
    %2187 = vmatprep.subr.mxu0 %v2124
    %2188 = vmatpush1.msra.mxu0 %v2123
    %2189 = vmatprep.subr.mxu0 %v2126
    %2190 = vmatpush1.msra.mxu0 %v2125
    %2191 = vmatprep.subr.mxu0 %v2128
    %2192 = vmatpush1.msra.mxu0 %v2127
    %2193 = vmatprep.subr.mxu0 %v2130
    %2194 = vmatpush1.msra.mxu0 %v2129
    %2195 = vmatprep.subr.mxu0 %v2132
    %2196 = vmatpush1.msra.mxu0 %v2131
    %2197 = vmatprep.subr.mxu0 %v2134
    %2198 = vmatpush1.msra.mxu0 %v2133
    %2199 = vmatprep.subr.mxu0 %v2136
    %2200 = vmatpush1.msra.mxu0 %v2135
    %2201 = vmatprep.subr.mxu0 %v2138
    %2202 = vmatpush1.msra.mxu0 %v2137
    %2203 = vmatprep.subr.mxu0 %v2140
    %2204 = vmatpush1.msra.mxu0 %v2139
    %2205 = vmatprep.subr.mxu0 %v2142
    %2206 = vmatpush1.msra.mxu0 %v2141
    %2207 = vmatprep.subr.mxu0 %v2144
    %2208 = vmatpush1.msra.mxu0 %v2143
    %2209 = vmatprep.subr.mxu0 %v2146
    %2210 = vmatpush1.msra.mxu0 %v2145
    %2211 = vmatprep.subr.mxu0 %v2148
    %2212 = vmatpush1.msra.mxu0 %v2147
    %2213 = vmatprep.subr.mxu0 %v2150
    %2214 = vmatpush1.msra.mxu0 %v2149
    %2215 = vmatprep.subr.mxu0 %v2152
    %2216 = vmatpush1.msra.mxu0 %v2151
    %2217 = vmatprep.subr.mxu0 %v2154
    %2218 = vmatpush1.msra.mxu0 %v2153
    %2219 = vmatprep.subr.mxu0 %v2156
    %2220 = vmatpush1.msra.mxu0 %v2155
    %2221 = vmatprep.subr.mxu0 %v2158
    %2222 = vmatpush1.msra.mxu0 %v2157
    %2223 = vmatprep.subr.mxu0 %v2160
    %2224 = vmatpush1.msra.mxu0 %v2159
    %2225 = vmatprep.subr.mxu0 %v2162
    %2226 = vmatpush1.msra.mxu0 %v2161
    %2227 = vmatprep.subr.mxu0 %v2164
    %2228 = vmatpush1.msra.mxu0 %v2163
    %2229 = vmatprep.subr.mxu0 %v2166
    %2230 = vmatpush1.msra.mxu0 %v2165
    %2231 = vmatprep.subr.mxu0 %v2168
    %2232 = vmatpush1.msra.mxu0 %v2167
    %2233 = vmatprep.subr.mxu0 %v2170
    %2234 = vmatpush1.msra.mxu0 %v2169
    %2235 = vmatprep.subr.mxu0 %v2172
    %2236 = vmatpush1.msra.mxu0 %v2171
    %2237 = vmatprep.subr.mxu0 %v2174
    %2238 = vmatpush1.msra.mxu0 %v2173
    %2239 = vmatprep.mubr.f32.mxu0 %v2109
    %2240 = vmatmul.mubr.f32.gmra.mrb[0].mxu0 %v2108
    %v2241 = vpop.f32.mrb[0].mxu0
    %v2242 = vadd.f32 0.0, %v2241
    %v2243 = vpop.f32.mrb[0].mxu0
    %v2244 = vadd.f32 0.0, %v2243
    %2245 = vdwg.mxu0
    %v2246 = vrot.slane %v2242, 4
    %v2247 = vadd.f32 %v2242, %v2246
    %v2248 = vrot.slane %v2247, 2
    %v2249 = vadd.f32 %v2247, %v2248
    %v2250 = vrot.slane %v2249, 1
    %v2251 = vadd.f32 %v2249, %v2250
    %v2252 = vrot.slane %v2244, 4
    %v2253 = vadd.f32 %v2244, %v2252
    %v2254 = vrot.slane %v2253, 2
    %v2255 = vadd.f32 %v2253, %v2254
    %v2256 = vrot.slane %v2255, 1
    %v2257 = vadd.f32 %v2255, %v2256
    %v2258 = vmul.f32 %v2251, %v225
    %v2259 = vmul.f32 %v2257, %v225
    %v2260 = vmul.f32 %v2242, %v2242
    %v2261 = vmul.f32 %v2244, %v2244
    %v2262 = vrot.slane %v2260, 4
    %v2263 = vadd.f32 %v2260, %v2262
    %v2264 = vrot.slane %v2263, 2
    %v2265 = vadd.f32 %v2263, %v2264
    %v2266 = vrot.slane %v2265, 1
    %v2267 = vadd.f32 %v2265, %v2266
    %v2268 = vrot.slane %v2261, 4
    %v2269 = vadd.f32 %v2261, %v2268
    %v2270 = vrot.slane %v2269, 2
    %v2271 = vadd.f32 %v2269, %v2270
    %v2272 = vrot.slane %v2271, 1
    %v2273 = vadd.f32 %v2271, %v2272
    %v2274 = vmul.f32 %v2267, %v225
    %v2275 = vmul.f32 %v2273, %v225
    %v2276 = vmul.f32 %v2258, %v2258
    %v2277 = vmul.f32 %v2259, %v2259
    %v2278 = vsub.f32 %v2274, %v2276
    %v2279 = vsub.f32 %v2275, %v2277
    %v2280 = vadd.f32 %v2278, 1e-05
    %v2281 = vadd.f32 %v2279, 1e-05
    %v2282 = vrsqrt.pop %v2280
    %v2283 = vrsqrt.pop %v2281
    %s2284 = scalar_lea.vmem [#allocation5], 17
    %v2285 = vld [vmem:[%s2284] ss:$8 sm:$0x3]
    %s2286 = scalar_lea.vmem [#allocation7], 17
    %v2287 = vld [vmem:[%s2286] ss:$8 sm:$0x3]
    %v2288 = vsub.f32 %v2242, %v2258
    %v2289 = vsub.f32 %v2244, %v2259
    %v2291 = vlaneseq
    %v2292 = vshrl.u32 %v2291, 7
    %v2293 = vsub.s32 0, %v2292
    %v2294 = vrot.slane %v2285, %v2293
    %v2295 = vlaneseq
    %v2296 = vshrl.u32 %v2295, 7
    %v2297 = vsub.s32 1, %v2296
    %v2298 = vrot.slane %v2285, %v2297
    %v2301 = vmul.f32 %v2282, %v2294
    %v2302 = vmul.f32 %v2283, %v2298
    %v2303 = vlaneseq
    %v2304 = vshrl.u32 %v2303, 7
    %v2305 = vsub.s32 0, %v2304
    %v2306 = vrot.slane %v2301, %v2305
    %v2307 = vlaneseq
    %v2308 = vshrl.u32 %v2307, 7
    %v2309 = vsub.s32 0, %v2308
    %v2310 = vrot.slane %v2302, %v2309
    %v2311 = vmul.f32 %v2288, %v2306
    %v2312 = vmul.f32 %v2289, %v2310
    %v2314 = vlaneseq
    %v2315 = vshrl.u32 %v2314, 7
    %v2316 = vsub.s32 0, %v2315
    %v2317 = vrot.slane %v2287, %v2316
    %v2318 = vlaneseq
    %v2319 = vshrl.u32 %v2318, 7
    %v2320 = vsub.s32 1, %v2319
    %v2321 = vrot.slane %v2287, %v2320
    %v2324 = vadd.f32 %v2311, %v2317
    %v2325 = vadd.f32 %v2312, %v2321
    %v2326 = vmul.f32 %v2324, 0.5
    %v2327 = vmul.f32 %v2325, 0.5
    %v2328 = vmul.f32 %v2324, 0.70710677
    %v2329 = vmul.f32 %v2325, 0.70710677
    %v2330 = verf.f32.pop %v2328
    %v2331 = verf.f32.pop %v2329
    %v2332 = vadd.f32 %v2330, 1.0
    %v2333 = vadd.f32 %v2331, 1.0
    %v2334 = vmul.f32 %v2326, %v2332
    %v2335 = vmul.f32 %v2327, %v2333
    %s2336 = scalar_lea.vmem [#allocation2], 5120
    %v2337 = vld [vmem:[%s2336] sm:$0xff]
    %v2338 = vld [vmem:[%s2336 + $0x8] sm:$0xff]
    %v2339 = vld [vmem:[%s2336 + $0x10] sm:$0xff]
    %v2340 = vld [vmem:[%s2336 + $0x18] sm:$0xff]
    %v2341 = vld [vmem:[%s2336 + $0x20] sm:$0xff]
    %v2342 = vld [vmem:[%s2336 + $0x28] sm:$0xff]
    %v2343 = vld [vmem:[%s2336 + $0x30] sm:$0xff]
    %v2344 = vld [vmem:[%s2336 + $0x38] sm:$0xff]
    %v2345 = vld [vmem:[%s2336 + $0x40] sm:$0xff]
    %v2346 = vld [vmem:[%s2336 + $0x48] sm:$0xff]
    %v2347 = vld [vmem:[%s2336 + $0x50] sm:$0xff]
    %v2348 = vld [vmem:[%s2336 + $0x58] sm:$0xff]
    %v2349 = vld [vmem:[%s2336 + $0x60] sm:$0xff]
    %v2350 = vld [vmem:[%s2336 + $0x68] sm:$0xff]
    %v2351 = vld [vmem:[%s2336 + $0x70] sm:$0xff]
    %v2352 = vld [vmem:[%s2336 + $0x78] sm:$0xff]
    %v2353 = vld [vmem:[%s2336 + $0x80] sm:$0xff]
    %v2354 = vld [vmem:[%s2336 + $0x88] sm:$0xff]
    %v2355 = vld [vmem:[%s2336 + $0x90] sm:$0xff]
    %v2356 = vld [vmem:[%s2336 + $0x98] sm:$0xff]
    %v2357 = vld [vmem:[%s2336 + $0xa0] sm:$0xff]
    %v2358 = vld [vmem:[%s2336 + $0xa8] sm:$0xff]
    %v2359 = vld [vmem:[%s2336 + $0xb0] sm:$0xff]
    %v2360 = vld [vmem:[%s2336 + $0xb8] sm:$0xff]
    %v2361 = vld [vmem:[%s2336 + $0xc0] sm:$0xff]
    %v2362 = vld [vmem:[%s2336 + $0xc8] sm:$0xff]
    %v2363 = vld [vmem:[%s2336 + $0xd0] sm:$0xff]
    %v2364 = vld [vmem:[%s2336 + $0xd8] sm:$0xff]
    %v2365 = vld [vmem:[%s2336 + $0xe0] sm:$0xff]
    %v2366 = vld [vmem:[%s2336 + $0xe8] sm:$0xff]
    %v2367 = vld [vmem:[%s2336 + $0xf0] sm:$0xff]
    %v2368 = vld [vmem:[%s2336 + $0xf8] sm:$0xff]
    %v2369 = vld [vmem:[%s2336 + $0x100] sm:$0xff]
    %v2370 = vld [vmem:[%s2336 + $0x108] sm:$0xff]
    %v2371 = vld [vmem:[%s2336 + $0x110] sm:$0xff]
    %v2372 = vld [vmem:[%s2336 + $0x118] sm:$0xff]
    %v2373 = vld [vmem:[%s2336 + $0x120] sm:$0xff]
    %v2374 = vld [vmem:[%s2336 + $0x128] sm:$0xff]
    %v2375 = vld [vmem:[%s2336 + $0x130] sm:$0xff]
    %v2376 = vld [vmem:[%s2336 + $0x138] sm:$0xff]
    %v2377 = vld [vmem:[%s2336 + $0x140] sm:$0xff]
    %v2378 = vld [vmem:[%s2336 + $0x148] sm:$0xff]
    %v2379 = vld [vmem:[%s2336 + $0x150] sm:$0xff]
    %v2380 = vld [vmem:[%s2336 + $0x158] sm:$0xff]
    %v2381 = vld [vmem:[%s2336 + $0x160] sm:$0xff]
    %v2382 = vld [vmem:[%s2336 + $0x168] sm:$0xff]
    %v2383 = vld [vmem:[%s2336 + $0x170] sm:$0xff]
    %v2384 = vld [vmem:[%s2336 + $0x178] sm:$0xff]
    %v2385 = vld [vmem:[%s2336 + $0x180] sm:$0xff]
    %v2386 = vld [vmem:[%s2336 + $0x188] sm:$0xff]
    %v2387 = vld [vmem:[%s2336 + $0x190] sm:$0xff]
    %v2388 = vld [vmem:[%s2336 + $0x198] sm:$0xff]
    %v2389 = vld [vmem:[%s2336 + $0x1a0] sm:$0xff]
    %v2390 = vld [vmem:[%s2336 + $0x1a8] sm:$0xff]
    %v2391 = vld [vmem:[%s2336 + $0x1b0] sm:$0xff]
    %v2392 = vld [vmem:[%s2336 + $0x1b8] sm:$0xff]
    %v2393 = vld [vmem:[%s2336 + $0x1c0] sm:$0xff]
    %v2394 = vld [vmem:[%s2336 + $0x1c8] sm:$0xff]
    %v2395 = vld [vmem:[%s2336 + $0x1d0] sm:$0xff]
    %v2396 = vld [vmem:[%s2336 + $0x1d8] sm:$0xff]
    %v2397 = vld [vmem:[%s2336 + $0x1e0] sm:$0xff]
    %v2398 = vld [vmem:[%s2336 + $0x1e8] sm:$0xff]
    %v2399 = vld [vmem:[%s2336 + $0x1f0] sm:$0xff]
    %v2400 = vld [vmem:[%s2336 + $0x1f8] sm:$0xff]
    %2401 = vmatprep.subr.mxu0 %v2338
    %2402 = vmatpush1.msra.mxu0 %v2337
    %2403 = vmatprep.subr.mxu0 %v2340
    %2404 = vmatpush1.msra.mxu0 %v2339
    %2405 = vmatprep.subr.mxu0 %v2342
    %2406 = vmatpush1.msra.mxu0 %v2341
    %2407 = vmatprep.subr.mxu0 %v2344
    %2408 = vmatpush1.msra.mxu0 %v2343
    %2409 = vmatprep.subr.mxu0 %v2346
    %2410 = vmatpush1.msra.mxu0 %v2345
    %2411 = vmatprep.subr.mxu0 %v2348
    %2412 = vmatpush1.msra.mxu0 %v2347
    %2413 = vmatprep.subr.mxu0 %v2350
    %2414 = vmatpush1.msra.mxu0 %v2349
    %2415 = vmatprep.subr.mxu0 %v2352
    %2416 = vmatpush1.msra.mxu0 %v2351
    %2417 = vmatprep.subr.mxu0 %v2354
    %2418 = vmatpush1.msra.mxu0 %v2353
    %2419 = vmatprep.subr.mxu0 %v2356
    %2420 = vmatpush1.msra.mxu0 %v2355
    %2421 = vmatprep.subr.mxu0 %v2358
    %2422 = vmatpush1.msra.mxu0 %v2357
    %2423 = vmatprep.subr.mxu0 %v2360
    %2424 = vmatpush1.msra.mxu0 %v2359
    %2425 = vmatprep.subr.mxu0 %v2362
    %2426 = vmatpush1.msra.mxu0 %v2361
    %2427 = vmatprep.subr.mxu0 %v2364
    %2428 = vmatpush1.msra.mxu0 %v2363
    %2429 = vmatprep.subr.mxu0 %v2366
    %2430 = vmatpush1.msra.mxu0 %v2365
    %2431 = vmatprep.subr.mxu0 %v2368
    %2432 = vmatpush1.msra.mxu0 %v2367
    %2433 = vmatprep.subr.mxu0 %v2370
    %2434 = vmatpush1.msra.mxu0 %v2369
    %2435 = vmatprep.subr.mxu0 %v2372
    %2436 = vmatpush1.msra.mxu0 %v2371
    %2437 = vmatprep.subr.mxu0 %v2374
    %2438 = vmatpush1.msra.mxu0 %v2373
    %2439 = vmatprep.subr.mxu0 %v2376
    %2440 = vmatpush1.msra.mxu0 %v2375
    %2441 = vmatprep.subr.mxu0 %v2378
    %2442 = vmatpush1.msra.mxu0 %v2377
    %2443 = vmatprep.subr.mxu0 %v2380
    %2444 = vmatpush1.msra.mxu0 %v2379
    %2445 = vmatprep.subr.mxu0 %v2382
    %2446 = vmatpush1.msra.mxu0 %v2381
    %2447 = vmatprep.subr.mxu0 %v2384
    %2448 = vmatpush1.msra.mxu0 %v2383
    %2449 = vmatprep.subr.mxu0 %v2386
    %2450 = vmatpush1.msra.mxu0 %v2385
    %2451 = vmatprep.subr.mxu0 %v2388
    %2452 = vmatpush1.msra.mxu0 %v2387
    %2453 = vmatprep.subr.mxu0 %v2390
    %2454 = vmatpush1.msra.mxu0 %v2389
    %2455 = vmatprep.subr.mxu0 %v2392
    %2456 = vmatpush1.msra.mxu0 %v2391
    %2457 = vmatprep.subr.mxu0 %v2394
    %2458 = vmatpush1.msra.mxu0 %v2393
    %2459 = vmatprep.subr.mxu0 %v2396
    %2460 = vmatpush1.msra.mxu0 %v2395
    %2461 = vmatprep.subr.mxu0 %v2398
    %2462 = vmatpush1.msra.mxu0 %v2397
    %2463 = vmatprep.subr.mxu0 %v2400
    %2464 = vmatpush1.msra.mxu0 %v2399
    %2465 = vmatprep.mubr.f32.mxu0 %v2335
    %2466 = vmatmul.mubr.f32.gmra.mrb[0].mxu0 %v2334
    %v2467 = vpop.f32.mrb[0].mxu0
    %v2468 = vadd.f32 0.0, %v2467
    %v2469 = vpop.f32.mrb[0].mxu0
    %v2470 = vadd.f32 0.0, %v2469
    %2471 = vdwg.mxu0
    %v2472 = vrot.slane %v2468, 4
    %v2473 = vadd.f32 %v2468, %v2472
    %v2474 = vrot.slane %v2473, 2
    %v2475 = vadd.f32 %v2473, %v2474
    %v2476 = vrot.slane %v2475, 1
    %v2477 = vadd.f32 %v2475, %v2476
    %v2478 = vrot.slane %v2470, 4
    %v2479 = vadd.f32 %v2470, %v2478
    %v2480 = vrot.slane %v2479, 2
    %v2481 = vadd.f32 %v2479, %v2480
    %v2482 = vrot.slane %v2481, 1
    %v2483 = vadd.f32 %v2481, %v2482
    %v2484 = vmul.f32 %v2477, %v225
    %v2485 = vmul.f32 %v2483, %v225
    %v2486 = vmul.f32 %v2468, %v2468
    %v2487 = vmul.f32 %v2470, %v2470
    %v2488 = vrot.slane %v2486, 4
    %v2489 = vadd.f32 %v2486, %v2488
    %v2490 = vrot.slane %v2489, 2
    %v2491 = vadd.f32 %v2489, %v2490
    %v2492 = vrot.slane %v2491, 1
    %v2493 = vadd.f32 %v2491, %v2492
    %v2494 = vrot.slane %v2487, 4
    %v2495 = vadd.f32 %v2487, %v2494
    %v2496 = vrot.slane %v2495, 2
    %v2497 = vadd.f32 %v2495, %v2496
    %v2498 = vrot.slane %v2497, 1
    %v2499 = vadd.f32 %v2497, %v2498
    %v2500 = vmul.f32 %v2493, %v225
    %v2501 = vmul.f32 %v2499, %v225
    %v2502 = vmul.f32 %v2484, %v2484
    %v2503 = vmul.f32 %v2485, %v2485
    %v2504 = vsub.f32 %v2500, %v2502
    %v2505 = vsub.f32 %v2501, %v2503
    %v2506 = vadd.f32 %v2504, 1e-05
    %v2507 = vadd.f32 %v2505, 1e-05
    %v2508 = vrsqrt.pop %v2506
    %v2509 = vrsqrt.pop %v2507
    %s2510 = scalar_lea.vmem [#allocation5], 18
    %v2511 = vld [vmem:[%s2510] ss:$8 sm:$0x3]
    %s2512 = scalar_lea.vmem [#allocation7], 18
    %v2513 = vld [vmem:[%s2512] ss:$8 sm:$0x3]
    %v2514 = vsub.f32 %v2468, %v2484
    %v2515 = vsub.f32 %v2470, %v2485
    %v2517 = vlaneseq
    %v2518 = vshrl.u32 %v2517, 7
    %v2519 = vsub.s32 0, %v2518
    %v2520 = vrot.slane %v2511, %v2519
    %v2521 = vlaneseq
    %v2522 = vshrl.u32 %v2521, 7
    %v2523 = vsub.s32 1, %v2522
    %v2524 = vrot.slane %v2511, %v2523
    %v2527 = vmul.f32 %v2508, %v2520
    %v2528 = vmul.f32 %v2509, %v2524
    %v2529 = vlaneseq
    %v2530 = vshrl.u32 %v2529, 7
    %v2531 = vsub.s32 0, %v2530
    %v2532 = vrot.slane %v2527, %v2531
    %v2533 = vlaneseq
    %v2534 = vshrl.u32 %v2533, 7
    %v2535 = vsub.s32 0, %v2534
    %v2536 = vrot.slane %v2528, %v2535
    %v2537 = vmul.f32 %v2514, %v2532
    %v2538 = vmul.f32 %v2515, %v2536
    %v2540 = vlaneseq
    %v2541 = vshrl.u32 %v2540, 7
    %v2542 = vsub.s32 0, %v2541
    %v2543 = vrot.slane %v2513, %v2542
    %v2544 = vlaneseq
    %v2545 = vshrl.u32 %v2544, 7
    %v2546 = vsub.s32 1, %v2545
    %v2547 = vrot.slane %v2513, %v2546
    %v2550 = vadd.f32 %v2537, %v2543
    %v2551 = vadd.f32 %v2538, %v2547
    %v2552 = vmul.f32 %v2550, 0.5
    %v2553 = vmul.f32 %v2551, 0.5
    %v2554 = vmul.f32 %v2550, 0.70710677
    %v2555 = vmul.f32 %v2551, 0.70710677
    %v2556 = verf.f32.pop %v2554
    %v2557 = verf.f32.pop %v2555
    %v2558 = vadd.f32 %v2556, 1.0
    %v2559 = vadd.f32 %v2557, 1.0
    %v2560 = vmul.f32 %v2552, %v2558
    %v2561 = vmul.f32 %v2553, %v2559
    %s2562 = scalar_lea.vmem [#allocation2], 5632
    %v2563 = vld [vmem:[%s2562] sm:$0xff]
    %v2564 = vld [vmem:[%s2562 + $0x8] sm:$0xff]
    %v2565 = vld [vmem:[%s2562 + $0x10] sm:$0xff]
    %v2566 = vld [vmem:[%s2562 + $0x18] sm:$0xff]
    %v2567 = vld [vmem:[%s2562 + $0x20] sm:$0xff]
    %v2568 = vld [vmem:[%s2562 + $0x28] sm:$0xff]
    %v2569 = vld [vmem:[%s2562 + $0x30] sm:$0xff]
    %v2570 = vld [vmem:[%s2562 + $0x38] sm:$0xff]
    %v2571 = vld [vmem:[%s2562 + $0x40] sm:$0xff]
    %v2572 = vld [vmem:[%s2562 + $0x48] sm:$0xff]
    %v2573 = vld [vmem:[%s2562 + $0x50] sm:$0xff]
    %v2574 = vld [vmem:[%s2562 + $0x58] sm:$0xff]
    %v2575 = vld [vmem:[%s2562 + $0x60] sm:$0xff]
    %v2576 = vld [vmem:[%s2562 + $0x68] sm:$0xff]
    %v2577 = vld [vmem:[%s2562 + $0x70] sm:$0xff]
    %v2578 = vld [vmem:[%s2562 + $0x78] sm:$0xff]
    %v2579 = vld [vmem:[%s2562 + $0x80] sm:$0xff]
    %v2580 = vld [vmem:[%s2562 + $0x88] sm:$0xff]
    %v2581 = vld [vmem:[%s2562 + $0x90] sm:$0xff]
    %v2582 = vld [vmem:[%s2562 + $0x98] sm:$0xff]
    %v2583 = vld [vmem:[%s2562 + $0xa0] sm:$0xff]
    %v2584 = vld [vmem:[%s2562 + $0xa8] sm:$0xff]
    %v2585 = vld [vmem:[%s2562 + $0xb0] sm:$0xff]
    %v2586 = vld [vmem:[%s2562 + $0xb8] sm:$0xff]
    %v2587 = vld [vmem:[%s2562 + $0xc0] sm:$0xff]
    %v2588 = vld [vmem:[%s2562 + $0xc8] sm:$0xff]
    %v2589 = vld [vmem:[%s2562 + $0xd0] sm:$0xff]
    %v2590 = vld [vmem:[%s2562 + $0xd8] sm:$0xff]
    %v2591 = vld [vmem:[%s2562 + $0xe0] sm:$0xff]
    %v2592 = vld [vmem:[%s2562 + $0xe8] sm:$0xff]
    %v2593 = vld [vmem:[%s2562 + $0xf0] sm:$0xff]
    %v2594 = vld [vmem:[%s2562 + $0xf8] sm:$0xff]
    %v2595 = vld [vmem:[%s2562 + $0x100] sm:$0xff]
    %v2596 = vld [vmem:[%s2562 + $0x108] sm:$0xff]
    %v2597 = vld [vmem:[%s2562 + $0x110] sm:$0xff]
    %v2598 = vld [vmem:[%s2562 + $0x118] sm:$0xff]
    %v2599 = vld [vmem:[%s2562 + $0x120] sm:$0xff]
    %v2600 = vld [vmem:[%s2562 + $0x128] sm:$0xff]
    %v2601 = vld [vmem:[%s2562 + $0x130] sm:$0xff]
    %v2602 = vld [vmem:[%s2562 + $0x138] sm:$0xff]
    %v2603 = vld [vmem:[%s2562 + $0x140] sm:$0xff]
    %v2604 = vld [vmem:[%s2562 + $0x148] sm:$0xff]
    %v2605 = vld [vmem:[%s2562 + $0x150] sm:$0xff]
    %v2606 = vld [vmem:[%s2562 + $0x158] sm:$0xff]
    %v2607 = vld [vmem:[%s2562 + $0x160] sm:$0xff]
    %v2608 = vld [vmem:[%s2562 + $0x168] sm:$0xff]
    %v2609 = vld [vmem:[%s2562 + $0x170] sm:$0xff]
    %v2610 = vld [vmem:[%s2562 + $0x178] sm:$0xff]
    %v2611 = vld [vmem:[%s2562 + $0x180] sm:$0xff]
    %v2612 = vld [vmem:[%s2562 + $0x188] sm:$0xff]
    %v2613 = vld [vmem:[%s2562 + $0x190] sm:$0xff]
    %v2614 = vld [vmem:[%s2562 + $0x198] sm:$0xff]
    %v2615 = vld [vmem:[%s2562 + $0x1a0] sm:$0xff]
    %v2616 = vld [vmem:[%s2562 + $0x1a8] sm:$0xff]
    %v2617 = vld [vmem:[%s2562 + $0x1b0] sm:$0xff]
    %v2618 = vld [vmem:[%s2562 + $0x1b8] sm:$0xff]
    %v2619 = vld [vmem:[%s2562 + $0x1c0] sm:$0xff]
    %v2620 = vld [vmem:[%s2562 + $0x1c8] sm:$0xff]
    %v2621 = vld [vmem:[%s2562 + $0x1d0] sm:$0xff]
    %v2622 = vld [vmem:[%s2562 + $0x1d8] sm:$0xff]
    %v2623 = vld [vmem:[%s2562 + $0x1e0] sm:$0xff]
    %v2624 = vld [vmem:[%s2562 + $0x1e8] sm:$0xff]
    %v2625 = vld [vmem:[%s2562 + $0x1f0] sm:$0xff]
    %v2626 = vld [vmem:[%s2562 + $0x1f8] sm:$0xff]
    %2627 = vmatprep.subr.mxu0 %v2564
    %2628 = vmatpush1.msra.mxu0 %v2563
    %2629 = vmatprep.subr.mxu0 %v2566
    %2630 = vmatpush1.msra.mxu0 %v2565
    %2631 = vmatprep.subr.mxu0 %v2568
    %2632 = vmatpush1.msra.mxu0 %v2567
    %2633 = vmatprep.subr.mxu0 %v2570
    %2634 = vmatpush1.msra.mxu0 %v2569
    %2635 = vmatprep.subr.mxu0 %v2572
    %2636 = vmatpush1.msra.mxu0 %v2571
    %2637 = vmatprep.subr.mxu0 %v2574
    %2638 = vmatpush1.msra.mxu0 %v2573
    %2639 = vmatprep.subr.mxu0 %v2576
    %2640 = vmatpush1.msra.mxu0 %v2575
    %2641 = vmatprep.subr.mxu0 %v2578
    %2642 = vmatpush1.msra.mxu0 %v2577
    %2643 = vmatprep.subr.mxu0 %v2580
    %2644 = vmatpush1.msra.mxu0 %v2579
    %2645 = vmatprep.subr.mxu0 %v2582
    %2646 = vmatpush1.msra.mxu0 %v2581
    %2647 = vmatprep.subr.mxu0 %v2584
    %2648 = vmatpush1.msra.mxu0 %v2583
    %2649 = vmatprep.subr.mxu0 %v2586
    %2650 = vmatpush1.msra.mxu0 %v2585
    %2651 = vmatprep.subr.mxu0 %v2588
    %2652 = vmatpush1.msra.mxu0 %v2587
    %2653 = vmatprep.subr.mxu0 %v2590
    %2654 = vmatpush1.msra.mxu0 %v2589
    %2655 = vmatprep.subr.mxu0 %v2592
    %2656 = vmatpush1.msra.mxu0 %v2591
    %2657 = vmatprep.subr.mxu0 %v2594
    %2658 = vmatpush1.msra.mxu0 %v2593
    %2659 = vmatprep.subr.mxu0 %v2596
    %2660 = vmatpush1.msra.mxu0 %v2595
    %2661 = vmatprep.subr.mxu0 %v2598
    %2662 = vmatpush1.msra.mxu0 %v2597
    %2663 = vmatprep.subr.mxu0 %v2600
    %2664 = vmatpush1.msra.mxu0 %v2599
    %2665 = vmatprep.subr.mxu0 %v2602
    %2666 = vmatpush1.msra.mxu0 %v2601
    %2667 = vmatprep.subr.mxu0 %v2604
    %2668 = vmatpush1.msra.mxu0 %v2603
    %2669 = vmatprep.subr.mxu0 %v2606
    %2670 = vmatpush1.msra.mxu0 %v2605
    %2671 = vmatprep.subr.mxu0 %v2608
    %2672 = vmatpush1.msra.mxu0 %v2607
    %2673 = vmatprep.subr.mxu0 %v2610
    %2674 = vmatpush1.msra.mxu0 %v2609
    %2675 = vmatprep.subr.mxu0 %v2612
    %2676 = vmatpush1.msra.mxu0 %v2611
    %2677 = vmatprep.subr.mxu0 %v2614
    %2678 = vmatpush1.msra.mxu0 %v2613
    %2679 = vmatprep.subr.mxu0 %v2616
    %2680 = vmatpush1.msra.mxu0 %v2615
    %2681 = vmatprep.subr.mxu0 %v2618
    %2682 = vmatpush1.msra.mxu0 %v2617
    %2683 = vmatprep.subr.mxu0 %v2620
    %2684 = vmatpush1.msra.mxu0 %v2619
    %2685 = vmatprep.subr.mxu0 %v2622
    %2686 = vmatpush1.msra.mxu0 %v2621
    %2687 = vmatprep.subr.mxu0 %v2624
    %2688 = vmatpush1.msra.mxu0 %v2623
    %2689 = vmatprep.subr.mxu0 %v2626
    %2690 = vmatpush1.msra.mxu0 %v2625
    %2691 = vmatprep.mubr.f32.mxu0 %v2561
    %2692 = vmatmul.mubr.f32.gmra.mrb[0].mxu0 %v2560
    %v2693 = vpop.f32.mrb[0].mxu0
    %v2694 = vadd.f32 0.0, %v2693
    %v2695 = vpop.f32.mrb[0].mxu0
    %v2696 = vadd.f32 0.0, %v2695
    %2697 = vdwg.mxu0
    %v2698 = vrot.slane %v2694, 4
    %v2699 = vadd.f32 %v2694, %v2698
    %v2700 = vrot.slane %v2699, 2
    %v2701 = vadd.f32 %v2699, %v2700
    %v2702 = vrot.slane %v2701, 1
    %v2703 = vadd.f32 %v2701, %v2702
    %v2704 = vrot.slane %v2696, 4
    %v2705 = vadd.f32 %v2696, %v2704
    %v2706 = vrot.slane %v2705, 2
    %v2707 = vadd.f32 %v2705, %v2706
    %v2708 = vrot.slane %v2707, 1
    %v2709 = vadd.f32 %v2707, %v2708
    %v2710 = vmul.f32 %v2703, %v225
    %v2711 = vmul.f32 %v2709, %v225
    %v2712 = vmul.f32 %v2694, %v2694
    %v2713 = vmul.f32 %v2696, %v2696
    %v2714 = vrot.slane %v2712, 4
    %v2715 = vadd.f32 %v2712, %v2714
    %v2716 = vrot.slane %v2715, 2
    %v2717 = vadd.f32 %v2715, %v2716
    %v2718 = vrot.slane %v2717, 1
    %v2719 = vadd.f32 %v2717, %v2718
    %v2720 = vrot.slane %v2713, 4
    %v2721 = vadd.f32 %v2713, %v2720
    %v2722 = vrot.slane %v2721, 2
    %v2723 = vadd.f32 %v2721, %v2722
    %v2724 = vrot.slane %v2723, 1
    %v2725 = vadd.f32 %v2723, %v2724
    %v2726 = vmul.f32 %v2719, %v225
    %v2727 = vmul.f32 %v2725, %v225
    %v2728 = vmul.f32 %v2710, %v2710
    %v2729 = vmul.f32 %v2711, %v2711
    %v2730 = vsub.f32 %v2726, %v2728
    %v2731 = vsub.f32 %v2727, %v2729
    %v2732 = vadd.f32 %v2730, 1e-05
    %v2733 = vadd.f32 %v2731, 1e-05
    %v2734 = vrsqrt.pop %v2732
    %v2735 = vrsqrt.pop %v2733
    %s2736 = scalar_lea.vmem [#allocation5], 19
    %v2737 = vld [vmem:[%s2736] ss:$8 sm:$0x3]
    %s2738 = scalar_lea.vmem [#allocation7], 19
    %v2739 = vld [vmem:[%s2738] ss:$8 sm:$0x3]
    %v2740 = vsub.f32 %v2694, %v2710
    %v2741 = vsub.f32 %v2696, %v2711
    %v2743 = vlaneseq
    %v2744 = vshrl.u32 %v2743, 7
    %v2745 = vsub.s32 0, %v2744
    %v2746 = vrot.slane %v2737, %v2745
    %v2747 = vlaneseq
    %v2748 = vshrl.u32 %v2747, 7
    %v2749 = vsub.s32 1, %v2748
    %v2750 = vrot.slane %v2737, %v2749
    %v2753 = vmul.f32 %v2734, %v2746
    %v2754 = vmul.f32 %v2735, %v2750
    %v2755 = vlaneseq
    %v2756 = vshrl.u32 %v2755, 7
    %v2757 = vsub.s32 0, %v2756
    %v2758 = vrot.slane %v2753, %v2757
    %v2759 = vlaneseq
    %v2760 = vshrl.u32 %v2759, 7
    %v2761 = vsub.s32 0, %v2760
    %v2762 = vrot.slane %v2754, %v2761
    %v2763 = vmul.f32 %v2740, %v2758
    %v2764 = vmul.f32 %v2741, %v2762
    %v2766 = vlaneseq
    %v2767 = vshrl.u32 %v2766, 7
    %v2768 = vsub.s32 0, %v2767
    %v2769 = vrot.slane %v2739, %v2768
    %v2770 = vlaneseq
    %v2771 = vshrl.u32 %v2770, 7
    %v2772 = vsub.s32 1, %v2771
    %v2773 = vrot.slane %v2739, %v2772
    %v2776 = vadd.f32 %v2763, %v2769
    %v2777 = vadd.f32 %v2764, %v2773
    %v2778 = vmul.f32 %v2776, 0.5
    %v2779 = vmul.f32 %v2777, 0.5
    %v2780 = vmul.f32 %v2776, 0.70710677
    %v2781 = vmul.f32 %v2777, 0.70710677
    %v2782 = verf.f32.pop %v2780
    %v2783 = verf.f32.pop %v2781
    %v2784 = vadd.f32 %v2782, 1.0
    %v2785 = vadd.f32 %v2783, 1.0
    %v2786 = vmul.f32 %v2778, %v2784
    %v2787 = vmul.f32 %v2779, %v2785
    %s2788 = scalar_lea.vmem [#allocation2], 6144
    %v2789 = vld [vmem:[%s2788] sm:$0xff]
    %v2790 = vld [vmem:[%s2788 + $0x8] sm:$0xff]
    %v2791 = vld [vmem:[%s2788 + $0x10] sm:$0xff]
    %v2792 = vld [vmem:[%s2788 + $0x18] sm:$0xff]
    %v2793 = vld [vmem:[%s2788 + $0x20] sm:$0xff]
    %v2794 = vld [vmem:[%s2788 + $0x28] sm:$0xff]
    %v2795 = vld [vmem:[%s2788 + $0x30] sm:$0xff]
    %v2796 = vld [vmem:[%s2788 + $0x38] sm:$0xff]
    %v2797 = vld [vmem:[%s2788 + $0x40] sm:$0xff]
    %v2798 = vld [vmem:[%s2788 + $0x48] sm:$0xff]
    %v2799 = vld [vmem:[%s2788 + $0x50] sm:$0xff]
    %v2800 = vld [vmem:[%s2788 + $0x58] sm:$0xff]
    %v2801 = vld [vmem:[%s2788 + $0x60] sm:$0xff]
    %v2802 = vld [vmem:[%s2788 + $0x68] sm:$0xff]
    %v2803 = vld [vmem:[%s2788 + $0x70] sm:$0xff]
    %v2804 = vld [vmem:[%s2788 + $0x78] sm:$0xff]
    %v2805 = vld [vmem:[%s2788 + $0x80] sm:$0xff]
    %v2806 = vld [vmem:[%s2788 + $0x88] sm:$0xff]
    %v2807 = vld [vmem:[%s2788 + $0x90] sm:$0xff]
    %v2808 = vld [vmem:[%s2788 + $0x98] sm:$0xff]
    %v2809 = vld [vmem:[%s2788 + $0xa0] sm:$0xff]
    %v2810 = vld [vmem:[%s2788 + $0xa8] sm:$0xff]
    %v2811 = vld [vmem:[%s2788 + $0xb0] sm:$0xff]
    %v2812 = vld [vmem:[%s2788 + $0xb8] sm:$0xff]
    %v2813 = vld [vmem:[%s2788 + $0xc0] sm:$0xff]
    %v2814 = vld [vmem:[%s2788 + $0xc8] sm:$0xff]
    %v2815 = vld [vmem:[%s2788 + $0xd0] sm:$0xff]
    %v2816 = vld [vmem:[%s2788 + $0xd8] sm:$0xff]
    %v2817 = vld [vmem:[%s2788 + $0xe0] sm:$0xff]
    %v2818 = vld [vmem:[%s2788 + $0xe8] sm:$0xff]
    %v2819 = vld [vmem:[%s2788 + $0xf0] sm:$0xff]
    %v2820 = vld [vmem:[%s2788 + $0xf8] sm:$0xff]
    %v2821 = vld [vmem:[%s2788 + $0x100] sm:$0xff]
    %v2822 = vld [vmem:[%s2788 + $0x108] sm:$0xff]
    %v2823 = vld [vmem:[%s2788 + $0x110] sm:$0xff]
    %v2824 = vld [vmem:[%s2788 + $0x118] sm:$0xff]
    %v2825 = vld [vmem:[%s2788 + $0x120] sm:$0xff]
    %v2826 = vld [vmem:[%s2788 + $0x128] sm:$0xff]
    %v2827 = vld [vmem:[%s2788 + $0x130] sm:$0xff]
    %v2828 = vld [vmem:[%s2788 + $0x138] sm:$0xff]
    %v2829 = vld [vmem:[%s2788 + $0x140] sm:$0xff]
    %v2830 = vld [vmem:[%s2788 + $0x148] sm:$0xff]
    %v2831 = vld [vmem:[%s2788 + $0x150] sm:$0xff]
    %v2832 = vld [vmem:[%s2788 + $0x158] sm:$0xff]
    %v2833 = vld [vmem:[%s2788 + $0x160] sm:$0xff]
    %v2834 = vld [vmem:[%s2788 + $0x168] sm:$0xff]
    %v2835 = vld [vmem:[%s2788 + $0x170] sm:$0xff]
    %v2836 = vld [vmem:[%s2788 + $0x178] sm:$0xff]
    %v2837 = vld [vmem:[%s2788 + $0x180] sm:$0xff]
    %v2838 = vld [vmem:[%s2788 + $0x188] sm:$0xff]
    %v2839 = vld [vmem:[%s2788 + $0x190] sm:$0xff]
    %v2840 = vld [vmem:[%s2788 + $0x198] sm:$0xff]
    %v2841 = vld [vmem:[%s2788 + $0x1a0] sm:$0xff]
    %v2842 = vld [vmem:[%s2788 + $0x1a8] sm:$0xff]
    %v2843 = vld [vmem:[%s2788 + $0x1b0] sm:$0xff]
    %v2844 = vld [vmem:[%s2788 + $0x1b8] sm:$0xff]
    %v2845 = vld [vmem:[%s2788 + $0x1c0] sm:$0xff]
    %v2846 = vld [vmem:[%s2788 + $0x1c8] sm:$0xff]
    %v2847 = vld [vmem:[%s2788 + $0x1d0] sm:$0xff]
    %v2848 = vld [vmem:[%s2788 + $0x1d8] sm:$0xff]
    %v2849 = vld [vmem:[%s2788 + $0x1e0] sm:$0xff]
    %v2850 = vld [vmem:[%s2788 + $0x1e8] sm:$0xff]
    %v2851 = vld [vmem:[%s2788 + $0x1f0] sm:$0xff]
    %v2852 = vld [vmem:[%s2788 + $0x1f8] sm:$0xff]
    %2853 = vmatprep.subr.mxu0 %v2790
    %2854 = vmatpush1.msra.mxu0 %v2789
    %2855 = vmatprep.subr.mxu0 %v2792
    %2856 = vmatpush1.msra.mxu0 %v2791
    %2857 = vmatprep.subr.mxu0 %v2794
    %2858 = vmatpush1.msra.mxu0 %v2793
    %2859 = vmatprep.subr.mxu0 %v2796
    %2860 = vmatpush1.msra.mxu0 %v2795
    %2861 = vmatprep.subr.mxu0 %v2798
    %2862 = vmatpush1.msra.mxu0 %v2797
    %2863 = vmatprep.subr.mxu0 %v2800
    %2864 = vmatpush1.msra.mxu0 %v2799
    %2865 = vmatprep.subr.mxu0 %v2802
    %2866 = vmatpush1.msra.mxu0 %v2801
    %2867 = vmatprep.subr.mxu0 %v2804
    %2868 = vmatpush1.msra.mxu0 %v2803
    %2869 = vmatprep.subr.mxu0 %v2806
    %2870 = vmatpush1.msra.mxu0 %v2805
    %2871 = vmatprep.subr.mxu0 %v2808
    %2872 = vmatpush1.msra.mxu0 %v2807
    %2873 = vmatprep.subr.mxu0 %v2810
    %2874 = vmatpush1.msra.mxu0 %v2809
    %2875 = vmatprep.subr.mxu0 %v2812
    %2876 = vmatpush1.msra.mxu0 %v2811
    %2877 = vmatprep.subr.mxu0 %v2814
    %2878 = vmatpush1.msra.mxu0 %v2813
    %2879 = vmatprep.subr.mxu0 %v2816
    %2880 = vmatpush1.msra.mxu0 %v2815
    %2881 = vmatprep.subr.mxu0 %v2818
    %2882 = vmatpush1.msra.mxu0 %v2817
    %2883 = vmatprep.subr.mxu0 %v2820
    %2884 = vmatpush1.msra.mxu0 %v2819
    %2885 = vmatprep.subr.mxu0 %v2822
    %2886 = vmatpush1.msra.mxu0 %v2821
    %2887 = vmatprep.subr.mxu0 %v2824
    %2888 = vmatpush1.msra.mxu0 %v2823
    %2889 = vmatprep.subr.mxu0 %v2826
    %2890 = vmatpush1.msra.mxu0 %v2825
    %2891 = vmatprep.subr.mxu0 %v2828
    %2892 = vmatpush1.msra.mxu0 %v2827
    %2893 = vmatprep.subr.mxu0 %v2830
    %2894 = vmatpush1.msra.mxu0 %v2829
    %2895 = vmatprep.subr.mxu0 %v2832
    %2896 = vmatpush1.msra.mxu0 %v2831
    %2897 = vmatprep.subr.mxu0 %v2834
    %2898 = vmatpush1.msra.mxu0 %v2833
    %2899 = vmatprep.subr.mxu0 %v2836
    %2900 = vmatpush1.msra.mxu0 %v2835
    %2901 = vmatprep.subr.mxu0 %v2838
    %2902 = vmatpush1.msra.mxu0 %v2837
    %2903 = vmatprep.subr.mxu0 %v2840
    %2904 = vmatpush1.msra.mxu0 %v2839
    %2905 = vmatprep.subr.mxu0 %v2842
    %2906 = vmatpush1.msra.mxu0 %v2841
    %2907 = vmatprep.subr.mxu0 %v2844
    %2908 = vmatpush1.msra.mxu0 %v2843
    %2909 = vmatprep.subr.mxu0 %v2846
    %2910 = vmatpush1.msra.mxu0 %v2845
    %2911 = vmatprep.subr.mxu0 %v2848
    %2912 = vmatpush1.msra.mxu0 %v2847
    %2913 = vmatprep.subr.mxu0 %v2850
    %2914 = vmatpush1.msra.mxu0 %v2849
    %2915 = vmatprep.subr.mxu0 %v2852
    %2916 = vmatpush1.msra.mxu0 %v2851
    %2917 = vmatprep.mubr.f32.mxu0 %v2787
    %2918 = vmatmul.mubr.f32.gmra.mrb[0].mxu0 %v2786
    %v2919 = vpop.f32.mrb[0].mxu0
    %v2920 = vadd.f32 0.0, %v2919
    %v2921 = vpop.f32.mrb[0].mxu0
    %v2922 = vadd.f32 0.0, %v2921
    %2923 = vdwg.mxu0
    %v2924 = vrot.slane %v2920, 4
    %v2925 = vadd.f32 %v2920, %v2924
    %v2926 = vrot.slane %v2925, 2
    %v2927 = vadd.f32 %v2925, %v2926
    %v2928 = vrot.slane %v2927, 1
    %v2929 = vadd.f32 %v2927, %v2928
    %v2930 = vrot.slane %v2922, 4
    %v2931 = vadd.f32 %v2922, %v2930
    %v2932 = vrot.slane %v2931, 2
    %v2933 = vadd.f32 %v2931, %v2932
    %v2934 = vrot.slane %v2933, 1
    %v2935 = vadd.f32 %v2933, %v2934
    %v2936 = vmul.f32 %v2929, %v225
    %v2937 = vmul.f32 %v2935, %v225
    %v2938 = vmul.f32 %v2920, %v2920
    %v2939 = vmul.f32 %v2922, %v2922
    %v2940 = vrot.slane %v2938, 4
    %v2941 = vadd.f32 %v2938, %v2940
    %v2942 = vrot.slane %v2941, 2
    %v2943 = vadd.f32 %v2941, %v2942
    %v2944 = vrot.slane %v2943, 1
    %v2945 = vadd.f32 %v2943, %v2944
    %v2946 = vrot.slane %v2939, 4
    %v2947 = vadd.f32 %v2939, %v2946
    %v2948 = vrot.slane %v2947, 2
    %v2949 = vadd.f32 %v2947, %v2948
    %v2950 = vrot.slane %v2949, 1
    %v2951 = vadd.f32 %v2949, %v2950
    %v2952 = vmul.f32 %v2945, %v225
    %v2953 = vmul.f32 %v2951, %v225
    %v2954 = vmul.f32 %v2936, %v2936
    %v2955 = vmul.f32 %v2937, %v2937
    %v2956 = vsub.f32 %v2952, %v2954
    %v2957 = vsub.f32 %v2953, %v2955
    %v2958 = vadd.f32 %v2956, 1e-05
    %v2959 = vadd.f32 %v2957, 1e-05
    %v2960 = vrsqrt.pop %v2958
    %v2961 = vrsqrt.pop %v2959
    %s2962 = scalar_lea.vmem [#allocation5], 20
    %v2963 = vld [vmem:[%s2962] ss:$8 sm:$0x3]
    %s2964 = scalar_lea.vmem [#allocation7], 20
    %v2965 = vld [vmem:[%s2964] ss:$8 sm:$0x3]
    %v2966 = vsub.f32 %v2920, %v2936
    %v2967 = vsub.f32 %v2922, %v2937
    %v2969 = vlaneseq
    %v2970 = vshrl.u32 %v2969, 7
    %v2971 = vsub.s32 0, %v2970
    %v2972 = vrot.slane %v2963, %v2971
    %v2973 = vlaneseq
    %v2974 = vshrl.u32 %v2973, 7
    %v2975 = vsub.s32 1, %v2974
    %v2976 = vrot.slane %v2963, %v2975
    %v2979 = vmul.f32 %v2960, %v2972
    %v2980 = vmul.f32 %v2961, %v2976
    %v2981 = vlaneseq
    %v2982 = vshrl.u32 %v2981, 7
    %v2983 = vsub.s32 0, %v2982
    %v2984 = vrot.slane %v2979, %v2983
    %v2985 = vlaneseq
    %v2986 = vshrl.u32 %v2985, 7
    %v2987 = vsub.s32 0, %v2986
    %v2988 = vrot.slane %v2980, %v2987
    %v2989 = vmul.f32 %v2966, %v2984
    %v2990 = vmul.f32 %v2967, %v2988
    %v2992 = vlaneseq
    %v2993 = vshrl.u32 %v2992, 7
    %v2994 = vsub.s32 0, %v2993
    %v2995 = vrot.slane %v2965, %v2994
    %v2996 = vlaneseq
    %v2997 = vshrl.u32 %v2996, 7
    %v2998 = vsub.s32 1, %v2997
    %v2999 = vrot.slane %v2965, %v2998
    %v3002 = vadd.f32 %v2989, %v2995
    %v3003 = vadd.f32 %v2990, %v2999
    %v3004 = vmul.f32 %v3002, 0.5
    %v3005 = vmul.f32 %v3003, 0.5
    %v3006 = vmul.f32 %v3002, 0.70710677
    %v3007 = vmul.f32 %v3003, 0.70710677
    %v3008 = verf.f32.pop %v3006
    %v3009 = verf.f32.pop %v3007
    %v3010 = vadd.f32 %v3008, 1.0
    %v3011 = vadd.f32 %v3009, 1.0
    %v3012 = vmul.f32 %v3004, %v3010
    %v3013 = vmul.f32 %v3005, %v3011
    %s3014 = scalar_lea.vmem [#allocation2], 10752
    %v3015 = vld [vmem:[%s3014] sm:$0xff]
    %v3016 = vld [vmem:[%s3014 + $0x8] sm:$0xff]
    %v3017 = vld [vmem:[%s3014 + $0x10] sm:$0xff]
    %v3018 = vld [vmem:[%s3014 + $0x18] sm:$0xff]
    %v3019 = vld [vmem:[%s3014 + $0x20] sm:$0xff]
    %v3020 = vld [vmem:[%s3014 + $0x28] sm:$0xff]
    %v3021 = vld [vmem:[%s3014 + $0x30] sm:$0xff]
    %v3022 = vld [vmem:[%s3014 + $0x38] sm:$0xff]
    %v3023 = vld [vmem:[%s3014 + $0x40] sm:$0xff]
    %v3024 = vld [vmem:[%s3014 + $0x48] sm:$0xff]
    %v3025 = vld [vmem:[%s3014 + $0x50] sm:$0xff]
    %v3026 = vld [vmem:[%s3014 + $0x58] sm:$0xff]
    %v3027 = vld [vmem:[%s3014 + $0x60] sm:$0xff]
    %v3028 = vld [vmem:[%s3014 + $0x68] sm:$0xff]
    %v3029 = vld [vmem:[%s3014 + $0x70] sm:$0xff]
    %v3030 = vld [vmem:[%s3014 + $0x78] sm:$0xff]
    %v3031 = vld [vmem:[%s3014 + $0x80] sm:$0xff]
    %v3032 = vld [vmem:[%s3014 + $0x88] sm:$0xff]
    %v3033 = vld [vmem:[%s3014 + $0x90] sm:$0xff]
    %v3034 = vld [vmem:[%s3014 + $0x98] sm:$0xff]
    %v3035 = vld [vmem:[%s3014 + $0xa0] sm:$0xff]
    %v3036 = vld [vmem:[%s3014 + $0xa8] sm:$0xff]
    %v3037 = vld [vmem:[%s3014 + $0xb0] sm:$0xff]
    %v3038 = vld [vmem:[%s3014 + $0xb8] sm:$0xff]
    %v3039 = vld [vmem:[%s3014 + $0xc0] sm:$0xff]
    %v3040 = vld [vmem:[%s3014 + $0xc8] sm:$0xff]
    %v3041 = vld [vmem:[%s3014 + $0xd0] sm:$0xff]
    %v3042 = vld [vmem:[%s3014 + $0xd8] sm:$0xff]
    %v3043 = vld [vmem:[%s3014 + $0xe0] sm:$0xff]
    %v3044 = vld [vmem:[%s3014 + $0xe8] sm:$0xff]
    %v3045 = vld [vmem:[%s3014 + $0xf0] sm:$0xff]
    %v3046 = vld [vmem:[%s3014 + $0xf8] sm:$0xff]
    %v3047 = vld [vmem:[%s3014 + $0x100] sm:$0xff]
    %v3048 = vld [vmem:[%s3014 + $0x108] sm:$0xff]
    %v3049 = vld [vmem:[%s3014 + $0x110] sm:$0xff]
    %v3050 = vld [vmem:[%s3014 + $0x118] sm:$0xff]
    %v3051 = vld [vmem:[%s3014 + $0x120] sm:$0xff]
    %v3052 = vld [vmem:[%s3014 + $0x128] sm:$0xff]
    %v3053 = vld [vmem:[%s3014 + $0x130] sm:$0xff]
    %v3054 = vld [vmem:[%s3014 + $0x138] sm:$0xff]
    %v3055 = vld [vmem:[%s3014 + $0x140] sm:$0xff]
    %v3056 = vld [vmem:[%s3014 + $0x148] sm:$0xff]
    %v3057 = vld [vmem:[%s3014 + $0x150] sm:$0xff]
    %v3058 = vld [vmem:[%s3014 + $0x158] sm:$0xff]
    %v3059 = vld [vmem:[%s3014 + $0x160] sm:$0xff]
    %v3060 = vld [vmem:[%s3014 + $0x168] sm:$0xff]
    %v3061 = vld [vmem:[%s3014 + $0x170] sm:$0xff]
    %v3062 = vld [vmem:[%s3014 + $0x178] sm:$0xff]
    %v3063 = vld [vmem:[%s3014 + $0x180] sm:$0xff]
    %v3064 = vld [vmem:[%s3014 + $0x188] sm:$0xff]
    %v3065 = vld [vmem:[%s3014 + $0x190] sm:$0xff]
    %v3066 = vld [vmem:[%s3014 + $0x198] sm:$0xff]
    %v3067 = vld [vmem:[%s3014 + $0x1a0] sm:$0xff]
    %v3068 = vld [vmem:[%s3014 + $0x1a8] sm:$0xff]
    %v3069 = vld [vmem:[%s3014 + $0x1b0] sm:$0xff]
    %v3070 = vld [vmem:[%s3014 + $0x1b8] sm:$0xff]
    %v3071 = vld [vmem:[%s3014 + $0x1c0] sm:$0xff]
    %v3072 = vld [vmem:[%s3014 + $0x1c8] sm:$0xff]
    %v3073 = vld [vmem:[%s3014 + $0x1d0] sm:$0xff]
    %v3074 = vld [vmem:[%s3014 + $0x1d8] sm:$0xff]
    %v3075 = vld [vmem:[%s3014 + $0x1e0] sm:$0xff]
    %v3076 = vld [vmem:[%s3014 + $0x1e8] sm:$0xff]
    %v3077 = vld [vmem:[%s3014 + $0x1f0] sm:$0xff]
    %v3078 = vld [vmem:[%s3014 + $0x1f8] sm:$0xff]
    %v3079 = vld [vmem:[#allocation8] ss:$2 sm:$0x3]
    %v3081 = vlaneseq
    %v3082 = vshrl.u32 %v3081, 7
    %v3083 = vsub.s32 0, %v3082
    %v3084 = vrot.slane %v3079, %v3083
    %3086 = vmatprep.subr.mxu0 %v3016
    %3087 = vmatpush1.msra.mxu0 %v3015
    %3088 = vmatprep.subr.mxu0 %v3018
    %3089 = vmatpush1.msra.mxu0 %v3017
    %3090 = vmatprep.subr.mxu0 %v3020
    %3091 = vmatpush1.msra.mxu0 %v3019
    %3092 = vmatprep.subr.mxu0 %v3022
    %3093 = vmatpush1.msra.mxu0 %v3021
    %3094 = vmatprep.subr.mxu0 %v3024
    %3095 = vmatpush1.msra.mxu0 %v3023
    %3096 = vmatprep.subr.mxu0 %v3026
    %3097 = vmatpush1.msra.mxu0 %v3025
    %3098 = vmatprep.subr.mxu0 %v3028
    %3099 = vmatpush1.msra.mxu0 %v3027
    %3100 = vmatprep.subr.mxu0 %v3030
    %3101 = vmatpush1.msra.mxu0 %v3029
    %3102 = vmatprep.subr.mxu0 %v3032
    %3103 = vmatpush1.msra.mxu0 %v3031
    %3104 = vmatprep.subr.mxu0 %v3034
    %3105 = vmatpush1.msra.mxu0 %v3033
    %3106 = vmatprep.subr.mxu0 %v3036
    %3107 = vmatpush1.msra.mxu0 %v3035
    %3108 = vmatprep.subr.mxu0 %v3038
    %3109 = vmatpush1.msra.mxu0 %v3037
    %3110 = vmatprep.subr.mxu0 %v3040
    %3111 = vmatpush1.msra.mxu0 %v3039
    %3112 = vmatprep.subr.mxu0 %v3042
    %3113 = vmatpush1.msra.mxu0 %v3041
    %3114 = vmatprep.subr.mxu0 %v3044
    %3115 = vmatpush1.msra.mxu0 %v3043
    %3116 = vmatprep.subr.mxu0 %v3046
    %3117 = vmatpush1.msra.mxu0 %v3045
    %3118 = vmatprep.subr.mxu0 %v3048
    %3119 = vmatpush1.msra.mxu0 %v3047
    %3120 = vmatprep.subr.mxu0 %v3050
    %3121 = vmatpush1.msra.mxu0 %v3049
    %3122 = vmatprep.subr.mxu0 %v3052
    %3123 = vmatpush1.msra.mxu0 %v3051
    %3124 = vmatprep.subr.mxu0 %v3054
    %3125 = vmatpush1.msra.mxu0 %v3053
    %3126 = vmatprep.subr.mxu0 %v3056
    %3127 = vmatpush1.msra.mxu0 %v3055
    %3128 = vmatprep.subr.mxu0 %v3058
    %3129 = vmatpush1.msra.mxu0 %v3057
    %3130 = vmatprep.subr.mxu0 %v3060
    %3131 = vmatpush1.msra.mxu0 %v3059
    %3132 = vmatprep.subr.mxu0 %v3062
    %3133 = vmatpush1.msra.mxu0 %v3061
    %3134 = vmatprep.subr.mxu0 %v3064
    %3135 = vmatpush1.msra.mxu0 %v3063
    %3136 = vmatprep.subr.mxu0 %v3066
    %3137 = vmatpush1.msra.mxu0 %v3065
    %3138 = vmatprep.subr.mxu0 %v3068
    %3139 = vmatpush1.msra.mxu0 %v3067
    %3140 = vmatprep.subr.mxu0 %v3070
    %3141 = vmatpush1.msra.mxu0 %v3069
    %3142 = vmatprep.subr.mxu0 %v3072
    %3143 = vmatpush1.msra.mxu0 %v3071
    %3144 = vmatprep.subr.mxu0 %v3074
    %3145 = vmatpush1.msra.mxu0 %v3073
    %3146 = vmatprep.subr.mxu0 %v3076
    %3147 = vmatpush1.msra.mxu0 %v3075
    %3148 = vmatprep.subr.mxu0 %v3078
    %3149 = vmatpush1.msra.mxu0 %v3077
    %3150 = vmatprep.mubr.f32.mxu0 %v3013
    %3151 = vmatmul.mubr.f32.gmra.mrb[0].mxu0 %v3012
    %v3152 = vpop.f32.mrb[0].mxu0
    %v3153 = vadd.f32 %v3084, %v3152
    %v3154 = vpop.f32.mrb[0].mxu0
    %3155 = vdwg.mxu0
    %vm3156 = vcmask 80896
    %v3157 = vsel %vm3156, %v3153, -inf
    %3158 = vmax.xlane.f32.xlu0 %v3157
    %v3159 = vpop.xlane.xlu0 %3158
    %v3160 = vsub.f32 %v3153, %v3159
    %v3161 = vmul.f32 %v3160, 1.442695
    %v3162 = vpow.pop %v3161
    %v3163 = vsel %vm3156, %v3162, 0.0
    %3164 = vadd.xlane.f32.xlu0 %v3163
    %v3165 = vpop.xlane.xlu0 %3164
    %v3166 = vrcp.pop %v3165
    %v3167 = vmul.f32 %v3162, %v3166
    %3168 = vst.msk [vmem:[#allocation10] sm:$0xff] %vm3156, %v3167
    %s3169 = scalar_lea.vmem [#allocation2], 6656
    %v3170 = vld [vmem:[%s3169] sm:$0xff]
    %v3171 = vld [vmem:[%s3169 + $0x8] sm:$0xff]
    %v3172 = vld [vmem:[%s3169 + $0x10] sm:$0xff]
    %v3173 = vld [vmem:[%s3169 + $0x18] sm:$0xff]
    %v3174 = vld [vmem:[%s3169 + $0x20] sm:$0xff]
    %v3175 = vld [vmem:[%s3169 + $0x28] sm:$0xff]
    %v3176 = vld [vmem:[%s3169 + $0x30] sm:$0xff]
    %v3177 = vld [vmem:[%s3169 + $0x38] sm:$0xff]
    %v3178 = vld [vmem:[%s3169 + $0x40] sm:$0xff]
    %v3179 = vld [vmem:[%s3169 + $0x48] sm:$0xff]
    %v3180 = vld [vmem:[%s3169 + $0x50] sm:$0xff]
    %v3181 = vld [vmem:[%s3169 + $0x58] sm:$0xff]
    %v3182 = vld [vmem:[%s3169 + $0x60] sm:$0xff]
    %v3183 = vld [vmem:[%s3169 + $0x68] sm:$0xff]
    %v3184 = vld [vmem:[%s3169 + $0x70] sm:$0xff]
    %v3185 = vld [vmem:[%s3169 + $0x78] sm:$0xff]
    %v3186 = vld [vmem:[%s3169 + $0x80] sm:$0xff]
    %v3187 = vld [vmem:[%s3169 + $0x88] sm:$0xff]
    %v3188 = vld [vmem:[%s3169 + $0x90] sm:$0xff]
    %v3189 = vld [vmem:[%s3169 + $0x98] sm:$0xff]
    %v3190 = vld [vmem:[%s3169 + $0xa0] sm:$0xff]
    %v3191 = vld [vmem:[%s3169 + $0xa8] sm:$0xff]
    %v3192 = vld [vmem:[%s3169 + $0xb0] sm:$0xff]
    %v3193 = vld [vmem:[%s3169 + $0xb8] sm:$0xff]
    %v3194 = vld [vmem:[%s3169 + $0xc0] sm:$0xff]
    %v3195 = vld [vmem:[%s3169 + $0xc8] sm:$0xff]
    %v3196 = vld [vmem:[%s3169 + $0xd0] sm:$0xff]
    %v3197 = vld [vmem:[%s3169 + $0xd8] sm:$0xff]
    %v3198 = vld [vmem:[%s3169 + $0xe0] sm:$0xff]
    %v3199 = vld [vmem:[%s3169 + $0xe8] sm:$0xff]
    %v3200 = vld [vmem:[%s3169 + $0xf0] sm:$0xff]
    %v3201 = vld [vmem:[%s3169 + $0xf8] sm:$0xff]
    %v3202 = vld [vmem:[%s3169 + $0x100] sm:$0xff]
    %v3203 = vld [vmem:[%s3169 + $0x108] sm:$0xff]
    %v3204 = vld [vmem:[%s3169 + $0x110] sm:$0xff]
    %v3205 = vld [vmem:[%s3169 + $0x118] sm:$0xff]
    %v3206 = vld [vmem:[%s3169 + $0x120] sm:$0xff]
    %v3207 = vld [vmem:[%s3169 + $0x128] sm:$0xff]
    %v3208 = vld [vmem:[%s3169 + $0x130] sm:$0xff]
    %v3209 = vld [vmem:[%s3169 + $0x138] sm:$0xff]
    %v3210 = vld [vmem:[%s3169 + $0x140] sm:$0xff]
    %v3211 = vld [vmem:[%s3169 + $0x148] sm:$0xff]
    %v3212 = vld [vmem:[%s3169 + $0x150] sm:$0xff]
    %v3213 = vld [vmem:[%s3169 + $0x158] sm:$0xff]
    %v3214 = vld [vmem:[%s3169 + $0x160] sm:$0xff]
    %v3215 = vld [vmem:[%s3169 + $0x168] sm:$0xff]
    %v3216 = vld [vmem:[%s3169 + $0x170] sm:$0xff]
    %v3217 = vld [vmem:[%s3169 + $0x178] sm:$0xff]
    %v3218 = vld [vmem:[%s3169 + $0x180] sm:$0xff]
    %v3219 = vld [vmem:[%s3169 + $0x188] sm:$0xff]
    %v3220 = vld [vmem:[%s3169 + $0x190] sm:$0xff]
    %v3221 = vld [vmem:[%s3169 + $0x198] sm:$0xff]
    %v3222 = vld [vmem:[%s3169 + $0x1a0] sm:$0xff]
    %v3223 = vld [vmem:[%s3169 + $0x1a8] sm:$0xff]
    %v3224 = vld [vmem:[%s3169 + $0x1b0] sm:$0xff]
    %v3225 = vld [vmem:[%s3169 + $0x1b8] sm:$0xff]
    %v3226 = vld [vmem:[%s3169 + $0x1c0] sm:$0xff]
    %v3227 = vld [vmem:[%s3169 + $0x1c8] sm:$0xff]
    %v3228 = vld [vmem:[%s3169 + $0x1d0] sm:$0xff]
    %v3229 = vld [vmem:[%s3169 + $0x1d8] sm:$0xff]
    %v3230 = vld [vmem:[%s3169 + $0x1e0] sm:$0xff]
    %v3231 = vld [vmem:[%s3169 + $0x1e8] sm:$0xff]
    %v3232 = vld [vmem:[%s3169 + $0x1f0] sm:$0xff]
    %v3233 = vld [vmem:[%s3169 + $0x1f8] sm:$0xff]
    %3234 = vmatprep.subr.mxu0 %v3171
    %3235 = vmatpush1.msra.mxu0 %v3170
    %3236 = vmatprep.subr.mxu0 %v3173
    %3237 = vmatpush1.msra.mxu0 %v3172
    %3238 = vmatprep.subr.mxu0 %v3175
    %3239 = vmatpush1.msra.mxu0 %v3174
    %3240 = vmatprep.subr.mxu0 %v3177
    %3241 = vmatpush1.msra.mxu0 %v3176
    %3242 = vmatprep.subr.mxu0 %v3179
    %3243 = vmatpush1.msra.mxu0 %v3178
    %3244 = vmatprep.subr.mxu0 %v3181
    %3245 = vmatpush1.msra.mxu0 %v3180
    %3246 = vmatprep.subr.mxu0 %v3183
    %3247 = vmatpush1.msra.mxu0 %v3182
    %3248 = vmatprep.subr.mxu0 %v3185
    %3249 = vmatpush1.msra.mxu0 %v3184
    %3250 = vmatprep.subr.mxu0 %v3187
    %3251 = vmatpush1.msra.mxu0 %v3186
    %3252 = vmatprep.subr.mxu0 %v3189
    %3253 = vmatpush1.msra.mxu0 %v3188
    %3254 = vmatprep.subr.mxu0 %v3191
    %3255 = vmatpush1.msra.mxu0 %v3190
    %3256 = vmatprep.subr.mxu0 %v3193
    %3257 = vmatpush1.msra.mxu0 %v3192
    %3258 = vmatprep.subr.mxu0 %v3195
    %3259 = vmatpush1.msra.mxu0 %v3194
    %3260 = vmatprep.subr.mxu0 %v3197
    %3261 = vmatpush1.msra.mxu0 %v3196
    %3262 = vmatprep.subr.mxu0 %v3199
    %3263 = vmatpush1.msra.mxu0 %v3198
    %3264 = vmatprep.subr.mxu0 %v3201
    %3265 = vmatpush1.msra.mxu0 %v3200
    %3266 = vmatprep.subr.mxu0 %v3203
    %3267 = vmatpush1.msra.mxu0 %v3202
    %3268 = vmatprep.subr.mxu0 %v3205
    %3269 = vmatpush1.msra.mxu0 %v3204
    %3270 = vmatprep.subr.mxu0 %v3207
    %3271 = vmatpush1.msra.mxu0 %v3206
    %3272 = vmatprep.subr.mxu0 %v3209
    %3273 = vmatpush1.msra.mxu0 %v3208
    %3274 = vmatprep.subr.mxu0 %v3211
    %3275 = vmatpush1.msra.mxu0 %v3210
    %3276 = vmatprep.subr.mxu0 %v3213
    %3277 = vmatpush1.msra.mxu0 %v3212
    %3278 = vmatprep.subr.mxu0 %v3215
    %3279 = vmatpush1.msra.mxu0 %v3214
    %3280 = vmatprep.subr.mxu0 %v3217
    %3281 = vmatpush1.msra.mxu0 %v3216
    %3282 = vmatprep.subr.mxu0 %v3219
    %3283 = vmatpush1.msra.mxu0 %v3218
    %3284 = vmatprep.subr.mxu0 %v3221
    %3285 = vmatpush1.msra.mxu0 %v3220
    %3286 = vmatprep.subr.mxu0 %v3223
    %3287 = vmatpush1.msra.mxu0 %v3222
    %3288 = vmatprep.subr.mxu0 %v3225
    %3289 = vmatpush1.msra.mxu0 %v3224
    %3290 = vmatprep.subr.mxu0 %v3227
    %3291 = vmatpush1.msra.mxu0 %v3226
    %3292 = vmatprep.subr.mxu0 %v3229
    %3293 = vmatpush1.msra.mxu0 %v3228
    %3294 = vmatprep.subr.mxu0 %v3231
    %3295 = vmatpush1.msra.mxu0 %v3230
    %3296 = vmatprep.subr.mxu0 %v3233
    %3297 = vmatpush1.msra.mxu0 %v3232
    %3298 = vmatprep.mubr.f32.mxu0 %v1883
    %3299 = vmatmul.mubr.f32.gmra.mrb[0].mxu0 %v1882
    %v3300 = vpop.f32.mrb[0].mxu0
    %v3301 = vadd.f32 0.0, %v3300
    %v3302 = vpop.f32.mrb[0].mxu0
    %v3303 = vadd.f32 0.0, %v3302
    %3304 = vdwg.mxu0
    %v3305 = vrot.slane %v3301, 4
    %v3306 = vadd.f32 %v3301, %v3305
    %v3307 = vrot.slane %v3306, 2
    %v3308 = vadd.f32 %v3306, %v3307
    %v3309 = vrot.slane %v3308, 1
    %v3310 = vadd.f32 %v3308, %v3309
    %v3311 = vrot.slane %v3303, 4
    %v3312 = vadd.f32 %v3303, %v3311
    %v3313 = vrot.slane %v3312, 2
    %v3314 = vadd.f32 %v3312, %v3313
    %v3315 = vrot.slane %v3314, 1
    %v3316 = vadd.f32 %v3314, %v3315
    %v3317 = vmul.f32 %v3310, %v225
    %v3318 = vmul.f32 %v3316, %v225
    %v3319 = vmul.f32 %v3301, %v3301
    %v3320 = vmul.f32 %v3303, %v3303
    %v3321 = vrot.slane %v3319, 4
    %v3322 = vadd.f32 %v3319, %v3321
    %v3323 = vrot.slane %v3322, 2
    %v3324 = vadd.f32 %v3322, %v3323
    %v3325 = vrot.slane %v3324, 1
    %v3326 = vadd.f32 %v3324, %v3325
    %v3327 = vrot.slane %v3320, 4
    %v3328 = vadd.f32 %v3320, %v3327
    %v3329 = vrot.slane %v3328, 2
    %v3330 = vadd.f32 %v3328, %v3329
    %v3331 = vrot.slane %v3330, 1
    %v3332 = vadd.f32 %v3330, %v3331
    %v3333 = vmul.f32 %v3326, %v225
    %v3334 = vmul.f32 %v3332, %v225
    %v3335 = vmul.f32 %v3317, %v3317
    %v3336 = vmul.f32 %v3318, %v3318
    %v3337 = vsub.f32 %v3333, %v3335
    %v3338 = vsub.f32 %v3334, %v3336
    %v3339 = vadd.f32 %v3337, 1e-05
    %v3340 = vadd.f32 %v3338, 1e-05
    %v3341 = vrsqrt.pop %v3339
    %v3342 = vrsqrt.pop %v3340
    %s3343 = scalar_lea.vmem [#allocation5], 21
    %v3344 = vld [vmem:[%s3343] ss:$8 sm:$0x3]
    %s3345 = scalar_lea.vmem [#allocation7], 21
    %v3346 = vld [vmem:[%s3345] ss:$8 sm:$0x3]
    %v3347 = vsub.f32 %v3301, %v3317
    %v3348 = vsub.f32 %v3303, %v3318
    %v3350 = vlaneseq
    %v3351 = vshrl.u32 %v3350, 7
    %v3352 = vsub.s32 0, %v3351
    %v3353 = vrot.slane %v3344, %v3352
    %v3354 = vlaneseq
    %v3355 = vshrl.u32 %v3354, 7
    %v3356 = vsub.s32 1, %v3355
    %v3357 = vrot.slane %v3344, %v3356
    %v3360 = vmul.f32 %v3341, %v3353
    %v3361 = vmul.f32 %v3342, %v3357
    %v3362 = vlaneseq
    %v3363 = vshrl.u32 %v3362, 7
    %v3364 = vsub.s32 0, %v3363
    %v3365 = vrot.slane %v3360, %v3364
    %v3366 = vlaneseq
    %v3367 = vshrl.u32 %v3366, 7
    %v3368 = vsub.s32 0, %v3367
    %v3369 = vrot.slane %v3361, %v3368
    %v3370 = vmul.f32 %v3347, %v3365
    %v3371 = vmul.f32 %v3348, %v3369
    %v3373 = vlaneseq
    %v3374 = vshrl.u32 %v3373, 7
    %v3375 = vsub.s32 0, %v3374
    %v3376 = vrot.slane %v3346, %v3375
    %v3377 = vlaneseq
    %v3378 = vshrl.u32 %v3377, 7
    %v3379 = vsub.s32 1, %v3378
    %v3380 = vrot.slane %v3346, %v3379
    %v3383 = vadd.f32 %v3370, %v3376
    %v3384 = vadd.f32 %v3371, %v3380
    %v3385 = vmul.f32 %v3383, 0.5
    %v3386 = vmul.f32 %v3384, 0.5
    %v3387 = vmul.f32 %v3383, 0.70710677
    %v3388 = vmul.f32 %v3384, 0.70710677
    %v3389 = verf.f32.pop %v3387
    %v3390 = verf.f32.pop %v3388
    %v3391 = vadd.f32 %v3389, 1.0
    %v3392 = vadd.f32 %v3390, 1.0
    %v3393 = vmul.f32 %v3385, %v3391
    %v3394 = vmul.f32 %v3386, %v3392
    %s3395 = scalar_lea.vmem [#allocation2], 7168
    %v3396 = vld [vmem:[%s3395] sm:$0xff]
    %v3397 = vld [vmem:[%s3395 + $0x8] sm:$0xff]
    %v3398 = vld [vmem:[%s3395 + $0x10] sm:$0xff]
    %v3399 = vld [vmem:[%s3395 + $0x18] sm:$0xff]
    %v3400 = vld [vmem:[%s3395 + $0x20] sm:$0xff]
    %v3401 = vld [vmem:[%s3395 + $0x28] sm:$0xff]
    %v3402 = vld [vmem:[%s3395 + $0x30] sm:$0xff]
    %v3403 = vld [vmem:[%s3395 + $0x38] sm:$0xff]
    %v3404 = vld [vmem:[%s3395 + $0x40] sm:$0xff]
    %v3405 = vld [vmem:[%s3395 + $0x48] sm:$0xff]
    %v3406 = vld [vmem:[%s3395 + $0x50] sm:$0xff]
    %v3407 = vld [vmem:[%s3395 + $0x58] sm:$0xff]
    %v3408 = vld [vmem:[%s3395 + $0x60] sm:$0xff]
    %v3409 = vld [vmem:[%s3395 + $0x68] sm:$0xff]
    %v3410 = vld [vmem:[%s3395 + $0x70] sm:$0xff]
    %v3411 = vld [vmem:[%s3395 + $0x78] sm:$0xff]
    %v3412 = vld [vmem:[%s3395 + $0x80] sm:$0xff]
    %v3413 = vld [vmem:[%s3395 + $0x88] sm:$0xff]
    %v3414 = vld [vmem:[%s3395 + $0x90] sm:$0xff]
    %v3415 = vld [vmem:[%s3395 + $0x98] sm:$0xff]
    %v3416 = vld [vmem:[%s3395 + $0xa0] sm:$0xff]
    %v3417 = vld [vmem:[%s3395 + $0xa8] sm:$0xff]
    %v3418 = vld [vmem:[%s3395 + $0xb0] sm:$0xff]
    %v3419 = vld [vmem:[%s3395 + $0xb8] sm:$0xff]
    %v3420 = vld [vmem:[%s3395 + $0xc0] sm:$0xff]
    %v3421 = vld [vmem:[%s3395 + $0xc8] sm:$0xff]
    %v3422 = vld [vmem:[%s3395 + $0xd0] sm:$0xff]
    %v3423 = vld [vmem:[%s3395 + $0xd8] sm:$0xff]
    %v3424 = vld [vmem:[%s3395 + $0xe0] sm:$0xff]
    %v3425 = vld [vmem:[%s3395 + $0xe8] sm:$0xff]
    %v3426 = vld [vmem:[%s3395 + $0xf0] sm:$0xff]
    %v3427 = vld [vmem:[%s3395 + $0xf8] sm:$0xff]
    %v3428 = vld [vmem:[%s3395 + $0x100] sm:$0xff]
    %v3429 = vld [vmem:[%s3395 + $0x108] sm:$0xff]
    %v3430 = vld [vmem:[%s3395 + $0x110] sm:$0xff]
    %v3431 = vld [vmem:[%s3395 + $0x118] sm:$0xff]
    %v3432 = vld [vmem:[%s3395 + $0x120] sm:$0xff]
    %v3433 = vld [vmem:[%s3395 + $0x128] sm:$0xff]
    %v3434 = vld [vmem:[%s3395 + $0x130] sm:$0xff]
    %v3435 = vld [vmem:[%s3395 + $0x138] sm:$0xff]
    %v3436 = vld [vmem:[%s3395 + $0x140] sm:$0xff]
    %v3437 = vld [vmem:[%s3395 + $0x148] sm:$0xff]
    %v3438 = vld [vmem:[%s3395 + $0x150] sm:$0xff]
    %v3439 = vld [vmem:[%s3395 + $0x158] sm:$0xff]
    %v3440 = vld [vmem:[%s3395 + $0x160] sm:$0xff]
    %v3441 = vld [vmem:[%s3395 + $0x168] sm:$0xff]
    %v3442 = vld [vmem:[%s3395 + $0x170] sm:$0xff]
    %v3443 = vld [vmem:[%s3395 + $0x178] sm:$0xff]
    %v3444 = vld [vmem:[%s3395 + $0x180] sm:$0xff]
    %v3445 = vld [vmem:[%s3395 + $0x188] sm:$0xff]
    %v3446 = vld [vmem:[%s3395 + $0x190] sm:$0xff]
    %v3447 = vld [vmem:[%s3395 + $0x198] sm:$0xff]
    %v3448 = vld [vmem:[%s3395 + $0x1a0] sm:$0xff]
    %v3449 = vld [vmem:[%s3395 + $0x1a8] sm:$0xff]
    %v3450 = vld [vmem:[%s3395 + $0x1b0] sm:$0xff]
    %v3451 = vld [vmem:[%s3395 + $0x1b8] sm:$0xff]
    %v3452 = vld [vmem:[%s3395 + $0x1c0] sm:$0xff]
    %v3453 = vld [vmem:[%s3395 + $0x1c8] sm:$0xff]
    %v3454 = vld [vmem:[%s3395 + $0x1d0] sm:$0xff]
    %v3455 = vld [vmem:[%s3395 + $0x1d8] sm:$0xff]
    %v3456 = vld [vmem:[%s3395 + $0x1e0] sm:$0xff]
    %v3457 = vld [vmem:[%s3395 + $0x1e8] sm:$0xff]
    %v3458 = vld [vmem:[%s3395 + $0x1f0] sm:$0xff]
    %v3459 = vld [vmem:[%s3395 + $0x1f8] sm:$0xff]
    %3460 = vmatprep.subr.mxu0 %v3397
    %3461 = vmatpush1.msra.mxu0 %v3396
    %3462 = vmatprep.subr.mxu0 %v3399
    %3463 = vmatpush1.msra.mxu0 %v3398
    %3464 = vmatprep.subr.mxu0 %v3401
    %3465 = vmatpush1.msra.mxu0 %v3400
    %3466 = vmatprep.subr.mxu0 %v3403
    %3467 = vmatpush1.msra.mxu0 %v3402
    %3468 = vmatprep.subr.mxu0 %v3405
    %3469 = vmatpush1.msra.mxu0 %v3404
    %3470 = vmatprep.subr.mxu0 %v3407
    %3471 = vmatpush1.msra.mxu0 %v3406
    %3472 = vmatprep.subr.mxu0 %v3409
    %3473 = vmatpush1.msra.mxu0 %v3408
    %3474 = vmatprep.subr.mxu0 %v3411
    %3475 = vmatpush1.msra.mxu0 %v3410
    %3476 = vmatprep.subr.mxu0 %v3413
    %3477 = vmatpush1.msra.mxu0 %v3412
    %3478 = vmatprep.subr.mxu0 %v3415
    %3479 = vmatpush1.msra.mxu0 %v3414
    %3480 = vmatprep.subr.mxu0 %v3417
    %3481 = vmatpush1.msra.mxu0 %v3416
    %3482 = vmatprep.subr.mxu0 %v3419
    %3483 = vmatpush1.msra.mxu0 %v3418
    %3484 = vmatprep.subr.mxu0 %v3421
    %3485 = vmatpush1.msra.mxu0 %v3420
    %3486 = vmatprep.subr.mxu0 %v3423
    %3487 = vmatpush1.msra.mxu0 %v3422
    %3488 = vmatprep.subr.mxu0 %v3425
    %3489 = vmatpush1.msra.mxu0 %v3424
    %3490 = vmatprep.subr.mxu0 %v3427
    %3491 = vmatpush1.msra.mxu0 %v3426
    %3492 = vmatprep.subr.mxu0 %v3429
    %3493 = vmatpush1.msra.mxu0 %v3428
    %3494 = vmatprep.subr.mxu0 %v3431
    %3495 = vmatpush1.msra.mxu0 %v3430
    %3496 = vmatprep.subr.mxu0 %v3433
    %3497 = vmatpush1.msra.mxu0 %v3432
    %3498 = vmatprep.subr.mxu0 %v3435
    %3499 = vmatpush1.msra.mxu0 %v3434
    %3500 = vmatprep.subr.mxu0 %v3437
    %3501 = vmatpush1.msra.mxu0 %v3436
    %3502 = vmatprep.subr.mxu0 %v3439
    %3503 = vmatpush1.msra.mxu0 %v3438
    %3504 = vmatprep.subr.mxu0 %v3441
    %3505 = vmatpush1.msra.mxu0 %v3440
    %3506 = vmatprep.subr.mxu0 %v3443
    %3507 = vmatpush1.msra.mxu0 %v3442
    %3508 = vmatprep.subr.mxu0 %v3445
    %3509 = vmatpush1.msra.mxu0 %v3444
    %3510 = vmatprep.subr.mxu0 %v3447
    %3511 = vmatpush1.msra.mxu0 %v3446
    %3512 = vmatprep.subr.mxu0 %v3449
    %3513 = vmatpush1.msra.mxu0 %v3448
    %3514 = vmatprep.subr.mxu0 %v3451
    %3515 = vmatpush1.msra.mxu0 %v3450
    %3516 = vmatprep.subr.mxu0 %v3453
    %3517 = vmatpush1.msra.mxu0 %v3452
    %3518 = vmatprep.subr.mxu0 %v3455
    %3519 = vmatpush1.msra.mxu0 %v3454
    %3520 = vmatprep.subr.mxu0 %v3457
    %3521 = vmatpush1.msra.mxu0 %v3456
    %3522 = vmatprep.subr.mxu0 %v3459
    %3523 = vmatpush1.msra.mxu0 %v3458
    %3524 = vmatprep.mubr.f32.mxu0 %v3394
    %3525 = vmatmul.mubr.f32.gmra.mrb[0].mxu0 %v3393
    %v3526 = vpop.f32.mrb[0].mxu0
    %v3527 = vadd.f32 0.0, %v3526
    %v3528 = vpop.f32.mrb[0].mxu0
    %v3529 = vadd.f32 0.0, %v3528
    %3530 = vdwg.mxu0
    %v3531 = vrot.slane %v3527, 4
    %v3532 = vadd.f32 %v3527, %v3531
    %v3533 = vrot.slane %v3532, 2
    %v3534 = vadd.f32 %v3532, %v3533
    %v3535 = vrot.slane %v3534, 1
    %v3536 = vadd.f32 %v3534, %v3535
    %v3537 = vrot.slane %v3529, 4
    %v3538 = vadd.f32 %v3529, %v3537
    %v3539 = vrot.slane %v3538, 2
    %v3540 = vadd.f32 %v3538, %v3539
    %v3541 = vrot.slane %v3540, 1
    %v3542 = vadd.f32 %v3540, %v3541
    %v3543 = vmul.f32 %v3536, %v225
    %v3544 = vmul.f32 %v3542, %v225
    %v3545 = vmul.f32 %v3527, %v3527
    %v3546 = vmul.f32 %v3529, %v3529
    %v3547 = vrot.slane %v3545, 4
    %v3548 = vadd.f32 %v3545, %v3547
    %v3549 = vrot.slane %v3548, 2
    %v3550 = vadd.f32 %v3548, %v3549
    %v3551 = vrot.slane %v3550, 1
    %v3552 = vadd.f32 %v3550, %v3551
    %v3553 = vrot.slane %v3546, 4
    %v3554 = vadd.f32 %v3546, %v3553
    %v3555 = vrot.slane %v3554, 2
    %v3556 = vadd.f32 %v3554, %v3555
    %v3557 = vrot.slane %v3556, 1
    %v3558 = vadd.f32 %v3556, %v3557
    %v3559 = vmul.f32 %v3552, %v225
    %v3560 = vmul.f32 %v3558, %v225
    %v3561 = vmul.f32 %v3543, %v3543
    %v3562 = vmul.f32 %v3544, %v3544
    %v3563 = vsub.f32 %v3559, %v3561
    %v3564 = vsub.f32 %v3560, %v3562
    %v3565 = vadd.f32 %v3563, 1e-05
    %v3566 = vadd.f32 %v3564, 1e-05
    %v3567 = vrsqrt.pop %v3565
    %v3568 = vrsqrt.pop %v3566
    %s3569 = scalar_lea.vmem [#allocation5], 22
    %v3570 = vld [vmem:[%s3569] ss:$8 sm:$0x3]
    %s3571 = scalar_lea.vmem [#allocation7], 22
    %v3572 = vld [vmem:[%s3571] ss:$8 sm:$0x3]
    %v3573 = vsub.f32 %v3527, %v3543
    %v3574 = vsub.f32 %v3529, %v3544
    %v3576 = vlaneseq
    %v3577 = vshrl.u32 %v3576, 7
    %v3578 = vsub.s32 0, %v3577
    %v3579 = vrot.slane %v3570, %v3578
    %v3580 = vlaneseq
    %v3581 = vshrl.u32 %v3580, 7
    %v3582 = vsub.s32 1, %v3581
    %v3583 = vrot.slane %v3570, %v3582
    %v3586 = vmul.f32 %v3567, %v3579
    %v3587 = vmul.f32 %v3568, %v3583
    %v3588 = vlaneseq
    %v3589 = vshrl.u32 %v3588, 7
    %v3590 = vsub.s32 0, %v3589
    %v3591 = vrot.slane %v3586, %v3590
    %v3592 = vlaneseq
    %v3593 = vshrl.u32 %v3592, 7
    %v3594 = vsub.s32 0, %v3593
    %v3595 = vrot.slane %v3587, %v3594
    %v3596 = vmul.f32 %v3573, %v3591
    %v3597 = vmul.f32 %v3574, %v3595
    %v3599 = vlaneseq
    %v3600 = vshrl.u32 %v3599, 7
    %v3601 = vsub.s32 0, %v3600
    %v3602 = vrot.slane %v3572, %v3601
    %v3603 = vlaneseq
    %v3604 = vshrl.u32 %v3603, 7
    %v3605 = vsub.s32 1, %v3604
    %v3606 = vrot.slane %v3572, %v3605
    %v3609 = vadd.f32 %v3596, %v3602
    %v3610 = vadd.f32 %v3597, %v3606
    %v3611 = vmul.f32 %v3609, 0.5
    %v3612 = vmul.f32 %v3610, 0.5
    %v3613 = vmul.f32 %v3609, 0.70710677
    %v3614 = vmul.f32 %v3610, 0.70710677
    %v3615 = verf.f32.pop %v3613
    %v3616 = verf.f32.pop %v3614
    %v3617 = vadd.f32 %v3615, 1.0
    %v3618 = vadd.f32 %v3616, 1.0
    %v3619 = vmul.f32 %v3611, %v3617
    %v3620 = vmul.f32 %v3612, %v3618
    %s3621 = scalar_lea.vmem [#allocation2], 7680
    %v3622 = vld [vmem:[%s3621] sm:$0xff]
    %v3623 = vld [vmem:[%s3621 + $0x8] sm:$0xff]
    %v3624 = vld [vmem:[%s3621 + $0x10] sm:$0xff]
    %v3625 = vld [vmem:[%s3621 + $0x18] sm:$0xff]
    %v3626 = vld [vmem:[%s3621 + $0x20] sm:$0xff]
    %v3627 = vld [vmem:[%s3621 + $0x28] sm:$0xff]
    %v3628 = vld [vmem:[%s3621 + $0x30] sm:$0xff]
    %v3629 = vld [vmem:[%s3621 + $0x38] sm:$0xff]
    %v3630 = vld [vmem:[%s3621 + $0x40] sm:$0xff]
    %v3631 = vld [vmem:[%s3621 + $0x48] sm:$0xff]
    %v3632 = vld [vmem:[%s3621 + $0x50] sm:$0xff]
    %v3633 = vld [vmem:[%s3621 + $0x58] sm:$0xff]
    %v3634 = vld [vmem:[%s3621 + $0x60] sm:$0xff]
    %v3635 = vld [vmem:[%s3621 + $0x68] sm:$0xff]
    %v3636 = vld [vmem:[%s3621 + $0x70] sm:$0xff]
    %v3637 = vld [vmem:[%s3621 + $0x78] sm:$0xff]
    %v3638 = vld [vmem:[%s3621 + $0x80] sm:$0xff]
    %v3639 = vld [vmem:[%s3621 + $0x88] sm:$0xff]
    %v3640 = vld [vmem:[%s3621 + $0x90] sm:$0xff]
    %v3641 = vld [vmem:[%s3621 + $0x98] sm:$0xff]
    %v3642 = vld [vmem:[%s3621 + $0xa0] sm:$0xff]
    %v3643 = vld [vmem:[%s3621 + $0xa8] sm:$0xff]
    %v3644 = vld [vmem:[%s3621 + $0xb0] sm:$0xff]
    %v3645 = vld [vmem:[%s3621 + $0xb8] sm:$0xff]
    %v3646 = vld [vmem:[%s3621 + $0xc0] sm:$0xff]
    %v3647 = vld [vmem:[%s3621 + $0xc8] sm:$0xff]
    %v3648 = vld [vmem:[%s3621 + $0xd0] sm:$0xff]
    %v3649 = vld [vmem:[%s3621 + $0xd8] sm:$0xff]
    %v3650 = vld [vmem:[%s3621 + $0xe0] sm:$0xff]
    %v3651 = vld [vmem:[%s3621 + $0xe8] sm:$0xff]
    %v3652 = vld [vmem:[%s3621 + $0xf0] sm:$0xff]
    %v3653 = vld [vmem:[%s3621 + $0xf8] sm:$0xff]
    %v3654 = vld [vmem:[%s3621 + $0x100] sm:$0xff]
    %v3655 = vld [vmem:[%s3621 + $0x108] sm:$0xff]
    %v3656 = vld [vmem:[%s3621 + $0x110] sm:$0xff]
    %v3657 = vld [vmem:[%s3621 + $0x118] sm:$0xff]
    %v3658 = vld [vmem:[%s3621 + $0x120] sm:$0xff]
    %v3659 = vld [vmem:[%s3621 + $0x128] sm:$0xff]
    %v3660 = vld [vmem:[%s3621 + $0x130] sm:$0xff]
    %v3661 = vld [vmem:[%s3621 + $0x138] sm:$0xff]
    %v3662 = vld [vmem:[%s3621 + $0x140] sm:$0xff]
    %v3663 = vld [vmem:[%s3621 + $0x148] sm:$0xff]
    %v3664 = vld [vmem:[%s3621 + $0x150] sm:$0xff]
    %v3665 = vld [vmem:[%s3621 + $0x158] sm:$0xff]
    %v3666 = vld [vmem:[%s3621 + $0x160] sm:$0xff]
    %v3667 = vld [vmem:[%s3621 + $0x168] sm:$0xff]
    %v3668 = vld [vmem:[%s3621 + $0x170] sm:$0xff]
    %v3669 = vld [vmem:[%s3621 + $0x178] sm:$0xff]
    %v3670 = vld [vmem:[%s3621 + $0x180] sm:$0xff]
    %v3671 = vld [vmem:[%s3621 + $0x188] sm:$0xff]
    %v3672 = vld [vmem:[%s3621 + $0x190] sm:$0xff]
    %v3673 = vld [vmem:[%s3621 + $0x198] sm:$0xff]
    %v3674 = vld [vmem:[%s3621 + $0x1a0] sm:$0xff]
    %v3675 = vld [vmem:[%s3621 + $0x1a8] sm:$0xff]
    %v3676 = vld [vmem:[%s3621 + $0x1b0] sm:$0xff]
    %v3677 = vld [vmem:[%s3621 + $0x1b8] sm:$0xff]
    %v3678 = vld [vmem:[%s3621 + $0x1c0] sm:$0xff]
    %v3679 = vld [vmem:[%s3621 + $0x1c8] sm:$0xff]
    %v3680 = vld [vmem:[%s3621 + $0x1d0] sm:$0xff]
    %v3681 = vld [vmem:[%s3621 + $0x1d8] sm:$0xff]
    %v3682 = vld [vmem:[%s3621 + $0x1e0] sm:$0xff]
    %v3683 = vld [vmem:[%s3621 + $0x1e8] sm:$0xff]
    %v3684 = vld [vmem:[%s3621 + $0x1f0] sm:$0xff]
    %v3685 = vld [vmem:[%s3621 + $0x1f8] sm:$0xff]
    %3686 = vmatprep.subr.mxu0 %v3623
    %3687 = vmatpush1.msra.mxu0 %v3622
    %3688 = vmatprep.subr.mxu0 %v3625
    %3689 = vmatpush1.msra.mxu0 %v3624
    %3690 = vmatprep.subr.mxu0 %v3627
    %3691 = vmatpush1.msra.mxu0 %v3626
    %3692 = vmatprep.subr.mxu0 %v3629
    %3693 = vmatpush1.msra.mxu0 %v3628
    %3694 = vmatprep.subr.mxu0 %v3631
    %3695 = vmatpush1.msra.mxu0 %v3630
    %3696 = vmatprep.subr.mxu0 %v3633
    %3697 = vmatpush1.msra.mxu0 %v3632
    %3698 = vmatprep.subr.mxu0 %v3635
    %3699 = vmatpush1.msra.mxu0 %v3634
    %3700 = vmatprep.subr.mxu0 %v3637
    %3701 = vmatpush1.msra.mxu0 %v3636
    %3702 = vmatprep.subr.mxu0 %v3639
    %3703 = vmatpush1.msra.mxu0 %v3638
    %3704 = vmatprep.subr.mxu0 %v3641
    %3705 = vmatpush1.msra.mxu0 %v3640
    %3706 = vmatprep.subr.mxu0 %v3643
    %3707 = vmatpush1.msra.mxu0 %v3642
    %3708 = vmatprep.subr.mxu0 %v3645
    %3709 = vmatpush1.msra.mxu0 %v3644
    %3710 = vmatprep.subr.mxu0 %v3647
    %3711 = vmatpush1.msra.mxu0 %v3646
    %3712 = vmatprep.subr.mxu0 %v3649
    %3713 = vmatpush1.msra.mxu0 %v3648
    %3714 = vmatprep.subr.mxu0 %v3651
    %3715 = vmatpush1.msra.mxu0 %v3650
    %3716 = vmatprep.subr.mxu0 %v3653
    %3717 = vmatpush1.msra.mxu0 %v3652
    %3718 = vmatprep.subr.mxu0 %v3655
    %3719 = vmatpush1.msra.mxu0 %v3654
    %3720 = vmatprep.subr.mxu0 %v3657
    %3721 = vmatpush1.msra.mxu0 %v3656
    %3722 = vmatprep.subr.mxu0 %v3659
    %3723 = vmatpush1.msra.mxu0 %v3658
    %3724 = vmatprep.subr.mxu0 %v3661
    %3725 = vmatpush1.msra.mxu0 %v3660
    %3726 = vmatprep.subr.mxu0 %v3663
    %3727 = vmatpush1.msra.mxu0 %v3662
    %3728 = vmatprep.subr.mxu0 %v3665
    %3729 = vmatpush1.msra.mxu0 %v3664
    %3730 = vmatprep.subr.mxu0 %v3667
    %3731 = vmatpush1.msra.mxu0 %v3666
    %3732 = vmatprep.subr.mxu0 %v3669
    %3733 = vmatpush1.msra.mxu0 %v3668
    %3734 = vmatprep.subr.mxu0 %v3671
    %3735 = vmatpush1.msra.mxu0 %v3670
    %3736 = vmatprep.subr.mxu0 %v3673
    %3737 = vmatpush1.msra.mxu0 %v3672
    %3738 = vmatprep.subr.mxu0 %v3675
    %3739 = vmatpush1.msra.mxu0 %v3674
    %3740 = vmatprep.subr.mxu0 %v3677
    %3741 = vmatpush1.msra.mxu0 %v3676
    %3742 = vmatprep.subr.mxu0 %v3679
    %3743 = vmatpush1.msra.mxu0 %v3678
    %3744 = vmatprep.subr.mxu0 %v3681
    %3745 = vmatpush1.msra.mxu0 %v3680
    %3746 = vmatprep.subr.mxu0 %v3683
    %3747 = vmatpush1.msra.mxu0 %v3682
    %3748 = vmatprep.subr.mxu0 %v3685
    %3749 = vmatpush1.msra.mxu0 %v3684
    %3750 = vmatprep.mubr.f32.mxu0 %v3620
    %3751 = vmatmul.mubr.f32.gmra.mrb[0].mxu0 %v3619
    %v3752 = vpop.f32.mrb[0].mxu0
    %v3753 = vadd.f32 0.0, %v3752
    %v3754 = vpop.f32.mrb[0].mxu0
    %v3755 = vadd.f32 0.0, %v3754
    %3756 = vdwg.mxu0
    %v3757 = vrot.slane %v3753, 4
    %v3758 = vadd.f32 %v3753, %v3757
    %v3759 = vrot.slane %v3758, 2
    %v3760 = vadd.f32 %v3758, %v3759
    %v3761 = vrot.slane %v3760, 1
    %v3762 = vadd.f32 %v3760, %v3761
    %v3763 = vrot.slane %v3755, 4
    %v3764 = vadd.f32 %v3755, %v3763
    %v3765 = vrot.slane %v3764, 2
    %v3766 = vadd.f32 %v3764, %v3765
    %v3767 = vrot.slane %v3766, 1
    %v3768 = vadd.f32 %v3766, %v3767
    %v3769 = vmul.f32 %v3762, %v225
    %v3770 = vmul.f32 %v3768, %v225
    %v3771 = vmul.f32 %v3753, %v3753
    %v3772 = vmul.f32 %v3755, %v3755
    %v3773 = vrot.slane %v3771, 4
    %v3774 = vadd.f32 %v3771, %v3773
    %v3775 = vrot.slane %v3774, 2
    %v3776 = vadd.f32 %v3774, %v3775
    %v3777 = vrot.slane %v3776, 1
    %v3778 = vadd.f32 %v3776, %v3777
    %v3779 = vrot.slane %v3772, 4
    %v3780 = vadd.f32 %v3772, %v3779
    %v3781 = vrot.slane %v3780, 2
    %v3782 = vadd.f32 %v3780, %v3781
    %v3783 = vrot.slane %v3782, 1
    %v3784 = vadd.f32 %v3782, %v3783
    %v3785 = vmul.f32 %v3778, %v225
    %v3786 = vmul.f32 %v3784, %v225
    %v3787 = vmul.f32 %v3769, %v3769
    %v3788 = vmul.f32 %v3770, %v3770
    %v3789 = vsub.f32 %v3785, %v3787
    %v3790 = vsub.f32 %v3786, %v3788
    %v3791 = vadd.f32 %v3789, 1e-05
    %v3792 = vadd.f32 %v3790, 1e-05
    %v3793 = vrsqrt.pop %v3791
    %v3794 = vrsqrt.pop %v3792
    %s3795 = scalar_lea.vmem [#allocation5], 23
    %v3796 = vld [vmem:[%s3795] ss:$8 sm:$0x3]
    %s3797 = scalar_lea.vmem [#allocation7], 23
    %v3798 = vld [vmem:[%s3797] ss:$8 sm:$0x3]
    %v3799 = vsub.f32 %v3753, %v3769
    %v3800 = vsub.f32 %v3755, %v3770
    %v3802 = vlaneseq
    %v3803 = vshrl.u32 %v3802, 7
    %v3804 = vsub.s32 0, %v3803
    %v3805 = vrot.slane %v3796, %v3804
    %v3806 = vlaneseq
    %v3807 = vshrl.u32 %v3806, 7
    %v3808 = vsub.s32 1, %v3807
    %v3809 = vrot.slane %v3796, %v3808
    %v3812 = vmul.f32 %v3793, %v3805
    %v3813 = vmul.f32 %v3794, %v3809
    %v3814 = vlaneseq
    %v3815 = vshrl.u32 %v3814, 7
    %v3816 = vsub.s32 0, %v3815
    %v3817 = vrot.slane %v3812, %v3816
    %v3818 = vlaneseq
    %v3819 = vshrl.u32 %v3818, 7
    %v3820 = vsub.s32 0, %v3819
    %v3821 = vrot.slane %v3813, %v3820
    %v3822 = vmul.f32 %v3799, %v3817
    %v3823 = vmul.f32 %v3800, %v3821
    %v3825 = vlaneseq
    %v3826 = vshrl.u32 %v3825, 7
    %v3827 = vsub.s32 0, %v3826
    %v3828 = vrot.slane %v3798, %v3827
    %v3829 = vlaneseq
    %v3830 = vshrl.u32 %v3829, 7
    %v3831 = vsub.s32 1, %v3830
    %v3832 = vrot.slane %v3798, %v3831
    %v3835 = vadd.f32 %v3822, %v3828
    %v3836 = vadd.f32 %v3823, %v3832
    %v3837 = vmul.f32 %v3835, 0.5
    %v3838 = vmul.f32 %v3836, 0.5
    %v3839 = vmul.f32 %v3835, 0.70710677
    %v3840 = vmul.f32 %v3836, 0.70710677
    %v3841 = verf.f32.pop %v3839
    %v3842 = verf.f32.pop %v3840
    %v3843 = vadd.f32 %v3841, 1.0
    %v3844 = vadd.f32 %v3842, 1.0
    %v3845 = vmul.f32 %v3837, %v3843
    %v3846 = vmul.f32 %v3838, %v3844
    %s3847 = scalar_lea.vmem [#allocation2], 8192
    %v3848 = vld [vmem:[%s3847] sm:$0xff]
    %v3849 = vld [vmem:[%s3847 + $0x8] sm:$0xff]
    %v3850 = vld [vmem:[%s3847 + $0x10] sm:$0xff]
    %v3851 = vld [vmem:[%s3847 + $0x18] sm:$0xff]
    %v3852 = vld [vmem:[%s3847 + $0x20] sm:$0xff]
    %v3853 = vld [vmem:[%s3847 + $0x28] sm:$0xff]
    %v3854 = vld [vmem:[%s3847 + $0x30] sm:$0xff]
    %v3855 = vld [vmem:[%s3847 + $0x38] sm:$0xff]
    %v3856 = vld [vmem:[%s3847 + $0x40] sm:$0xff]
    %v3857 = vld [vmem:[%s3847 + $0x48] sm:$0xff]
    %v3858 = vld [vmem:[%s3847 + $0x50] sm:$0xff]
    %v3859 = vld [vmem:[%s3847 + $0x58] sm:$0xff]
    %v3860 = vld [vmem:[%s3847 + $0x60] sm:$0xff]
    %v3861 = vld [vmem:[%s3847 + $0x68] sm:$0xff]
    %v3862 = vld [vmem:[%s3847 + $0x70] sm:$0xff]
    %v3863 = vld [vmem:[%s3847 + $0x78] sm:$0xff]
    %v3864 = vld [vmem:[%s3847 + $0x80] sm:$0xff]
    %v3865 = vld [vmem:[%s3847 + $0x88] sm:$0xff]
    %v3866 = vld [vmem:[%s3847 + $0x90] sm:$0xff]
    %v3867 = vld [vmem:[%s3847 + $0x98] sm:$0xff]
    %v3868 = vld [vmem:[%s3847 + $0xa0] sm:$0xff]
    %v3869 = vld [vmem:[%s3847 + $0xa8] sm:$0xff]
    %v3870 = vld [vmem:[%s3847 + $0xb0] sm:$0xff]
    %v3871 = vld [vmem:[%s3847 + $0xb8] sm:$0xff]
    %v3872 = vld [vmem:[%s3847 + $0xc0] sm:$0xff]
    %v3873 = vld [vmem:[%s3847 + $0xc8] sm:$0xff]
    %v3874 = vld [vmem:[%s3847 + $0xd0] sm:$0xff]
    %v3875 = vld [vmem:[%s3847 + $0xd8] sm:$0xff]
    %v3876 = vld [vmem:[%s3847 + $0xe0] sm:$0xff]
    %v3877 = vld [vmem:[%s3847 + $0xe8] sm:$0xff]
    %v3878 = vld [vmem:[%s3847 + $0xf0] sm:$0xff]
    %v3879 = vld [vmem:[%s3847 + $0xf8] sm:$0xff]
    %v3880 = vld [vmem:[%s3847 + $0x100] sm:$0xff]
    %v3881 = vld [vmem:[%s3847 + $0x108] sm:$0xff]
    %v3882 = vld [vmem:[%s3847 + $0x110] sm:$0xff]
    %v3883 = vld [vmem:[%s3847 + $0x118] sm:$0xff]
    %v3884 = vld [vmem:[%s3847 + $0x120] sm:$0xff]
    %v3885 = vld [vmem:[%s3847 + $0x128] sm:$0xff]
    %v3886 = vld [vmem:[%s3847 + $0x130] sm:$0xff]
    %v3887 = vld [vmem:[%s3847 + $0x138] sm:$0xff]
    %v3888 = vld [vmem:[%s3847 + $0x140] sm:$0xff]
    %v3889 = vld [vmem:[%s3847 + $0x148] sm:$0xff]
    %v3890 = vld [vmem:[%s3847 + $0x150] sm:$0xff]
    %v3891 = vld [vmem:[%s3847 + $0x158] sm:$0xff]
    %v3892 = vld [vmem:[%s3847 + $0x160] sm:$0xff]
    %v3893 = vld [vmem:[%s3847 + $0x168] sm:$0xff]
    %v3894 = vld [vmem:[%s3847 + $0x170] sm:$0xff]
    %v3895 = vld [vmem:[%s3847 + $0x178] sm:$0xff]
    %v3896 = vld [vmem:[%s3847 + $0x180] sm:$0xff]
    %v3897 = vld [vmem:[%s3847 + $0x188] sm:$0xff]
    %v3898 = vld [vmem:[%s3847 + $0x190] sm:$0xff]
    %v3899 = vld [vmem:[%s3847 + $0x198] sm:$0xff]
    %v3900 = vld [vmem:[%s3847 + $0x1a0] sm:$0xff]
    %v3901 = vld [vmem:[%s3847 + $0x1a8] sm:$0xff]
    %v3902 = vld [vmem:[%s3847 + $0x1b0] sm:$0xff]
    %v3903 = vld [vmem:[%s3847 + $0x1b8] sm:$0xff]
    %v3904 = vld [vmem:[%s3847 + $0x1c0] sm:$0xff]
    %v3905 = vld [vmem:[%s3847 + $0x1c8] sm:$0xff]
    %v3906 = vld [vmem:[%s3847 + $0x1d0] sm:$0xff]
    %v3907 = vld [vmem:[%s3847 + $0x1d8] sm:$0xff]
    %v3908 = vld [vmem:[%s3847 + $0x1e0] sm:$0xff]
    %v3909 = vld [vmem:[%s3847 + $0x1e8] sm:$0xff]
    %v3910 = vld [vmem:[%s3847 + $0x1f0] sm:$0xff]
    %v3911 = vld [vmem:[%s3847 + $0x1f8] sm:$0xff]
    %3912 = vmatprep.subr.mxu0 %v3849
    %3913 = vmatpush1.msra.mxu0 %v3848
    %3914 = vmatprep.subr.mxu0 %v3851
    %3915 = vmatpush1.msra.mxu0 %v3850
    %3916 = vmatprep.subr.mxu0 %v3853
    %3917 = vmatpush1.msra.mxu0 %v3852
    %3918 = vmatprep.subr.mxu0 %v3855
    %3919 = vmatpush1.msra.mxu0 %v3854
    %3920 = vmatprep.subr.mxu0 %v3857
    %3921 = vmatpush1.msra.mxu0 %v3856
    %3922 = vmatprep.subr.mxu0 %v3859
    %3923 = vmatpush1.msra.mxu0 %v3858
    %3924 = vmatprep.subr.mxu0 %v3861
    %3925 = vmatpush1.msra.mxu0 %v3860
    %3926 = vmatprep.subr.mxu0 %v3863
    %3927 = vmatpush1.msra.mxu0 %v3862
    %3928 = vmatprep.subr.mxu0 %v3865
    %3929 = vmatpush1.msra.mxu0 %v3864
    %3930 = vmatprep.subr.mxu0 %v3867
    %3931 = vmatpush1.msra.mxu0 %v3866
    %3932 = vmatprep.subr.mxu0 %v3869
    %3933 = vmatpush1.msra.mxu0 %v3868
    %3934 = vmatprep.subr.mxu0 %v3871
    %3935 = vmatpush1.msra.mxu0 %v3870
    %3936 = vmatprep.subr.mxu0 %v3873
    %3937 = vmatpush1.msra.mxu0 %v3872
    %3938 = vmatprep.subr.mxu0 %v3875
    %3939 = vmatpush1.msra.mxu0 %v3874
    %3940 = vmatprep.subr.mxu0 %v3877
    %3941 = vmatpush1.msra.mxu0 %v3876
    %3942 = vmatprep.subr.mxu0 %v3879
    %3943 = vmatpush1.msra.mxu0 %v3878
    %3944 = vmatprep.subr.mxu0 %v3881
    %3945 = vmatpush1.msra.mxu0 %v3880
    %3946 = vmatprep.subr.mxu0 %v3883
    %3947 = vmatpush1.msra.mxu0 %v3882
    %3948 = vmatprep.subr.mxu0 %v3885
    %3949 = vmatpush1.msra.mxu0 %v3884
    %3950 = vmatprep.subr.mxu0 %v3887
    %3951 = vmatpush1.msra.mxu0 %v3886
    %3952 = vmatprep.subr.mxu0 %v3889
    %3953 = vmatpush1.msra.mxu0 %v3888
    %3954 = vmatprep.subr.mxu0 %v3891
    %3955 = vmatpush1.msra.mxu0 %v3890
    %3956 = vmatprep.subr.mxu0 %v3893
    %3957 = vmatpush1.msra.mxu0 %v3892
    %3958 = vmatprep.subr.mxu0 %v3895
    %3959 = vmatpush1.msra.mxu0 %v3894
    %3960 = vmatprep.subr.mxu0 %v3897
    %3961 = vmatpush1.msra.mxu0 %v3896
    %3962 = vmatprep.subr.mxu0 %v3899
    %3963 = vmatpush1.msra.mxu0 %v3898
    %3964 = vmatprep.subr.mxu0 %v3901
    %3965 = vmatpush1.msra.mxu0 %v3900
    %3966 = vmatprep.subr.mxu0 %v3903
    %3967 = vmatpush1.msra.mxu0 %v3902
    %3968 = vmatprep.subr.mxu0 %v3905
    %3969 = vmatpush1.msra.mxu0 %v3904
    %3970 = vmatprep.subr.mxu0 %v3907
    %3971 = vmatpush1.msra.mxu0 %v3906
    %3972 = vmatprep.subr.mxu0 %v3909
    %3973 = vmatpush1.msra.mxu0 %v3908
    %3974 = vmatprep.subr.mxu0 %v3911
    %3975 = vmatpush1.msra.mxu0 %v3910
    %3976 = vmatprep.mubr.f32.mxu0 %v3846
    %3977 = vmatmul.mubr.f32.gmra.mrb[0].mxu0 %v3845
    %v3978 = vpop.f32.mrb[0].mxu0
    %v3979 = vadd.f32 0.0, %v3978
    %v3980 = vpop.f32.mrb[0].mxu0
    %v3981 = vadd.f32 0.0, %v3980
    %3982 = vdwg.mxu0
    %v3983 = vrot.slane %v3979, 4
    %v3984 = vadd.f32 %v3979, %v3983
    %v3985 = vrot.slane %v3984, 2
    %v3986 = vadd.f32 %v3984, %v3985
    %v3987 = vrot.slane %v3986, 1
    %v3988 = vadd.f32 %v3986, %v3987
    %v3989 = vrot.slane %v3981, 4
    %v3990 = vadd.f32 %v3981, %v3989
    %v3991 = vrot.slane %v3990, 2
    %v3992 = vadd.f32 %v3990, %v3991
    %v3993 = vrot.slane %v3992, 1
    %v3994 = vadd.f32 %v3992, %v3993
    %v3995 = vmul.f32 %v3988, %v225
    %v3996 = vmul.f32 %v3994, %v225
    %v3997 = vmul.f32 %v3979, %v3979
    %v3998 = vmul.f32 %v3981, %v3981
    %v3999 = vrot.slane %v3997, 4
    %v4000 = vadd.f32 %v3997, %v3999
    %v4001 = vrot.slane %v4000, 2
    %v4002 = vadd.f32 %v4000, %v4001
    %v4003 = vrot.slane %v4002, 1
    %v4004 = vadd.f32 %v4002, %v4003
    %v4005 = vrot.slane %v3998, 4
    %v4006 = vadd.f32 %v3998, %v4005
    %v4007 = vrot.slane %v4006, 2
    %v4008 = vadd.f32 %v4006, %v4007
    %v4009 = vrot.slane %v4008, 1
    %v4010 = vadd.f32 %v4008, %v4009
    %v4011 = vmul.f32 %v4004, %v225
    %v4012 = vmul.f32 %v4010, %v225
    %v4013 = vmul.f32 %v3995, %v3995
    %v4014 = vmul.f32 %v3996, %v3996
    %v4015 = vsub.f32 %v4011, %v4013
    %v4016 = vsub.f32 %v4012, %v4014
    %v4017 = vadd.f32 %v4015, 1e-05
    %v4018 = vadd.f32 %v4016, 1e-05
    %v4019 = vrsqrt.pop %v4017
    %v4020 = vrsqrt.pop %v4018
    %s4021 = scalar_lea.vmem [#allocation5], 32
    %v4022 = vld [vmem:[%s4021] ss:$8 sm:$0x3]
    %s4023 = scalar_lea.vmem [#allocation7], 32
    %v4024 = vld [vmem:[%s4023] ss:$8 sm:$0x3]
    %v4025 = vsub.f32 %v3979, %v3995
    %v4026 = vsub.f32 %v3981, %v3996
    %v4028 = vlaneseq
    %v4029 = vshrl.u32 %v4028, 7
    %v4030 = vsub.s32 0, %v4029
    %v4031 = vrot.slane %v4022, %v4030
    %v4032 = vlaneseq
    %v4033 = vshrl.u32 %v4032, 7
    %v4034 = vsub.s32 1, %v4033
    %v4035 = vrot.slane %v4022, %v4034
    %v4038 = vmul.f32 %v4019, %v4031
    %v4039 = vmul.f32 %v4020, %v4035
    %v4040 = vlaneseq
    %v4041 = vshrl.u32 %v4040, 7
    %v4042 = vsub.s32 0, %v4041
    %v4043 = vrot.slane %v4038, %v4042
    %v4044 = vlaneseq
    %v4045 = vshrl.u32 %v4044, 7
    %v4046 = vsub.s32 0, %v4045
    %v4047 = vrot.slane %v4039, %v4046
    %v4048 = vmul.f32 %v4025, %v4043
    %v4049 = vmul.f32 %v4026, %v4047
    %v4051 = vlaneseq
    %v4052 = vshrl.u32 %v4051, 7
    %v4053 = vsub.s32 0, %v4052
    %v4054 = vrot.slane %v4024, %v4053
    %v4055 = vlaneseq
    %v4056 = vshrl.u32 %v4055, 7
    %v4057 = vsub.s32 1, %v4056
    %v4058 = vrot.slane %v4024, %v4057
    %v4061 = vadd.f32 %v4048, %v4054
    %v4062 = vadd.f32 %v4049, %v4058
    %v4063 = vmul.f32 %v4061, 0.5
    %v4064 = vmul.f32 %v4062, 0.5
    %v4065 = vmul.f32 %v4061, 0.70710677
    %v4066 = vmul.f32 %v4062, 0.70710677
    %v4067 = verf.f32.pop %v4065
    %v4068 = verf.f32.pop %v4066
    %v4069 = vadd.f32 %v4067, 1.0
    %v4070 = vadd.f32 %v4068, 1.0
    %v4071 = vmul.f32 %v4063, %v4069
    %v4072 = vmul.f32 %v4064, %v4070
    %s4073 = scalar_lea.vmem [#allocation2], 8704
    %v4074 = vld [vmem:[%s4073] sm:$0xff]
    %v4075 = vld [vmem:[%s4073 + $0x8] sm:$0xff]
    %v4076 = vld [vmem:[%s4073 + $0x10] sm:$0xff]
    %v4077 = vld [vmem:[%s4073 + $0x18] sm:$0xff]
    %v4078 = vld [vmem:[%s4073 + $0x20] sm:$0xff]
    %v4079 = vld [vmem:[%s4073 + $0x28] sm:$0xff]
    %v4080 = vld [vmem:[%s4073 + $0x30] sm:$0xff]
    %v4081 = vld [vmem:[%s4073 + $0x38] sm:$0xff]
    %v4082 = vld [vmem:[%s4073 + $0x40] sm:$0xff]
    %v4083 = vld [vmem:[%s4073 + $0x48] sm:$0xff]
    %v4084 = vld [vmem:[%s4073 + $0x50] sm:$0xff]
    %v4085 = vld [vmem:[%s4073 + $0x58] sm:$0xff]
    %v4086 = vld [vmem:[%s4073 + $0x60] sm:$0xff]
    %v4087 = vld [vmem:[%s4073 + $0x68] sm:$0xff]
    %v4088 = vld [vmem:[%s4073 + $0x70] sm:$0xff]
    %v4089 = vld [vmem:[%s4073 + $0x78] sm:$0xff]
    %v4090 = vld [vmem:[%s4073 + $0x80] sm:$0xff]
    %v4091 = vld [vmem:[%s4073 + $0x88] sm:$0xff]
    %v4092 = vld [vmem:[%s4073 + $0x90] sm:$0xff]
    %v4093 = vld [vmem:[%s4073 + $0x98] sm:$0xff]
    %v4094 = vld [vmem:[%s4073 + $0xa0] sm:$0xff]
    %v4095 = vld [vmem:[%s4073 + $0xa8] sm:$0xff]
    %v4096 = vld [vmem:[%s4073 + $0xb0] sm:$0xff]
    %v4097 = vld [vmem:[%s4073 + $0xb8] sm:$0xff]
    %v4098 = vld [vmem:[%s4073 + $0xc0] sm:$0xff]
    %v4099 = vld [vmem:[%s4073 + $0xc8] sm:$0xff]
    %v4100 = vld [vmem:[%s4073 + $0xd0] sm:$0xff]
    %v4101 = vld [vmem:[%s4073 + $0xd8] sm:$0xff]
    %v4102 = vld [vmem:[%s4073 + $0xe0] sm:$0xff]
    %v4103 = vld [vmem:[%s4073 + $0xe8] sm:$0xff]
    %v4104 = vld [vmem:[%s4073 + $0xf0] sm:$0xff]
    %v4105 = vld [vmem:[%s4073 + $0xf8] sm:$0xff]
    %v4106 = vld [vmem:[%s4073 + $0x100] sm:$0xff]
    %v4107 = vld [vmem:[%s4073 + $0x108] sm:$0xff]
    %v4108 = vld [vmem:[%s4073 + $0x110] sm:$0xff]
    %v4109 = vld [vmem:[%s4073 + $0x118] sm:$0xff]
    %v4110 = vld [vmem:[%s4073 + $0x120] sm:$0xff]
    %v4111 = vld [vmem:[%s4073 + $0x128] sm:$0xff]
    %v4112 = vld [vmem:[%s4073 + $0x130] sm:$0xff]
    %v4113 = vld [vmem:[%s4073 + $0x138] sm:$0xff]
    %v4114 = vld [vmem:[%s4073 + $0x140] sm:$0xff]
    %v4115 = vld [vmem:[%s4073 + $0x148] sm:$0xff]
    %v4116 = vld [vmem:[%s4073 + $0x150] sm:$0xff]
    %v4117 = vld [vmem:[%s4073 + $0x158] sm:$0xff]
    %v4118 = vld [vmem:[%s4073 + $0x160] sm:$0xff]
    %v4119 = vld [vmem:[%s4073 + $0x168] sm:$0xff]
    %v4120 = vld [vmem:[%s4073 + $0x170] sm:$0xff]
    %v4121 = vld [vmem:[%s4073 + $0x178] sm:$0xff]
    %v4122 = vld [vmem:[%s4073 + $0x180] sm:$0xff]
    %v4123 = vld [vmem:[%s4073 + $0x188] sm:$0xff]
    %v4124 = vld [vmem:[%s4073 + $0x190] sm:$0xff]
    %v4125 = vld [vmem:[%s4073 + $0x198] sm:$0xff]
    %v4126 = vld [vmem:[%s4073 + $0x1a0] sm:$0xff]
    %v4127 = vld [vmem:[%s4073 + $0x1a8] sm:$0xff]
    %v4128 = vld [vmem:[%s4073 + $0x1b0] sm:$0xff]
    %v4129 = vld [vmem:[%s4073 + $0x1b8] sm:$0xff]
    %v4130 = vld [vmem:[%s4073 + $0x1c0] sm:$0xff]
    %v4131 = vld [vmem:[%s4073 + $0x1c8] sm:$0xff]
    %v4132 = vld [vmem:[%s4073 + $0x1d0] sm:$0xff]
    %v4133 = vld [vmem:[%s4073 + $0x1d8] sm:$0xff]
    %v4134 = vld [vmem:[%s4073 + $0x1e0] sm:$0xff]
    %v4135 = vld [vmem:[%s4073 + $0x1e8] sm:$0xff]
    %v4136 = vld [vmem:[%s4073 + $0x1f0] sm:$0xff]
    %v4137 = vld [vmem:[%s4073 + $0x1f8] sm:$0xff]
    %4138 = vmatprep.subr.mxu0 %v4075
    %4139 = vmatpush1.msra.mxu0 %v4074
    %4140 = vmatprep.subr.mxu0 %v4077
    %4141 = vmatpush1.msra.mxu0 %v4076
    %4142 = vmatprep.subr.mxu0 %v4079
    %4143 = vmatpush1.msra.mxu0 %v4078
    %4144 = vmatprep.subr.mxu0 %v4081
    %4145 = vmatpush1.msra.mxu0 %v4080
    %4146 = vmatprep.subr.mxu0 %v4083
    %4147 = vmatpush1.msra.mxu0 %v4082
    %4148 = vmatprep.subr.mxu0 %v4085
    %4149 = vmatpush1.msra.mxu0 %v4084
    %4150 = vmatprep.subr.mxu0 %v4087
    %4151 = vmatpush1.msra.mxu0 %v4086
    %4152 = vmatprep.subr.mxu0 %v4089
    %4153 = vmatpush1.msra.mxu0 %v4088
    %4154 = vmatprep.subr.mxu0 %v4091
    %4155 = vmatpush1.msra.mxu0 %v4090
    %4156 = vmatprep.subr.mxu0 %v4093
    %4157 = vmatpush1.msra.mxu0 %v4092
    %4158 = vmatprep.subr.mxu0 %v4095
    %4159 = vmatpush1.msra.mxu0 %v4094
    %4160 = vmatprep.subr.mxu0 %v4097
    %4161 = vmatpush1.msra.mxu0 %v4096
    %4162 = vmatprep.subr.mxu0 %v4099
    %4163 = vmatpush1.msra.mxu0 %v4098
    %4164 = vmatprep.subr.mxu0 %v4101
    %4165 = vmatpush1.msra.mxu0 %v4100
    %4166 = vmatprep.subr.mxu0 %v4103
    %4167 = vmatpush1.msra.mxu0 %v4102
    %4168 = vmatprep.subr.mxu0 %v4105
    %4169 = vmatpush1.msra.mxu0 %v4104
    %4170 = vmatprep.subr.mxu0 %v4107
    %4171 = vmatpush1.msra.mxu0 %v4106
    %4172 = vmatprep.subr.mxu0 %v4109
    %4173 = vmatpush1.msra.mxu0 %v4108
    %4174 = vmatprep.subr.mxu0 %v4111
    %4175 = vmatpush1.msra.mxu0 %v4110
    %4176 = vmatprep.subr.mxu0 %v4113
    %4177 = vmatpush1.msra.mxu0 %v4112
    %4178 = vmatprep.subr.mxu0 %v4115
    %4179 = vmatpush1.msra.mxu0 %v4114
    %4180 = vmatprep.subr.mxu0 %v4117
    %4181 = vmatpush1.msra.mxu0 %v4116
    %4182 = vmatprep.subr.mxu0 %v4119
    %4183 = vmatpush1.msra.mxu0 %v4118
    %4184 = vmatprep.subr.mxu0 %v4121
    %4185 = vmatpush1.msra.mxu0 %v4120
    %4186 = vmatprep.subr.mxu0 %v4123
    %4187 = vmatpush1.msra.mxu0 %v4122
    %4188 = vmatprep.subr.mxu0 %v4125
    %4189 = vmatpush1.msra.mxu0 %v4124
    %4190 = vmatprep.subr.mxu0 %v4127
    %4191 = vmatpush1.msra.mxu0 %v4126
    %4192 = vmatprep.subr.mxu0 %v4129
    %4193 = vmatpush1.msra.mxu0 %v4128
    %4194 = vmatprep.subr.mxu0 %v4131
    %4195 = vmatpush1.msra.mxu0 %v4130
    %4196 = vmatprep.subr.mxu0 %v4133
    %4197 = vmatpush1.msra.mxu0 %v4132
    %4198 = vmatprep.subr.mxu0 %v4135
    %4199 = vmatpush1.msra.mxu0 %v4134
    %4200 = vmatprep.subr.mxu0 %v4137
    %4201 = vmatpush1.msra.mxu0 %v4136
    %4202 = vmatprep.mubr.f32.mxu0 %v4072
    %4203 = vmatmul.mubr.f32.gmra.mrb[0].mxu0 %v4071
    %v4204 = vpop.f32.mrb[0].mxu0
    %v4205 = vadd.f32 0.0, %v4204
    %v4206 = vpop.f32.mrb[0].mxu0
    %v4207 = vadd.f32 0.0, %v4206
    %4208 = vdwg.mxu0
    %v4209 = vrot.slane %v4205, 4
    %v4210 = vadd.f32 %v4205, %v4209
    %v4211 = vrot.slane %v4210, 2
    %v4212 = vadd.f32 %v4210, %v4211
    %v4213 = vrot.slane %v4212, 1
    %v4214 = vadd.f32 %v4212, %v4213
    %v4215 = vrot.slane %v4207, 4
    %v4216 = vadd.f32 %v4207, %v4215
    %v4217 = vrot.slane %v4216, 2
    %v4218 = vadd.f32 %v4216, %v4217
    %v4219 = vrot.slane %v4218, 1
    %v4220 = vadd.f32 %v4218, %v4219
    %v4221 = vmul.f32 %v4214, %v225
    %v4222 = vmul.f32 %v4220, %v225
    %v4223 = vmul.f32 %v4205, %v4205
    %v4224 = vmul.f32 %v4207, %v4207
    %v4225 = vrot.slane %v4223, 4
    %v4226 = vadd.f32 %v4223, %v4225
    %v4227 = vrot.slane %v4226, 2
    %v4228 = vadd.f32 %v4226, %v4227
    %v4229 = vrot.slane %v4228, 1
    %v4230 = vadd.f32 %v4228, %v4229
    %v4231 = vrot.slane %v4224, 4
    %v4232 = vadd.f32 %v4224, %v4231
    %v4233 = vrot.slane %v4232, 2
    %v4234 = vadd.f32 %v4232, %v4233
    %v4235 = vrot.slane %v4234, 1
    %v4236 = vadd.f32 %v4234, %v4235
    %v4237 = vmul.f32 %v4230, %v225
    %v4238 = vmul.f32 %v4236, %v225
    %v4239 = vmul.f32 %v4221, %v4221
    %v4240 = vmul.f32 %v4222, %v4222
    %v4241 = vsub.f32 %v4237, %v4239
    %v4242 = vsub.f32 %v4238, %v4240
    %v4243 = vadd.f32 %v4241, 1e-05
    %v4244 = vadd.f32 %v4242, 1e-05
    %v4245 = vrsqrt.pop %v4243
    %v4246 = vrsqrt.pop %v4244
    %s4247 = scalar_lea.vmem [#allocation5], 33
    %v4248 = vld [vmem:[%s4247] ss:$8 sm:$0x3]
    %s4249 = scalar_lea.vmem [#allocation7], 33
    %v4250 = vld [vmem:[%s4249] ss:$8 sm:$0x3]
    %v4251 = vsub.f32 %v4205, %v4221
    %v4252 = vsub.f32 %v4207, %v4222
    %v4254 = vlaneseq
    %v4255 = vshrl.u32 %v4254, 7
    %v4256 = vsub.s32 0, %v4255
    %v4257 = vrot.slane %v4248, %v4256
    %v4258 = vlaneseq
    %v4259 = vshrl.u32 %v4258, 7
    %v4260 = vsub.s32 1, %v4259
    %v4261 = vrot.slane %v4248, %v4260
    %v4264 = vmul.f32 %v4245, %v4257
    %v4265 = vmul.f32 %v4246, %v4261
    %v4266 = vlaneseq
    %v4267 = vshrl.u32 %v4266, 7
    %v4268 = vsub.s32 0, %v4267
    %v4269 = vrot.slane %v4264, %v4268
    %v4270 = vlaneseq
    %v4271 = vshrl.u32 %v4270, 7
    %v4272 = vsub.s32 0, %v4271
    %v4273 = vrot.slane %v4265, %v4272
    %v4274 = vmul.f32 %v4251, %v4269
    %v4275 = vmul.f32 %v4252, %v4273
    %v4277 = vlaneseq
    %v4278 = vshrl.u32 %v4277, 7
    %v4279 = vsub.s32 0, %v4278
    %v4280 = vrot.slane %v4250, %v4279
    %v4281 = vlaneseq
    %v4282 = vshrl.u32 %v4281, 7
    %v4283 = vsub.s32 1, %v4282
    %v4284 = vrot.slane %v4250, %v4283
    %v4287 = vadd.f32 %v4274, %v4280
    %v4288 = vadd.f32 %v4275, %v4284
    %v4289 = vmul.f32 %v4287, 0.5
    %v4290 = vmul.f32 %v4288, 0.5
    %v4291 = vmul.f32 %v4287, 0.70710677
    %v4292 = vmul.f32 %v4288, 0.70710677
    %v4293 = verf.f32.pop %v4291
    %v4294 = verf.f32.pop %v4292
    %v4295 = vadd.f32 %v4293, 1.0
    %v4296 = vadd.f32 %v4294, 1.0
    %v4297 = vmul.f32 %v4289, %v4295
    %v4298 = vmul.f32 %v4290, %v4296
    %s4299 = scalar_lea.vmem [#allocation2], 9216
    %v4300 = vld [vmem:[%s4299] sm:$0xff]
    %v4301 = vld [vmem:[%s4299 + $0x8] sm:$0xff]
    %v4302 = vld [vmem:[%s4299 + $0x10] sm:$0xff]
    %v4303 = vld [vmem:[%s4299 + $0x18] sm:$0xff]
    %v4304 = vld [vmem:[%s4299 + $0x20] sm:$0xff]
    %v4305 = vld [vmem:[%s4299 + $0x28] sm:$0xff]
    %v4306 = vld [vmem:[%s4299 + $0x30] sm:$0xff]
    %v4307 = vld [vmem:[%s4299 + $0x38] sm:$0xff]
    %v4308 = vld [vmem:[%s4299 + $0x40] sm:$0xff]
    %v4309 = vld [vmem:[%s4299 + $0x48] sm:$0xff]
    %v4310 = vld [vmem:[%s4299 + $0x50] sm:$0xff]
    %v4311 = vld [vmem:[%s4299 + $0x58] sm:$0xff]
    %v4312 = vld [vmem:[%s4299 + $0x60] sm:$0xff]
    %v4313 = vld [vmem:[%s4299 + $0x68] sm:$0xff]
    %v4314 = vld [vmem:[%s4299 + $0x70] sm:$0xff]
    %v4315 = vld [vmem:[%s4299 + $0x78] sm:$0xff]
    %v4316 = vld [vmem:[%s4299 + $0x80] sm:$0xff]
    %v4317 = vld [vmem:[%s4299 + $0x88] sm:$0xff]
    %v4318 = vld [vmem:[%s4299 + $0x90] sm:$0xff]
    %v4319 = vld [vmem:[%s4299 + $0x98] sm:$0xff]
    %v4320 = vld [vmem:[%s4299 + $0xa0] sm:$0xff]
    %v4321 = vld [vmem:[%s4299 + $0xa8] sm:$0xff]
    %v4322 = vld [vmem:[%s4299 + $0xb0] sm:$0xff]
    %v4323 = vld [vmem:[%s4299 + $0xb8] sm:$0xff]
    %v4324 = vld [vmem:[%s4299 + $0xc0] sm:$0xff]
    %v4325 = vld [vmem:[%s4299 + $0xc8] sm:$0xff]
    %v4326 = vld [vmem:[%s4299 + $0xd0] sm:$0xff]
    %v4327 = vld [vmem:[%s4299 + $0xd8] sm:$0xff]
    %v4328 = vld [vmem:[%s4299 + $0xe0] sm:$0xff]
    %v4329 = vld [vmem:[%s4299 + $0xe8] sm:$0xff]
    %v4330 = vld [vmem:[%s4299 + $0xf0] sm:$0xff]
    %v4331 = vld [vmem:[%s4299 + $0xf8] sm:$0xff]
    %v4332 = vld [vmem:[%s4299 + $0x100] sm:$0xff]
    %v4333 = vld [vmem:[%s4299 + $0x108] sm:$0xff]
    %v4334 = vld [vmem:[%s4299 + $0x110] sm:$0xff]
    %v4335 = vld [vmem:[%s4299 + $0x118] sm:$0xff]
    %v4336 = vld [vmem:[%s4299 + $0x120] sm:$0xff]
    %v4337 = vld [vmem:[%s4299 + $0x128] sm:$0xff]
    %v4338 = vld [vmem:[%s4299 + $0x130] sm:$0xff]
    %v4339 = vld [vmem:[%s4299 + $0x138] sm:$0xff]
    %v4340 = vld [vmem:[%s4299 + $0x140] sm:$0xff]
    %v4341 = vld [vmem:[%s4299 + $0x148] sm:$0xff]
    %v4342 = vld [vmem:[%s4299 + $0x150] sm:$0xff]
    %v4343 = vld [vmem:[%s4299 + $0x158] sm:$0xff]
    %v4344 = vld [vmem:[%s4299 + $0x160] sm:$0xff]
    %v4345 = vld [vmem:[%s4299 + $0x168] sm:$0xff]
    %v4346 = vld [vmem:[%s4299 + $0x170] sm:$0xff]
    %v4347 = vld [vmem:[%s4299 + $0x178] sm:$0xff]
    %v4348 = vld [vmem:[%s4299 + $0x180] sm:$0xff]
    %v4349 = vld [vmem:[%s4299 + $0x188] sm:$0xff]
    %v4350 = vld [vmem:[%s4299 + $0x190] sm:$0xff]
    %v4351 = vld [vmem:[%s4299 + $0x198] sm:$0xff]
    %v4352 = vld [vmem:[%s4299 + $0x1a0] sm:$0xff]
    %v4353 = vld [vmem:[%s4299 + $0x1a8] sm:$0xff]
    %v4354 = vld [vmem:[%s4299 + $0x1b0] sm:$0xff]
    %v4355 = vld [vmem:[%s4299 + $0x1b8] sm:$0xff]
    %v4356 = vld [vmem:[%s4299 + $0x1c0] sm:$0xff]
    %v4357 = vld [vmem:[%s4299 + $0x1c8] sm:$0xff]
    %v4358 = vld [vmem:[%s4299 + $0x1d0] sm:$0xff]
    %v4359 = vld [vmem:[%s4299 + $0x1d8] sm:$0xff]
    %v4360 = vld [vmem:[%s4299 + $0x1e0] sm:$0xff]
    %v4361 = vld [vmem:[%s4299 + $0x1e8] sm:$0xff]
    %v4362 = vld [vmem:[%s4299 + $0x1f0] sm:$0xff]
    %v4363 = vld [vmem:[%s4299 + $0x1f8] sm:$0xff]
    %4364 = vmatprep.subr.mxu0 %v4301
    %4365 = vmatpush1.msra.mxu0 %v4300
    %4366 = vmatprep.subr.mxu0 %v4303
    %4367 = vmatpush1.msra.mxu0 %v4302
    %4368 = vmatprep.subr.mxu0 %v4305
    %4369 = vmatpush1.msra.mxu0 %v4304
    %4370 = vmatprep.subr.mxu0 %v4307
    %4371 = vmatpush1.msra.mxu0 %v4306
    %4372 = vmatprep.subr.mxu0 %v4309
    %4373 = vmatpush1.msra.mxu0 %v4308
    %4374 = vmatprep.subr.mxu0 %v4311
    %4375 = vmatpush1.msra.mxu0 %v4310
    %4376 = vmatprep.subr.mxu0 %v4313
    %4377 = vmatpush1.msra.mxu0 %v4312
    %4378 = vmatprep.subr.mxu0 %v4315
    %4379 = vmatpush1.msra.mxu0 %v4314
    %4380 = vmatprep.subr.mxu0 %v4317
    %4381 = vmatpush1.msra.mxu0 %v4316
    %4382 = vmatprep.subr.mxu0 %v4319
    %4383 = vmatpush1.msra.mxu0 %v4318
    %4384 = vmatprep.subr.mxu0 %v4321
    %4385 = vmatpush1.msra.mxu0 %v4320
    %4386 = vmatprep.subr.mxu0 %v4323
    %4387 = vmatpush1.msra.mxu0 %v4322
    %4388 = vmatprep.subr.mxu0 %v4325
    %4389 = vmatpush1.msra.mxu0 %v4324
    %4390 = vmatprep.subr.mxu0 %v4327
    %4391 = vmatpush1.msra.mxu0 %v4326
    %4392 = vmatprep.subr.mxu0 %v4329
    %4393 = vmatpush1.msra.mxu0 %v4328
    %4394 = vmatprep.subr.mxu0 %v4331
    %4395 = vmatpush1.msra.mxu0 %v4330
    %4396 = vmatprep.subr.mxu0 %v4333
    %4397 = vmatpush1.msra.mxu0 %v4332
    %4398 = vmatprep.subr.mxu0 %v4335
    %4399 = vmatpush1.msra.mxu0 %v4334
    %4400 = vmatprep.subr.mxu0 %v4337
    %4401 = vmatpush1.msra.mxu0 %v4336
    %4402 = vmatprep.subr.mxu0 %v4339
    %4403 = vmatpush1.msra.mxu0 %v4338
    %4404 = vmatprep.subr.mxu0 %v4341
    %4405 = vmatpush1.msra.mxu0 %v4340
    %4406 = vmatprep.subr.mxu0 %v4343
    %4407 = vmatpush1.msra.mxu0 %v4342
    %4408 = vmatprep.subr.mxu0 %v4345
    %4409 = vmatpush1.msra.mxu0 %v4344
    %4410 = vmatprep.subr.mxu0 %v4347
    %4411 = vmatpush1.msra.mxu0 %v4346
    %4412 = vmatprep.subr.mxu0 %v4349
    %4413 = vmatpush1.msra.mxu0 %v4348
    %4414 = vmatprep.subr.mxu0 %v4351
    %4415 = vmatpush1.msra.mxu0 %v4350
    %4416 = vmatprep.subr.mxu0 %v4353
    %4417 = vmatpush1.msra.mxu0 %v4352
    %4418 = vmatprep.subr.mxu0 %v4355
    %4419 = vmatpush1.msra.mxu0 %v4354
    %4420 = vmatprep.subr.mxu0 %v4357
    %4421 = vmatpush1.msra.mxu0 %v4356
    %4422 = vmatprep.subr.mxu0 %v4359
    %4423 = vmatpush1.msra.mxu0 %v4358
    %4424 = vmatprep.subr.mxu0 %v4361
    %4425 = vmatpush1.msra.mxu0 %v4360
    %4426 = vmatprep.subr.mxu0 %v4363
    %4427 = vmatpush1.msra.mxu0 %v4362
    %4428 = vmatprep.mubr.f32.mxu0 %v4298
    %4429 = vmatmul.mubr.f32.gmra.mrb[0].mxu0 %v4297
    %v4430 = vpop.f32.mrb[0].mxu0
    %v4431 = vadd.f32 0.0, %v4430
    %v4432 = vpop.f32.mrb[0].mxu0
    %v4433 = vadd.f32 0.0, %v4432
    %4434 = vdwg.mxu0
    %v4435 = vrot.slane %v4431, 4
    %v4436 = vadd.f32 %v4431, %v4435
    %v4437 = vrot.slane %v4436, 2
    %v4438 = vadd.f32 %v4436, %v4437
    %v4439 = vrot.slane %v4438, 1
    %v4440 = vadd.f32 %v4438, %v4439
    %v4441 = vrot.slane %v4433, 4
    %v4442 = vadd.f32 %v4433, %v4441
    %v4443 = vrot.slane %v4442, 2
    %v4444 = vadd.f32 %v4442, %v4443
    %v4445 = vrot.slane %v4444, 1
    %v4446 = vadd.f32 %v4444, %v4445
    %v4447 = vmul.f32 %v4440, %v225
    %v4448 = vmul.f32 %v4446, %v225
    %v4449 = vmul.f32 %v4431, %v4431
    %v4450 = vmul.f32 %v4433, %v4433
    %v4451 = vrot.slane %v4449, 4
    %v4452 = vadd.f32 %v4449, %v4451
    %v4453 = vrot.slane %v4452, 2
    %v4454 = vadd.f32 %v4452, %v4453
    %v4455 = vrot.slane %v4454, 1
    %v4456 = vadd.f32 %v4454, %v4455
    %v4457 = vrot.slane %v4450, 4
    %v4458 = vadd.f32 %v4450, %v4457
    %v4459 = vrot.slane %v4458, 2
    %v4460 = vadd.f32 %v4458, %v4459
    %v4461 = vrot.slane %v4460, 1
    %v4462 = vadd.f32 %v4460, %v4461
    %v4463 = vmul.f32 %v4456, %v225
    %v4464 = vmul.f32 %v4462, %v225
    %v4465 = vmul.f32 %v4447, %v4447
    %v4466 = vmul.f32 %v4448, %v4448
    %v4467 = vsub.f32 %v4463, %v4465
    %v4468 = vsub.f32 %v4464, %v4466
    %v4469 = vadd.f32 %v4467, 1e-05
    %v4470 = vadd.f32 %v4468, 1e-05
    %v4471 = vrsqrt.pop %v4469
    %v4472 = vrsqrt.pop %v4470
    %s4473 = scalar_lea.vmem [#allocation5], 34
    %v4474 = vld [vmem:[%s4473] ss:$8 sm:$0x3]
    %s4475 = scalar_lea.vmem [#allocation7], 34
    %v4476 = vld [vmem:[%s4475] ss:$8 sm:$0x3]
    %v4477 = vsub.f32 %v4431, %v4447
    %v4478 = vsub.f32 %v4433, %v4448
    %v4480 = vlaneseq
    %v4481 = vshrl.u32 %v4480, 7
    %v4482 = vsub.s32 0, %v4481
    %v4483 = vrot.slane %v4474, %v4482
    %v4484 = vlaneseq
    %v4485 = vshrl.u32 %v4484, 7
    %v4486 = vsub.s32 1, %v4485
    %v4487 = vrot.slane %v4474, %v4486
    %v4490 = vmul.f32 %v4471, %v4483
    %v4491 = vmul.f32 %v4472, %v4487
    %v4492 = vlaneseq
    %v4493 = vshrl.u32 %v4492, 7
    %v4494 = vsub.s32 0, %v4493
    %v4495 = vrot.slane %v4490, %v4494
    %v4496 = vlaneseq
    %v4497 = vshrl.u32 %v4496, 7
    %v4498 = vsub.s32 0, %v4497
    %v4499 = vrot.slane %v4491, %v4498
    %v4500 = vmul.f32 %v4477, %v4495
    %v4501 = vmul.f32 %v4478, %v4499
    %v4503 = vlaneseq
    %v4504 = vshrl.u32 %v4503, 7
    %v4505 = vsub.s32 0, %v4504
    %v4506 = vrot.slane %v4476, %v4505
    %v4507 = vlaneseq
    %v4508 = vshrl.u32 %v4507, 7
    %v4509 = vsub.s32 1, %v4508
    %v4510 = vrot.slane %v4476, %v4509
    %v4513 = vadd.f32 %v4500, %v4506
    %v4514 = vadd.f32 %v4501, %v4510
    %v4515 = vmul.f32 %v4513, 0.5
    %v4516 = vmul.f32 %v4514, 0.5
    %v4517 = vmul.f32 %v4513, 0.70710677
    %v4518 = vmul.f32 %v4514, 0.70710677
    %v4519 = verf.f32.pop %v4517
    %v4520 = verf.f32.pop %v4518
    %v4521 = vadd.f32 %v4519, 1.0
    %v4522 = vadd.f32 %v4520, 1.0
    %v4523 = vmul.f32 %v4515, %v4521
    %v4524 = vmul.f32 %v4516, %v4522
    %s4525 = scalar_lea.vmem [#allocation2], 9728
    %v4526 = vld [vmem:[%s4525] sm:$0xff]
    %v4527 = vld [vmem:[%s4525 + $0x8] sm:$0xff]
    %v4528 = vld [vmem:[%s4525 + $0x10] sm:$0xff]
    %v4529 = vld [vmem:[%s4525 + $0x18] sm:$0xff]
    %v4530 = vld [vmem:[%s4525 + $0x20] sm:$0xff]
    %v4531 = vld [vmem:[%s4525 + $0x28] sm:$0xff]
    %v4532 = vld [vmem:[%s4525 + $0x30] sm:$0xff]
    %v4533 = vld [vmem:[%s4525 + $0x38] sm:$0xff]
    %v4534 = vld [vmem:[%s4525 + $0x40] sm:$0xff]
    %v4535 = vld [vmem:[%s4525 + $0x48] sm:$0xff]
    %v4536 = vld [vmem:[%s4525 + $0x50] sm:$0xff]
    %v4537 = vld [vmem:[%s4525 + $0x58] sm:$0xff]
    %v4538 = vld [vmem:[%s4525 + $0x60] sm:$0xff]
    %v4539 = vld [vmem:[%s4525 + $0x68] sm:$0xff]
    %v4540 = vld [vmem:[%s4525 + $0x70] sm:$0xff]
    %v4541 = vld [vmem:[%s4525 + $0x78] sm:$0xff]
    %v4542 = vld [vmem:[%s4525 + $0x80] sm:$0xff]
    %v4543 = vld [vmem:[%s4525 + $0x88] sm:$0xff]
    %v4544 = vld [vmem:[%s4525 + $0x90] sm:$0xff]
    %v4545 = vld [vmem:[%s4525 + $0x98] sm:$0xff]
    %v4546 = vld [vmem:[%s4525 + $0xa0] sm:$0xff]
    %v4547 = vld [vmem:[%s4525 + $0xa8] sm:$0xff]
    %v4548 = vld [vmem:[%s4525 + $0xb0] sm:$0xff]
    %v4549 = vld [vmem:[%s4525 + $0xb8] sm:$0xff]
    %v4550 = vld [vmem:[%s4525 + $0xc0] sm:$0xff]
    %v4551 = vld [vmem:[%s4525 + $0xc8] sm:$0xff]
    %v4552 = vld [vmem:[%s4525 + $0xd0] sm:$0xff]
    %v4553 = vld [vmem:[%s4525 + $0xd8] sm:$0xff]
    %v4554 = vld [vmem:[%s4525 + $0xe0] sm:$0xff]
    %v4555 = vld [vmem:[%s4525 + $0xe8] sm:$0xff]
    %v4556 = vld [vmem:[%s4525 + $0xf0] sm:$0xff]
    %v4557 = vld [vmem:[%s4525 + $0xf8] sm:$0xff]
    %v4558 = vld [vmem:[%s4525 + $0x100] sm:$0xff]
    %v4559 = vld [vmem:[%s4525 + $0x108] sm:$0xff]
    %v4560 = vld [vmem:[%s4525 + $0x110] sm:$0xff]
    %v4561 = vld [vmem:[%s4525 + $0x118] sm:$0xff]
    %v4562 = vld [vmem:[%s4525 + $0x120] sm:$0xff]
    %v4563 = vld [vmem:[%s4525 + $0x128] sm:$0xff]
    %v4564 = vld [vmem:[%s4525 + $0x130] sm:$0xff]
    %v4565 = vld [vmem:[%s4525 + $0x138] sm:$0xff]
    %v4566 = vld [vmem:[%s4525 + $0x140] sm:$0xff]
    %v4567 = vld [vmem:[%s4525 + $0x148] sm:$0xff]
    %v4568 = vld [vmem:[%s4525 + $0x150] sm:$0xff]
    %v4569 = vld [vmem:[%s4525 + $0x158] sm:$0xff]
    %v4570 = vld [vmem:[%s4525 + $0x160] sm:$0xff]
    %v4571 = vld [vmem:[%s4525 + $0x168] sm:$0xff]
    %v4572 = vld [vmem:[%s4525 + $0x170] sm:$0xff]
    %v4573 = vld [vmem:[%s4525 + $0x178] sm:$0xff]
    %v4574 = vld [vmem:[%s4525 + $0x180] sm:$0xff]
    %v4575 = vld [vmem:[%s4525 + $0x188] sm:$0xff]
    %v4576 = vld [vmem:[%s4525 + $0x190] sm:$0xff]
    %v4577 = vld [vmem:[%s4525 + $0x198] sm:$0xff]
    %v4578 = vld [vmem:[%s4525 + $0x1a0] sm:$0xff]
    %v4579 = vld [vmem:[%s4525 + $0x1a8] sm:$0xff]
    %v4580 = vld [vmem:[%s4525 + $0x1b0] sm:$0xff]
    %v4581 = vld [vmem:[%s4525 + $0x1b8] sm:$0xff]
    %v4582 = vld [vmem:[%s4525 + $0x1c0] sm:$0xff]
    %v4583 = vld [vmem:[%s4525 + $0x1c8] sm:$0xff]
    %v4584 = vld [vmem:[%s4525 + $0x1d0] sm:$0xff]
    %v4585 = vld [vmem:[%s4525 + $0x1d8] sm:$0xff]
    %v4586 = vld [vmem:[%s4525 + $0x1e0] sm:$0xff]
    %v4587 = vld [vmem:[%s4525 + $0x1e8] sm:$0xff]
    %v4588 = vld [vmem:[%s4525 + $0x1f0] sm:$0xff]
    %v4589 = vld [vmem:[%s4525 + $0x1f8] sm:$0xff]
    %4590 = vmatprep.subr.mxu0 %v4527
    %4591 = vmatpush1.msra.mxu0 %v4526
    %4592 = vmatprep.subr.mxu0 %v4529
    %4593 = vmatpush1.msra.mxu0 %v4528
    %4594 = vmatprep.subr.mxu0 %v4531
    %4595 = vmatpush1.msra.mxu0 %v4530
    %4596 = vmatprep.subr.mxu0 %v4533
    %4597 = vmatpush1.msra.mxu0 %v4532
    %4598 = vmatprep.subr.mxu0 %v4535
    %4599 = vmatpush1.msra.mxu0 %v4534
    %4600 = vmatprep.subr.mxu0 %v4537
    %4601 = vmatpush1.msra.mxu0 %v4536
    %4602 = vmatprep.subr.mxu0 %v4539
    %4603 = vmatpush1.msra.mxu0 %v4538
    %4604 = vmatprep.subr.mxu0 %v4541
    %4605 = vmatpush1.msra.mxu0 %v4540
    %4606 = vmatprep.subr.mxu0 %v4543
    %4607 = vmatpush1.msra.mxu0 %v4542
    %4608 = vmatprep.subr.mxu0 %v4545
    %4609 = vmatpush1.msra.mxu0 %v4544
    %4610 = vmatprep.subr.mxu0 %v4547
    %4611 = vmatpush1.msra.mxu0 %v4546
    %4612 = vmatprep.subr.mxu0 %v4549
    %4613 = vmatpush1.msra.mxu0 %v4548
    %4614 = vmatprep.subr.mxu0 %v4551
    %4615 = vmatpush1.msra.mxu0 %v4550
    %4616 = vmatprep.subr.mxu0 %v4553
    %4617 = vmatpush1.msra.mxu0 %v4552
    %4618 = vmatprep.subr.mxu0 %v4555
    %4619 = vmatpush1.msra.mxu0 %v4554
    %4620 = vmatprep.subr.mxu0 %v4557
    %4621 = vmatpush1.msra.mxu0 %v4556
    %4622 = vmatprep.subr.mxu0 %v4559
    %4623 = vmatpush1.msra.mxu0 %v4558
    %4624 = vmatprep.subr.mxu0 %v4561
    %4625 = vmatpush1.msra.mxu0 %v4560
    %4626 = vmatprep.subr.mxu0 %v4563
    %4627 = vmatpush1.msra.mxu0 %v4562
    %4628 = vmatprep.subr.mxu0 %v4565
    %4629 = vmatpush1.msra.mxu0 %v4564
    %4630 = vmatprep.subr.mxu0 %v4567
    %4631 = vmatpush1.msra.mxu0 %v4566
    %4632 = vmatprep.subr.mxu0 %v4569
    %4633 = vmatpush1.msra.mxu0 %v4568
    %4634 = vmatprep.subr.mxu0 %v4571
    %4635 = vmatpush1.msra.mxu0 %v4570
    %4636 = vmatprep.subr.mxu0 %v4573
    %4637 = vmatpush1.msra.mxu0 %v4572
    %4638 = vmatprep.subr.mxu0 %v4575
    %4639 = vmatpush1.msra.mxu0 %v4574
    %4640 = vmatprep.subr.mxu0 %v4577
    %4641 = vmatpush1.msra.mxu0 %v4576
    %4642 = vmatprep.subr.mxu0 %v4579
    %4643 = vmatpush1.msra.mxu0 %v4578
    %4644 = vmatprep.subr.mxu0 %v4581
    %4645 = vmatpush1.msra.mxu0 %v4580
    %4646 = vmatprep.subr.mxu0 %v4583
    %4647 = vmatpush1.msra.mxu0 %v4582
    %4648 = vmatprep.subr.mxu0 %v4585
    %4649 = vmatpush1.msra.mxu0 %v4584
    %4650 = vmatprep.subr.mxu0 %v4587
    %4651 = vmatpush1.msra.mxu0 %v4586
    %4652 = vmatprep.subr.mxu0 %v4589
    %4653 = vmatpush1.msra.mxu0 %v4588
    %4654 = vmatprep.mubr.f32.mxu0 %v4524
    %4655 = vmatmul.mubr.f32.gmra.mrb[0].mxu0 %v4523
    %v4656 = vpop.f32.mrb[0].mxu0
    %v4657 = vadd.f32 0.0, %v4656
    %v4658 = vpop.f32.mrb[0].mxu0
    %v4659 = vadd.f32 0.0, %v4658
    %4660 = vdwg.mxu0
    %v4661 = vrot.slane %v4657, 4
    %v4662 = vadd.f32 %v4657, %v4661
    %v4663 = vrot.slane %v4662, 2
    %v4664 = vadd.f32 %v4662, %v4663
    %v4665 = vrot.slane %v4664, 1
    %v4666 = vadd.f32 %v4664, %v4665
    %v4667 = vrot.slane %v4659, 4
    %v4668 = vadd.f32 %v4659, %v4667
    %v4669 = vrot.slane %v4668, 2
    %v4670 = vadd.f32 %v4668, %v4669
    %v4671 = vrot.slane %v4670, 1
    %v4672 = vadd.f32 %v4670, %v4671
    %v4673 = vmul.f32 %v4666, %v225
    %v4674 = vmul.f32 %v4672, %v225
    %v4675 = vmul.f32 %v4657, %v4657
    %v4676 = vmul.f32 %v4659, %v4659
    %v4677 = vrot.slane %v4675, 4
    %v4678 = vadd.f32 %v4675, %v4677
    %v4679 = vrot.slane %v4678, 2
    %v4680 = vadd.f32 %v4678, %v4679
    %v4681 = vrot.slane %v4680, 1
    %v4682 = vadd.f32 %v4680, %v4681
    %v4683 = vrot.slane %v4676, 4
    %v4684 = vadd.f32 %v4676, %v4683
    %v4685 = vrot.slane %v4684, 2
    %v4686 = vadd.f32 %v4684, %v4685
    %v4687 = vrot.slane %v4686, 1
    %v4688 = vadd.f32 %v4686, %v4687
    %v4689 = vmul.f32 %v4682, %v225
    %v4690 = vmul.f32 %v4688, %v225
    %v4691 = vmul.f32 %v4673, %v4673
    %v4692 = vmul.f32 %v4674, %v4674
    %v4693 = vsub.f32 %v4689, %v4691
    %v4694 = vsub.f32 %v4690, %v4692
    %v4695 = vadd.f32 %v4693, 1e-05
    %v4696 = vadd.f32 %v4694, 1e-05
    %v4697 = vrsqrt.pop %v4695
    %v4698 = vrsqrt.pop %v4696
    %s4699 = scalar_lea.vmem [#allocation5], 35
    %v4700 = vld [vmem:[%s4699] ss:$8 sm:$0x3]
    %s4701 = scalar_lea.vmem [#allocation7], 35
    %v4702 = vld [vmem:[%s4701] ss:$8 sm:$0x3]
    %v4703 = vsub.f32 %v4657, %v4673
    %v4704 = vsub.f32 %v4659, %v4674
    %v4706 = vlaneseq
    %v4707 = vshrl.u32 %v4706, 7
    %v4708 = vsub.s32 0, %v4707
    %v4709 = vrot.slane %v4700, %v4708
    %v4710 = vlaneseq
    %v4711 = vshrl.u32 %v4710, 7
    %v4712 = vsub.s32 1, %v4711
    %v4713 = vrot.slane %v4700, %v4712
    %v4716 = vmul.f32 %v4697, %v4709
    %v4717 = vmul.f32 %v4698, %v4713
    %v4718 = vlaneseq
    %v4719 = vshrl.u32 %v4718, 7
    %v4720 = vsub.s32 0, %v4719
    %v4721 = vrot.slane %v4716, %v4720
    %v4722 = vlaneseq
    %v4723 = vshrl.u32 %v4722, 7
    %v4724 = vsub.s32 0, %v4723
    %v4725 = vrot.slane %v4717, %v4724
    %v4726 = vmul.f32 %v4703, %v4721
    %v4727 = vmul.f32 %v4704, %v4725
    %v4729 = vlaneseq
    %v4730 = vshrl.u32 %v4729, 7
    %v4731 = vsub.s32 0, %v4730
    %v4732 = vrot.slane %v4702, %v4731
    %v4733 = vlaneseq
    %v4734 = vshrl.u32 %v4733, 7
    %v4735 = vsub.s32 1, %v4734
    %v4736 = vrot.slane %v4702, %v4735
    %v4739 = vadd.f32 %v4726, %v4732
    %v4740 = vadd.f32 %v4727, %v4736
    %v4741 = vmul.f32 %v4739, 0.5
    %v4742 = vmul.f32 %v4740, 0.5
    %v4743 = vmul.f32 %v4739, 0.70710677
    %v4744 = vmul.f32 %v4740, 0.70710677
    %v4745 = verf.f32.pop %v4743
    %v4746 = verf.f32.pop %v4744
    %v4747 = vadd.f32 %v4745, 1.0
    %v4748 = vadd.f32 %v4746, 1.0
    %v4749 = vmul.f32 %v4741, %v4747
    %v4750 = vmul.f32 %v4742, %v4748
    %s4751 = scalar_lea.vmem [#allocation2], 10240
    %v4752 = vld [vmem:[%s4751] sm:$0xff]
    %v4753 = vld [vmem:[%s4751 + $0x8] sm:$0xff]
    %v4754 = vld [vmem:[%s4751 + $0x10] sm:$0xff]
    %v4755 = vld [vmem:[%s4751 + $0x18] sm:$0xff]
    %v4756 = vld [vmem:[%s4751 + $0x20] sm:$0xff]
    %v4757 = vld [vmem:[%s4751 + $0x28] sm:$0xff]
    %v4758 = vld [vmem:[%s4751 + $0x30] sm:$0xff]
    %v4759 = vld [vmem:[%s4751 + $0x38] sm:$0xff]
    %v4760 = vld [vmem:[%s4751 + $0x40] sm:$0xff]
    %v4761 = vld [vmem:[%s4751 + $0x48] sm:$0xff]
    %v4762 = vld [vmem:[%s4751 + $0x50] sm:$0xff]
    %v4763 = vld [vmem:[%s4751 + $0x58] sm:$0xff]
    %v4764 = vld [vmem:[%s4751 + $0x60] sm:$0xff]
    %v4765 = vld [vmem:[%s4751 + $0x68] sm:$0xff]
    %v4766 = vld [vmem:[%s4751 + $0x70] sm:$0xff]
    %v4767 = vld [vmem:[%s4751 + $0x78] sm:$0xff]
    %v4768 = vld [vmem:[%s4751 + $0x80] sm:$0xff]
    %v4769 = vld [vmem:[%s4751 + $0x88] sm:$0xff]
    %v4770 = vld [vmem:[%s4751 + $0x90] sm:$0xff]
    %v4771 = vld [vmem:[%s4751 + $0x98] sm:$0xff]
    %v4772 = vld [vmem:[%s4751 + $0xa0] sm:$0xff]
    %v4773 = vld [vmem:[%s4751 + $0xa8] sm:$0xff]
    %v4774 = vld [vmem:[%s4751 + $0xb0] sm:$0xff]
    %v4775 = vld [vmem:[%s4751 + $0xb8] sm:$0xff]
    %v4776 = vld [vmem:[%s4751 + $0xc0] sm:$0xff]
    %v4777 = vld [vmem:[%s4751 + $0xc8] sm:$0xff]
    %v4778 = vld [vmem:[%s4751 + $0xd0] sm:$0xff]
    %v4779 = vld [vmem:[%s4751 + $0xd8] sm:$0xff]
    %v4780 = vld [vmem:[%s4751 + $0xe0] sm:$0xff]
    %v4781 = vld [vmem:[%s4751 + $0xe8] sm:$0xff]
    %v4782 = vld [vmem:[%s4751 + $0xf0] sm:$0xff]
    %v4783 = vld [vmem:[%s4751 + $0xf8] sm:$0xff]
    %v4784 = vld [vmem:[%s4751 + $0x100] sm:$0xff]
    %v4785 = vld [vmem:[%s4751 + $0x108] sm:$0xff]
    %v4786 = vld [vmem:[%s4751 + $0x110] sm:$0xff]
    %v4787 = vld [vmem:[%s4751 + $0x118] sm:$0xff]
    %v4788 = vld [vmem:[%s4751 + $0x120] sm:$0xff]
    %v4789 = vld [vmem:[%s4751 + $0x128] sm:$0xff]
    %v4790 = vld [vmem:[%s4751 + $0x130] sm:$0xff]
    %v4791 = vld [vmem:[%s4751 + $0x138] sm:$0xff]
    %v4792 = vld [vmem:[%s4751 + $0x140] sm:$0xff]
    %v4793 = vld [vmem:[%s4751 + $0x148] sm:$0xff]
    %v4794 = vld [vmem:[%s4751 + $0x150] sm:$0xff]
    %v4795 = vld [vmem:[%s4751 + $0x158] sm:$0xff]
    %v4796 = vld [vmem:[%s4751 + $0x160] sm:$0xff]
    %v4797 = vld [vmem:[%s4751 + $0x168] sm:$0xff]
    %v4798 = vld [vmem:[%s4751 + $0x170] sm:$0xff]
    %v4799 = vld [vmem:[%s4751 + $0x178] sm:$0xff]
    %v4800 = vld [vmem:[%s4751 + $0x180] sm:$0xff]
    %v4801 = vld [vmem:[%s4751 + $0x188] sm:$0xff]
    %v4802 = vld [vmem:[%s4751 + $0x190] sm:$0xff]
    %v4803 = vld [vmem:[%s4751 + $0x198] sm:$0xff]
    %v4804 = vld [vmem:[%s4751 + $0x1a0] sm:$0xff]
    %v4805 = vld [vmem:[%s4751 + $0x1a8] sm:$0xff]
    %v4806 = vld [vmem:[%s4751 + $0x1b0] sm:$0xff]
    %v4807 = vld [vmem:[%s4751 + $0x1b8] sm:$0xff]
    %v4808 = vld [vmem:[%s4751 + $0x1c0] sm:$0xff]
    %v4809 = vld [vmem:[%s4751 + $0x1c8] sm:$0xff]
    %v4810 = vld [vmem:[%s4751 + $0x1d0] sm:$0xff]
    %v4811 = vld [vmem:[%s4751 + $0x1d8] sm:$0xff]
    %v4812 = vld [vmem:[%s4751 + $0x1e0] sm:$0xff]
    %v4813 = vld [vmem:[%s4751 + $0x1e8] sm:$0xff]
    %v4814 = vld [vmem:[%s4751 + $0x1f0] sm:$0xff]
    %v4815 = vld [vmem:[%s4751 + $0x1f8] sm:$0xff]
    %4816 = vmatprep.subr.mxu0 %v4753
    %4817 = vmatpush1.msra.mxu0 %v4752
    %4818 = vmatprep.subr.mxu0 %v4755
    %4819 = vmatpush1.msra.mxu0 %v4754
    %4820 = vmatprep.subr.mxu0 %v4757
    %4821 = vmatpush1.msra.mxu0 %v4756
    %4822 = vmatprep.subr.mxu0 %v4759
    %4823 = vmatpush1.msra.mxu0 %v4758
    %4824 = vmatprep.subr.mxu0 %v4761
    %4825 = vmatpush1.msra.mxu0 %v4760
    %4826 = vmatprep.subr.mxu0 %v4763
    %4827 = vmatpush1.msra.mxu0 %v4762
    %4828 = vmatprep.subr.mxu0 %v4765
    %4829 = vmatpush1.msra.mxu0 %v4764
    %4830 = vmatprep.subr.mxu0 %v4767
    %4831 = vmatpush1.msra.mxu0 %v4766
    %4832 = vmatprep.subr.mxu0 %v4769
    %4833 = vmatpush1.msra.mxu0 %v4768
    %4834 = vmatprep.subr.mxu0 %v4771
    %4835 = vmatpush1.msra.mxu0 %v4770
    %4836 = vmatprep.subr.mxu0 %v4773
    %4837 = vmatpush1.msra.mxu0 %v4772
    %4838 = vmatprep.subr.mxu0 %v4775
    %4839 = vmatpush1.msra.mxu0 %v4774
    %4840 = vmatprep.subr.mxu0 %v4777
    %4841 = vmatpush1.msra.mxu0 %v4776
    %4842 = vmatprep.subr.mxu0 %v4779
    %4843 = vmatpush1.msra.mxu0 %v4778
    %4844 = vmatprep.subr.mxu0 %v4781
    %4845 = vmatpush1.msra.mxu0 %v4780
    %4846 = vmatprep.subr.mxu0 %v4783
    %4847 = vmatpush1.msra.mxu0 %v4782
    %4848 = vmatprep.subr.mxu0 %v4785
    %4849 = vmatpush1.msra.mxu0 %v4784
    %4850 = vmatprep.subr.mxu0 %v4787
    %4851 = vmatpush1.msra.mxu0 %v4786
    %4852 = vmatprep.subr.mxu0 %v4789
    %4853 = vmatpush1.msra.mxu0 %v4788
    %4854 = vmatprep.subr.mxu0 %v4791
    %4855 = vmatpush1.msra.mxu0 %v4790
    %4856 = vmatprep.subr.mxu0 %v4793
    %4857 = vmatpush1.msra.mxu0 %v4792
    %4858 = vmatprep.subr.mxu0 %v4795
    %4859 = vmatpush1.msra.mxu0 %v4794
    %4860 = vmatprep.subr.mxu0 %v4797
    %4861 = vmatpush1.msra.mxu0 %v4796
    %4862 = vmatprep.subr.mxu0 %v4799
    %4863 = vmatpush1.msra.mxu0 %v4798
    %4864 = vmatprep.subr.mxu0 %v4801
    %4865 = vmatpush1.msra.mxu0 %v4800
    %4866 = vmatprep.subr.mxu0 %v4803
    %4867 = vmatpush1.msra.mxu0 %v4802
    %4868 = vmatprep.subr.mxu0 %v4805
    %4869 = vmatpush1.msra.mxu0 %v4804
    %4870 = vmatprep.subr.mxu0 %v4807
    %4871 = vmatpush1.msra.mxu0 %v4806
    %4872 = vmatprep.subr.mxu0 %v4809
    %4873 = vmatpush1.msra.mxu0 %v4808
    %4874 = vmatprep.subr.mxu0 %v4811
    %4875 = vmatpush1.msra.mxu0 %v4810
    %4876 = vmatprep.subr.mxu0 %v4813
    %4877 = vmatpush1.msra.mxu0 %v4812
    %4878 = vmatprep.subr.mxu0 %v4815
    %4879 = vmatpush1.msra.mxu0 %v4814
    %4880 = vmatprep.mubr.f32.mxu0 %v4750
    %4881 = vmatmul.mubr.f32.gmra.mrb[0].mxu0 %v4749
    %v4882 = vpop.f32.mrb[0].mxu0
    %v4883 = vadd.f32 0.0, %v4882
    %v4884 = vpop.f32.mrb[0].mxu0
    %v4885 = vadd.f32 0.0, %v4884
    %4886 = vdwg.mxu0
    %v4887 = vrot.slane %v4883, 4
    %v4888 = vadd.f32 %v4883, %v4887
    %v4889 = vrot.slane %v4888, 2
    %v4890 = vadd.f32 %v4888, %v4889
    %v4891 = vrot.slane %v4890, 1
    %v4892 = vadd.f32 %v4890, %v4891
    %v4893 = vrot.slane %v4885, 4
    %v4894 = vadd.f32 %v4885, %v4893
    %v4895 = vrot.slane %v4894, 2
    %v4896 = vadd.f32 %v4894, %v4895
    %v4897 = vrot.slane %v4896, 1
    %v4898 = vadd.f32 %v4896, %v4897
    %v4899 = vmul.f32 %v4892, %v225
    %v4900 = vmul.f32 %v4898, %v225
    %v4901 = vmul.f32 %v4883, %v4883
    %v4902 = vmul.f32 %v4885, %v4885
    %v4903 = vrot.slane %v4901, 4
    %v4904 = vadd.f32 %v4901, %v4903
    %v4905 = vrot.slane %v4904, 2
    %v4906 = vadd.f32 %v4904, %v4905
    %v4907 = vrot.slane %v4906, 1
    %v4908 = vadd.f32 %v4906, %v4907
    %v4909 = vrot.slane %v4902, 4
    %v4910 = vadd.f32 %v4902, %v4909
    %v4911 = vrot.slane %v4910, 2
    %v4912 = vadd.f32 %v4910, %v4911
    %v4913 = vrot.slane %v4912, 1
    %v4914 = vadd.f32 %v4912, %v4913
    %v4915 = vmul.f32 %v4908, %v225
    %v4916 = vmul.f32 %v4914, %v225
    %v4917 = vmul.f32 %v4899, %v4899
    %v4918 = vmul.f32 %v4900, %v4900
    %v4919 = vsub.f32 %v4915, %v4917
    %v4920 = vsub.f32 %v4916, %v4918
    %v4921 = vadd.f32 %v4919, 1e-05
    %v4922 = vadd.f32 %v4920, 1e-05
    %v4923 = vrsqrt.pop %v4921
    %v4924 = vrsqrt.pop %v4922
    %s4925 = scalar_lea.vmem [#allocation5], 36
    %v4926 = vld [vmem:[%s4925] ss:$8 sm:$0x3]
    %s4927 = scalar_lea.vmem [#allocation7], 36
    %v4928 = vld [vmem:[%s4927] ss:$8 sm:$0x3]
    %v4929 = vsub.f32 %v4883, %v4899
    %v4930 = vsub.f32 %v4885, %v4900
    %v4932 = vlaneseq
    %v4933 = vshrl.u32 %v4932, 7
    %v4934 = vsub.s32 0, %v4933
    %v4935 = vrot.slane %v4926, %v4934
    %v4936 = vlaneseq
    %v4937 = vshrl.u32 %v4936, 7
    %v4938 = vsub.s32 1, %v4937
    %v4939 = vrot.slane %v4926, %v4938
    %v4942 = vmul.f32 %v4923, %v4935
    %v4943 = vmul.f32 %v4924, %v4939
    %v4944 = vlaneseq
    %v4945 = vshrl.u32 %v4944, 7
    %v4946 = vsub.s32 0, %v4945
    %v4947 = vrot.slane %v4942, %v4946
    %v4948 = vlaneseq
    %v4949 = vshrl.u32 %v4948, 7
    %v4950 = vsub.s32 0, %v4949
    %v4951 = vrot.slane %v4943, %v4950
    %v4952 = vmul.f32 %v4929, %v4947
    %v4953 = vmul.f32 %v4930, %v4951
    %v4955 = vlaneseq
    %v4956 = vshrl.u32 %v4955, 7
    %v4957 = vsub.s32 0, %v4956
    %v4958 = vrot.slane %v4928, %v4957
    %v4959 = vlaneseq
    %v4960 = vshrl.u32 %v4959, 7
    %v4961 = vsub.s32 1, %v4960
    %v4962 = vrot.slane %v4928, %v4961
    %v4965 = vadd.f32 %v4952, %v4958
    %v4966 = vadd.f32 %v4953, %v4962
    %v4967 = vmul.f32 %v4965, 0.5
    %v4968 = vmul.f32 %v4966, 0.5
    %v4969 = vmul.f32 %v4965, 0.70710677
    %v4970 = vmul.f32 %v4966, 0.70710677
    %v4971 = verf.f32.pop %v4969
    %v4972 = verf.f32.pop %v4970
    %v4973 = vadd.f32 %v4971, 1.0
    %v4974 = vadd.f32 %v4972, 1.0
    %v4975 = vmul.f32 %v4967, %v4973
    %v4976 = vmul.f32 %v4968, %v4974
    %s4977 = scalar_lea.vmem [#allocation2], 11264
    %v4978 = vld [vmem:[%s4977] sm:$0xff]
    %v4979 = vld [vmem:[%s4977 + $0x8] sm:$0xff]
    %v4980 = vld [vmem:[%s4977 + $0x10] sm:$0xff]
    %v4981 = vld [vmem:[%s4977 + $0x18] sm:$0xff]
    %v4982 = vld [vmem:[%s4977 + $0x20] sm:$0xff]
    %v4983 = vld [vmem:[%s4977 + $0x28] sm:$0xff]
    %v4984 = vld [vmem:[%s4977 + $0x30] sm:$0xff]
    %v4985 = vld [vmem:[%s4977 + $0x38] sm:$0xff]
    %v4986 = vld [vmem:[%s4977 + $0x40] sm:$0xff]
    %v4987 = vld [vmem:[%s4977 + $0x48] sm:$0xff]
    %v4988 = vld [vmem:[%s4977 + $0x50] sm:$0xff]
    %v4989 = vld [vmem:[%s4977 + $0x58] sm:$0xff]
    %v4990 = vld [vmem:[%s4977 + $0x60] sm:$0xff]
    %v4991 = vld [vmem:[%s4977 + $0x68] sm:$0xff]
    %v4992 = vld [vmem:[%s4977 + $0x70] sm:$0xff]
    %v4993 = vld [vmem:[%s4977 + $0x78] sm:$0xff]
    %v4994 = vld [vmem:[%s4977 + $0x80] sm:$0xff]
    %v4995 = vld [vmem:[%s4977 + $0x88] sm:$0xff]
    %v4996 = vld [vmem:[%s4977 + $0x90] sm:$0xff]
    %v4997 = vld [vmem:[%s4977 + $0x98] sm:$0xff]
    %v4998 = vld [vmem:[%s4977 + $0xa0] sm:$0xff]
    %v4999 = vld [vmem:[%s4977 + $0xa8] sm:$0xff]
    %v5000 = vld [vmem:[%s4977 + $0xb0] sm:$0xff]
    %v5001 = vld [vmem:[%s4977 + $0xb8] sm:$0xff]
    %v5002 = vld [vmem:[%s4977 + $0xc0] sm:$0xff]
    %v5003 = vld [vmem:[%s4977 + $0xc8] sm:$0xff]
    %v5004 = vld [vmem:[%s4977 + $0xd0] sm:$0xff]
    %v5005 = vld [vmem:[%s4977 + $0xd8] sm:$0xff]
    %v5006 = vld [vmem:[%s4977 + $0xe0] sm:$0xff]
    %v5007 = vld [vmem:[%s4977 + $0xe8] sm:$0xff]
    %v5008 = vld [vmem:[%s4977 + $0xf0] sm:$0xff]
    %v5009 = vld [vmem:[%s4977 + $0xf8] sm:$0xff]
    %v5010 = vld [vmem:[%s4977 + $0x100] sm:$0xff]
    %v5011 = vld [vmem:[%s4977 + $0x108] sm:$0xff]
    %v5012 = vld [vmem:[%s4977 + $0x110] sm:$0xff]
    %v5013 = vld [vmem:[%s4977 + $0x118] sm:$0xff]
    %v5014 = vld [vmem:[%s4977 + $0x120] sm:$0xff]
    %v5015 = vld [vmem:[%s4977 + $0x128] sm:$0xff]
    %v5016 = vld [vmem:[%s4977 + $0x130] sm:$0xff]
    %v5017 = vld [vmem:[%s4977 + $0x138] sm:$0xff]
    %v5018 = vld [vmem:[%s4977 + $0x140] sm:$0xff]
    %v5019 = vld [vmem:[%s4977 + $0x148] sm:$0xff]
    %v5020 = vld [vmem:[%s4977 + $0x150] sm:$0xff]
    %v5021 = vld [vmem:[%s4977 + $0x158] sm:$0xff]
    %v5022 = vld [vmem:[%s4977 + $0x160] sm:$0xff]
    %v5023 = vld [vmem:[%s4977 + $0x168] sm:$0xff]
    %v5024 = vld [vmem:[%s4977 + $0x170] sm:$0xff]
    %v5025 = vld [vmem:[%s4977 + $0x178] sm:$0xff]
    %v5026 = vld [vmem:[%s4977 + $0x180] sm:$0xff]
    %v5027 = vld [vmem:[%s4977 + $0x188] sm:$0xff]
    %v5028 = vld [vmem:[%s4977 + $0x190] sm:$0xff]
    %v5029 = vld [vmem:[%s4977 + $0x198] sm:$0xff]
    %v5030 = vld [vmem:[%s4977 + $0x1a0] sm:$0xff]
    %v5031 = vld [vmem:[%s4977 + $0x1a8] sm:$0xff]
    %v5032 = vld [vmem:[%s4977 + $0x1b0] sm:$0xff]
    %v5033 = vld [vmem:[%s4977 + $0x1b8] sm:$0xff]
    %v5034 = vld [vmem:[%s4977 + $0x1c0] sm:$0xff]
    %v5035 = vld [vmem:[%s4977 + $0x1c8] sm:$0xff]
    %v5036 = vld [vmem:[%s4977 + $0x1d0] sm:$0xff]
    %v5037 = vld [vmem:[%s4977 + $0x1d8] sm:$0xff]
    %v5038 = vld [vmem:[%s4977 + $0x1e0] sm:$0xff]
    %v5039 = vld [vmem:[%s4977 + $0x1e8] sm:$0xff]
    %v5040 = vld [vmem:[%s4977 + $0x1f0] sm:$0xff]
    %v5041 = vld [vmem:[%s4977 + $0x1f8] sm:$0xff]
    %s5042 = scalar_lea.vmem [#allocation8], 1
    %v5043 = vld [vmem:[%s5042] ss:$2 sm:$0x3]
    %v5045 = vlaneseq
    %v5046 = vshrl.u32 %v5045, 7
    %v5047 = vsub.s32 0, %v5046
    %v5048 = vrot.slane %v5043, %v5047
    %5050 = vmatprep.subr.mxu0 %v4979
    %5051 = vmatpush1.msra.mxu0 %v4978
    %5052 = vmatprep.subr.mxu0 %v4981
    %5053 = vmatpush1.msra.mxu0 %v4980
    %5054 = vmatprep.subr.mxu0 %v4983
    %5055 = vmatpush1.msra.mxu0 %v4982
    %5056 = vmatprep.subr.mxu0 %v4985
    %5057 = vmatpush1.msra.mxu0 %v4984
    %5058 = vmatprep.subr.mxu0 %v4987
    %5059 = vmatpush1.msra.mxu0 %v4986
    %5060 = vmatprep.subr.mxu0 %v4989
    %5061 = vmatpush1.msra.mxu0 %v4988
    %5062 = vmatprep.subr.mxu0 %v4991
    %5063 = vmatpush1.msra.mxu0 %v4990
    %5064 = vmatprep.subr.mxu0 %v4993
    %5065 = vmatpush1.msra.mxu0 %v4992
    %5066 = vmatprep.subr.mxu0 %v4995
    %5067 = vmatpush1.msra.mxu0 %v4994
    %5068 = vmatprep.subr.mxu0 %v4997
    %5069 = vmatpush1.msra.mxu0 %v4996
    %5070 = vmatprep.subr.mxu0 %v4999
    %5071 = vmatpush1.msra.mxu0 %v4998
    %5072 = vmatprep.subr.mxu0 %v5001
    %5073 = vmatpush1.msra.mxu0 %v5000
    %5074 = vmatprep.subr.mxu0 %v5003
    %5075 = vmatpush1.msra.mxu0 %v5002
    %5076 = vmatprep.subr.mxu0 %v5005
    %5077 = vmatpush1.msra.mxu0 %v5004
    %5078 = vmatprep.subr.mxu0 %v5007
    %5079 = vmatpush1.msra.mxu0 %v5006
    %5080 = vmatprep.subr.mxu0 %v5009
    %5081 = vmatpush1.msra.mxu0 %v5008
    %5082 = vmatprep.subr.mxu0 %v5011
    %5083 = vmatpush1.msra.mxu0 %v5010
    %5084 = vmatprep.subr.mxu0 %v5013
    %5085 = vmatpush1.msra.mxu0 %v5012
    %5086 = vmatprep.subr.mxu0 %v5015
    %5087 = vmatpush1.msra.mxu0 %v5014
    %5088 = vmatprep.subr.mxu0 %v5017
    %5089 = vmatpush1.msra.mxu0 %v5016
    %5090 = vmatprep.subr.mxu0 %v5019
    %5091 = vmatpush1.msra.mxu0 %v5018
    %5092 = vmatprep.subr.mxu0 %v5021
    %5093 = vmatpush1.msra.mxu0 %v5020
    %5094 = vmatprep.subr.mxu0 %v5023
    %5095 = vmatpush1.msra.mxu0 %v5022
    %5096 = vmatprep.subr.mxu0 %v5025
    %5097 = vmatpush1.msra.mxu0 %v5024
    %5098 = vmatprep.subr.mxu0 %v5027
    %5099 = vmatpush1.msra.mxu0 %v5026
    %5100 = vmatprep.subr.mxu0 %v5029
    %5101 = vmatpush1.msra.mxu0 %v5028
    %5102 = vmatprep.subr.mxu0 %v5031
    %5103 = vmatpush1.msra.mxu0 %v5030
    %5104 = vmatprep.subr.mxu0 %v5033
    %5105 = vmatpush1.msra.mxu0 %v5032
    %5106 = vmatprep.subr.mxu0 %v5035
    %5107 = vmatpush1.msra.mxu0 %v5034
    %5108 = vmatprep.subr.mxu0 %v5037
    %5109 = vmatpush1.msra.mxu0 %v5036
    %5110 = vmatprep.subr.mxu0 %v5039
    %5111 = vmatpush1.msra.mxu0 %v5038
    %5112 = vmatprep.subr.mxu0 %v5041
    %5113 = vmatpush1.msra.mxu0 %v5040
    %5114 = vmatprep.mubr.f32.mxu0 %v4976
    %5115 = vmatmul.mubr.f32.gmra.mrb[0].mxu0 %v4975
    %v5116 = vpop.f32.mrb[0].mxu0
    %v5117 = vadd.f32 %v5048, %v5116
    %v5118 = vpop.f32.mrb[0].mxu0
    %5119 = vdwg.mxu0
    %vm5120 = vcmask 7168
    %5121 = vst.msk [vmem:[%s6] sm:$0xff] %vm5120, %v5117
    // Predicated region
    $region38: #{net_forward.1} parent=1 // pred_check
      _
    $region39: #{net_forward.1} parent=1 // pred_check_branch
      %5123 = sbr.rel (0) target = $region41
    $region40: #{net_forward.1} parent=1 // pred_region
      %s5125 = ssub.s32 128, 128
      %5126 = vsyncadd [#allocation4], %s5125
      %s5128 = sshll.u32 [#allocation10], 4
      %s5129 = int_to_ptr.vmem [resolvable:$true] %s5128
      %5131 = dma.vmem_to_hbm [thread:$0]  %s5129, 128, %s5, [#allocation4]
    $region41: #{net_forward.1} parent=1 // pred_fallthru
      _
    // Predicated region
    $region42: #{net_forward.1} parent=1 // pred_check
      _
    $region43: #{net_forward.1} parent=1 // pred_check_branch
      %5133 = sbr.rel (0) target = $region45
    $region44: #{net_forward.1} parent=1 // pred_region
      _
    $region45: #{net_forward.1} parent=1 // pred_fallthru
      _
    // Predicated region
    $region46: #{net_forward.1} parent=1 // pred_check
      _
    $region47: #{net_forward.1} parent=1 // pred_check_branch
      %5135 = sbr.rel (0) target = $region49
    $region48: #{net_forward.1} parent=1 // pred_region
      %5136 = dma.done [#allocation4], 128
    $region49: #{net_forward.1} parent=1 // pred_fallthru
      _
    // Predicated region
    $region50: #{net_forward.1} parent=1 // pred_check
      _
    $region51: #{net_forward.1} parent=1 // pred_check_branch
      %5138 = sbr.rel (0) target = $region53
    $region52: #{net_forward.1} parent=1 // pred_region
      _
    $region53: #{net_forward.1} parent=1 // pred_fallthru
      _
    %5139 = vsyncpa [#allocation3], 1
    %5140 = vsyncpa [#allocation6], 1
    %5141 = vsyncpa [#allocation9], 1
    %5142 = vsyncpa [#allocation4], 1

</llo_original>
